<compile_context>
chip_gen: v7x
topology: tpu7x:2x2x1
jax: 0.10.0
libtpu: 0.0.40
codegen_flags: <defaults>
</compile_context>

<pallas_src>
import jax
import jax.numpy as jnp
from jax import lax
from jax.experimental import pallas as pl
from jax.experimental.pallas import tpu as pltpu

K = 7            # spatial-attention conv kernel size
PAD = K // 2     # padding = 3
_MAX_TOEPLITZ_HW = 1024   # beyond this the (2*HW, HW) operator no longer fits VMEM


def _cbam_kernel(x_ref, w1t_ref, b1_ref, w2t_ref, b2_ref, wsp_ref, o_ref):
    x = x_ref[...]                                   # (Bt, C, HW), native dtype, lane-dense

    # ---------------- Channel attention (tiny MLP on the otherwise-idle MXU) ----------------
    avg = jnp.mean(x, axis=-1, dtype=jnp.float32)    # (Bt, C)   lane reduce, f32 accumulation
    mx = jnp.max(x, axis=-1).astype(jnp.float32)     # (Bt, C)

    w1t = w1t_ref[...]                               # (C, hidden)
    b1 = b1_ref[...]                                 # (1, hidden)
    w2t = w2t_ref[...]                               # (hidden, C)
    b2 = b2_ref[...]                                 # (1, C)

    def layer1(u):                                   # (Bt, C) @ (C, hidden) on the MXU
        return jnp.dot(u, w1t, preferred_element_type=jnp.float32,
                       precision=lax.Precision.HIGHEST) + b1

    h = jnp.maximum(layer1(avg), 0.0) + jnp.maximum(layer1(mx), 0.0)      # (Bt, hidden)
    # Second layer is linear, so both MLP branches share it (2*b2 = b2 + b2).
    y = jnp.dot(h, w2t, preferred_element_type=jnp.float32,
                precision=lax.Precision.HIGHEST) + 2.0 * b2               # (Bt, C)
    ca = jax.nn.sigmoid(y)                                                # (Bt, C), f32

    # ca[:, :, None] moves C from lanes to sublanes; this relayout only touches
    # Bt*C elements (HW x smaller than the elementwise work below), which is the
    # price for keeping the MLP on the MXU instead of the XLU.
    x_ca = x * ca.astype(x.dtype)[:, :, None]        # (Bt, C, HW), stays in input dtype

    # ---------------- Spatial attention (fused Toeplitz conv on the MXU) ----------------
    avg_map = jnp.mean(x_ca, axis=1, dtype=jnp.float32)    # (Bt, HW)  sublane reduce over C
    max_map = jnp.max(x_ca, axis=1).astype(jnp.float32)    # (Bt, HW)
    cat = jnp.concatenate([avg_map, max_map], axis=-1)     # (Bt, 2*HW), lane concat
    # One MXU stream with K = 2*HW instead of two K = HW drains.
    conv = jnp.dot(cat, wsp_ref[...], preferred_element_type=jnp.float32,
                   precision=lax.Precision.HIGHEST)        # (Bt, HW)
    sa = jax.nn.sigmoid(conv).astype(x.dtype)[:, None, :]  # (Bt, 1, HW), sublane broadcast
    o_ref[...] = (x_ca * sa).astype(o_ref.dtype)           # unmasked lane-dense store


def _spatial_conv_operator(conv_w, H, W):
    """Fold the (1, 2, K, K) conv weights into a (2*H*W, H*W) matmul operator.

    op[c*HW + ip*W + jp, iq*W + jq] = conv_w[0, c, ip-iq+PAD, jp-jq+PAD]
    (0 outside the 7x7 window), so `[avg|max] @ op` == cross-correlation with
    zero 'same' padding, exactly matching nn.Conv2d(2, 1, 7, padding=3).
    """
    w = jnp.asarray(conv_w, jnp.float32)[0]       # (2, K, K)
    ip = jnp.arange(H)[:, None, None, None]
    jp = jnp.arange(W)[None, :, None, None]
    iq = jnp.arange(H)[None, None, :, None]
    jq = jnp.arange(W)[None, None, None, :]
    ky = ip - iq + PAD                            # (H, W, H, W)
    kx = jp - jq + PAD
    valid = (ky >= 0) & (ky < K) & (kx >= 0) & (kx < K)
    vals = w[:, jnp.clip(ky, 0, K - 1), jnp.clip(kx, 0, K - 1)]   # (2, H, W, H, W)
    op = jnp.where(valid[None], vals, 0.0)
    return op.reshape(2 * H * W, H * W)


def _chip_tuning():
    """Per-generation sizing.

    Returns (need_two_grid_steps, per_step_x_budget_bytes, vmem_limit_bytes_or_None).
      * v5e / v6e: single TensorCore, 128 MiB physical VMEM -> one big step,
        ~8 MiB of x per step, 96 MiB scoped-VMEM limit.
      * v7x: 2 TensorCores (megacore via "parallel"), 64 MiB VMEM -> keep >= 2
        grid steps, ~4 MiB of x per step, 48 MiB scoped-VMEM limit.
      * unknown: keep the previous known-good conservative configuration.
    """
    kind = ""
    try:
        kind = jax.devices()[0].device_kind.lower().replace(" ", "")
    except Exception:
        pass
    if any(t in kind for t in ("v5e", "v5lite", "v6e", "v6lite")):
        return False, 8 << 20, 96 << 20
    if "v7" in kind:
        return True, 4 << 20, 48 << 20
    return True, 2 << 20, None


def _pick_block_b(B, bytes_per_sample, budget, need_two_steps):
    """Samples per grid step: as large as the budget allows (live footprint is
    ~5-6x the x block: double-buffered input + output + f32 temporaries),
    exactly dividing B, and keeping >= 2 grid steps only on multi-TC chips."""
    bt = min(B, max(1, budget // max(1, bytes_per_sample)))
    while bt > 1 and (B % bt != 0 or (need_two_steps and B // bt < 2)):
        bt -= 1
    return bt


def _const_specs(shapes, single_buffer):
    """BlockSpecs for grid-invariant operands (constant index_map).

    When supported, request single buffering: there is no point double-buffering
    a block that is revisited with the same index every step (the (2*HW, HW)
    conv operator in particular scales as (HW)^2)."""
    specs = []
    for shape in shapes:
        idx = lambda b, _n=len(shape): (0,) * _n
        if single_buffer:
            specs.append(pl.BlockSpec(shape, idx, pipeline_mode=pl.Buffered(1)))
        else:
            specs.append(pl.BlockSpec(shape, idx))
    return specs


def _build_call(x_dtype, B, C, HW, hidden, bt, vmem_limit, single_buffer_params):
    in_specs = [pl.BlockSpec((bt, C, HW), lambda b: (b, 0, 0))]        # x (lane-dense)
    in_specs += _const_specs(
        [(C, hidden), (1, hidden), (hidden, C), (1, C), (2 * HW, HW)],
        single_buffer_params)

    cp_kwargs = dict(dimension_semantics=("parallel",))
    if vmem_limit is not None:
        cp_kwargs["vmem_limit_bytes"] = vmem_limit

    return pl.pallas_call(
        _cbam_kernel,
        out_shape=jax.ShapeDtypeStruct((B, C, HW), x_dtype),
        grid_spec=pltpu.PrefetchScalarGridSpec(
            num_scalar_prefetch=0,
            grid=(B // bt,),
            in_specs=in_specs,
            out_specs=pl.BlockSpec((bt, C, HW), lambda b: (b, 0, 0)),
        ),
        compiler_params=pltpu.CompilerParams(**cp_kwargs),
    )


def cbam(x, w1, b1, w2, b2, conv_w, *, block_b=None):
    B, C, H, W = x.shape
    hidden = w1.shape[0]
    HW = H * W

    # TODO(synk): for HW > 1024 the (2*HW, HW) Toeplitz operator (16*(HW/1024)^2 MiB)
    # exceeds VMEM; switch to a shifted-accumulation conv (pltpu.roll over the 49 taps).
    assert HW <= _MAX_TOEPLITZ_HW, f"H*W={HW} too large for the Toeplitz conv operator"

    x_flat = x.reshape(B, C, HW)                   # lane-dense layout (HW on lanes)
    w1t = jnp.asarray(w1, jnp.float32).T           # (C, hidden)
    w2t = jnp.asarray(w2, jnp.float32).T           # (hidden, C)
    b1_r = jnp.asarray(b1, jnp.float32).reshape(1, hidden)
    b2_r = jnp.asarray(b2, jnp.float32).reshape(1, C)
    wsp = _spatial_conv_operator(conv_w, H, W)     # (2*HW, HW)

    need_two_steps, x_budget, vmem_limit = _chip_tuning()
    bt = block_b if block_b is not None else _pick_block_b(
        B, C * HW * x.dtype.itemsize, x_budget, need_two_steps)
    assert B % bt == 0, (B, bt)

    args = (x_flat, w1t, b1_r, w2t, b2_r, wsp)
    try:
        out = _build_call(x.dtype, B, C, HW, hidden, bt, vmem_limit, True)(*args)
    except Exception:
        # Fallback for jax versions without BlockSpec.pipeline_mode / Buffered(1)
        # support in the TPU pipeline; identical semantics, just double-buffered params.
        out = _build_call(x.dtype, B, C, HW, hidden, bt, vmem_limit, False)(*args)
    return out.reshape(B, C, H, W)


def cbam_ref(x, w1, b1, w2, b2, conv_w):
    """Plain-JAX reference matching the PyTorch module."""
    avg = jnp.mean(x, axis=(2, 3))
    mx = jnp.max(x, axis=(2, 3))

    def mlp(v):
        h = jnp.maximum(jnp.dot(v, w1.T, precision=lax.Precision.HIGHEST) + b1, 0.0)
        return jnp.dot(h, w2.T, precision=lax.Precision.HIGHEST) + b2

    ca = jax.nn.sigmoid(mlp(avg) + mlp(mx))[:, :, None, None]
    x_ca = x * ca
    amap = jnp.mean(x_ca, axis=1, keepdims=True)
    mmap = jnp.max(x_ca, axis=1, keepdims=True)
    cat = jnp.concatenate([amap, mmap], axis=1)
    sa = lax.conv_general_dilated(
        cat, conv_w, window_strides=(1, 1), padding=((PAD, PAD), (PAD, PAD)),
        dimension_numbers=("NCHW", "OIHW", "NCHW"),
        precision=lax.Precision.HIGHEST)
    sa = jax.nn.sigmoid(sa)
    return x_ca * sa


if __name__ == "__main__":
    B, C, H, W = 2, 32, 16, 16
    reduction = 16
    hidden = C // reduction

    key = jax.random.PRNGKey(0)
    kx, k1, kb1, k2, kb2, kc = jax.random.split(key, 6)
    x = jax.random.normal(kx, (B, C, H, W), jnp.float32)
    # deterministic synthetic parameters (shapes match nn.Linear / nn.Conv2d in the module)
    w1 = jax.random.normal(k1, (hidden, C), jnp.float32) * 0.1
    b1 = jax.random.normal(kb1, (hidden,), jnp.float32) * 0.1
    w2 = jax.random.normal(k2, (C, hidden), jnp.float32) * 0.1
    b2 = jax.random.normal(kb2, (C,), jnp.float32) * 0.1
    conv_w = jax.random.normal(kc, (1, 2, K, K), jnp.float32) * 0.1   # bias=False

    out = jax.block_until_ready(cbam(x, w1, b1, w2, b2, conv_w))

    ref = cbam_ref(x, w1, b1, w2, b2, conv_w)
    assert out.shape == (B, C, H, W)
    # HIGHEST-precision MXU dots -> tight tolerance vs the reference
    assert jnp.allclose(out, ref, atol=1e-4, rtol=1e-4), "mismatch vs reference"
    print("KERNEL_OK")
</pallas_src>

<mosaic_0001>
module attributes {stable_mosaic.version = 11 : i64} {
  func.func @_cbam_kernel(%arg0: i32, %arg1: memref<1x32x256xf32, #tpu.memory_space<vmem>>, %arg2: memref<32x2xf32, #tpu.memory_space<vmem>>, %arg3: memref<1x2xf32, #tpu.memory_space<vmem>>, %arg4: memref<2x32xf32, #tpu.memory_space<vmem>>, %arg5: memref<1x32xf32, #tpu.memory_space<vmem>>, %arg6: memref<512x256xf32, #tpu.memory_space<vmem>>, %arg7: memref<1x32x256xf32, #tpu.memory_space<vmem>>) attributes {dimension_semantics = [#tpu.dimension_semantics<parallel>], iteration_bounds = array<i64: 2>, scalar_prefetch = 0 : i64, scratch_operands = 0 : i64, tpu.core_type = #tpu.core_type<tc>, window_params = [{transform_indices = @transform_0, window_bounds = array<i64: 1, 32, 256>}, {pipeline_mode = #tpu.pipeline_mode<synchronous>, transform_indices = @transform_1, window_bounds = array<i64: 32, 2>}, {pipeline_mode = #tpu.pipeline_mode<synchronous>, transform_indices = @transform_2, window_bounds = array<i64: 1, 2>}, {pipeline_mode = #tpu.pipeline_mode<synchronous>, transform_indices = @transform_3, window_bounds = array<i64: 2, 32>}, {pipeline_mode = #tpu.pipeline_mode<synchronous>, transform_indices = @transform_4, window_bounds = array<i64: 1, 32>}, {pipeline_mode = #tpu.pipeline_mode<synchronous>, transform_indices = @transform_5, window_bounds = array<i64: 512, 256>}, {transform_indices = @transform_6, window_bounds = array<i64: 1, 32, 256>}]} {
    %c0 = arith.constant 0 : index
    %c0_0 = arith.constant 0 : index
    %c0_1 = arith.constant 0 : index
    %0 = vector.load %arg1[%c0, %c0_0, %c0_1] : memref<1x32x256xf32, #tpu.memory_space<vmem>>, vector<1x32x256xf32>
    %cst = arith.constant dense<0.000000e+00> : vector<1x32xf32>
    %1 = vector.multi_reduction <add>, %0, %cst [2] : vector<1x32x256xf32> to vector<1x32xf32>
    %cst_2 = arith.constant 2.560000e+02 : f32
    %2 = vector.broadcast %cst_2 : f32 to vector<1x32xf32>
    %3 = arith.divf %1, %2 : vector<1x32xf32>
    %cst_3 = arith.constant dense<0xFF800000> : vector<1x32xf32>
    %4 = vector.multi_reduction <maximumf>, %0, %cst_3 [2] : vector<1x32x256xf32> to vector<1x32xf32>
    %c0_4 = arith.constant 0 : index
    %c0_5 = arith.constant 0 : index
    %5 = vector.load %arg2[%c0_4, %c0_5] : memref<32x2xf32, #tpu.memory_space<vmem>>, vector<32x2xf32>
    %c0_6 = arith.constant 0 : index
    %c0_7 = arith.constant 0 : index
    %6 = vector.load %arg3[%c0_6, %c0_7] : memref<1x2xf32, #tpu.memory_space<vmem>>, vector<1x2xf32>
    %c0_8 = arith.constant 0 : index
    %c0_9 = arith.constant 0 : index
    %7 = vector.load %arg4[%c0_8, %c0_9] : memref<2x32xf32, #tpu.memory_space<vmem>>, vector<2x32xf32>
    %c0_10 = arith.constant 0 : index
    %c0_11 = arith.constant 0 : index
    %8 = vector.load %arg5[%c0_10, %c0_11] : memref<1x32xf32, #tpu.memory_space<vmem>>, vector<1x32xf32>
    %cst_12 = arith.constant dense<0.000000e+00> : vector<1x2xf32>
    %9 = tpu.matmul %3, %5, %cst_12 {dimension_numbers = #tpu.dot_dimension_numbers<[1], [0], [0], [1], [0, 0, 1, 1], [], []>, precision = #tpu.contract_precision<fp32>} : vector<1x32xf32>, vector<32x2xf32>, vector<1x2xf32> -> vector<1x2xf32>
    %10 = arith.addf %9, %6 : vector<1x2xf32>
    %cst_13 = arith.constant 0.000000e+00 : f32
    %11 = vector.broadcast %cst_13 : f32 to vector<1x2xf32>
    %12 = arith.maximumf %10, %11 : vector<1x2xf32>
    %cst_14 = arith.constant dense<0.000000e+00> : vector<1x2xf32>
    %13 = tpu.matmul %4, %5, %cst_14 {dimension_numbers = #tpu.dot_dimension_numbers<[1], [0], [0], [1], [0, 0, 1, 1], [], []>, precision = #tpu.contract_precision<fp32>} : vector<1x32xf32>, vector<32x2xf32>, vector<1x2xf32> -> vector<1x2xf32>
    %14 = arith.addf %13, %6 : vector<1x2xf32>
    %cst_15 = arith.constant 0.000000e+00 : f32
    %15 = vector.broadcast %cst_15 : f32 to vector<1x2xf32>
    %16 = arith.maximumf %14, %15 : vector<1x2xf32>
    %17 = arith.addf %12, %16 : vector<1x2xf32>
    %cst_16 = arith.constant dense<0.000000e+00> : vector<1x32xf32>
    %18 = tpu.matmul %17, %7, %cst_16 {dimension_numbers = #tpu.dot_dimension_numbers<[1], [0], [0], [1], [0, 0, 1, 1], [], []>, precision = #tpu.contract_precision<fp32>} : vector<1x2xf32>, vector<2x32xf32>, vector<1x32xf32> -> vector<1x32xf32>
    %cst_17 = arith.constant 2.000000e+00 : f32
    %19 = vector.broadcast %cst_17 : f32 to vector<1x32xf32>
    %20 = arith.mulf %19, %8 : vector<1x32xf32>
    %21 = arith.addf %18, %20 : vector<1x32xf32>
    %22 = arith.negf %21 : vector<1x32xf32>
    %23 = math.exp %22 : vector<1x32xf32>
    %cst_18 = arith.constant 1.000000e+00 : f32
    %24 = vector.broadcast %cst_18 : f32 to vector<1x32xf32>
    %25 = arith.addf %24, %23 : vector<1x32xf32>
    %26 = arith.divf %24, %25 : vector<1x32xf32>
    %27 = vector.shape_cast %26 : vector<1x32xf32> to vector<1x32x1xf32>
    %28 = vector.broadcast %27 : vector<1x32x1xf32> to vector<1x32x256xf32>
    %29 = arith.mulf %0, %28 : vector<1x32x256xf32>
    %cst_19 = arith.constant dense<0.000000e+00> : vector<1x256xf32>
    %30 = vector.multi_reduction <add>, %29, %cst_19 [1] : vector<1x32x256xf32> to vector<1x256xf32>
    %cst_20 = arith.constant 3.200000e+01 : f32
    %31 = vector.broadcast %cst_20 : f32 to vector<1x256xf32>
    %32 = arith.divf %30, %31 : vector<1x256xf32>
    %cst_21 = arith.constant dense<0xFF800000> : vector<1x256xf32>
    %33 = vector.multi_reduction <maximumf>, %29, %cst_21 [1] : vector<1x32x256xf32> to vector<1x256xf32>
    %34 = tpu.concatenate %32, %33 in 1 : vector<1x256xf32>, vector<1x256xf32> -> vector<1x512xf32>
    %c0_22 = arith.constant 0 : index
    %c0_23 = arith.constant 0 : index
    %35 = vector.load %arg6[%c0_22, %c0_23] : memref<512x256xf32, #tpu.memory_space<vmem>>, vector<512x256xf32>
    %cst_24 = arith.constant dense<0.000000e+00> : vector<1x256xf32>
    %36 = tpu.matmul %34, %35, %cst_24 {dimension_numbers = #tpu.dot_dimension_numbers<[1], [0], [0], [1], [0, 0, 1, 1], [], []>, precision = #tpu.contract_precision<fp32>} : vector<1x512xf32>, vector<512x256xf32>, vector<1x256xf32> -> vector<1x256xf32>
    %37 = arith.negf %36 : vector<1x256xf32>
    %38 = math.exp %37 : vector<1x256xf32>
    %cst_25 = arith.constant 1.000000e+00 : f32
    %39 = vector.broadcast %cst_25 : f32 to vector<1x256xf32>
    %40 = arith.addf %39, %38 : vector<1x256xf32>
    %41 = arith.divf %39, %40 : vector<1x256xf32>
    %42 = vector.shape_cast %41 : vector<1x256xf32> to vector<1x1x256xf32>
    %43 = vector.broadcast %42 : vector<1x1x256xf32> to vector<1x32x256xf32>
    %44 = arith.mulf %29, %43 : vector<1x32x256xf32>
    %c0_26 = arith.constant 0 : index
    %c0_27 = arith.constant 0 : index
    %c0_28 = arith.constant 0 : index
    %45 = vector.load %arg7[%c0_26, %c0_27, %c0_28] : memref<1x32x256xf32, #tpu.memory_space<vmem>>, vector<1x32x256xf32>
    tpu.vector_store %arg7[%c0_26, %c0_27, %c0_28], %44 {strides = array<i32>} : memref<1x32x256xf32, #tpu.memory_space<vmem>>, vector<1x32x256xf32>,
    return
  }
  func.func @transform_0(%arg0: i32) -> (i32, i32, i32) {
    %c0_i32 = arith.constant 0 : i32
    %c0_i32_0 = arith.constant 0 : i32
    %c0_i32_1 = arith.constant 0 : i32
    return %arg0, %c0_i32, %c0_i32_0 : i32, i32, i32
  }
  func.func @transform_1(%arg0: i32) -> (i32, i32) {
    %c0_i32 = arith.constant 0 : i32
    %c0_i32_0 = arith.constant 0 : i32
    %c0_i32_1 = arith.constant 0 : i32
    return %c0_i32, %c0_i32_0 : i32, i32
  }
  func.func @transform_2(%arg0: i32) -> (i32, i32) {
    %c0_i32 = arith.constant 0 : i32
    %c0_i32_0 = arith.constant 0 : i32
    %c0_i32_1 = arith.constant 0 : i32
    return %c0_i32, %c0_i32_0 : i32, i32
  }
  func.func @transform_3(%arg0: i32) -> (i32, i32) {
    %c0_i32 = arith.constant 0 : i32
    %c0_i32_0 = arith.constant 0 : i32
    %c0_i32_1 = arith.constant 0 : i32
    return %c0_i32, %c0_i32_0 : i32, i32
  }
  func.func @transform_4(%arg0: i32) -> (i32, i32) {
    %c0_i32 = arith.constant 0 : i32
    %c0_i32_0 = arith.constant 0 : i32
    %c0_i32_1 = arith.constant 0 : i32
    return %c0_i32, %c0_i32_0 : i32, i32
  }
  func.func @transform_5(%arg0: i32) -> (i32, i32) {
    %c0_i32 = arith.constant 0 : i32
    %c0_i32_0 = arith.constant 0 : i32
    %c0_i32_1 = arith.constant 0 : i32
    return %c0_i32, %c0_i32_0 : i32, i32
  }
  func.func @transform_6(%arg0: i32) -> (i32, i32, i32) {
    %c0_i32 = arith.constant 0 : i32
    %c0_i32_0 = arith.constant 0 : i32
    %c0_i32_1 = arith.constant 0 : i32
    return %arg0, %c0_i32, %c0_i32_0 : i32, i32, i32
  }
}

module attributes {stable_mosaic.version = 11 : i64} {
  func.func @_cbam_kernel(%arg0: i32, %arg1: memref<1x32x256xf32, #tpu.memory_space<vmem>>, %arg2: memref<32x2xf32, #tpu.memory_space<vmem>>, %arg3: memref<1x2xf32, #tpu.memory_space<vmem>>, %arg4: memref<2x32xf32, #tpu.memory_space<vmem>>, %arg5: memref<1x32xf32, #tpu.memory_space<vmem>>, %arg6: memref<512x256xf32, #tpu.memory_space<vmem>>, %arg7: memref<1x32x256xf32, #tpu.memory_space<vmem>>) attributes {dimension_semantics = [#tpu.dimension_semantics<parallel>], iteration_bounds = array<i64: 2>, scalar_prefetch = 0 : i64, scratch_operands = 0 : i64, tpu.core_type = #tpu.core_type<tc>, window_params = [{transform_indices = @transform_0, window_bounds = array<i64: 1, 32, 256>}, {pipeline_mode = #tpu.pipeline_mode<synchronous>, transform_indices = @transform_1, window_bounds = array<i64: 32, 2>}, {pipeline_mode = #tpu.pipeline_mode<synchronous>, transform_indices = @transform_2, window_bounds = array<i64: 1, 2>}, {pipeline_mode = #tpu.pipeline_mode<synchronous>, transform_indices = @transform_3, window_bounds = array<i64: 2, 32>}, {pipeline_mode = #tpu.pipeline_mode<synchronous>, transform_indices = @transform_4, window_bounds = array<i64: 1, 32>}, {pipeline_mode = #tpu.pipeline_mode<synchronous>, transform_indices = @transform_5, window_bounds = array<i64: 512, 256>}, {transform_indices = @transform_6, window_bounds = array<i64: 1, 32, 256>}]} {
    %c0 = arith.constant 0 : index
    %c0_0 = arith.constant 0 : index
    %c0_1 = arith.constant 0 : index
    %0 = vector.load %arg1[%c0, %c0_0, %c0_1] : memref<1x32x256xf32, #tpu.memory_space<vmem>>, vector<1x32x256xf32>
    %cst = arith.constant dense<0.000000e+00> : vector<1x32xf32>
    %1 = vector.multi_reduction <add>, %0, %cst [2] : vector<1x32x256xf32> to vector<1x32xf32>
    %cst_2 = arith.constant 2.560000e+02 : f32
    %2 = vector.broadcast %cst_2 : f32 to vector<1x32xf32>
    %3 = arith.divf %1, %2 : vector<1x32xf32>
    %cst_3 = arith.constant dense<0xFF800000> : vector<1x32xf32>
    %4 = vector.multi_reduction <maximumf>, %0, %cst_3 [2] : vector<1x32x256xf32> to vector<1x32xf32>
    %c0_4 = arith.constant 0 : index
    %c0_5 = arith.constant 0 : index
    %5 = vector.load %arg2[%c0_4, %c0_5] : memref<32x2xf32, #tpu.memory_space<vmem>>, vector<32x2xf32>
    %c0_6 = arith.constant 0 : index
    %c0_7 = arith.constant 0 : index
    %6 = vector.load %arg3[%c0_6, %c0_7] : memref<1x2xf32, #tpu.memory_space<vmem>>, vector<1x2xf32>
    %c0_8 = arith.constant 0 : index
    %c0_9 = arith.constant 0 : index
    %7 = vector.load %arg4[%c0_8, %c0_9] : memref<2x32xf32, #tpu.memory_space<vmem>>, vector<2x32xf32>
    %c0_10 = arith.constant 0 : index
    %c0_11 = arith.constant 0 : index
    %8 = vector.load %arg5[%c0_10, %c0_11] : memref<1x32xf32, #tpu.memory_space<vmem>>, vector<1x32xf32>
    %cst_12 = arith.constant dense<0.000000e+00> : vector<1x2xf32>
    %9 = tpu.matmul %3, %5, %cst_12 {dimension_numbers = #tpu.dot_dimension_numbers<[1], [0], [0], [1], [0, 0, 1, 1], [], []>, precision = #tpu.contract_precision<fp32>} : vector<1x32xf32>, vector<32x2xf32>, vector<1x2xf32> -> vector<1x2xf32>
    %10 = arith.addf %9, %6 : vector<1x2xf32>
    %cst_13 = arith.constant 0.000000e+00 : f32
    %11 = vector.broadcast %cst_13 : f32 to vector<1x2xf32>
    %12 = arith.maximumf %10, %11 : vector<1x2xf32>
    %cst_14 = arith.constant dense<0.000000e+00> : vector<1x2xf32>
    %13 = tpu.matmul %4, %5, %cst_14 {dimension_numbers = #tpu.dot_dimension_numbers<[1], [0], [0], [1], [0, 0, 1, 1], [], []>, precision = #tpu.contract_precision<fp32>} : vector<1x32xf32>, vector<32x2xf32>, vector<1x2xf32> -> vector<1x2xf32>
    %14 = arith.addf %13, %6 : vector<1x2xf32>
    %cst_15 = arith.constant 0.000000e+00 : f32
    %15 = vector.broadcast %cst_15 : f32 to vector<1x2xf32>
    %16 = arith.maximumf %14, %15 : vector<1x2xf32>
    %17 = arith.addf %12, %16 : vector<1x2xf32>
    %cst_16 = arith.constant dense<0.000000e+00> : vector<1x32xf32>
    %18 = tpu.matmul %17, %7, %cst_16 {dimension_numbers = #tpu.dot_dimension_numbers<[1], [0], [0], [1], [0, 0, 1, 1], [], []>, precision = #tpu.contract_precision<fp32>} : vector<1x2xf32>, vector<2x32xf32>, vector<1x32xf32> -> vector<1x32xf32>
    %cst_17 = arith.constant 2.000000e+00 : f32
    %19 = vector.broadcast %cst_17 : f32 to vector<1x32xf32>
    %20 = arith.mulf %19, %8 : vector<1x32xf32>
    %21 = arith.addf %18, %20 : vector<1x32xf32>
    %22 = arith.negf %21 : vector<1x32xf32>
    %23 = math.exp %22 : vector<1x32xf32>
    %cst_18 = arith.constant 1.000000e+00 : f32
    %24 = vector.broadcast %cst_18 : f32 to vector<1x32xf32>
    %25 = arith.addf %24, %23 : vector<1x32xf32>
    %26 = arith.divf %24, %25 : vector<1x32xf32>
    %27 = vector.shape_cast %26 : vector<1x32xf32> to vector<1x32x1xf32>
    %28 = vector.broadcast %27 : vector<1x32x1xf32> to vector<1x32x256xf32>
    %29 = arith.mulf %0, %28 : vector<1x32x256xf32>
    %cst_19 = arith.constant dense<0.000000e+00> : vector<1x256xf32>
    %30 = vector.multi_reduction <add>, %29, %cst_19 [1] : vector<1x32x256xf32> to vector<1x256xf32>
    %cst_20 = arith.constant 3.200000e+01 : f32
    %31 = vector.broadcast %cst_20 : f32 to vector<1x256xf32>
    %32 = arith.divf %30, %31 : vector<1x256xf32>
    %cst_21 = arith.constant dense<0xFF800000> : vector<1x256xf32>
    %33 = vector.multi_reduction <maximumf>, %29, %cst_21 [1] : vector<1x32x256xf32> to vector<1x256xf32>
    %34 = tpu.concatenate %32, %33 in 1 : vector<1x256xf32>, vector<1x256xf32> -> vector<1x512xf32>
    %c0_22 = arith.constant 0 : index
    %c0_23 = arith.constant 0 : index
    %35 = vector.load %arg6[%c0_22, %c0_23] : memref<512x256xf32, #tpu.memory_space<vmem>>, vector<512x256xf32>
    %cst_24 = arith.constant dense<0.000000e+00> : vector<1x256xf32>
    %36 = tpu.matmul %34, %35, %cst_24 {dimension_numbers = #tpu.dot_dimension_numbers<[1], [0], [0], [1], [0, 0, 1, 1], [], []>, precision = #tpu.contract_precision<fp32>} : vector<1x512xf32>, vector<512x256xf32>, vector<1x256xf32> -> vector<1x256xf32>
    %37 = arith.negf %36 : vector<1x256xf32>
    %38 = math.exp %37 : vector<1x256xf32>
    %cst_25 = arith.constant 1.000000e+00 : f32
    %39 = vector.broadcast %cst_25 : f32 to vector<1x256xf32>
    %40 = arith.addf %39, %38 : vector<1x256xf32>
    %41 = arith.divf %39, %40 : vector<1x256xf32>
    %42 = vector.shape_cast %41 : vector<1x256xf32> to vector<1x1x256xf32>
    %43 = vector.broadcast %42 : vector<1x1x256xf32> to vector<1x32x256xf32>
    %44 = arith.mulf %29, %43 : vector<1x32x256xf32>
    %c0_26 = arith.constant 0 : index
    %c0_27 = arith.constant 0 : index
    %c0_28 = arith.constant 0 : index
    %45 = vector.load %arg7[%c0_26, %c0_27, %c0_28] : memref<1x32x256xf32, #tpu.memory_space<vmem>>, vector<1x32x256xf32>
    tpu.vector_store %arg7[%c0_26, %c0_27, %c0_28], %44 {strides = array<i32>} : memref<1x32x256xf32, #tpu.memory_space<vmem>>, vector<1x32x256xf32>,
    return
  }
  func.func @transform_0(%arg0: i32) -> (i32, i32, i32) {
    %c0_i32 = arith.constant 0 : i32
    %c0_i32_0 = arith.constant 0 : i32
    %c0_i32_1 = arith.constant 0 : i32
    return %arg0, %c0_i32, %c0_i32_0 : i32, i32, i32
  }
  func.func @transform_1(%arg0: i32) -> (i32, i32) {
    %c0_i32 = arith.constant 0 : i32
    %c0_i32_0 = arith.constant 0 : i32
    %c0_i32_1 = arith.constant 0 : i32
    return %c0_i32, %c0_i32_0 : i32, i32
  }
  func.func @transform_2(%arg0: i32) -> (i32, i32) {
    %c0_i32 = arith.constant 0 : i32
    %c0_i32_0 = arith.constant 0 : i32
    %c0_i32_1 = arith.constant 0 : i32
    return %c0_i32, %c0_i32_0 : i32, i32
  }
  func.func @transform_3(%arg0: i32) -> (i32, i32) {
    %c0_i32 = arith.constant 0 : i32
    %c0_i32_0 = arith.constant 0 : i32
    %c0_i32_1 = arith.constant 0 : i32
    return %c0_i32, %c0_i32_0 : i32, i32
  }
  func.func @transform_4(%arg0: i32) -> (i32, i32) {
    %c0_i32 = arith.constant 0 : i32
    %c0_i32_0 = arith.constant 0 : i32
    %c0_i32_1 = arith.constant 0 : i32
    return %c0_i32, %c0_i32_0 : i32, i32
  }
  func.func @transform_5(%arg0: i32) -> (i32, i32) {
    %c0_i32 = arith.constant 0 : i32
    %c0_i32_0 = arith.constant 0 : i32
    %c0_i32_1 = arith.constant 0 : i32
    return %c0_i32, %c0_i32_0 : i32, i32
  }
  func.func @transform_6(%arg0: i32) -> (i32, i32, i32) {
    %c0_i32 = arith.constant 0 : i32
    %c0_i32_0 = arith.constant 0 : i32
    %c0_i32_1 = arith.constant 0 : i32
    return %arg0, %c0_i32, %c0_i32_0 : i32, i32, i32
  }
}

</mosaic_0001>

<llo_original>
// kernel: tpu_custom_call.1
$region0: #{tpu_custom_call.1}
  #allocation0 [shape = 'u32[]', space=smem, size = 0x4, offset = 0x4, fixed_abs, tag = 'smem constant byte address 0x4 - core index']
  #allocation1 [shape = 'u32[144,128]{1,0:T(1,128)}', space=vmem, size = 0x12000, scoped, tag = 'internal scratch']
  %s0 = inlined_call_operand.hbm [shape: f32[2,32,256], index: 0, kind: input, shape index: {}]
  %s1 = inlined_call_operand.vmem [shape: f32[32,2], index: 1, kind: input, shape index: {}]
  %s2 = inlined_call_operand.vmem [shape: f32[1,2], index: 2, kind: input, shape index: {}]
  %s3 = inlined_call_operand.vmem [shape: f32[2,32], index: 3, kind: input, shape index: {}]
  %s4 = inlined_call_operand.vmem [shape: f32[1,32], index: 4, kind: input, shape index: {}]
  %s5 = inlined_call_operand.hbm [shape: f32[512,256], index: 5, kind: input, shape index: {}]
  %s6 = inlined_call_operand.hbm [shape: f32[2,32,256], index: 6, kind: output, shape index: {}]
  %s7 = sld [smem:[#allocation0]]
  $region65: #{tpu_custom_call.1} parent=0
    _
  %s9 = ssub.s32 1, %s7
  %s10 = scalar_select 0, %s9, %s7
  $region1: #{tpu_custom_call.1} parent=0
    #allocation2 [shape = 'u8[65536]{0}', space=vmem, size = 0x10000, scoped, tag = 'input window, operand 0']
    #allocation3 [shape = 's32[2]{0}', space=sflag, size = 0x8, scoped, tag = 'scoped memory for tpu_custom_call.1']
    #allocation4 [shape = 's32[2]{0}', space=sflag, size = 0x8, scoped, tag = 'scoped memory for tpu_custom_call.1']
    #allocation5 [shape = 'u8[524288]{0}', space=vmem, size = 0x80000, scoped, tag = 'input window, operand 5, single buffered']
    #allocation6 [shape = 's32[1]{0}', space=sflag, size = 0x4, scoped, tag = 'scoped memory for tpu_custom_call.1']
    #allocation7 [shape = 'u8[65536]{0}', space=vmem, size = 0x10000, scoped, tag = 'output window, operand 0']
    %11 = vsyncpa [#allocation3], 0
    %s12 = scalar_lea.sflag [#allocation3], 1
    %13 = vsyncpa %s12, 0
    %14 = vsyncpa [#allocation6], 0
    %15 = vsyncpa [#allocation4], 0
    %s16 = scalar_lea.sflag [#allocation4], 1
    %17 = vsyncpa %s16, 0
    loop: start=0, step=1, limit=4
    $region2: #{tpu_custom_call.1} parent=1 // loop_pre_header
      _
    $region3: #{tpu_custom_call.1} parent=1 // loop_header
      %s19 = sphi 0, %s23
      %p20 = scmp.ge.s32.totalorder %s19, 4
      %s29 = sphi 0, %s31
      %s32 = sphi 0, %s29
      %s33 = sphi 0, %s32
      %s49 = sphi 0, %s33
      %s53 = sphi 0, %s53
      %s55 = sphi 0, %s53
      %s56 = sphi 0, %s55
      %s70 = sphi 0, %s56
      %s74 = sphi 0, %s74
      %s76 = sphi 0, %s74
      %s77 = sphi 0, %s76
      %s91 = sphi 0, %s77
      %s95 = sphi 0, %s95
      %s97 = sphi 0, %s95
      %s98 = sphi 0, %s97
      %s112 = sphi 0, %s98
      %s116 = sphi 0, %s116
      %s118 = sphi 0, %s116
      %s119 = sphi 0, %s118
      %s133 = sphi 0, %s119
      %s137 = sphi 0, %s137
      %s139 = sphi 0, %s137
      %s140 = sphi 0, %s139
      %s154 = sphi 0, %s140
      %s160 = sphi 0, %s162
      %s163 = sphi 0, %s160
      %s164 = sphi 0, %s163
      %s180 = sphi 0, %s164
    $region4: #{tpu_custom_call.1} parent=1 // loop_header_branch
      %22 = sbr.rel (%p20) target = $region8
    $region5: #{tpu_custom_call.1} parent=1 // loop_body
      %s24 = ssub.s32 %s19, 1
      %s25 = ssub.s32 %s19, 2
      %s26 = sadd.s32 %s19, 1
      %s27 = ssub.s32 %s19, %s26
      %p28 = scmp.eq.s32.totalorder %s27, 0
      %s30 = sadd.s32 %s29, 1
      %s31 = scalar_select %p28, %s29, %s30
      %p34 = pneg %p28
      %p35 = scmp.eq.s32.totalorder %s19, 1
      %p36 = por %p34, %p35
      %p37 = scmp.ne.s32.totalorder %s29, %s32
      %p38 = scmp.eq.s32.totalorder %s19, 0
      %p39 = por %p37, %p38
      %p40 = scmp.ne.s32.totalorder %s29, %s32
      %p41 = scmp.eq.s32.totalorder %s24, 1
      %p42 = por %p40, %p41
      %p43 = scmp.ne.s32.totalorder %s32, %s33
      %p44 = scmp.eq.s32.totalorder %s24, 0
      %p45 = por %p43, %p44
      %p46 = scmp.ne.s32.totalorder %s32, %s33
      %p47 = scmp.eq.s32.totalorder %s25, 1
      %p48 = por %p46, %p47
      %p50 = scmp.ne.s32.totalorder %s33, %s49
      %p51 = scmp.eq.s32.totalorder %s25, 0
      %p52 = por %p50, %p51
      %s54 = sadd.s32 %s53, 1
      %p57 = scmp.eq.s32.totalorder %s19, 1
      %p58 = scmp.ne.s32.totalorder %s53, %s55
      %p59 = scmp.eq.s32.totalorder %s19, 0
      %p60 = por %p58, %p59
      %p61 = scmp.ne.s32.totalorder %s53, %s55
      %p62 = scmp.eq.s32.totalorder %s24, 1
      %p63 = por %p61, %p62
      %p64 = scmp.ne.s32.totalorder %s55, %s56
      %p65 = scmp.eq.s32.totalorder %s24, 0
      %p66 = por %p64, %p65
      %p67 = scmp.ne.s32.totalorder %s55, %s56
      %p68 = scmp.eq.s32.totalorder %s25, 1
      %p69 = por %p67, %p68
      %p71 = scmp.ne.s32.totalorder %s56, %s70
      %p72 = scmp.eq.s32.totalorder %s25, 0
      %p73 = por %p71, %p72
      %s75 = sadd.s32 %s74, 1
      %p78 = scmp.eq.s32.totalorder %s19, 1
      %p79 = scmp.ne.s32.totalorder %s74, %s76
      %p80 = scmp.eq.s32.totalorder %s19, 0
      %p81 = por %p79, %p80
      %p82 = scmp.ne.s32.totalorder %s74, %s76
      %p83 = scmp.eq.s32.totalorder %s24, 1
      %p84 = por %p82, %p83
      %p85 = scmp.ne.s32.totalorder %s76, %s77
      %p86 = scmp.eq.s32.totalorder %s24, 0
      %p87 = por %p85, %p86
      %p88 = scmp.ne.s32.totalorder %s76, %s77
      %p89 = scmp.eq.s32.totalorder %s25, 1
      %p90 = por %p88, %p89
      %p92 = scmp.ne.s32.totalorder %s77, %s91
      %p93 = scmp.eq.s32.totalorder %s25, 0
      %p94 = por %p92, %p93
      %s96 = sadd.s32 %s95, 1
      %p99 = scmp.eq.s32.totalorder %s19, 1
      %p100 = scmp.ne.s32.totalorder %s95, %s97
      %p101 = scmp.eq.s32.totalorder %s19, 0
      %p102 = por %p100, %p101
      %p103 = scmp.ne.s32.totalorder %s95, %s97
      %p104 = scmp.eq.s32.totalorder %s24, 1
      %p105 = por %p103, %p104
      %p106 = scmp.ne.s32.totalorder %s97, %s98
      %p107 = scmp.eq.s32.totalorder %s24, 0
      %p108 = por %p106, %p107
      %p109 = scmp.ne.s32.totalorder %s97, %s98
      %p110 = scmp.eq.s32.totalorder %s25, 1
      %p111 = por %p109, %p110
      %p113 = scmp.ne.s32.totalorder %s98, %s112
      %p114 = scmp.eq.s32.totalorder %s25, 0
      %p115 = por %p113, %p114
      %s117 = sadd.s32 %s116, 1
      %p120 = scmp.eq.s32.totalorder %s19, 1
      %p121 = scmp.ne.s32.totalorder %s116, %s118
      %p122 = scmp.eq.s32.totalorder %s19, 0
      %p123 = por %p121, %p122
      %p124 = scmp.ne.s32.totalorder %s116, %s118
      %p125 = scmp.eq.s32.totalorder %s24, 1
      %p126 = por %p124, %p125
      %p127 = scmp.ne.s32.totalorder %s118, %s119
      %p128 = scmp.eq.s32.totalorder %s24, 0
      %p129 = por %p127, %p128
      %p130 = scmp.ne.s32.totalorder %s118, %s119
      %p131 = scmp.eq.s32.totalorder %s25, 1
      %p132 = por %p130, %p131
      %p134 = scmp.ne.s32.totalorder %s119, %s133
      %p135 = scmp.eq.s32.totalorder %s25, 0
      %p136 = por %p134, %p135
      %s138 = sadd.s32 %s137, 1
      %p141 = scmp.eq.s32.totalorder %s19, 1
      %p142 = scmp.ne.s32.totalorder %s137, %s139
      %p143 = scmp.eq.s32.totalorder %s19, 0
      %p144 = por %p142, %p143
      %p145 = scmp.ne.s32.totalorder %s137, %s139
      %p146 = scmp.eq.s32.totalorder %s24, 1
      %p147 = por %p145, %p146
      %p148 = scmp.ne.s32.totalorder %s139, %s140
      %p149 = scmp.eq.s32.totalorder %s24, 0
      %p150 = por %p148, %p149
      %p151 = scmp.ne.s32.totalorder %s139, %s140
      %p152 = scmp.eq.s32.totalorder %s25, 1
      %p153 = por %p151, %p152
      %p155 = scmp.ne.s32.totalorder %s140, %s154
      %p156 = scmp.eq.s32.totalorder %s25, 0
      %p157 = por %p155, %p156
      %s158 = ssub.s32 %s19, %s26
      %p159 = scmp.eq.s32.totalorder %s158, 0
      %s161 = sadd.s32 %s160, 1
      %s162 = scalar_select %p159, %s160, %s161
      %p165 = pneg %p159
      %p166 = scmp.eq.s32.totalorder %s19, 1
      %p167 = por %p165, %p166
      %p168 = scmp.ne.s32.totalorder %s160, %s163
      %p169 = scmp.eq.s32.totalorder %s19, 0
      %p170 = por %p168, %p169
      %p171 = scmp.ne.s32.totalorder %s160, %s163
      %p172 = scmp.eq.s32.totalorder %s24, 1
      %p173 = por %p171, %p172
      %p174 = scmp.ne.s32.totalorder %s163, %s164
      %p175 = scmp.eq.s32.totalorder %s24, 0
      %p176 = por %p174, %p175
      %p177 = scmp.ne.s32.totalorder %s163, %s164
      %p178 = scmp.eq.s32.totalorder %s25, 1
      %p179 = por %p177, %p178
      %p181 = scmp.ne.s32.totalorder %s164, %s180
      %p182 = scmp.eq.s32.totalorder %s25, 0
      %p183 = por %p181, %p182
      %p184 = scmp.le.s32.totalorder 1, %s19
      %p185 = scmp.lt.s32.totalorder %s19, 3
      %p186 = pnand %p184, %p185
      %p187 = pneg %p186
      // Predicated region
      $region9: #{tpu_custom_call.1} parent=5 // pred_check
        _
      $region10: #{tpu_custom_call.1} parent=5 // pred_check_branch
        %189 = sbr.rel (%p186) target = $region12
      $region11: #{tpu_custom_call.1} parent=5 // pred_region
        %s190 = ssub.s32 %s19, 1
        // Predicated region
        $region13: #{tpu_custom_call.1} parent=11 // pred_check
          %p191 = pneg %p66
        $region14: #{tpu_custom_call.1} parent=11 // pred_check_branch
          %193 = sbr.rel (%p191) target = $region16
        $region15: #{tpu_custom_call.1} parent=11 // pred_region
          _
        $region16: #{tpu_custom_call.1} parent=11 // pred_fallthru
          _
        // Predicated region
        $region17: #{tpu_custom_call.1} parent=11 // pred_check
          %p194 = pneg %p87
        $region18: #{tpu_custom_call.1} parent=11 // pred_check_branch
          %196 = sbr.rel (%p194) target = $region20
        $region19: #{tpu_custom_call.1} parent=11 // pred_region
          _
        $region20: #{tpu_custom_call.1} parent=11 // pred_fallthru
          _
        // Predicated region
        $region21: #{tpu_custom_call.1} parent=11 // pred_check
          %p197 = pneg %p108
        $region22: #{tpu_custom_call.1} parent=11 // pred_check_branch
          %199 = sbr.rel (%p197) target = $region24
        $region23: #{tpu_custom_call.1} parent=11 // pred_region
          _
        $region24: #{tpu_custom_call.1} parent=11 // pred_fallthru
          _
        // Predicated region
        $region25: #{tpu_custom_call.1} parent=11 // pred_check
          %p200 = pneg %p129
        $region26: #{tpu_custom_call.1} parent=11 // pred_check_branch
          %202 = sbr.rel (%p200) target = $region28
        $region27: #{tpu_custom_call.1} parent=11 // pred_region
          _
        $region28: #{tpu_custom_call.1} parent=11 // pred_fallthru
          _
        // Predicated region
        $region29: #{tpu_custom_call.1} parent=11 // pred_check
          %p203 = pneg %p150
        $region30: #{tpu_custom_call.1} parent=11 // pred_check_branch
          %205 = sbr.rel (%p203) target = $region32
        $region31: #{tpu_custom_call.1} parent=11 // pred_region
          %s207 = ssub.s32 16384, 16384
          %208 = vsyncadd [#allocation6], %s207
          %s209 = sshll.u32 [#allocation5], 4
          %s210 = int_to_ptr.vmem [resolvable:$true] %s209
          %215 = dma.hbm_to_vmem [thread:$0]  %s5, 16384, %s210, [#allocation6], 256, 256, 16
        $region32: #{tpu_custom_call.1} parent=11 // pred_fallthru
          _
      $region12: #{tpu_custom_call.1} parent=5 // pred_fallthru
        _
      %p216 = scmp.lt.s32.totalorder %s19, 2
      // Predicated region
      $region33: #{tpu_custom_call.1} parent=5 // pred_check
        %p217 = pneg %p216
      $region34: #{tpu_custom_call.1} parent=5 // pred_check_branch
        %219 = sbr.rel (%p217) target = $region36
      $region35: #{tpu_custom_call.1} parent=5 // pred_region
        // Predicated region
        $region37: #{tpu_custom_call.1} parent=35 // pred_check
          %p220 = pneg %p39
        $region38: #{tpu_custom_call.1} parent=35 // pred_check_branch
          %222 = sbr.rel (%p220) target = $region40
        $region39: #{tpu_custom_call.1} parent=35 // pred_region
          %s223 = sand.u32 %s29, 1
          %s224 = scalar_lea.sflag [#allocation3], %s223
          %s225 = sand.u32 %s29, 1
          %s226 = smul.addr %s225, 64
          %s227 = scalar_lea.vmem [#allocation2], %s226
          %s229 = ssub.s32 1024, 1024
          %230 = vsyncadd %s224, %s229
          %s231 = smul.addr %s19, 8
          %s232 = smul.addr %s231, 128
          %s233 = scalar_lea.hbm %s0, %s232
          %s234 = sshll.u32 %s227, 4
          %s235 = int_to_ptr.vmem [resolvable:$true] %s234
          %240 = dma.hbm_to_vmem [thread:$0]  %s233, 1024, %s235, %s224, 256, 256, 16
        $region40: #{tpu_custom_call.1} parent=35 // pred_fallthru
          _
      $region36: #{tpu_custom_call.1} parent=5 // pred_fallthru
        _
      %p241 = scmp.le.s32.totalorder 1, %s19
      %p242 = scmp.lt.s32.totalorder %s19, 3
      %p243 = pnand %p241, %p242
      %p244 = pneg %p243
      // Predicated region
      $region41: #{tpu_custom_call.1} parent=5 // pred_check
        _
      $region42: #{tpu_custom_call.1} parent=5 // pred_check_branch
        %246 = sbr.rel (%p243) target = $region44
      $region43: #{tpu_custom_call.1} parent=5 // pred_region
        %s247 = ssub.s32 %s19, 1
        %s248 = sand.u32 %s32, 1
        %s249 = scalar_lea.sflag [#allocation3], %s248
        %s250 = sand.u32 %s32, 1
        %s251 = smul.addr %s250, 64
        %s252 = scalar_lea.vmem [#allocation2], %s251
        // Predicated region
        $region45: #{tpu_custom_call.1} parent=43 // pred_check
          %p253 = pneg %p45
        $region46: #{tpu_custom_call.1} parent=43 // pred_check_branch
          %255 = sbr.rel (%p253) target = $region48
        $region47: #{tpu_custom_call.1} parent=43 // pred_region
          %256 = dma.done %s249, 1024
        $region48: #{tpu_custom_call.1} parent=43 // pred_fallthru
          _
        // Predicated region
        $region49: #{tpu_custom_call.1} parent=43 // pred_check
          %p257 = pneg %p150
        $region50: #{tpu_custom_call.1} parent=43 // pred_check_branch
          %259 = sbr.rel (%p257) target = $region52
        $region51: #{tpu_custom_call.1} parent=43 // pred_region
          %260 = dma.done [#allocation6], 16384
        $region52: #{tpu_custom_call.1} parent=43 // pred_fallthru
          _
        %s261 = sand.u32 %s32, 1
        %s262 = scalar_lea.sflag [#allocation3], %s261
        %s263 = sand.u32 %s32, 1
        %s264 = smul.addr %s263, 64
        %s265 = scalar_lea.vmem [#allocation2], %s264
        %p266 = pneg %p45
        %p267 = pneg %p42
        %p268 = pneg %p66
        %p269 = pneg %p63
        %p270 = pneg %p87
        %p271 = pneg %p84
        %p272 = pneg %p108
        %p273 = pneg %p105
        %p274 = pneg %p129
        %p275 = pneg %p126
        %p276 = pneg %p150
        %p277 = pneg %p147
        %p278 = pneg %p176
        %p279 = pneg %p173
        %s280 = sand.u32 %s163, 1
        %s281 = scalar_lea.sflag [#allocation4], %s280
        %s282 = sand.u32 %s163, 1
        %s283 = smul.addr %s282, 64
        %s284 = scalar_lea.vmem [#allocation7], %s283
        %v285 = vld [vmem:[%s252] sm:$0xff]
        %v286 = vld [vmem:[%s252 + $0x8] sm:$0xff]
        %v287 = vld [vmem:[%s252 + $0x10] sm:$0xff]
        %v288 = vld [vmem:[%s252 + $0x18] sm:$0xff]
        %v289 = vld [vmem:[%s252 + $0x20] sm:$0xff]
        %v290 = vld [vmem:[%s252 + $0x28] sm:$0xff]
        %v291 = vld [vmem:[%s252 + $0x30] sm:$0xff]
        %v292 = vld [vmem:[%s252 + $0x38] sm:$0xff]
        %v293 = vadd.f32 %v285, %v286
        %294 = vadd.xlane.f32.xlu0 %v293
        %v295 = vpop.xlane.xlu0 %294
        %v296 = vadd.f32 %v287, %v288
        %297 = vadd.xlane.f32.xlu0 %v296
        %v298 = vpop.xlane.xlu0 %297
        %v299 = vadd.f32 %v289, %v290
        %300 = vadd.xlane.f32.xlu0 %v299
        %v301 = vpop.xlane.xlu0 %300
        %v302 = vadd.f32 %v291, %v292
        %303 = vadd.xlane.f32.xlu0 %v302
        %v304 = vpop.xlane.xlu0 %303
        %v305 = vrcp.pop 256.0
        %v306 = vmul.f32 %v295, %v305
        %v307 = vmul.f32 %v298, %v305
        %v308 = vmul.f32 %v301, %v305
        %v309 = vmul.f32 %v304, %v305
        %v310 = vmax.f32 %v285, %v286
        %311 = vmax.xlane.f32.xlu0 %v310
        %v312 = vpop.xlane.xlu0 %311
        %v313 = vmax.f32 %v287, %v288
        %314 = vmax.xlane.f32.xlu0 %v313
        %v315 = vpop.xlane.xlu0 %314
        %v316 = vmax.f32 %v289, %v290
        %317 = vmax.xlane.f32.xlu0 %v316
        %v318 = vpop.xlane.xlu0 %317
        %v319 = vmax.f32 %v291, %v292
        %320 = vmax.xlane.f32.xlu0 %v319
        %v321 = vpop.xlane.xlu0 %320
        %v322 = vld [vmem:[%s1] sm:$0xff]
        %v323 = vld [vmem:[%s1 + $0x8] sm:$0xff]
        %v324 = vld [vmem:[%s1 + $0x10] sm:$0xff]
        %v325 = vld [vmem:[%s1 + $0x18] sm:$0xff]
        %v326 = vld [vmem:[%s2] sm:$0x1]
        %v327 = vld [vmem:[%s3] sm:$0x3]
        %v328 = vld [vmem:[%s4] sm:$0x1]
        %v333 = vlaneseq
        %v334 = vand.u32 %v333, 127
        %v335 = vlaneseq
        %v336 = vshrl.u32 %v335, 7
        %v337 = vsub.s32 %v334, %v336
        %v338 = vrot.slane %v306, %v337
        %v339 = vadd.s32 %v334, 4294967288
        %v340 = vlaneseq
        %v341 = vshrl.u32 %v340, 7
        %v342 = vsub.s32 %v339, %v341
        %v343 = vrot.slane %v307, %v342
        %vm344 = vcmask 130112
        %v345 = vsel %vm344, %v343, %v338
        %v346 = vadd.s32 %v334, 4294967280
        %v347 = vlaneseq
        %v348 = vshrl.u32 %v347, 7
        %v349 = vsub.s32 %v346, %v348
        %v350 = vrot.slane %v308, %v349
        %vm351 = vcmask 195712
        %v352 = vsel %vm351, %v350, %v345
        %v353 = vadd.s32 %v334, 4294967272
        %v354 = vlaneseq
        %v355 = vshrl.u32 %v354, 7
        %v356 = vsub.s32 %v353, %v355
        %v357 = vrot.slane %v309, %v356
        %vm358 = vcmask 261312
        %v359 = vsel %vm358, %v357, %v352
        %vm360 = vcmask 261120
        %v361 = vsel %vm360, %v359, 0
        %363 = vmatprep.subr.mxu0 0.0
        %v364 = vand.u32 %v322, 4294901760
        %365 = vmatpush1.msra.mxu0 %v364
        %366 = vmatprep.subr.mxu0 0.0
        %v367 = vand.u32 %v323, 4294901760
        %368 = vmatpush1.msra.mxu0 %v367
        %369 = vmatprep.subr.mxu0 0.0
        %v370 = vand.u32 %v324, 4294901760
        %371 = vmatpush1.msra.mxu0 %v370
        %372 = vmatprep.subr.mxu0 0.0
        %v373 = vand.u32 %v325, 4294901760
        %374 = vmatpush1.msra.mxu0 %v373
        %375 = vmatprep.subr.mxu0 0.0
        %376 = vmatpush1.msra.mxu0 0.0
        %377 = vmatprep.subr.mxu0 0.0
        %378 = vmatpush1.msra.mxu0 0.0
        %379 = vmatprep.subr.mxu0 0.0
        %380 = vmatpush1.msra.mxu0 0.0
        %381 = vmatprep.subr.mxu0 0.0
        %382 = vmatpush1.msra.mxu0 0.0
        %383 = vmatprep.subr.mxu0 0.0
        %384 = vmatpush1.msra.mxu0 0.0
        %385 = vmatprep.subr.mxu0 0.0
        %386 = vmatpush1.msra.mxu0 0.0
        %387 = vmatprep.subr.mxu0 0.0
        %388 = vmatpush1.msra.mxu0 0.0
        %389 = vmatprep.subr.mxu0 0.0
        %390 = vmatpush1.msra.mxu0 0.0
        %391 = vmatprep.subr.mxu0 0.0
        %392 = vmatpush1.msra.mxu0 0.0
        %393 = vmatprep.subr.mxu0 0.0
        %394 = vmatpush1.msra.mxu0 0.0
        %395 = vmatprep.subr.mxu0 0.0
        %396 = vmatpush1.msra.mxu0 0.0
        %397 = vmatprep.subr.mxu0 0.0
        %398 = vmatpush1.msra.mxu0 0.0
        %399 = vmatprep.subr.mxu0 0.0
        %400 = vmatpush1.msra.mxu0 0.0
        %401 = vmatprep.subr.mxu0 0.0
        %402 = vmatpush1.msra.mxu0 0.0
        %403 = vmatprep.subr.mxu0 0.0
        %404 = vmatpush1.msra.mxu0 0.0
        %405 = vmatprep.subr.mxu0 0.0
        %406 = vmatpush1.msra.mxu0 0.0
        %407 = vmatprep.subr.mxu0 0.0
        %408 = vmatpush1.msra.mxu0 0.0
        %409 = vmatprep.subr.mxu0 0.0
        %410 = vmatpush1.msra.mxu0 0.0
        %411 = vmatprep.subr.mxu0 0.0
        %412 = vmatpush1.msra.mxu0 0.0
        %413 = vmatprep.subr.mxu0 0.0
        %414 = vmatpush1.msra.mxu0 0.0
        %415 = vmatprep.subr.mxu0 0.0
        %416 = vmatpush1.msra.mxu0 0.0
        %417 = vmatprep.subr.mxu0 0.0
        %418 = vmatpush1.msra.mxu0 0.0
        %419 = vmatprep.subr.mxu0 0.0
        %420 = vmatpush1.msra.mxu0 0.0
        %421 = vmatprep.subr.mxu0 0.0
        %422 = vmatpush1.msra.mxu0 0.0
        %423 = vmatprep.subr.mxu0 0.0
        %424 = vmatpush1.msra.mxu0 0.0
        %425 = vmatprep.subr.mxu0 0.0
        %426 = vmatpush1.msra.mxu0 0.0
        %427 = vmatprep.subr.mxu0 0.0
        %428 = vmatpush1.msra.mxu0 0.0
        %429 = vmatprep.subr.mxu0 0.0
        %430 = vmatpush1.msra.mxu0 0.0
        %431 = vmatprep.mubr.f32.mxu0 0.0
        %v432 = vand.u32 %v361, 4294901760
        %v433 = vsub.f32 %v361, %v432
        %v434 = vand.u32 %v433, 4294901760
        %v435 = vsub.f32 %v433, %v434
        %v436 = vand.u32 %v435, 4294901760
        %437 = vmatmul.mubr.f32.gmra.mrb[0].mxu0 %v436
        %v438 = vpop.f32.mrb[0].mxu0
        %v439 = vadd.f32 %v326, %v438
        %v440 = vpop.f32.mrb[0].mxu0
        %441 = vdwg.mxu0
        %442 = vmatprep.subr.mxu0 0.0
        %v443 = vand.u32 %v322, 4294901760
        %v444 = vsub.f32 %v322, %v443
        %v445 = vand.u32 %v444, 4294901760
        %v446 = vsub.f32 %v444, %v445
        %v447 = vand.u32 %v446, 4294901760
        %448 = vmatpush1.msra.mxu0 %v447
        %449 = vmatprep.subr.mxu0 0.0
        %v450 = vand.u32 %v323, 4294901760
        %v451 = vsub.f32 %v323, %v450
        %v452 = vand.u32 %v451, 4294901760
        %v453 = vsub.f32 %v451, %v452
        %v454 = vand.u32 %v453, 4294901760
        %455 = vmatpush1.msra.mxu0 %v454
        %456 = vmatprep.subr.mxu0 0.0
        %v457 = vand.u32 %v324, 4294901760
        %v458 = vsub.f32 %v324, %v457
        %v459 = vand.u32 %v458, 4294901760
        %v460 = vsub.f32 %v458, %v459
        %v461 = vand.u32 %v460, 4294901760
        %462 = vmatpush1.msra.mxu0 %v461
        %463 = vmatprep.subr.mxu0 0.0
        %v464 = vand.u32 %v325, 4294901760
        %v465 = vsub.f32 %v325, %v464
        %v466 = vand.u32 %v465, 4294901760
        %v467 = vsub.f32 %v465, %v466
        %v468 = vand.u32 %v467, 4294901760
        %469 = vmatpush1.msra.mxu0 %v468
        %470 = vmatprep.subr.mxu0 0.0
        %471 = vmatpush1.msra.mxu0 0.0
        %472 = vmatprep.subr.mxu0 0.0
        %473 = vmatpush1.msra.mxu0 0.0
        %474 = vmatprep.subr.mxu0 0.0
        %475 = vmatpush1.msra.mxu0 0.0
        %476 = vmatprep.subr.mxu0 0.0
        %477 = vmatpush1.msra.mxu0 0.0
        %478 = vmatprep.subr.mxu0 0.0
        %479 = vmatpush1.msra.mxu0 0.0
        %480 = vmatprep.subr.mxu0 0.0
        %481 = vmatpush1.msra.mxu0 0.0
        %482 = vmatprep.subr.mxu0 0.0
        %483 = vmatpush1.msra.mxu0 0.0
        %484 = vmatprep.subr.mxu0 0.0
        %485 = vmatpush1.msra.mxu0 0.0
        %486 = vmatprep.subr.mxu0 0.0
        %487 = vmatpush1.msra.mxu0 0.0
        %488 = vmatprep.subr.mxu0 0.0
        %489 = vmatpush1.msra.mxu0 0.0
        %490 = vmatprep.subr.mxu0 0.0
        %491 = vmatpush1.msra.mxu0 0.0
        %492 = vmatprep.subr.mxu0 0.0
        %493 = vmatpush1.msra.mxu0 0.0
        %494 = vmatprep.subr.mxu0 0.0
        %495 = vmatpush1.msra.mxu0 0.0
        %496 = vmatprep.subr.mxu0 0.0
        %497 = vmatpush1.msra.mxu0 0.0
        %498 = vmatprep.subr.mxu0 0.0
        %499 = vmatpush1.msra.mxu0 0.0
        %500 = vmatprep.subr.mxu0 0.0
        %501 = vmatpush1.msra.mxu0 0.0
        %502 = vmatprep.subr.mxu0 0.0
        %503 = vmatpush1.msra.mxu0 0.0
        %504 = vmatprep.subr.mxu0 0.0
        %505 = vmatpush1.msra.mxu0 0.0
        %506 = vmatprep.subr.mxu0 0.0
        %507 = vmatpush1.msra.mxu0 0.0
        %508 = vmatprep.subr.mxu0 0.0
        %509 = vmatpush1.msra.mxu0 0.0
        %510 = vmatprep.subr.mxu0 0.0
        %511 = vmatpush1.msra.mxu0 0.0
        %512 = vmatprep.subr.mxu0 0.0
        %513 = vmatpush1.msra.mxu0 0.0
        %514 = vmatprep.subr.mxu0 0.0
        %515 = vmatpush1.msra.mxu0 0.0
        %516 = vmatprep.subr.mxu0 0.0
        %517 = vmatpush1.msra.mxu0 0.0
        %518 = vmatprep.subr.mxu0 0.0
        %519 = vmatpush1.msra.mxu0 0.0
        %520 = vmatprep.subr.mxu0 0.0
        %521 = vmatpush1.msra.mxu0 0.0
        %522 = vmatprep.subr.mxu0 0.0
        %523 = vmatpush1.msra.mxu0 0.0
        %524 = vmatprep.subr.mxu0 0.0
        %525 = vmatpush1.msra.mxu0 0.0
        %526 = vmatprep.mubr.f32.mxu0 0.0
        %v527 = vand.u32 %v361, 4294901760
        %528 = vmatmul.mubr.f32.gmra.mrb[0].mxu0 %v527
        %v529 = vpop.f32.mrb[0].mxu0
        %v530 = vadd.f32 %v439, %v529
        %v531 = vpop.f32.mrb[0].mxu0
        %532 = vdwg.mxu0
        %533 = vmatprep.subr.mxu0 0.0
        %v534 = vand.u32 %v322, 4294901760
        %v535 = vsub.f32 %v322, %v534
        %536 = vmatpush1.msra.mxu0 %v535
        %537 = vmatprep.subr.mxu0 0.0
        %v538 = vand.u32 %v323, 4294901760
        %v539 = vsub.f32 %v323, %v538
        %540 = vmatpush1.msra.mxu0 %v539
        %541 = vmatprep.subr.mxu0 0.0
        %v542 = vand.u32 %v324, 4294901760
        %v543 = vsub.f32 %v324, %v542
        %544 = vmatpush1.msra.mxu0 %v543
        %545 = vmatprep.subr.mxu0 0.0
        %v546 = vand.u32 %v325, 4294901760
        %v547 = vsub.f32 %v325, %v546
        %548 = vmatpush1.msra.mxu0 %v547
        %549 = vmatprep.subr.mxu0 0.0
        %550 = vmatpush1.msra.mxu0 0.0
        %551 = vmatprep.subr.mxu0 0.0
        %552 = vmatpush1.msra.mxu0 0.0
        %553 = vmatprep.subr.mxu0 0.0
        %554 = vmatpush1.msra.mxu0 0.0
        %555 = vmatprep.subr.mxu0 0.0
        %556 = vmatpush1.msra.mxu0 0.0
        %557 = vmatprep.subr.mxu0 0.0
        %558 = vmatpush1.msra.mxu0 0.0
        %559 = vmatprep.subr.mxu0 0.0
        %560 = vmatpush1.msra.mxu0 0.0
        %561 = vmatprep.subr.mxu0 0.0
        %562 = vmatpush1.msra.mxu0 0.0
        %563 = vmatprep.subr.mxu0 0.0
        %564 = vmatpush1.msra.mxu0 0.0
        %565 = vmatprep.subr.mxu0 0.0
        %566 = vmatpush1.msra.mxu0 0.0
        %567 = vmatprep.subr.mxu0 0.0
        %568 = vmatpush1.msra.mxu0 0.0
        %569 = vmatprep.subr.mxu0 0.0
        %570 = vmatpush1.msra.mxu0 0.0
        %571 = vmatprep.subr.mxu0 0.0
        %572 = vmatpush1.msra.mxu0 0.0
        %573 = vmatprep.subr.mxu0 0.0
        %574 = vmatpush1.msra.mxu0 0.0
        %575 = vmatprep.subr.mxu0 0.0
        %576 = vmatpush1.msra.mxu0 0.0
        %577 = vmatprep.subr.mxu0 0.0
        %578 = vmatpush1.msra.mxu0 0.0
        %579 = vmatprep.subr.mxu0 0.0
        %580 = vmatpush1.msra.mxu0 0.0
        %581 = vmatprep.subr.mxu0 0.0
        %582 = vmatpush1.msra.mxu0 0.0
        %583 = vmatprep.subr.mxu0 0.0
        %584 = vmatpush1.msra.mxu0 0.0
        %585 = vmatprep.subr.mxu0 0.0
        %586 = vmatpush1.msra.mxu0 0.0
        %587 = vmatprep.subr.mxu0 0.0
        %588 = vmatpush1.msra.mxu0 0.0
        %589 = vmatprep.subr.mxu0 0.0
        %590 = vmatpush1.msra.mxu0 0.0
        %591 = vmatprep.subr.mxu0 0.0
        %592 = vmatpush1.msra.mxu0 0.0
        %593 = vmatprep.subr.mxu0 0.0
        %594 = vmatpush1.msra.mxu0 0.0
        %595 = vmatprep.subr.mxu0 0.0
        %596 = vmatpush1.msra.mxu0 0.0
        %597 = vmatprep.subr.mxu0 0.0
        %598 = vmatpush1.msra.mxu0 0.0
        %599 = vmatprep.subr.mxu0 0.0
        %600 = vmatpush1.msra.mxu0 0.0
        %601 = vmatprep.subr.mxu0 0.0
        %602 = vmatpush1.msra.mxu0 0.0
        %603 = vmatprep.subr.mxu0 0.0
        %604 = vmatpush1.msra.mxu0 0.0
        %605 = vmatprep.mubr.f32.mxu0 0.0
        %v606 = vand.u32 %v361, 4294901760
        %v607 = vsub.f32 %v361, %v606
        %608 = vmatmul.mubr.f32.gmra.mrb[0].mxu0 %v607
        %v609 = vpop.f32.mrb[0].mxu0
        %v610 = vadd.f32 %v530, %v609
        %v611 = vpop.f32.mrb[0].mxu0
        %612 = vdwg.mxu0
        %613 = vmatprep.subr.mxu0 0.0
        %v614 = vand.u32 %v322, 4294901760
        %615 = vmatpush1.msra.mxu0 %v614
        %616 = vmatprep.subr.mxu0 0.0
        %v617 = vand.u32 %v323, 4294901760
        %618 = vmatpush1.msra.mxu0 %v617
        %619 = vmatprep.subr.mxu0 0.0
        %v620 = vand.u32 %v324, 4294901760
        %621 = vmatpush1.msra.mxu0 %v620
        %622 = vmatprep.subr.mxu0 0.0
        %v623 = vand.u32 %v325, 4294901760
        %624 = vmatpush1.msra.mxu0 %v623
        %625 = vmatprep.subr.mxu0 0.0
        %626 = vmatpush1.msra.mxu0 0.0
        %627 = vmatprep.subr.mxu0 0.0
        %628 = vmatpush1.msra.mxu0 0.0
        %629 = vmatprep.subr.mxu0 0.0
        %630 = vmatpush1.msra.mxu0 0.0
        %631 = vmatprep.subr.mxu0 0.0
        %632 = vmatpush1.msra.mxu0 0.0
        %633 = vmatprep.subr.mxu0 0.0
        %634 = vmatpush1.msra.mxu0 0.0
        %635 = vmatprep.subr.mxu0 0.0
        %636 = vmatpush1.msra.mxu0 0.0
        %637 = vmatprep.subr.mxu0 0.0
        %638 = vmatpush1.msra.mxu0 0.0
        %639 = vmatprep.subr.mxu0 0.0
        %640 = vmatpush1.msra.mxu0 0.0
        %641 = vmatprep.subr.mxu0 0.0
        %642 = vmatpush1.msra.mxu0 0.0
        %643 = vmatprep.subr.mxu0 0.0
        %644 = vmatpush1.msra.mxu0 0.0
        %645 = vmatprep.subr.mxu0 0.0
        %646 = vmatpush1.msra.mxu0 0.0
        %647 = vmatprep.subr.mxu0 0.0
        %648 = vmatpush1.msra.mxu0 0.0
        %649 = vmatprep.subr.mxu0 0.0
        %650 = vmatpush1.msra.mxu0 0.0
        %651 = vmatprep.subr.mxu0 0.0
        %652 = vmatpush1.msra.mxu0 0.0
        %653 = vmatprep.subr.mxu0 0.0
        %654 = vmatpush1.msra.mxu0 0.0
        %655 = vmatprep.subr.mxu0 0.0
        %656 = vmatpush1.msra.mxu0 0.0
        %657 = vmatprep.subr.mxu0 0.0
        %658 = vmatpush1.msra.mxu0 0.0
        %659 = vmatprep.subr.mxu0 0.0
        %660 = vmatpush1.msra.mxu0 0.0
        %661 = vmatprep.subr.mxu0 0.0
        %662 = vmatpush1.msra.mxu0 0.0
        %663 = vmatprep.subr.mxu0 0.0
        %664 = vmatpush1.msra.mxu0 0.0
        %665 = vmatprep.subr.mxu0 0.0
        %666 = vmatpush1.msra.mxu0 0.0
        %667 = vmatprep.subr.mxu0 0.0
        %668 = vmatpush1.msra.mxu0 0.0
        %669 = vmatprep.subr.mxu0 0.0
        %670 = vmatpush1.msra.mxu0 0.0
        %671 = vmatprep.subr.mxu0 0.0
        %672 = vmatpush1.msra.mxu0 0.0
        %673 = vmatprep.subr.mxu0 0.0
        %674 = vmatpush1.msra.mxu0 0.0
        %675 = vmatprep.subr.mxu0 0.0
        %676 = vmatpush1.msra.mxu0 0.0
        %677 = vmatprep.subr.mxu0 0.0
        %678 = vmatpush1.msra.mxu0 0.0
        %679 = vmatprep.subr.mxu0 0.0
        %680 = vmatpush1.msra.mxu0 0.0
        %681 = vmatprep.mubr.f32.mxu0 0.0
        %v682 = vand.u32 %v361, 4294901760
        %v683 = vsub.f32 %v361, %v682
        %v684 = vand.u32 %v683, 4294901760
        %685 = vmatmul.mubr.f32.gmra.mrb[0].mxu0 %v684
        %v686 = vpop.f32.mrb[0].mxu0
        %v687 = vadd.f32 %v610, %v686
        %v688 = vpop.f32.mrb[0].mxu0
        %689 = vdwg.mxu0
        %690 = vmatprep.subr.mxu0 0.0
        %v691 = vand.u32 %v322, 4294901760
        %v692 = vsub.f32 %v322, %v691
        %v693 = vand.u32 %v692, 4294901760
        %694 = vmatpush1.msra.mxu0 %v693
        %695 = vmatprep.subr.mxu0 0.0
        %v696 = vand.u32 %v323, 4294901760
        %v697 = vsub.f32 %v323, %v696
        %v698 = vand.u32 %v697, 4294901760
        %699 = vmatpush1.msra.mxu0 %v698
        %700 = vmatprep.subr.mxu0 0.0
        %v701 = vand.u32 %v324, 4294901760
        %v702 = vsub.f32 %v324, %v701
        %v703 = vand.u32 %v702, 4294901760
        %704 = vmatpush1.msra.mxu0 %v703
        %705 = vmatprep.subr.mxu0 0.0
        %v706 = vand.u32 %v325, 4294901760
        %v707 = vsub.f32 %v325, %v706
        %v708 = vand.u32 %v707, 4294901760
        %709 = vmatpush1.msra.mxu0 %v708
        %710 = vmatprep.subr.mxu0 0.0
        %711 = vmatpush1.msra.mxu0 0.0
        %712 = vmatprep.subr.mxu0 0.0
        %713 = vmatpush1.msra.mxu0 0.0
        %714 = vmatprep.subr.mxu0 0.0
        %715 = vmatpush1.msra.mxu0 0.0
        %716 = vmatprep.subr.mxu0 0.0
        %717 = vmatpush1.msra.mxu0 0.0
        %718 = vmatprep.subr.mxu0 0.0
        %719 = vmatpush1.msra.mxu0 0.0
        %720 = vmatprep.subr.mxu0 0.0
        %721 = vmatpush1.msra.mxu0 0.0
        %722 = vmatprep.subr.mxu0 0.0
        %723 = vmatpush1.msra.mxu0 0.0
        %724 = vmatprep.subr.mxu0 0.0
        %725 = vmatpush1.msra.mxu0 0.0
        %726 = vmatprep.subr.mxu0 0.0
        %727 = vmatpush1.msra.mxu0 0.0
        %728 = vmatprep.subr.mxu0 0.0
        %729 = vmatpush1.msra.mxu0 0.0
        %730 = vmatprep.subr.mxu0 0.0
        %731 = vmatpush1.msra.mxu0 0.0
        %732 = vmatprep.subr.mxu0 0.0
        %733 = vmatpush1.msra.mxu0 0.0
        %734 = vmatprep.subr.mxu0 0.0
        %735 = vmatpush1.msra.mxu0 0.0
        %736 = vmatprep.subr.mxu0 0.0
        %737 = vmatpush1.msra.mxu0 0.0
        %738 = vmatprep.subr.mxu0 0.0
        %739 = vmatpush1.msra.mxu0 0.0
        %740 = vmatprep.subr.mxu0 0.0
        %741 = vmatpush1.msra.mxu0 0.0
        %742 = vmatprep.subr.mxu0 0.0
        %743 = vmatpush1.msra.mxu0 0.0
        %744 = vmatprep.subr.mxu0 0.0
        %745 = vmatpush1.msra.mxu0 0.0
        %746 = vmatprep.subr.mxu0 0.0
        %747 = vmatpush1.msra.mxu0 0.0
        %748 = vmatprep.subr.mxu0 0.0
        %749 = vmatpush1.msra.mxu0 0.0
        %750 = vmatprep.subr.mxu0 0.0
        %751 = vmatpush1.msra.mxu0 0.0
        %752 = vmatprep.subr.mxu0 0.0
        %753 = vmatpush1.msra.mxu0 0.0
        %754 = vmatprep.subr.mxu0 0.0
        %755 = vmatpush1.msra.mxu0 0.0
        %756 = vmatprep.subr.mxu0 0.0
        %757 = vmatpush1.msra.mxu0 0.0
        %758 = vmatprep.subr.mxu0 0.0
        %759 = vmatpush1.msra.mxu0 0.0
        %760 = vmatprep.subr.mxu0 0.0
        %761 = vmatpush1.msra.mxu0 0.0
        %762 = vmatprep.subr.mxu0 0.0
        %763 = vmatpush1.msra.mxu0 0.0
        %764 = vmatprep.subr.mxu0 0.0
        %765 = vmatpush1.msra.mxu0 0.0
        %766 = vmatprep.mubr.f32.mxu0 0.0
        %v767 = vand.u32 %v361, 4294901760
        %768 = vmatmul.mubr.f32.gmra.mrb[0].mxu0 %v767
        %v769 = vpop.f32.mrb[0].mxu0
        %v770 = vadd.f32 %v687, %v769
        %v771 = vpop.f32.mrb[0].mxu0
        %772 = vdwg.mxu0
        %773 = vmatprep.subr.mxu0 0.0
        %v774 = vand.u32 %v322, 4294901760
        %775 = vmatpush1.msra.mxu0 %v774
        %776 = vmatprep.subr.mxu0 0.0
        %v777 = vand.u32 %v323, 4294901760
        %778 = vmatpush1.msra.mxu0 %v777
        %779 = vmatprep.subr.mxu0 0.0
        %v780 = vand.u32 %v324, 4294901760
        %781 = vmatpush1.msra.mxu0 %v780
        %782 = vmatprep.subr.mxu0 0.0
        %v783 = vand.u32 %v325, 4294901760
        %784 = vmatpush1.msra.mxu0 %v783
        %785 = vmatprep.subr.mxu0 0.0
        %786 = vmatpush1.msra.mxu0 0.0
        %787 = vmatprep.subr.mxu0 0.0
        %788 = vmatpush1.msra.mxu0 0.0
        %789 = vmatprep.subr.mxu0 0.0
        %790 = vmatpush1.msra.mxu0 0.0
        %791 = vmatprep.subr.mxu0 0.0
        %792 = vmatpush1.msra.mxu0 0.0
        %793 = vmatprep.subr.mxu0 0.0
        %794 = vmatpush1.msra.mxu0 0.0
        %795 = vmatprep.subr.mxu0 0.0
        %796 = vmatpush1.msra.mxu0 0.0
        %797 = vmatprep.subr.mxu0 0.0
        %798 = vmatpush1.msra.mxu0 0.0
        %799 = vmatprep.subr.mxu0 0.0
        %800 = vmatpush1.msra.mxu0 0.0
        %801 = vmatprep.subr.mxu0 0.0
        %802 = vmatpush1.msra.mxu0 0.0
        %803 = vmatprep.subr.mxu0 0.0
        %804 = vmatpush1.msra.mxu0 0.0
        %805 = vmatprep.subr.mxu0 0.0
        %806 = vmatpush1.msra.mxu0 0.0
        %807 = vmatprep.subr.mxu0 0.0
        %808 = vmatpush1.msra.mxu0 0.0
        %809 = vmatprep.subr.mxu0 0.0
        %810 = vmatpush1.msra.mxu0 0.0
        %811 = vmatprep.subr.mxu0 0.0
        %812 = vmatpush1.msra.mxu0 0.0
        %813 = vmatprep.subr.mxu0 0.0
        %814 = vmatpush1.msra.mxu0 0.0
        %815 = vmatprep.subr.mxu0 0.0
        %816 = vmatpush1.msra.mxu0 0.0
        %817 = vmatprep.subr.mxu0 0.0
        %818 = vmatpush1.msra.mxu0 0.0
        %819 = vmatprep.subr.mxu0 0.0
        %820 = vmatpush1.msra.mxu0 0.0
        %821 = vmatprep.subr.mxu0 0.0
        %822 = vmatpush1.msra.mxu0 0.0
        %823 = vmatprep.subr.mxu0 0.0
        %824 = vmatpush1.msra.mxu0 0.0
        %825 = vmatprep.subr.mxu0 0.0
        %826 = vmatpush1.msra.mxu0 0.0
        %827 = vmatprep.subr.mxu0 0.0
        %828 = vmatpush1.msra.mxu0 0.0
        %829 = vmatprep.subr.mxu0 0.0
        %830 = vmatpush1.msra.mxu0 0.0
        %831 = vmatprep.subr.mxu0 0.0
        %832 = vmatpush1.msra.mxu0 0.0
        %833 = vmatprep.subr.mxu0 0.0
        %834 = vmatpush1.msra.mxu0 0.0
        %835 = vmatprep.subr.mxu0 0.0
        %836 = vmatpush1.msra.mxu0 0.0
        %837 = vmatprep.subr.mxu0 0.0
        %838 = vmatpush1.msra.mxu0 0.0
        %839 = vmatprep.subr.mxu0 0.0
        %840 = vmatpush1.msra.mxu0 0.0
        %841 = vmatprep.mubr.f32.mxu0 0.0
        %v842 = vand.u32 %v361, 4294901760
        %843 = vmatmul.mubr.f32.gmra.mrb[0].mxu0 %v842
        %v844 = vpop.f32.mrb[0].mxu0
        %v845 = vadd.f32 %v770, %v844
        %v846 = vpop.f32.mrb[0].mxu0
        %847 = vdwg.mxu0
        %v848 = vmax.f32 %v845, 0.0
        %v853 = vlaneseq
        %v854 = vshrl.u32 %v853, 7
        %v855 = vsub.s32 %v334, %v854
        %v856 = vrot.slane %v312, %v855
        %v857 = vlaneseq
        %v858 = vshrl.u32 %v857, 7
        %v859 = vsub.s32 %v339, %v858
        %v860 = vrot.slane %v315, %v859
        %v861 = vsel %vm344, %v860, %v856
        %v862 = vlaneseq
        %v863 = vshrl.u32 %v862, 7
        %v864 = vsub.s32 %v346, %v863
        %v865 = vrot.slane %v318, %v864
        %v866 = vsel %vm351, %v865, %v861
        %v867 = vlaneseq
        %v868 = vshrl.u32 %v867, 7
        %v869 = vsub.s32 %v353, %v868
        %v870 = vrot.slane %v321, %v869
        %v871 = vsel %vm358, %v870, %v866
        %v872 = vsel %vm360, %v871, 0
        %874 = vmatprep.subr.mxu0 0.0
        %v875 = vand.u32 %v322, 4294901760
        %876 = vmatpush1.msra.mxu0 %v875
        %877 = vmatprep.subr.mxu0 0.0
        %v878 = vand.u32 %v323, 4294901760
        %879 = vmatpush1.msra.mxu0 %v878
        %880 = vmatprep.subr.mxu0 0.0
        %v881 = vand.u32 %v324, 4294901760
        %882 = vmatpush1.msra.mxu0 %v881
        %883 = vmatprep.subr.mxu0 0.0
        %v884 = vand.u32 %v325, 4294901760
        %885 = vmatpush1.msra.mxu0 %v884
        %886 = vmatprep.subr.mxu0 0.0
        %887 = vmatpush1.msra.mxu0 0.0
        %888 = vmatprep.subr.mxu0 0.0
        %889 = vmatpush1.msra.mxu0 0.0
        %890 = vmatprep.subr.mxu0 0.0
        %891 = vmatpush1.msra.mxu0 0.0
        %892 = vmatprep.subr.mxu0 0.0
        %893 = vmatpush1.msra.mxu0 0.0
        %894 = vmatprep.subr.mxu0 0.0
        %895 = vmatpush1.msra.mxu0 0.0
        %896 = vmatprep.subr.mxu0 0.0
        %897 = vmatpush1.msra.mxu0 0.0
        %898 = vmatprep.subr.mxu0 0.0
        %899 = vmatpush1.msra.mxu0 0.0
        %900 = vmatprep.subr.mxu0 0.0
        %901 = vmatpush1.msra.mxu0 0.0
        %902 = vmatprep.subr.mxu0 0.0
        %903 = vmatpush1.msra.mxu0 0.0
        %904 = vmatprep.subr.mxu0 0.0
        %905 = vmatpush1.msra.mxu0 0.0
        %906 = vmatprep.subr.mxu0 0.0
        %907 = vmatpush1.msra.mxu0 0.0
        %908 = vmatprep.subr.mxu0 0.0
        %909 = vmatpush1.msra.mxu0 0.0
        %910 = vmatprep.subr.mxu0 0.0
        %911 = vmatpush1.msra.mxu0 0.0
        %912 = vmatprep.subr.mxu0 0.0
        %913 = vmatpush1.msra.mxu0 0.0
        %914 = vmatprep.subr.mxu0 0.0
        %915 = vmatpush1.msra.mxu0 0.0
        %916 = vmatprep.subr.mxu0 0.0
        %917 = vmatpush1.msra.mxu0 0.0
        %918 = vmatprep.subr.mxu0 0.0
        %919 = vmatpush1.msra.mxu0 0.0
        %920 = vmatprep.subr.mxu0 0.0
        %921 = vmatpush1.msra.mxu0 0.0
        %922 = vmatprep.subr.mxu0 0.0
        %923 = vmatpush1.msra.mxu0 0.0
        %924 = vmatprep.subr.mxu0 0.0
        %925 = vmatpush1.msra.mxu0 0.0
        %926 = vmatprep.subr.mxu0 0.0
        %927 = vmatpush1.msra.mxu0 0.0
        %928 = vmatprep.subr.mxu0 0.0
        %929 = vmatpush1.msra.mxu0 0.0
        %930 = vmatprep.subr.mxu0 0.0
        %931 = vmatpush1.msra.mxu0 0.0
        %932 = vmatprep.subr.mxu0 0.0
        %933 = vmatpush1.msra.mxu0 0.0
        %934 = vmatprep.subr.mxu0 0.0
        %935 = vmatpush1.msra.mxu0 0.0
        %936 = vmatprep.subr.mxu0 0.0
        %937 = vmatpush1.msra.mxu0 0.0
        %938 = vmatprep.subr.mxu0 0.0
        %939 = vmatpush1.msra.mxu0 0.0
        %940 = vmatprep.subr.mxu0 0.0
        %941 = vmatpush1.msra.mxu0 0.0
        %942 = vmatprep.mubr.f32.mxu0 0.0
        %v943 = vand.u32 %v872, 4294901760
        %v944 = vsub.f32 %v872, %v943
        %v945 = vand.u32 %v944, 4294901760
        %v946 = vsub.f32 %v944, %v945
        %v947 = vand.u32 %v946, 4294901760
        %948 = vmatmul.mubr.f32.gmra.mrb[0].mxu0 %v947
        %v949 = vpop.f32.mrb[0].mxu0
        %v950 = vadd.f32 %v326, %v949
        %v951 = vpop.f32.mrb[0].mxu0
        %952 = vdwg.mxu0
        %953 = vmatprep.subr.mxu0 0.0
        %v954 = vand.u32 %v322, 4294901760
        %v955 = vsub.f32 %v322, %v954
        %v956 = vand.u32 %v955, 4294901760
        %v957 = vsub.f32 %v955, %v956
        %v958 = vand.u32 %v957, 4294901760
        %959 = vmatpush1.msra.mxu0 %v958
        %960 = vmatprep.subr.mxu0 0.0
        %v961 = vand.u32 %v323, 4294901760
        %v962 = vsub.f32 %v323, %v961
        %v963 = vand.u32 %v962, 4294901760
        %v964 = vsub.f32 %v962, %v963
        %v965 = vand.u32 %v964, 4294901760
        %966 = vmatpush1.msra.mxu0 %v965
        %967 = vmatprep.subr.mxu0 0.0
        %v968 = vand.u32 %v324, 4294901760
        %v969 = vsub.f32 %v324, %v968
        %v970 = vand.u32 %v969, 4294901760
        %v971 = vsub.f32 %v969, %v970
        %v972 = vand.u32 %v971, 4294901760
        %973 = vmatpush1.msra.mxu0 %v972
        %974 = vmatprep.subr.mxu0 0.0
        %v975 = vand.u32 %v325, 4294901760
        %v976 = vsub.f32 %v325, %v975
        %v977 = vand.u32 %v976, 4294901760
        %v978 = vsub.f32 %v976, %v977
        %v979 = vand.u32 %v978, 4294901760
        %980 = vmatpush1.msra.mxu0 %v979
        %981 = vmatprep.subr.mxu0 0.0
        %982 = vmatpush1.msra.mxu0 0.0
        %983 = vmatprep.subr.mxu0 0.0
        %984 = vmatpush1.msra.mxu0 0.0
        %985 = vmatprep.subr.mxu0 0.0
        %986 = vmatpush1.msra.mxu0 0.0
        %987 = vmatprep.subr.mxu0 0.0
        %988 = vmatpush1.msra.mxu0 0.0
        %989 = vmatprep.subr.mxu0 0.0
        %990 = vmatpush1.msra.mxu0 0.0
        %991 = vmatprep.subr.mxu0 0.0
        %992 = vmatpush1.msra.mxu0 0.0
        %993 = vmatprep.subr.mxu0 0.0
        %994 = vmatpush1.msra.mxu0 0.0
        %995 = vmatprep.subr.mxu0 0.0
        %996 = vmatpush1.msra.mxu0 0.0
        %997 = vmatprep.subr.mxu0 0.0
        %998 = vmatpush1.msra.mxu0 0.0
        %999 = vmatprep.subr.mxu0 0.0
        %1000 = vmatpush1.msra.mxu0 0.0
        %1001 = vmatprep.subr.mxu0 0.0
        %1002 = vmatpush1.msra.mxu0 0.0
        %1003 = vmatprep.subr.mxu0 0.0
        %1004 = vmatpush1.msra.mxu0 0.0
        %1005 = vmatprep.subr.mxu0 0.0
        %1006 = vmatpush1.msra.mxu0 0.0
        %1007 = vmatprep.subr.mxu0 0.0
        %1008 = vmatpush1.msra.mxu0 0.0
        %1009 = vmatprep.subr.mxu0 0.0
        %1010 = vmatpush1.msra.mxu0 0.0
        %1011 = vmatprep.subr.mxu0 0.0
        %1012 = vmatpush1.msra.mxu0 0.0
        %1013 = vmatprep.subr.mxu0 0.0
        %1014 = vmatpush1.msra.mxu0 0.0
        %1015 = vmatprep.subr.mxu0 0.0
        %1016 = vmatpush1.msra.mxu0 0.0
        %1017 = vmatprep.subr.mxu0 0.0
        %1018 = vmatpush1.msra.mxu0 0.0
        %1019 = vmatprep.subr.mxu0 0.0
        %1020 = vmatpush1.msra.mxu0 0.0
        %1021 = vmatprep.subr.mxu0 0.0
        %1022 = vmatpush1.msra.mxu0 0.0
        %1023 = vmatprep.subr.mxu0 0.0
        %1024 = vmatpush1.msra.mxu0 0.0
        %1025 = vmatprep.subr.mxu0 0.0
        %1026 = vmatpush1.msra.mxu0 0.0
        %1027 = vmatprep.subr.mxu0 0.0
        %1028 = vmatpush1.msra.mxu0 0.0
        %1029 = vmatprep.subr.mxu0 0.0
        %1030 = vmatpush1.msra.mxu0 0.0
        %1031 = vmatprep.subr.mxu0 0.0
        %1032 = vmatpush1.msra.mxu0 0.0
        %1033 = vmatprep.subr.mxu0 0.0
        %1034 = vmatpush1.msra.mxu0 0.0
        %1035 = vmatprep.subr.mxu0 0.0
        %1036 = vmatpush1.msra.mxu0 0.0
        %1037 = vmatprep.mubr.f32.mxu0 0.0
        %v1038 = vand.u32 %v872, 4294901760
        %1039 = vmatmul.mubr.f32.gmra.mrb[0].mxu0 %v1038
        %v1040 = vpop.f32.mrb[0].mxu0
        %v1041 = vadd.f32 %v950, %v1040
        %v1042 = vpop.f32.mrb[0].mxu0
        %1043 = vdwg.mxu0
        %1044 = vmatprep.subr.mxu0 0.0
        %v1045 = vand.u32 %v322, 4294901760
        %v1046 = vsub.f32 %v322, %v1045
        %1047 = vmatpush1.msra.mxu0 %v1046
        %1048 = vmatprep.subr.mxu0 0.0
        %v1049 = vand.u32 %v323, 4294901760
        %v1050 = vsub.f32 %v323, %v1049
        %1051 = vmatpush1.msra.mxu0 %v1050
        %1052 = vmatprep.subr.mxu0 0.0
        %v1053 = vand.u32 %v324, 4294901760
        %v1054 = vsub.f32 %v324, %v1053
        %1055 = vmatpush1.msra.mxu0 %v1054
        %1056 = vmatprep.subr.mxu0 0.0
        %v1057 = vand.u32 %v325, 4294901760
        %v1058 = vsub.f32 %v325, %v1057
        %1059 = vmatpush1.msra.mxu0 %v1058
        %1060 = vmatprep.subr.mxu0 0.0
        %1061 = vmatpush1.msra.mxu0 0.0
        %1062 = vmatprep.subr.mxu0 0.0
        %1063 = vmatpush1.msra.mxu0 0.0
        %1064 = vmatprep.subr.mxu0 0.0
        %1065 = vmatpush1.msra.mxu0 0.0
        %1066 = vmatprep.subr.mxu0 0.0
        %1067 = vmatpush1.msra.mxu0 0.0
        %1068 = vmatprep.subr.mxu0 0.0
        %1069 = vmatpush1.msra.mxu0 0.0
        %1070 = vmatprep.subr.mxu0 0.0
        %1071 = vmatpush1.msra.mxu0 0.0
        %1072 = vmatprep.subr.mxu0 0.0
        %1073 = vmatpush1.msra.mxu0 0.0
        %1074 = vmatprep.subr.mxu0 0.0
        %1075 = vmatpush1.msra.mxu0 0.0
        %1076 = vmatprep.subr.mxu0 0.0
        %1077 = vmatpush1.msra.mxu0 0.0
        %1078 = vmatprep.subr.mxu0 0.0
        %1079 = vmatpush1.msra.mxu0 0.0
        %1080 = vmatprep.subr.mxu0 0.0
        %1081 = vmatpush1.msra.mxu0 0.0
        %1082 = vmatprep.subr.mxu0 0.0
        %1083 = vmatpush1.msra.mxu0 0.0
        %1084 = vmatprep.subr.mxu0 0.0
        %1085 = vmatpush1.msra.mxu0 0.0
        %1086 = vmatprep.subr.mxu0 0.0
        %1087 = vmatpush1.msra.mxu0 0.0
        %1088 = vmatprep.subr.mxu0 0.0
        %1089 = vmatpush1.msra.mxu0 0.0
        %1090 = vmatprep.subr.mxu0 0.0
        %1091 = vmatpush1.msra.mxu0 0.0
        %1092 = vmatprep.subr.mxu0 0.0
        %1093 = vmatpush1.msra.mxu0 0.0
        %1094 = vmatprep.subr.mxu0 0.0
        %1095 = vmatpush1.msra.mxu0 0.0
        %1096 = vmatprep.subr.mxu0 0.0
        %1097 = vmatpush1.msra.mxu0 0.0
        %1098 = vmatprep.subr.mxu0 0.0
        %1099 = vmatpush1.msra.mxu0 0.0
        %1100 = vmatprep.subr.mxu0 0.0
        %1101 = vmatpush1.msra.mxu0 0.0
        %1102 = vmatprep.subr.mxu0 0.0
        %1103 = vmatpush1.msra.mxu0 0.0
        %1104 = vmatprep.subr.mxu0 0.0
        %1105 = vmatpush1.msra.mxu0 0.0
        %1106 = vmatprep.subr.mxu0 0.0
        %1107 = vmatpush1.msra.mxu0 0.0
        %1108 = vmatprep.subr.mxu0 0.0
        %1109 = vmatpush1.msra.mxu0 0.0
        %1110 = vmatprep.subr.mxu0 0.0
        %1111 = vmatpush1.msra.mxu0 0.0
        %1112 = vmatprep.subr.mxu0 0.0
        %1113 = vmatpush1.msra.mxu0 0.0
        %1114 = vmatprep.subr.mxu0 0.0
        %1115 = vmatpush1.msra.mxu0 0.0
        %1116 = vmatprep.mubr.f32.mxu0 0.0
        %v1117 = vand.u32 %v872, 4294901760
        %v1118 = vsub.f32 %v872, %v1117
        %1119 = vmatmul.mubr.f32.gmra.mrb[0].mxu0 %v1118
        %v1120 = vpop.f32.mrb[0].mxu0
        %v1121 = vadd.f32 %v1041, %v1120
        %v1122 = vpop.f32.mrb[0].mxu0
        %1123 = vdwg.mxu0
        %1124 = vmatprep.subr.mxu0 0.0
        %v1125 = vand.u32 %v322, 4294901760
        %1126 = vmatpush1.msra.mxu0 %v1125
        %1127 = vmatprep.subr.mxu0 0.0
        %v1128 = vand.u32 %v323, 4294901760
        %1129 = vmatpush1.msra.mxu0 %v1128
        %1130 = vmatprep.subr.mxu0 0.0
        %v1131 = vand.u32 %v324, 4294901760
        %1132 = vmatpush1.msra.mxu0 %v1131
        %1133 = vmatprep.subr.mxu0 0.0
        %v1134 = vand.u32 %v325, 4294901760
        %1135 = vmatpush1.msra.mxu0 %v1134
        %1136 = vmatprep.subr.mxu0 0.0
        %1137 = vmatpush1.msra.mxu0 0.0
        %1138 = vmatprep.subr.mxu0 0.0
        %1139 = vmatpush1.msra.mxu0 0.0
        %1140 = vmatprep.subr.mxu0 0.0
        %1141 = vmatpush1.msra.mxu0 0.0
        %1142 = vmatprep.subr.mxu0 0.0
        %1143 = vmatpush1.msra.mxu0 0.0
        %1144 = vmatprep.subr.mxu0 0.0
        %1145 = vmatpush1.msra.mxu0 0.0
        %1146 = vmatprep.subr.mxu0 0.0
        %1147 = vmatpush1.msra.mxu0 0.0
        %1148 = vmatprep.subr.mxu0 0.0
        %1149 = vmatpush1.msra.mxu0 0.0
        %1150 = vmatprep.subr.mxu0 0.0
        %1151 = vmatpush1.msra.mxu0 0.0
        %1152 = vmatprep.subr.mxu0 0.0
        %1153 = vmatpush1.msra.mxu0 0.0
        %1154 = vmatprep.subr.mxu0 0.0
        %1155 = vmatpush1.msra.mxu0 0.0
        %1156 = vmatprep.subr.mxu0 0.0
        %1157 = vmatpush1.msra.mxu0 0.0
        %1158 = vmatprep.subr.mxu0 0.0
        %1159 = vmatpush1.msra.mxu0 0.0
        %1160 = vmatprep.subr.mxu0 0.0
        %1161 = vmatpush1.msra.mxu0 0.0
        %1162 = vmatprep.subr.mxu0 0.0
        %1163 = vmatpush1.msra.mxu0 0.0
        %1164 = vmatprep.subr.mxu0 0.0
        %1165 = vmatpush1.msra.mxu0 0.0
        %1166 = vmatprep.subr.mxu0 0.0
        %1167 = vmatpush1.msra.mxu0 0.0
        %1168 = vmatprep.subr.mxu0 0.0
        %1169 = vmatpush1.msra.mxu0 0.0
        %1170 = vmatprep.subr.mxu0 0.0
        %1171 = vmatpush1.msra.mxu0 0.0
        %1172 = vmatprep.subr.mxu0 0.0
        %1173 = vmatpush1.msra.mxu0 0.0
        %1174 = vmatprep.subr.mxu0 0.0
        %1175 = vmatpush1.msra.mxu0 0.0
        %1176 = vmatprep.subr.mxu0 0.0
        %1177 = vmatpush1.msra.mxu0 0.0
        %1178 = vmatprep.subr.mxu0 0.0
        %1179 = vmatpush1.msra.mxu0 0.0
        %1180 = vmatprep.subr.mxu0 0.0
        %1181 = vmatpush1.msra.mxu0 0.0
        %1182 = vmatprep.subr.mxu0 0.0
        %1183 = vmatpush1.msra.mxu0 0.0
        %1184 = vmatprep.subr.mxu0 0.0
        %1185 = vmatpush1.msra.mxu0 0.0
        %1186 = vmatprep.subr.mxu0 0.0
        %1187 = vmatpush1.msra.mxu0 0.0
        %1188 = vmatprep.subr.mxu0 0.0
        %1189 = vmatpush1.msra.mxu0 0.0
        %1190 = vmatprep.subr.mxu0 0.0
        %1191 = vmatpush1.msra.mxu0 0.0
        %1192 = vmatprep.mubr.f32.mxu0 0.0
        %v1193 = vand.u32 %v872, 4294901760
        %v1194 = vsub.f32 %v872, %v1193
        %v1195 = vand.u32 %v1194, 4294901760
        %1196 = vmatmul.mubr.f32.gmra.mrb[0].mxu0 %v1195
        %v1197 = vpop.f32.mrb[0].mxu0
        %v1198 = vadd.f32 %v1121, %v1197
        %v1199 = vpop.f32.mrb[0].mxu0
        %1200 = vdwg.mxu0
        %1201 = vmatprep.subr.mxu0 0.0
        %v1202 = vand.u32 %v322, 4294901760
        %v1203 = vsub.f32 %v322, %v1202
        %v1204 = vand.u32 %v1203, 4294901760
        %1205 = vmatpush1.msra.mxu0 %v1204
        %1206 = vmatprep.subr.mxu0 0.0
        %v1207 = vand.u32 %v323, 4294901760
        %v1208 = vsub.f32 %v323, %v1207
        %v1209 = vand.u32 %v1208, 4294901760
        %1210 = vmatpush1.msra.mxu0 %v1209
        %1211 = vmatprep.subr.mxu0 0.0
        %v1212 = vand.u32 %v324, 4294901760
        %v1213 = vsub.f32 %v324, %v1212
        %v1214 = vand.u32 %v1213, 4294901760
        %1215 = vmatpush1.msra.mxu0 %v1214
        %1216 = vmatprep.subr.mxu0 0.0
        %v1217 = vand.u32 %v325, 4294901760
        %v1218 = vsub.f32 %v325, %v1217
        %v1219 = vand.u32 %v1218, 4294901760
        %1220 = vmatpush1.msra.mxu0 %v1219
        %1221 = vmatprep.subr.mxu0 0.0
        %1222 = vmatpush1.msra.mxu0 0.0
        %1223 = vmatprep.subr.mxu0 0.0
        %1224 = vmatpush1.msra.mxu0 0.0
        %1225 = vmatprep.subr.mxu0 0.0
        %1226 = vmatpush1.msra.mxu0 0.0
        %1227 = vmatprep.subr.mxu0 0.0
        %1228 = vmatpush1.msra.mxu0 0.0
        %1229 = vmatprep.subr.mxu0 0.0
        %1230 = vmatpush1.msra.mxu0 0.0
        %1231 = vmatprep.subr.mxu0 0.0
        %1232 = vmatpush1.msra.mxu0 0.0
        %1233 = vmatprep.subr.mxu0 0.0
        %1234 = vmatpush1.msra.mxu0 0.0
        %1235 = vmatprep.subr.mxu0 0.0
        %1236 = vmatpush1.msra.mxu0 0.0
        %1237 = vmatprep.subr.mxu0 0.0
        %1238 = vmatpush1.msra.mxu0 0.0
        %1239 = vmatprep.subr.mxu0 0.0
        %1240 = vmatpush1.msra.mxu0 0.0
        %1241 = vmatprep.subr.mxu0 0.0
        %1242 = vmatpush1.msra.mxu0 0.0
        %1243 = vmatprep.subr.mxu0 0.0
        %1244 = vmatpush1.msra.mxu0 0.0
        %1245 = vmatprep.subr.mxu0 0.0
        %1246 = vmatpush1.msra.mxu0 0.0
        %1247 = vmatprep.subr.mxu0 0.0
        %1248 = vmatpush1.msra.mxu0 0.0
        %1249 = vmatprep.subr.mxu0 0.0
        %1250 = vmatpush1.msra.mxu0 0.0
        %1251 = vmatprep.subr.mxu0 0.0
        %1252 = vmatpush1.msra.mxu0 0.0
        %1253 = vmatprep.subr.mxu0 0.0
        %1254 = vmatpush1.msra.mxu0 0.0
        %1255 = vmatprep.subr.mxu0 0.0
        %1256 = vmatpush1.msra.mxu0 0.0
        %1257 = vmatprep.subr.mxu0 0.0
        %1258 = vmatpush1.msra.mxu0 0.0
        %1259 = vmatprep.subr.mxu0 0.0
        %1260 = vmatpush1.msra.mxu0 0.0
        %1261 = vmatprep.subr.mxu0 0.0
        %1262 = vmatpush1.msra.mxu0 0.0
        %1263 = vmatprep.subr.mxu0 0.0
        %1264 = vmatpush1.msra.mxu0 0.0
        %1265 = vmatprep.subr.mxu0 0.0
        %1266 = vmatpush1.msra.mxu0 0.0
        %1267 = vmatprep.subr.mxu0 0.0
        %1268 = vmatpush1.msra.mxu0 0.0
        %1269 = vmatprep.subr.mxu0 0.0
        %1270 = vmatpush1.msra.mxu0 0.0
        %1271 = vmatprep.subr.mxu0 0.0
        %1272 = vmatpush1.msra.mxu0 0.0
        %1273 = vmatprep.subr.mxu0 0.0
        %1274 = vmatpush1.msra.mxu0 0.0
        %1275 = vmatprep.subr.mxu0 0.0
        %1276 = vmatpush1.msra.mxu0 0.0
        %1277 = vmatprep.mubr.f32.mxu0 0.0
        %v1278 = vand.u32 %v872, 4294901760
        %1279 = vmatmul.mubr.f32.gmra.mrb[0].mxu0 %v1278
        %v1280 = vpop.f32.mrb[0].mxu0
        %v1281 = vadd.f32 %v1198, %v1280
        %v1282 = vpop.f32.mrb[0].mxu0
        %1283 = vdwg.mxu0
        %1284 = vmatprep.subr.mxu0 0.0
        %v1285 = vand.u32 %v322, 4294901760
        %1286 = vmatpush1.msra.mxu0 %v1285
        %1287 = vmatprep.subr.mxu0 0.0
        %v1288 = vand.u32 %v323, 4294901760
        %1289 = vmatpush1.msra.mxu0 %v1288
        %1290 = vmatprep.subr.mxu0 0.0
        %v1291 = vand.u32 %v324, 4294901760
        %1292 = vmatpush1.msra.mxu0 %v1291
        %1293 = vmatprep.subr.mxu0 0.0
        %v1294 = vand.u32 %v325, 4294901760
        %1295 = vmatpush1.msra.mxu0 %v1294
        %1296 = vmatprep.subr.mxu0 0.0
        %1297 = vmatpush1.msra.mxu0 0.0
        %1298 = vmatprep.subr.mxu0 0.0
        %1299 = vmatpush1.msra.mxu0 0.0
        %1300 = vmatprep.subr.mxu0 0.0
        %1301 = vmatpush1.msra.mxu0 0.0
        %1302 = vmatprep.subr.mxu0 0.0
        %1303 = vmatpush1.msra.mxu0 0.0
        %1304 = vmatprep.subr.mxu0 0.0
        %1305 = vmatpush1.msra.mxu0 0.0
        %1306 = vmatprep.subr.mxu0 0.0
        %1307 = vmatpush1.msra.mxu0 0.0
        %1308 = vmatprep.subr.mxu0 0.0
        %1309 = vmatpush1.msra.mxu0 0.0
        %1310 = vmatprep.subr.mxu0 0.0
        %1311 = vmatpush1.msra.mxu0 0.0
        %1312 = vmatprep.subr.mxu0 0.0
        %1313 = vmatpush1.msra.mxu0 0.0
        %1314 = vmatprep.subr.mxu0 0.0
        %1315 = vmatpush1.msra.mxu0 0.0
        %1316 = vmatprep.subr.mxu0 0.0
        %1317 = vmatpush1.msra.mxu0 0.0
        %1318 = vmatprep.subr.mxu0 0.0
        %1319 = vmatpush1.msra.mxu0 0.0
        %1320 = vmatprep.subr.mxu0 0.0
        %1321 = vmatpush1.msra.mxu0 0.0
        %1322 = vmatprep.subr.mxu0 0.0
        %1323 = vmatpush1.msra.mxu0 0.0
        %1324 = vmatprep.subr.mxu0 0.0
        %1325 = vmatpush1.msra.mxu0 0.0
        %1326 = vmatprep.subr.mxu0 0.0
        %1327 = vmatpush1.msra.mxu0 0.0
        %1328 = vmatprep.subr.mxu0 0.0
        %1329 = vmatpush1.msra.mxu0 0.0
        %1330 = vmatprep.subr.mxu0 0.0
        %1331 = vmatpush1.msra.mxu0 0.0
        %1332 = vmatprep.subr.mxu0 0.0
        %1333 = vmatpush1.msra.mxu0 0.0
        %1334 = vmatprep.subr.mxu0 0.0
        %1335 = vmatpush1.msra.mxu0 0.0
        %1336 = vmatprep.subr.mxu0 0.0
        %1337 = vmatpush1.msra.mxu0 0.0
        %1338 = vmatprep.subr.mxu0 0.0
        %1339 = vmatpush1.msra.mxu0 0.0
        %1340 = vmatprep.subr.mxu0 0.0
        %1341 = vmatpush1.msra.mxu0 0.0
        %1342 = vmatprep.subr.mxu0 0.0
        %1343 = vmatpush1.msra.mxu0 0.0
        %1344 = vmatprep.subr.mxu0 0.0
        %1345 = vmatpush1.msra.mxu0 0.0
        %1346 = vmatprep.subr.mxu0 0.0
        %1347 = vmatpush1.msra.mxu0 0.0
        %1348 = vmatprep.subr.mxu0 0.0
        %1349 = vmatpush1.msra.mxu0 0.0
        %1350 = vmatprep.subr.mxu0 0.0
        %1351 = vmatpush1.msra.mxu0 0.0
        %1352 = vmatprep.mubr.f32.mxu0 0.0
        %v1353 = vand.u32 %v872, 4294901760
        %1354 = vmatmul.mubr.f32.gmra.mrb[0].mxu0 %v1353
        %v1355 = vpop.f32.mrb[0].mxu0
        %v1356 = vadd.f32 %v1281, %v1355
        %v1357 = vpop.f32.mrb[0].mxu0
        %1358 = vdwg.mxu0
        %v1359 = vmax.f32 %v1356, 0.0
        %v1360 = vadd.f32 %v848, %v1359
        %v1361 = vmul.f32 %v328, 2.0
        %vm1362 = vcmask 15360
        %v1364 = vsel %vm1362, %v1360, 0
        %vm1366 = vcmask 1041408
        %v1368 = vsel %vm1366, %v327, 0
        %1370 = vmatprep.subr.mxu0 0.0
        %v1371 = vand.u32 %v1368, 4294901760
        %1372 = vmatpush1.msra.mxu0 %v1371
        %1373 = vmatprep.subr.mxu0 0.0
        %1374 = vmatpush1.msra.mxu0 0.0
        %1375 = vmatprep.subr.mxu0 0.0
        %1376 = vmatpush1.msra.mxu0 0.0
        %1377 = vmatprep.subr.mxu0 0.0
        %1378 = vmatpush1.msra.mxu0 0.0
        %1379 = vmatprep.subr.mxu0 0.0
        %1380 = vmatpush1.msra.mxu0 0.0
        %1381 = vmatprep.subr.mxu0 0.0
        %1382 = vmatpush1.msra.mxu0 0.0
        %1383 = vmatprep.subr.mxu0 0.0
        %1384 = vmatpush1.msra.mxu0 0.0
        %1385 = vmatprep.subr.mxu0 0.0
        %1386 = vmatpush1.msra.mxu0 0.0
        %1387 = vmatprep.subr.mxu0 0.0
        %1388 = vmatpush1.msra.mxu0 0.0
        %1389 = vmatprep.subr.mxu0 0.0
        %1390 = vmatpush1.msra.mxu0 0.0
        %1391 = vmatprep.subr.mxu0 0.0
        %1392 = vmatpush1.msra.mxu0 0.0
        %1393 = vmatprep.subr.mxu0 0.0
        %1394 = vmatpush1.msra.mxu0 0.0
        %1395 = vmatprep.subr.mxu0 0.0
        %1396 = vmatpush1.msra.mxu0 0.0
        %1397 = vmatprep.subr.mxu0 0.0
        %1398 = vmatpush1.msra.mxu0 0.0
        %1399 = vmatprep.subr.mxu0 0.0
        %1400 = vmatpush1.msra.mxu0 0.0
        %1401 = vmatprep.subr.mxu0 0.0
        %1402 = vmatpush1.msra.mxu0 0.0
        %1403 = vmatprep.subr.mxu0 0.0
        %1404 = vmatpush1.msra.mxu0 0.0
        %1405 = vmatprep.subr.mxu0 0.0
        %1406 = vmatpush1.msra.mxu0 0.0
        %1407 = vmatprep.subr.mxu0 0.0
        %1408 = vmatpush1.msra.mxu0 0.0
        %1409 = vmatprep.subr.mxu0 0.0
        %1410 = vmatpush1.msra.mxu0 0.0
        %1411 = vmatprep.subr.mxu0 0.0
        %1412 = vmatpush1.msra.mxu0 0.0
        %1413 = vmatprep.subr.mxu0 0.0
        %1414 = vmatpush1.msra.mxu0 0.0
        %1415 = vmatprep.subr.mxu0 0.0
        %1416 = vmatpush1.msra.mxu0 0.0
        %1417 = vmatprep.subr.mxu0 0.0
        %1418 = vmatpush1.msra.mxu0 0.0
        %1419 = vmatprep.subr.mxu0 0.0
        %1420 = vmatpush1.msra.mxu0 0.0
        %1421 = vmatprep.subr.mxu0 0.0
        %1422 = vmatpush1.msra.mxu0 0.0
        %1423 = vmatprep.subr.mxu0 0.0
        %1424 = vmatpush1.msra.mxu0 0.0
        %1425 = vmatprep.subr.mxu0 0.0
        %1426 = vmatpush1.msra.mxu0 0.0
        %1427 = vmatprep.subr.mxu0 0.0
        %1428 = vmatpush1.msra.mxu0 0.0
        %1429 = vmatprep.subr.mxu0 0.0
        %1430 = vmatpush1.msra.mxu0 0.0
        %1431 = vmatprep.subr.mxu0 0.0
        %1432 = vmatpush1.msra.mxu0 0.0
        %1433 = vmatprep.subr.mxu0 0.0
        %1434 = vmatpush1.msra.mxu0 0.0
        %1435 = vmatprep.mubr.f32.mxu0 0.0
        %v1436 = vand.u32 %v1364, 4294901760
        %v1437 = vsub.f32 %v1364, %v1436
        %v1438 = vand.u32 %v1437, 4294901760
        %v1439 = vsub.f32 %v1437, %v1438
        %v1440 = vand.u32 %v1439, 4294901760
        %1441 = vmatmul.mubr.f32.gmra.mrb[0].mxu0 %v1440
        %v1442 = vpop.f32.mrb[0].mxu0
        %v1443 = vadd.f32 %v1361, %v1442
        %v1444 = vpop.f32.mrb[0].mxu0
        %1445 = vdwg.mxu0
        %1446 = vmatprep.subr.mxu0 0.0
        %v1447 = vand.u32 %v1368, 4294901760
        %v1448 = vsub.f32 %v1368, %v1447
        %v1449 = vand.u32 %v1448, 4294901760
        %v1450 = vsub.f32 %v1448, %v1449
        %v1451 = vand.u32 %v1450, 4294901760
        %1452 = vmatpush1.msra.mxu0 %v1451
        %1453 = vmatprep.subr.mxu0 0.0
        %1454 = vmatpush1.msra.mxu0 0.0
        %1455 = vmatprep.subr.mxu0 0.0
        %1456 = vmatpush1.msra.mxu0 0.0
        %1457 = vmatprep.subr.mxu0 0.0
        %1458 = vmatpush1.msra.mxu0 0.0
        %1459 = vmatprep.subr.mxu0 0.0
        %1460 = vmatpush1.msra.mxu0 0.0
        %1461 = vmatprep.subr.mxu0 0.0
        %1462 = vmatpush1.msra.mxu0 0.0
        %1463 = vmatprep.subr.mxu0 0.0
        %1464 = vmatpush1.msra.mxu0 0.0
        %1465 = vmatprep.subr.mxu0 0.0
        %1466 = vmatpush1.msra.mxu0 0.0
        %1467 = vmatprep.subr.mxu0 0.0
        %1468 = vmatpush1.msra.mxu0 0.0
        %1469 = vmatprep.subr.mxu0 0.0
        %1470 = vmatpush1.msra.mxu0 0.0
        %1471 = vmatprep.subr.mxu0 0.0
        %1472 = vmatpush1.msra.mxu0 0.0
        %1473 = vmatprep.subr.mxu0 0.0
        %1474 = vmatpush1.msra.mxu0 0.0
        %1475 = vmatprep.subr.mxu0 0.0
        %1476 = vmatpush1.msra.mxu0 0.0
        %1477 = vmatprep.subr.mxu0 0.0
        %1478 = vmatpush1.msra.mxu0 0.0
        %1479 = vmatprep.subr.mxu0 0.0
        %1480 = vmatpush1.msra.mxu0 0.0
        %1481 = vmatprep.subr.mxu0 0.0
        %1482 = vmatpush1.msra.mxu0 0.0
        %1483 = vmatprep.subr.mxu0 0.0
        %1484 = vmatpush1.msra.mxu0 0.0
        %1485 = vmatprep.subr.mxu0 0.0
        %1486 = vmatpush1.msra.mxu0 0.0
        %1487 = vmatprep.subr.mxu0 0.0
        %1488 = vmatpush1.msra.mxu0 0.0
        %1489 = vmatprep.subr.mxu0 0.0
        %1490 = vmatpush1.msra.mxu0 0.0
        %1491 = vmatprep.subr.mxu0 0.0
        %1492 = vmatpush1.msra.mxu0 0.0
        %1493 = vmatprep.subr.mxu0 0.0
        %1494 = vmatpush1.msra.mxu0 0.0
        %1495 = vmatprep.subr.mxu0 0.0
        %1496 = vmatpush1.msra.mxu0 0.0
        %1497 = vmatprep.subr.mxu0 0.0
        %1498 = vmatpush1.msra.mxu0 0.0
        %1499 = vmatprep.subr.mxu0 0.0
        %1500 = vmatpush1.msra.mxu0 0.0
        %1501 = vmatprep.subr.mxu0 0.0
        %1502 = vmatpush1.msra.mxu0 0.0
        %1503 = vmatprep.subr.mxu0 0.0
        %1504 = vmatpush1.msra.mxu0 0.0
        %1505 = vmatprep.subr.mxu0 0.0
        %1506 = vmatpush1.msra.mxu0 0.0
        %1507 = vmatprep.subr.mxu0 0.0
        %1508 = vmatpush1.msra.mxu0 0.0
        %1509 = vmatprep.subr.mxu0 0.0
        %1510 = vmatpush1.msra.mxu0 0.0
        %1511 = vmatprep.subr.mxu0 0.0
        %1512 = vmatpush1.msra.mxu0 0.0
        %1513 = vmatprep.subr.mxu0 0.0
        %1514 = vmatpush1.msra.mxu0 0.0
        %1515 = vmatprep.mubr.f32.mxu0 0.0
        %v1516 = vand.u32 %v1364, 4294901760
        %1517 = vmatmul.mubr.f32.gmra.mrb[0].mxu0 %v1516
        %v1518 = vpop.f32.mrb[0].mxu0
        %v1519 = vadd.f32 %v1443, %v1518
        %v1520 = vpop.f32.mrb[0].mxu0
        %1521 = vdwg.mxu0
        %1522 = vmatprep.subr.mxu0 0.0
        %v1523 = vand.u32 %v1368, 4294901760
        %v1524 = vsub.f32 %v1368, %v1523
        %1525 = vmatpush1.msra.mxu0 %v1524
        %1526 = vmatprep.subr.mxu0 0.0
        %1527 = vmatpush1.msra.mxu0 0.0
        %1528 = vmatprep.subr.mxu0 0.0
        %1529 = vmatpush1.msra.mxu0 0.0
        %1530 = vmatprep.subr.mxu0 0.0
        %1531 = vmatpush1.msra.mxu0 0.0
        %1532 = vmatprep.subr.mxu0 0.0
        %1533 = vmatpush1.msra.mxu0 0.0
        %1534 = vmatprep.subr.mxu0 0.0
        %1535 = vmatpush1.msra.mxu0 0.0
        %1536 = vmatprep.subr.mxu0 0.0
        %1537 = vmatpush1.msra.mxu0 0.0
        %1538 = vmatprep.subr.mxu0 0.0
        %1539 = vmatpush1.msra.mxu0 0.0
        %1540 = vmatprep.subr.mxu0 0.0
        %1541 = vmatpush1.msra.mxu0 0.0
        %1542 = vmatprep.subr.mxu0 0.0
        %1543 = vmatpush1.msra.mxu0 0.0
        %1544 = vmatprep.subr.mxu0 0.0
        %1545 = vmatpush1.msra.mxu0 0.0
        %1546 = vmatprep.subr.mxu0 0.0
        %1547 = vmatpush1.msra.mxu0 0.0
        %1548 = vmatprep.subr.mxu0 0.0
        %1549 = vmatpush1.msra.mxu0 0.0
        %1550 = vmatprep.subr.mxu0 0.0
        %1551 = vmatpush1.msra.mxu0 0.0
        %1552 = vmatprep.subr.mxu0 0.0
        %1553 = vmatpush1.msra.mxu0 0.0
        %1554 = vmatprep.subr.mxu0 0.0
        %1555 = vmatpush1.msra.mxu0 0.0
        %1556 = vmatprep.subr.mxu0 0.0
        %1557 = vmatpush1.msra.mxu0 0.0
        %1558 = vmatprep.subr.mxu0 0.0
        %1559 = vmatpush1.msra.mxu0 0.0
        %1560 = vmatprep.subr.mxu0 0.0
        %1561 = vmatpush1.msra.mxu0 0.0
        %1562 = vmatprep.subr.mxu0 0.0
        %1563 = vmatpush1.msra.mxu0 0.0
        %1564 = vmatprep.subr.mxu0 0.0
        %1565 = vmatpush1.msra.mxu0 0.0
        %1566 = vmatprep.subr.mxu0 0.0
        %1567 = vmatpush1.msra.mxu0 0.0
        %1568 = vmatprep.subr.mxu0 0.0
        %1569 = vmatpush1.msra.mxu0 0.0
        %1570 = vmatprep.subr.mxu0 0.0
        %1571 = vmatpush1.msra.mxu0 0.0
        %1572 = vmatprep.subr.mxu0 0.0
        %1573 = vmatpush1.msra.mxu0 0.0
        %1574 = vmatprep.subr.mxu0 0.0
        %1575 = vmatpush1.msra.mxu0 0.0
        %1576 = vmatprep.subr.mxu0 0.0
        %1577 = vmatpush1.msra.mxu0 0.0
        %1578 = vmatprep.subr.mxu0 0.0
        %1579 = vmatpush1.msra.mxu0 0.0
        %1580 = vmatprep.subr.mxu0 0.0
        %1581 = vmatpush1.msra.mxu0 0.0
        %1582 = vmatprep.subr.mxu0 0.0
        %1583 = vmatpush1.msra.mxu0 0.0
        %1584 = vmatprep.subr.mxu0 0.0
        %1585 = vmatpush1.msra.mxu0 0.0
        %1586 = vmatprep.subr.mxu0 0.0
        %1587 = vmatpush1.msra.mxu0 0.0
        %1588 = vmatprep.mubr.f32.mxu0 0.0
        %v1589 = vand.u32 %v1364, 4294901760
        %v1590 = vsub.f32 %v1364, %v1589
        %1591 = vmatmul.mubr.f32.gmra.mrb[0].mxu0 %v1590
        %v1592 = vpop.f32.mrb[0].mxu0
        %v1593 = vadd.f32 %v1519, %v1592
        %v1594 = vpop.f32.mrb[0].mxu0
        %1595 = vdwg.mxu0
        %1596 = vmatprep.subr.mxu0 0.0
        %v1597 = vand.u32 %v1368, 4294901760
        %1598 = vmatpush1.msra.mxu0 %v1597
        %1599 = vmatprep.subr.mxu0 0.0
        %1600 = vmatpush1.msra.mxu0 0.0
        %1601 = vmatprep.subr.mxu0 0.0
        %1602 = vmatpush1.msra.mxu0 0.0
        %1603 = vmatprep.subr.mxu0 0.0
        %1604 = vmatpush1.msra.mxu0 0.0
        %1605 = vmatprep.subr.mxu0 0.0
        %1606 = vmatpush1.msra.mxu0 0.0
        %1607 = vmatprep.subr.mxu0 0.0
        %1608 = vmatpush1.msra.mxu0 0.0
        %1609 = vmatprep.subr.mxu0 0.0
        %1610 = vmatpush1.msra.mxu0 0.0
        %1611 = vmatprep.subr.mxu0 0.0
        %1612 = vmatpush1.msra.mxu0 0.0
        %1613 = vmatprep.subr.mxu0 0.0
        %1614 = vmatpush1.msra.mxu0 0.0
        %1615 = vmatprep.subr.mxu0 0.0
        %1616 = vmatpush1.msra.mxu0 0.0
        %1617 = vmatprep.subr.mxu0 0.0
        %1618 = vmatpush1.msra.mxu0 0.0
        %1619 = vmatprep.subr.mxu0 0.0
        %1620 = vmatpush1.msra.mxu0 0.0
        %1621 = vmatprep.subr.mxu0 0.0
        %1622 = vmatpush1.msra.mxu0 0.0
        %1623 = vmatprep.subr.mxu0 0.0
        %1624 = vmatpush1.msra.mxu0 0.0
        %1625 = vmatprep.subr.mxu0 0.0
        %1626 = vmatpush1.msra.mxu0 0.0
        %1627 = vmatprep.subr.mxu0 0.0
        %1628 = vmatpush1.msra.mxu0 0.0
        %1629 = vmatprep.subr.mxu0 0.0
        %1630 = vmatpush1.msra.mxu0 0.0
        %1631 = vmatprep.subr.mxu0 0.0
        %1632 = vmatpush1.msra.mxu0 0.0
        %1633 = vmatprep.subr.mxu0 0.0
        %1634 = vmatpush1.msra.mxu0 0.0
        %1635 = vmatprep.subr.mxu0 0.0
        %1636 = vmatpush1.msra.mxu0 0.0
        %1637 = vmatprep.subr.mxu0 0.0
        %1638 = vmatpush1.msra.mxu0 0.0
        %1639 = vmatprep.subr.mxu0 0.0
        %1640 = vmatpush1.msra.mxu0 0.0
        %1641 = vmatprep.subr.mxu0 0.0
        %1642 = vmatpush1.msra.mxu0 0.0
        %1643 = vmatprep.subr.mxu0 0.0
        %1644 = vmatpush1.msra.mxu0 0.0
        %1645 = vmatprep.subr.mxu0 0.0
        %1646 = vmatpush1.msra.mxu0 0.0
        %1647 = vmatprep.subr.mxu0 0.0
        %1648 = vmatpush1.msra.mxu0 0.0
        %1649 = vmatprep.subr.mxu0 0.0
        %1650 = vmatpush1.msra.mxu0 0.0
        %1651 = vmatprep.subr.mxu0 0.0
        %1652 = vmatpush1.msra.mxu0 0.0
        %1653 = vmatprep.subr.mxu0 0.0
        %1654 = vmatpush1.msra.mxu0 0.0
        %1655 = vmatprep.subr.mxu0 0.0
        %1656 = vmatpush1.msra.mxu0 0.0
        %1657 = vmatprep.subr.mxu0 0.0
        %1658 = vmatpush1.msra.mxu0 0.0
        %1659 = vmatprep.subr.mxu0 0.0
        %1660 = vmatpush1.msra.mxu0 0.0
        %1661 = vmatprep.mubr.f32.mxu0 0.0
        %v1662 = vand.u32 %v1364, 4294901760
        %v1663 = vsub.f32 %v1364, %v1662
        %v1664 = vand.u32 %v1663, 4294901760
        %1665 = vmatmul.mubr.f32.gmra.mrb[0].mxu0 %v1664
        %v1666 = vpop.f32.mrb[0].mxu0
        %v1667 = vadd.f32 %v1593, %v1666
        %v1668 = vpop.f32.mrb[0].mxu0
        %1669 = vdwg.mxu0
        %1670 = vmatprep.subr.mxu0 0.0
        %v1671 = vand.u32 %v1368, 4294901760
        %v1672 = vsub.f32 %v1368, %v1671
        %v1673 = vand.u32 %v1672, 4294901760
        %1674 = vmatpush1.msra.mxu0 %v1673
        %1675 = vmatprep.subr.mxu0 0.0
        %1676 = vmatpush1.msra.mxu0 0.0
        %1677 = vmatprep.subr.mxu0 0.0
        %1678 = vmatpush1.msra.mxu0 0.0
        %1679 = vmatprep.subr.mxu0 0.0
        %1680 = vmatpush1.msra.mxu0 0.0
        %1681 = vmatprep.subr.mxu0 0.0
        %1682 = vmatpush1.msra.mxu0 0.0
        %1683 = vmatprep.subr.mxu0 0.0
        %1684 = vmatpush1.msra.mxu0 0.0
        %1685 = vmatprep.subr.mxu0 0.0
        %1686 = vmatpush1.msra.mxu0 0.0
        %1687 = vmatprep.subr.mxu0 0.0
        %1688 = vmatpush1.msra.mxu0 0.0
        %1689 = vmatprep.subr.mxu0 0.0
        %1690 = vmatpush1.msra.mxu0 0.0
        %1691 = vmatprep.subr.mxu0 0.0
        %1692 = vmatpush1.msra.mxu0 0.0
        %1693 = vmatprep.subr.mxu0 0.0
        %1694 = vmatpush1.msra.mxu0 0.0
        %1695 = vmatprep.subr.mxu0 0.0
        %1696 = vmatpush1.msra.mxu0 0.0
        %1697 = vmatprep.subr.mxu0 0.0
        %1698 = vmatpush1.msra.mxu0 0.0
        %1699 = vmatprep.subr.mxu0 0.0
        %1700 = vmatpush1.msra.mxu0 0.0
        %1701 = vmatprep.subr.mxu0 0.0
        %1702 = vmatpush1.msra.mxu0 0.0
        %1703 = vmatprep.subr.mxu0 0.0
        %1704 = vmatpush1.msra.mxu0 0.0
        %1705 = vmatprep.subr.mxu0 0.0
        %1706 = vmatpush1.msra.mxu0 0.0
        %1707 = vmatprep.subr.mxu0 0.0
        %1708 = vmatpush1.msra.mxu0 0.0
        %1709 = vmatprep.subr.mxu0 0.0
        %1710 = vmatpush1.msra.mxu0 0.0
        %1711 = vmatprep.subr.mxu0 0.0
        %1712 = vmatpush1.msra.mxu0 0.0
        %1713 = vmatprep.subr.mxu0 0.0
        %1714 = vmatpush1.msra.mxu0 0.0
        %1715 = vmatprep.subr.mxu0 0.0
        %1716 = vmatpush1.msra.mxu0 0.0
        %1717 = vmatprep.subr.mxu0 0.0
        %1718 = vmatpush1.msra.mxu0 0.0
        %1719 = vmatprep.subr.mxu0 0.0
        %1720 = vmatpush1.msra.mxu0 0.0
        %1721 = vmatprep.subr.mxu0 0.0
        %1722 = vmatpush1.msra.mxu0 0.0
        %1723 = vmatprep.subr.mxu0 0.0
        %1724 = vmatpush1.msra.mxu0 0.0
        %1725 = vmatprep.subr.mxu0 0.0
        %1726 = vmatpush1.msra.mxu0 0.0
        %1727 = vmatprep.subr.mxu0 0.0
        %1728 = vmatpush1.msra.mxu0 0.0
        %1729 = vmatprep.subr.mxu0 0.0
        %1730 = vmatpush1.msra.mxu0 0.0
        %1731 = vmatprep.subr.mxu0 0.0
        %1732 = vmatpush1.msra.mxu0 0.0
        %1733 = vmatprep.subr.mxu0 0.0
        %1734 = vmatpush1.msra.mxu0 0.0
        %1735 = vmatprep.subr.mxu0 0.0
        %1736 = vmatpush1.msra.mxu0 0.0
        %1737 = vmatprep.mubr.f32.mxu0 0.0
        %v1738 = vand.u32 %v1364, 4294901760
        %1739 = vmatmul.mubr.f32.gmra.mrb[0].mxu0 %v1738
        %v1740 = vpop.f32.mrb[0].mxu0
        %v1741 = vadd.f32 %v1667, %v1740
        %v1742 = vpop.f32.mrb[0].mxu0
        %1743 = vdwg.mxu0
        %1744 = vmatprep.subr.mxu0 0.0
        %v1745 = vand.u32 %v1368, 4294901760
        %1746 = vmatpush1.msra.mxu0 %v1745
        %1747 = vmatprep.subr.mxu0 0.0
        %1748 = vmatpush1.msra.mxu0 0.0
        %1749 = vmatprep.subr.mxu0 0.0
        %1750 = vmatpush1.msra.mxu0 0.0
        %1751 = vmatprep.subr.mxu0 0.0
        %1752 = vmatpush1.msra.mxu0 0.0
        %1753 = vmatprep.subr.mxu0 0.0
        %1754 = vmatpush1.msra.mxu0 0.0
        %1755 = vmatprep.subr.mxu0 0.0
        %1756 = vmatpush1.msra.mxu0 0.0
        %1757 = vmatprep.subr.mxu0 0.0
        %1758 = vmatpush1.msra.mxu0 0.0
        %1759 = vmatprep.subr.mxu0 0.0
        %1760 = vmatpush1.msra.mxu0 0.0
        %1761 = vmatprep.subr.mxu0 0.0
        %1762 = vmatpush1.msra.mxu0 0.0
        %1763 = vmatprep.subr.mxu0 0.0
        %1764 = vmatpush1.msra.mxu0 0.0
        %1765 = vmatprep.subr.mxu0 0.0
        %1766 = vmatpush1.msra.mxu0 0.0
        %1767 = vmatprep.subr.mxu0 0.0
        %1768 = vmatpush1.msra.mxu0 0.0
        %1769 = vmatprep.subr.mxu0 0.0
        %1770 = vmatpush1.msra.mxu0 0.0
        %1771 = vmatprep.subr.mxu0 0.0
        %1772 = vmatpush1.msra.mxu0 0.0
        %1773 = vmatprep.subr.mxu0 0.0
        %1774 = vmatpush1.msra.mxu0 0.0
        %1775 = vmatprep.subr.mxu0 0.0
        %1776 = vmatpush1.msra.mxu0 0.0
        %1777 = vmatprep.subr.mxu0 0.0
        %1778 = vmatpush1.msra.mxu0 0.0
        %1779 = vmatprep.subr.mxu0 0.0
        %1780 = vmatpush1.msra.mxu0 0.0
        %1781 = vmatprep.subr.mxu0 0.0
        %1782 = vmatpush1.msra.mxu0 0.0
        %1783 = vmatprep.subr.mxu0 0.0
        %1784 = vmatpush1.msra.mxu0 0.0
        %1785 = vmatprep.subr.mxu0 0.0
        %1786 = vmatpush1.msra.mxu0 0.0
        %1787 = vmatprep.subr.mxu0 0.0
        %1788 = vmatpush1.msra.mxu0 0.0
        %1789 = vmatprep.subr.mxu0 0.0
        %1790 = vmatpush1.msra.mxu0 0.0
        %1791 = vmatprep.subr.mxu0 0.0
        %1792 = vmatpush1.msra.mxu0 0.0
        %1793 = vmatprep.subr.mxu0 0.0
        %1794 = vmatpush1.msra.mxu0 0.0
        %1795 = vmatprep.subr.mxu0 0.0
        %1796 = vmatpush1.msra.mxu0 0.0
        %1797 = vmatprep.subr.mxu0 0.0
        %1798 = vmatpush1.msra.mxu0 0.0
        %1799 = vmatprep.subr.mxu0 0.0
        %1800 = vmatpush1.msra.mxu0 0.0
        %1801 = vmatprep.subr.mxu0 0.0
        %1802 = vmatpush1.msra.mxu0 0.0
        %1803 = vmatprep.subr.mxu0 0.0
        %1804 = vmatpush1.msra.mxu0 0.0
        %1805 = vmatprep.subr.mxu0 0.0
        %1806 = vmatpush1.msra.mxu0 0.0
        %1807 = vmatprep.subr.mxu0 0.0
        %1808 = vmatpush1.msra.mxu0 0.0
        %1809 = vmatprep.mubr.f32.mxu0 0.0
        %v1810 = vand.u32 %v1364, 4294901760
        %1811 = vmatmul.mubr.f32.gmra.mrb[0].mxu0 %v1810
        %v1812 = vpop.f32.mrb[0].mxu0
        %v1813 = vadd.f32 %v1741, %v1812
        %v1814 = vpop.f32.mrb[0].mxu0
        %1815 = vdwg.mxu0
        %v1816 = vxor.u32 %v1813, 2147483648
        %v1817 = vmul.f32 %v1816, 1.442695
        %v1818 = vpow.pop %v1817
        %v1819 = vadd.f32 %v1818, 1.0
        %v1820 = vrcp.pop %v1819
        %v1821 = vmul.f32 1.0, %v1820
        %v1822 = vlaneseq
        %v1823 = vshrl.u32 %v1822, 7
        %v1824 = vsub.s32 0, %v1823
        %v1825 = vrot.slane %v1821, %v1824
        %1827 = vbcast.lane.b32.xlu0 %v1825, 256
        %v1828 = vpop.permute.xlu0 %1827
        %s1830 = sor.u32 256, 8
        %1831 = vbcast.lane.b32.xlu0 %v1825, %s1830
        %v1832 = vpop.permute.xlu0 %1831
        %s1834 = sor.u32 256, 16
        %1835 = vbcast.lane.b32.xlu0 %v1825, %s1834
        %v1836 = vpop.permute.xlu0 %1835
        %s1838 = sor.u32 256, 24
        %1839 = vbcast.lane.b32.xlu0 %v1825, %s1838
        %v1840 = vpop.permute.xlu0 %1839
        %v1841 = vmul.f32 %v285, %v1828
        %v1842 = vmul.f32 %v286, %v1828
        %v1843 = vmul.f32 %v287, %v1832
        %v1844 = vmul.f32 %v288, %v1832
        %v1845 = vmul.f32 %v289, %v1836
        %v1846 = vmul.f32 %v290, %v1836
        %v1847 = vmul.f32 %v291, %v1840
        %v1848 = vmul.f32 %v292, %v1840
        %v1849 = vadd.f32 %v1841, %v1843
        %v1850 = vadd.f32 %v1849, %v1845
        %v1851 = vadd.f32 %v1850, %v1847
        %v1852 = vrot.slane %v1851, 4
        %v1853 = vadd.f32 %v1851, %v1852
        %v1854 = vrot.slane %v1853, 2
        %v1855 = vadd.f32 %v1853, %v1854
        %v1856 = vrot.slane %v1855, 1
        %v1857 = vadd.f32 %v1855, %v1856
        %v1858 = vadd.f32 %v1842, %v1844
        %v1859 = vadd.f32 %v1858, %v1846
        %v1860 = vadd.f32 %v1859, %v1848
        %v1861 = vrot.slane %v1860, 4
        %v1862 = vadd.f32 %v1860, %v1861
        %v1863 = vrot.slane %v1862, 2
        %v1864 = vadd.f32 %v1862, %v1863
        %v1865 = vrot.slane %v1864, 1
        %v1866 = vadd.f32 %v1864, %v1865
        %v1867 = vrcp.pop 32.0
        %v1868 = vmul.f32 %v1857, %v1867
        %v1869 = vmul.f32 %v1866, %v1867
        %v1870 = vmax.f32 %v1841, %v1845
        %v1871 = vmax.f32 %v1843, %v1847
        %v1872 = vmax.f32 %v1870, %v1871
        %v1873 = vrot.slane %v1872, 4
        %v1874 = vmax.f32 %v1872, %v1873
        %v1875 = vrot.slane %v1874, 2
        %v1876 = vmax.f32 %v1874, %v1875
        %v1877 = vrot.slane %v1876, 1
        %v1878 = vmax.f32 %v1876, %v1877
        %v1879 = vmax.f32 %v1842, %v1846
        %v1880 = vmax.f32 %v1844, %v1848
        %v1881 = vmax.f32 %v1879, %v1880
        %v1882 = vrot.slane %v1881, 4
        %v1883 = vmax.f32 %v1881, %v1882
        %v1884 = vrot.slane %v1883, 2
        %v1885 = vmax.f32 %v1883, %v1884
        %v1886 = vrot.slane %v1885, 1
        %v1887 = vmax.f32 %v1885, %v1886
        %v1888 = vld [vmem:[#allocation5] sm:$0xff]
        %v1889 = vld [vmem:[#allocation5 + $0x8] sm:$0xff]
        %v1890 = vld [vmem:[#allocation5 + $0x10] sm:$0xff]
        %v1891 = vld [vmem:[#allocation5 + $0x18] sm:$0xff]
        %v1892 = vld [vmem:[#allocation5 + $0x20] sm:$0xff]
        %v1893 = vld [vmem:[#allocation5 + $0x28] sm:$0xff]
        %v1894 = vld [vmem:[#allocation5 + $0x30] sm:$0xff]
        %v1895 = vld [vmem:[#allocation5 + $0x38] sm:$0xff]
        %v1896 = vld [vmem:[#allocation5 + $0x40] sm:$0xff]
        %v1897 = vld [vmem:[#allocation5 + $0x48] sm:$0xff]
        %v1898 = vld [vmem:[#allocation5 + $0x50] sm:$0xff]
        %v1899 = vld [vmem:[#allocation5 + $0x58] sm:$0xff]
        %v1900 = vld [vmem:[#allocation5 + $0x60] sm:$0xff]
        %v1901 = vld [vmem:[#allocation5 + $0x68] sm:$0xff]
        %v1902 = vld [vmem:[#allocation5 + $0x70] sm:$0xff]
        %v1903 = vld [vmem:[#allocation5 + $0x78] sm:$0xff]
        %v1904 = vld [vmem:[#allocation5 + $0x80] sm:$0xff]
        %v1905 = vld [vmem:[#allocation5 + $0x88] sm:$0xff]
        %v1906 = vld [vmem:[#allocation5 + $0x90] sm:$0xff]
        %v1907 = vld [vmem:[#allocation5 + $0x98] sm:$0xff]
        %v1908 = vld [vmem:[#allocation5 + $0xa0] sm:$0xff]
        %v1909 = vld [vmem:[#allocation5 + $0xa8] sm:$0xff]
        %v1910 = vld [vmem:[#allocation5 + $0xb0] sm:$0xff]
        %v1911 = vld [vmem:[#allocation5 + $0xb8] sm:$0xff]
        %v1912 = vld [vmem:[#allocation5 + $0xc0] sm:$0xff]
        %v1913 = vld [vmem:[#allocation5 + $0xc8] sm:$0xff]
        %v1914 = vld [vmem:[#allocation5 + $0xd0] sm:$0xff]
        %v1915 = vld [vmem:[#allocation5 + $0xd8] sm:$0xff]
        %v1916 = vld [vmem:[#allocation5 + $0xe0] sm:$0xff]
        %v1917 = vld [vmem:[#allocation5 + $0xe8] sm:$0xff]
        %v1918 = vld [vmem:[#allocation5 + $0xf0] sm:$0xff]
        %v1919 = vld [vmem:[#allocation5 + $0xf8] sm:$0xff]
        %v1920 = vld [vmem:[#allocation5 + $0x100] sm:$0xff]
        %v1921 = vld [vmem:[#allocation5 + $0x108] sm:$0xff]
        %v1922 = vld [vmem:[#allocation5 + $0x110] sm:$0xff]
        %v1923 = vld [vmem:[#allocation5 + $0x118] sm:$0xff]
        %v1924 = vld [vmem:[#allocation5 + $0x120] sm:$0xff]
        %v1925 = vld [vmem:[#allocation5 + $0x128] sm:$0xff]
        %v1926 = vld [vmem:[#allocation5 + $0x130] sm:$0xff]
        %v1927 = vld [vmem:[#allocation5 + $0x138] sm:$0xff]
        %v1928 = vld [vmem:[#allocation5 + $0x140] sm:$0xff]
        %v1929 = vld [vmem:[#allocation5 + $0x148] sm:$0xff]
        %v1930 = vld [vmem:[#allocation5 + $0x150] sm:$0xff]
        %v1931 = vld [vmem:[#allocation5 + $0x158] sm:$0xff]
        %v1932 = vld [vmem:[#allocation5 + $0x160] sm:$0xff]
        %v1933 = vld [vmem:[#allocation5 + $0x168] sm:$0xff]
        %v1934 = vld [vmem:[#allocation5 + $0x170] sm:$0xff]
        %v1935 = vld [vmem:[#allocation5 + $0x178] sm:$0xff]
        %v1936 = vld [vmem:[#allocation5 + $0x180] sm:$0xff]
        %v1937 = vld [vmem:[#allocation5 + $0x188] sm:$0xff]
        %v1938 = vld [vmem:[#allocation5 + $0x190] sm:$0xff]
        %v1939 = vld [vmem:[#allocation5 + $0x198] sm:$0xff]
        %v1940 = vld [vmem:[#allocation5 + $0x1a0] sm:$0xff]
        %v1941 = vld [vmem:[#allocation5 + $0x1a8] sm:$0xff]
        %v1942 = vld [vmem:[#allocation5 + $0x1b0] sm:$0xff]
        %v1943 = vld [vmem:[#allocation5 + $0x1b8] sm:$0xff]
        %v1944 = vld [vmem:[#allocation5 + $0x1c0] sm:$0xff]
        %v1945 = vld [vmem:[#allocation5 + $0x1c8] sm:$0xff]
        %v1946 = vld [vmem:[#allocation5 + $0x1d0] sm:$0xff]
        %v1947 = vld [vmem:[#allocation5 + $0x1d8] sm:$0xff]
        %v1948 = vld [vmem:[#allocation5 + $0x1e0] sm:$0xff]
        %v1949 = vld [vmem:[#allocation5 + $0x1e8] sm:$0xff]
        %v1950 = vld [vmem:[#allocation5 + $0x1f0] sm:$0xff]
        %v1951 = vld [vmem:[#allocation5 + $0x1f8] sm:$0xff]
        %v1952 = vld [vmem:[#allocation5 + $0x200] sm:$0xff]
        %v1953 = vld [vmem:[#allocation5 + $0x208] sm:$0xff]
        %v1954 = vld [vmem:[#allocation5 + $0x210] sm:$0xff]
        %v1955 = vld [vmem:[#allocation5 + $0x218] sm:$0xff]
        %v1956 = vld [vmem:[#allocation5 + $0x220] sm:$0xff]
        %v1957 = vld [vmem:[#allocation5 + $0x228] sm:$0xff]
        %v1958 = vld [vmem:[#allocation5 + $0x230] sm:$0xff]
        %v1959 = vld [vmem:[#allocation5 + $0x238] sm:$0xff]
        %v1960 = vld [vmem:[#allocation5 + $0x240] sm:$0xff]
        %v1961 = vld [vmem:[#allocation5 + $0x248] sm:$0xff]
        %v1962 = vld [vmem:[#allocation5 + $0x250] sm:$0xff]
        %v1963 = vld [vmem:[#allocation5 + $0x258] sm:$0xff]
        %v1964 = vld [vmem:[#allocation5 + $0x260] sm:$0xff]
        %v1965 = vld [vmem:[#allocation5 + $0x268] sm:$0xff]
        %v1966 = vld [vmem:[#allocation5 + $0x270] sm:$0xff]
        %v1967 = vld [vmem:[#allocation5 + $0x278] sm:$0xff]
        %v1968 = vld [vmem:[#allocation5 + $0x280] sm:$0xff]
        %v1969 = vld [vmem:[#allocation5 + $0x288] sm:$0xff]
        %v1970 = vld [vmem:[#allocation5 + $0x290] sm:$0xff]
        %v1971 = vld [vmem:[#allocation5 + $0x298] sm:$0xff]
        %v1972 = vld [vmem:[#allocation5 + $0x2a0] sm:$0xff]
        %v1973 = vld [vmem:[#allocation5 + $0x2a8] sm:$0xff]
        %v1974 = vld [vmem:[#allocation5 + $0x2b0] sm:$0xff]
        %v1975 = vld [vmem:[#allocation5 + $0x2b8] sm:$0xff]
        %v1976 = vld [vmem:[#allocation5 + $0x2c0] sm:$0xff]
        %v1977 = vld [vmem:[#allocation5 + $0x2c8] sm:$0xff]
        %v1978 = vld [vmem:[#allocation5 + $0x2d0] sm:$0xff]
        %v1979 = vld [vmem:[#allocation5 + $0x2d8] sm:$0xff]
        %v1980 = vld [vmem:[#allocation5 + $0x2e0] sm:$0xff]
        %v1981 = vld [vmem:[#allocation5 + $0x2e8] sm:$0xff]
        %v1982 = vld [vmem:[#allocation5 + $0x2f0] sm:$0xff]
        %v1983 = vld [vmem:[#allocation5 + $0x2f8] sm:$0xff]
        %v1984 = vld [vmem:[#allocation5 + $0x300] sm:$0xff]
        %v1985 = vld [vmem:[#allocation5 + $0x308] sm:$0xff]
        %v1986 = vld [vmem:[#allocation5 + $0x310] sm:$0xff]
        %v1987 = vld [vmem:[#allocation5 + $0x318] sm:$0xff]
        %v1988 = vld [vmem:[#allocation5 + $0x320] sm:$0xff]
        %v1989 = vld [vmem:[#allocation5 + $0x328] sm:$0xff]
        %v1990 = vld [vmem:[#allocation5 + $0x330] sm:$0xff]
        %v1991 = vld [vmem:[#allocation5 + $0x338] sm:$0xff]
        %v1992 = vld [vmem:[#allocation5 + $0x340] sm:$0xff]
        %v1993 = vld [vmem:[#allocation5 + $0x348] sm:$0xff]
        %v1994 = vld [vmem:[#allocation5 + $0x350] sm:$0xff]
        %v1995 = vld [vmem:[#allocation5 + $0x358] sm:$0xff]
        %v1996 = vld [vmem:[#allocation5 + $0x360] sm:$0xff]
        %v1997 = vld [vmem:[#allocation5 + $0x368] sm:$0xff]
        %v1998 = vld [vmem:[#allocation5 + $0x370] sm:$0xff]
        %v1999 = vld [vmem:[#allocation5 + $0x378] sm:$0xff]
        %v2000 = vld [vmem:[#allocation5 + $0x380] sm:$0xff]
        %v2001 = vld [vmem:[#allocation5 + $0x388] sm:$0xff]
        %v2002 = vld [vmem:[#allocation5 + $0x390] sm:$0xff]
        %v2003 = vld [vmem:[#allocation5 + $0x398] sm:$0xff]
        %v2004 = vld [vmem:[#allocation5 + $0x3a0] sm:$0xff]
        %v2005 = vld [vmem:[#allocation5 + $0x3a8] sm:$0xff]
        %v2006 = vld [vmem:[#allocation5 + $0x3b0] sm:$0xff]
        %v2007 = vld [vmem:[#allocation5 + $0x3b8] sm:$0xff]
        %v2008 = vld [vmem:[#allocation5 + $0x3c0] sm:$0xff]
        %v2009 = vld [vmem:[#allocation5 + $0x3c8] sm:$0xff]
        %v2010 = vld [vmem:[#allocation5 + $0x3d0] sm:$0xff]
        %v2011 = vld [vmem:[#allocation5 + $0x3d8] sm:$0xff]
        %v2012 = vld [vmem:[#allocation5 + $0x3e0] sm:$0xff]
        %v2013 = vld [vmem:[#allocation5 + $0x3e8] sm:$0xff]
        %v2014 = vld [vmem:[#allocation5 + $0x3f0] sm:$0xff]
        %v2015 = vld [vmem:[#allocation5 + $0x3f8] sm:$0xff]
        %v2016 = vand.u32 %v1889, 4294901760
        %2017 = vmatprep.subr.mxu0 %v2016
        %v2018 = vand.u32 %v1888, 4294901760
        %2019 = vmatpush1.msra.mxu0 %v2018
        %v2020 = vand.u32 %v1891, 4294901760
        %2021 = vmatprep.subr.mxu0 %v2020
        %v2022 = vand.u32 %v1890, 4294901760
        %2023 = vmatpush1.msra.mxu0 %v2022
        %v2024 = vand.u32 %v1893, 4294901760
        %2025 = vmatprep.subr.mxu0 %v2024
        %v2026 = vand.u32 %v1892, 4294901760
        %2027 = vmatpush1.msra.mxu0 %v2026
        %v2028 = vand.u32 %v1895, 4294901760
        %2029 = vmatprep.subr.mxu0 %v2028
        %v2030 = vand.u32 %v1894, 4294901760
        %2031 = vmatpush1.msra.mxu0 %v2030
        %v2032 = vand.u32 %v1897, 4294901760
        %2033 = vmatprep.subr.mxu0 %v2032
        %v2034 = vand.u32 %v1896, 4294901760
        %2035 = vmatpush1.msra.mxu0 %v2034
        %v2036 = vand.u32 %v1899, 4294901760
        %2037 = vmatprep.subr.mxu0 %v2036
        %v2038 = vand.u32 %v1898, 4294901760
        %2039 = vmatpush1.msra.mxu0 %v2038
        %v2040 = vand.u32 %v1901, 4294901760
        %2041 = vmatprep.subr.mxu0 %v2040
        %v2042 = vand.u32 %v1900, 4294901760
        %2043 = vmatpush1.msra.mxu0 %v2042
        %v2044 = vand.u32 %v1903, 4294901760
        %2045 = vmatprep.subr.mxu0 %v2044
        %v2046 = vand.u32 %v1902, 4294901760
        %2047 = vmatpush1.msra.mxu0 %v2046
        %v2048 = vand.u32 %v1905, 4294901760
        %2049 = vmatprep.subr.mxu0 %v2048
        %v2050 = vand.u32 %v1904, 4294901760
        %2051 = vmatpush1.msra.mxu0 %v2050
        %v2052 = vand.u32 %v1907, 4294901760
        %2053 = vmatprep.subr.mxu0 %v2052
        %v2054 = vand.u32 %v1906, 4294901760
        %2055 = vmatpush1.msra.mxu0 %v2054
        %v2056 = vand.u32 %v1909, 4294901760
        %2057 = vmatprep.subr.mxu0 %v2056
        %v2058 = vand.u32 %v1908, 4294901760
        %2059 = vmatpush1.msra.mxu0 %v2058
        %v2060 = vand.u32 %v1911, 4294901760
        %2061 = vmatprep.subr.mxu0 %v2060
        %v2062 = vand.u32 %v1910, 4294901760
        %2063 = vmatpush1.msra.mxu0 %v2062
        %v2064 = vand.u32 %v1913, 4294901760
        %2065 = vmatprep.subr.mxu0 %v2064
        %v2066 = vand.u32 %v1912, 4294901760
        %2067 = vmatpush1.msra.mxu0 %v2066
        %v2068 = vand.u32 %v1915, 4294901760
        %2069 = vmatprep.subr.mxu0 %v2068
        %v2070 = vand.u32 %v1914, 4294901760
        %2071 = vmatpush1.msra.mxu0 %v2070
        %v2072 = vand.u32 %v1917, 4294901760
        %2073 = vmatprep.subr.mxu0 %v2072
        %v2074 = vand.u32 %v1916, 4294901760
        %2075 = vmatpush1.msra.mxu0 %v2074
        %v2076 = vand.u32 %v1919, 4294901760
        %2077 = vmatprep.subr.mxu0 %v2076
        %v2078 = vand.u32 %v1918, 4294901760
        %2079 = vmatpush1.msra.mxu0 %v2078
        %v2080 = vand.u32 %v1921, 4294901760
        %2081 = vmatprep.subr.mxu0 %v2080
        %v2082 = vand.u32 %v1920, 4294901760
        %2083 = vmatpush1.msra.mxu0 %v2082
        %v2084 = vand.u32 %v1923, 4294901760
        %2085 = vmatprep.subr.mxu0 %v2084
        %v2086 = vand.u32 %v1922, 4294901760
        %2087 = vmatpush1.msra.mxu0 %v2086
        %v2088 = vand.u32 %v1925, 4294901760
        %2089 = vmatprep.subr.mxu0 %v2088
        %v2090 = vand.u32 %v1924, 4294901760
        %2091 = vmatpush1.msra.mxu0 %v2090
        %v2092 = vand.u32 %v1927, 4294901760
        %2093 = vmatprep.subr.mxu0 %v2092
        %v2094 = vand.u32 %v1926, 4294901760
        %2095 = vmatpush1.msra.mxu0 %v2094
        %v2096 = vand.u32 %v1929, 4294901760
        %2097 = vmatprep.subr.mxu0 %v2096
        %v2098 = vand.u32 %v1928, 4294901760
        %2099 = vmatpush1.msra.mxu0 %v2098
        %v2100 = vand.u32 %v1931, 4294901760
        %2101 = vmatprep.subr.mxu0 %v2100
        %v2102 = vand.u32 %v1930, 4294901760
        %2103 = vmatpush1.msra.mxu0 %v2102
        %v2104 = vand.u32 %v1933, 4294901760
        %2105 = vmatprep.subr.mxu0 %v2104
        %v2106 = vand.u32 %v1932, 4294901760
        %2107 = vmatpush1.msra.mxu0 %v2106
        %v2108 = vand.u32 %v1935, 4294901760
        %2109 = vmatprep.subr.mxu0 %v2108
        %v2110 = vand.u32 %v1934, 4294901760
        %2111 = vmatpush1.msra.mxu0 %v2110
        %v2112 = vand.u32 %v1937, 4294901760
        %2113 = vmatprep.subr.mxu0 %v2112
        %v2114 = vand.u32 %v1936, 4294901760
        %2115 = vmatpush1.msra.mxu0 %v2114
        %v2116 = vand.u32 %v1939, 4294901760
        %2117 = vmatprep.subr.mxu0 %v2116
        %v2118 = vand.u32 %v1938, 4294901760
        %2119 = vmatpush1.msra.mxu0 %v2118
        %v2120 = vand.u32 %v1941, 4294901760
        %2121 = vmatprep.subr.mxu0 %v2120
        %v2122 = vand.u32 %v1940, 4294901760
        %2123 = vmatpush1.msra.mxu0 %v2122
        %v2124 = vand.u32 %v1943, 4294901760
        %2125 = vmatprep.subr.mxu0 %v2124
        %v2126 = vand.u32 %v1942, 4294901760
        %2127 = vmatpush1.msra.mxu0 %v2126
        %v2128 = vand.u32 %v1945, 4294901760
        %2129 = vmatprep.subr.mxu0 %v2128
        %v2130 = vand.u32 %v1944, 4294901760
        %2131 = vmatpush1.msra.mxu0 %v2130
        %v2132 = vand.u32 %v1947, 4294901760
        %2133 = vmatprep.subr.mxu0 %v2132
        %v2134 = vand.u32 %v1946, 4294901760
        %2135 = vmatpush1.msra.mxu0 %v2134
        %v2136 = vand.u32 %v1949, 4294901760
        %2137 = vmatprep.subr.mxu0 %v2136
        %v2138 = vand.u32 %v1948, 4294901760
        %2139 = vmatpush1.msra.mxu0 %v2138
        %v2140 = vand.u32 %v1951, 4294901760
        %2141 = vmatprep.subr.mxu0 %v2140
        %v2142 = vand.u32 %v1950, 4294901760
        %2143 = vmatpush1.msra.mxu0 %v2142
        %v2144 = vand.u32 %v1869, 4294901760
        %v2145 = vsub.f32 %v1869, %v2144
        %v2146 = vand.u32 %v2145, 4294901760
        %v2147 = vsub.f32 %v2145, %v2146
        %v2148 = vand.u32 %v2147, 4294901760
        %2149 = vmatprep.mubr.f32.mxu0 %v2148
        %v2150 = vand.u32 %v1868, 4294901760
        %v2151 = vsub.f32 %v1868, %v2150
        %v2152 = vand.u32 %v2151, 4294901760
        %v2153 = vsub.f32 %v2151, %v2152
        %v2154 = vand.u32 %v2153, 4294901760
        %2155 = vmatmul.mubr.f32.gmra.mrb[0].mxu0 %v2154
        %v2156 = vpop.f32.mrb[0].mxu0
        %v2157 = vadd.f32 0.0, %v2156
        %v2158 = vpop.f32.mrb[0].mxu0
        %v2159 = vadd.f32 0.0, %v2158
        %2160 = vdwg.mxu0
        %v2161 = vand.u32 %v1889, 4294901760
        %v2162 = vsub.f32 %v1889, %v2161
        %v2163 = vand.u32 %v2162, 4294901760
        %v2164 = vsub.f32 %v2162, %v2163
        %v2165 = vand.u32 %v2164, 4294901760
        %2166 = vmatprep.subr.mxu0 %v2165
        %v2167 = vand.u32 %v1888, 4294901760
        %v2168 = vsub.f32 %v1888, %v2167
        %v2169 = vand.u32 %v2168, 4294901760
        %v2170 = vsub.f32 %v2168, %v2169
        %v2171 = vand.u32 %v2170, 4294901760
        %2172 = vmatpush1.msra.mxu0 %v2171
        %v2173 = vand.u32 %v1891, 4294901760
        %v2174 = vsub.f32 %v1891, %v2173
        %v2175 = vand.u32 %v2174, 4294901760
        %v2176 = vsub.f32 %v2174, %v2175
        %v2177 = vand.u32 %v2176, 4294901760
        %2178 = vmatprep.subr.mxu0 %v2177
        %v2179 = vand.u32 %v1890, 4294901760
        %v2180 = vsub.f32 %v1890, %v2179
        %v2181 = vand.u32 %v2180, 4294901760
        %v2182 = vsub.f32 %v2180, %v2181
        %v2183 = vand.u32 %v2182, 4294901760
        %2184 = vmatpush1.msra.mxu0 %v2183
        %v2185 = vand.u32 %v1893, 4294901760
        %v2186 = vsub.f32 %v1893, %v2185
        %v2187 = vand.u32 %v2186, 4294901760
        %v2188 = vsub.f32 %v2186, %v2187
        %v2189 = vand.u32 %v2188, 4294901760
        %2190 = vmatprep.subr.mxu0 %v2189
        %v2191 = vand.u32 %v1892, 4294901760
        %v2192 = vsub.f32 %v1892, %v2191
        %v2193 = vand.u32 %v2192, 4294901760
        %v2194 = vsub.f32 %v2192, %v2193
        %v2195 = vand.u32 %v2194, 4294901760
        %2196 = vmatpush1.msra.mxu0 %v2195
        %v2197 = vand.u32 %v1895, 4294901760
        %v2198 = vsub.f32 %v1895, %v2197
        %v2199 = vand.u32 %v2198, 4294901760
        %v2200 = vsub.f32 %v2198, %v2199
        %v2201 = vand.u32 %v2200, 4294901760
        %2202 = vmatprep.subr.mxu0 %v2201
        %v2203 = vand.u32 %v1894, 4294901760
        %v2204 = vsub.f32 %v1894, %v2203
        %v2205 = vand.u32 %v2204, 4294901760
        %v2206 = vsub.f32 %v2204, %v2205
        %v2207 = vand.u32 %v2206, 4294901760
        %2208 = vmatpush1.msra.mxu0 %v2207
        %v2209 = vand.u32 %v1897, 4294901760
        %v2210 = vsub.f32 %v1897, %v2209
        %v2211 = vand.u32 %v2210, 4294901760
        %v2212 = vsub.f32 %v2210, %v2211
        %v2213 = vand.u32 %v2212, 4294901760
        %2214 = vmatprep.subr.mxu0 %v2213
        %v2215 = vand.u32 %v1896, 4294901760
        %v2216 = vsub.f32 %v1896, %v2215
        %v2217 = vand.u32 %v2216, 4294901760
        %v2218 = vsub.f32 %v2216, %v2217
        %v2219 = vand.u32 %v2218, 4294901760
        %2220 = vmatpush1.msra.mxu0 %v2219
        %v2221 = vand.u32 %v1899, 4294901760
        %v2222 = vsub.f32 %v1899, %v2221
        %v2223 = vand.u32 %v2222, 4294901760
        %v2224 = vsub.f32 %v2222, %v2223
        %v2225 = vand.u32 %v2224, 4294901760
        %2226 = vmatprep.subr.mxu0 %v2225
        %v2227 = vand.u32 %v1898, 4294901760
        %v2228 = vsub.f32 %v1898, %v2227
        %v2229 = vand.u32 %v2228, 4294901760
        %v2230 = vsub.f32 %v2228, %v2229
        %v2231 = vand.u32 %v2230, 4294901760
        %2232 = vmatpush1.msra.mxu0 %v2231
        %v2233 = vand.u32 %v1901, 4294901760
        %v2234 = vsub.f32 %v1901, %v2233
        %v2235 = vand.u32 %v2234, 4294901760
        %v2236 = vsub.f32 %v2234, %v2235
        %v2237 = vand.u32 %v2236, 4294901760
        %2238 = vmatprep.subr.mxu0 %v2237
        %v2239 = vand.u32 %v1900, 4294901760
        %v2240 = vsub.f32 %v1900, %v2239
        %v2241 = vand.u32 %v2240, 4294901760
        %v2242 = vsub.f32 %v2240, %v2241
        %v2243 = vand.u32 %v2242, 4294901760
        %2244 = vmatpush1.msra.mxu0 %v2243
        %v2245 = vand.u32 %v1903, 4294901760
        %v2246 = vsub.f32 %v1903, %v2245
        %v2247 = vand.u32 %v2246, 4294901760
        %v2248 = vsub.f32 %v2246, %v2247
        %v2249 = vand.u32 %v2248, 4294901760
        %2250 = vmatprep.subr.mxu0 %v2249
        %v2251 = vand.u32 %v1902, 4294901760
        %v2252 = vsub.f32 %v1902, %v2251
        %v2253 = vand.u32 %v2252, 4294901760
        %v2254 = vsub.f32 %v2252, %v2253
        %v2255 = vand.u32 %v2254, 4294901760
        %2256 = vmatpush1.msra.mxu0 %v2255
        %v2257 = vand.u32 %v1905, 4294901760
        %v2258 = vsub.f32 %v1905, %v2257
        %v2259 = vand.u32 %v2258, 4294901760
        %v2260 = vsub.f32 %v2258, %v2259
        %v2261 = vand.u32 %v2260, 4294901760
        %2262 = vmatprep.subr.mxu0 %v2261
        %v2263 = vand.u32 %v1904, 4294901760
        %v2264 = vsub.f32 %v1904, %v2263
        %v2265 = vand.u32 %v2264, 4294901760
        %v2266 = vsub.f32 %v2264, %v2265
        %v2267 = vand.u32 %v2266, 4294901760
        %2268 = vmatpush1.msra.mxu0 %v2267
        %v2269 = vand.u32 %v1907, 4294901760
        %v2270 = vsub.f32 %v1907, %v2269
        %v2271 = vand.u32 %v2270, 4294901760
        %v2272 = vsub.f32 %v2270, %v2271
        %v2273 = vand.u32 %v2272, 4294901760
        %2274 = vmatprep.subr.mxu0 %v2273
        %v2275 = vand.u32 %v1906, 4294901760
        %v2276 = vsub.f32 %v1906, %v2275
        %v2277 = vand.u32 %v2276, 4294901760
        %v2278 = vsub.f32 %v2276, %v2277
        %v2279 = vand.u32 %v2278, 4294901760
        %2280 = vmatpush1.msra.mxu0 %v2279
        %v2281 = vand.u32 %v1909, 4294901760
        %v2282 = vsub.f32 %v1909, %v2281
        %v2283 = vand.u32 %v2282, 4294901760
        %v2284 = vsub.f32 %v2282, %v2283
        %v2285 = vand.u32 %v2284, 4294901760
        %2286 = vmatprep.subr.mxu0 %v2285
        %v2287 = vand.u32 %v1908, 4294901760
        %v2288 = vsub.f32 %v1908, %v2287
        %v2289 = vand.u32 %v2288, 4294901760
        %v2290 = vsub.f32 %v2288, %v2289
        %v2291 = vand.u32 %v2290, 4294901760
        %2292 = vmatpush1.msra.mxu0 %v2291
        %v2293 = vand.u32 %v1911, 4294901760
        %v2294 = vsub.f32 %v1911, %v2293
        %v2295 = vand.u32 %v2294, 4294901760
        %v2296 = vsub.f32 %v2294, %v2295
        %v2297 = vand.u32 %v2296, 4294901760
        %2298 = vmatprep.subr.mxu0 %v2297
        %v2299 = vand.u32 %v1910, 4294901760
        %v2300 = vsub.f32 %v1910, %v2299
        %v2301 = vand.u32 %v2300, 4294901760
        %v2302 = vsub.f32 %v2300, %v2301
        %v2303 = vand.u32 %v2302, 4294901760
        %2304 = vmatpush1.msra.mxu0 %v2303
        %v2305 = vand.u32 %v1913, 4294901760
        %v2306 = vsub.f32 %v1913, %v2305
        %v2307 = vand.u32 %v2306, 4294901760
        %v2308 = vsub.f32 %v2306, %v2307
        %v2309 = vand.u32 %v2308, 4294901760
        %2310 = vmatprep.subr.mxu0 %v2309
        %v2311 = vand.u32 %v1912, 4294901760
        %v2312 = vsub.f32 %v1912, %v2311
        %v2313 = vand.u32 %v2312, 4294901760
        %v2314 = vsub.f32 %v2312, %v2313
        %v2315 = vand.u32 %v2314, 4294901760
        %2316 = vmatpush1.msra.mxu0 %v2315
        %v2317 = vand.u32 %v1915, 4294901760
        %v2318 = vsub.f32 %v1915, %v2317
        %v2319 = vand.u32 %v2318, 4294901760
        %v2320 = vsub.f32 %v2318, %v2319
        %v2321 = vand.u32 %v2320, 4294901760
        %2322 = vmatprep.subr.mxu0 %v2321
        %v2323 = vand.u32 %v1914, 4294901760
        %v2324 = vsub.f32 %v1914, %v2323
        %v2325 = vand.u32 %v2324, 4294901760
        %v2326 = vsub.f32 %v2324, %v2325
        %v2327 = vand.u32 %v2326, 4294901760
        %2328 = vmatpush1.msra.mxu0 %v2327
        %v2329 = vand.u32 %v1917, 4294901760
        %v2330 = vsub.f32 %v1917, %v2329
        %v2331 = vand.u32 %v2330, 4294901760
        %v2332 = vsub.f32 %v2330, %v2331
        %v2333 = vand.u32 %v2332, 4294901760
        %2334 = vmatprep.subr.mxu0 %v2333
        %v2335 = vand.u32 %v1916, 4294901760
        %v2336 = vsub.f32 %v1916, %v2335
        %v2337 = vand.u32 %v2336, 4294901760
        %v2338 = vsub.f32 %v2336, %v2337
        %v2339 = vand.u32 %v2338, 4294901760
        %2340 = vmatpush1.msra.mxu0 %v2339
        %v2341 = vand.u32 %v1919, 4294901760
        %v2342 = vsub.f32 %v1919, %v2341
        %v2343 = vand.u32 %v2342, 4294901760
        %v2344 = vsub.f32 %v2342, %v2343
        %v2345 = vand.u32 %v2344, 4294901760
        %2346 = vmatprep.subr.mxu0 %v2345
        %v2347 = vand.u32 %v1918, 4294901760
        %v2348 = vsub.f32 %v1918, %v2347
        %v2349 = vand.u32 %v2348, 4294901760
        %v2350 = vsub.f32 %v2348, %v2349
        %v2351 = vand.u32 %v2350, 4294901760
        %2352 = vmatpush1.msra.mxu0 %v2351
        %v2353 = vand.u32 %v1921, 4294901760
        %v2354 = vsub.f32 %v1921, %v2353
        %v2355 = vand.u32 %v2354, 4294901760
        %v2356 = vsub.f32 %v2354, %v2355
        %v2357 = vand.u32 %v2356, 4294901760
        %2358 = vmatprep.subr.mxu0 %v2357
        %v2359 = vand.u32 %v1920, 4294901760
        %v2360 = vsub.f32 %v1920, %v2359
        %v2361 = vand.u32 %v2360, 4294901760
        %v2362 = vsub.f32 %v2360, %v2361
        %v2363 = vand.u32 %v2362, 4294901760
        %2364 = vmatpush1.msra.mxu0 %v2363
        %v2365 = vand.u32 %v1923, 4294901760
        %v2366 = vsub.f32 %v1923, %v2365
        %v2367 = vand.u32 %v2366, 4294901760
        %v2368 = vsub.f32 %v2366, %v2367
        %v2369 = vand.u32 %v2368, 4294901760
        %2370 = vmatprep.subr.mxu0 %v2369
        %v2371 = vand.u32 %v1922, 4294901760
        %v2372 = vsub.f32 %v1922, %v2371
        %v2373 = vand.u32 %v2372, 4294901760
        %v2374 = vsub.f32 %v2372, %v2373
        %v2375 = vand.u32 %v2374, 4294901760
        %2376 = vmatpush1.msra.mxu0 %v2375
        %v2377 = vand.u32 %v1925, 4294901760
        %v2378 = vsub.f32 %v1925, %v2377
        %v2379 = vand.u32 %v2378, 4294901760
        %v2380 = vsub.f32 %v2378, %v2379
        %v2381 = vand.u32 %v2380, 4294901760
        %2382 = vmatprep.subr.mxu0 %v2381
        %v2383 = vand.u32 %v1924, 4294901760
        %v2384 = vsub.f32 %v1924, %v2383
        %v2385 = vand.u32 %v2384, 4294901760
        %v2386 = vsub.f32 %v2384, %v2385
        %v2387 = vand.u32 %v2386, 4294901760
        %2388 = vmatpush1.msra.mxu0 %v2387
        %v2389 = vand.u32 %v1927, 4294901760
        %v2390 = vsub.f32 %v1927, %v2389
        %v2391 = vand.u32 %v2390, 4294901760
        %v2392 = vsub.f32 %v2390, %v2391
        %v2393 = vand.u32 %v2392, 4294901760
        %2394 = vmatprep.subr.mxu0 %v2393
        %v2395 = vand.u32 %v1926, 4294901760
        %v2396 = vsub.f32 %v1926, %v2395
        %v2397 = vand.u32 %v2396, 4294901760
        %v2398 = vsub.f32 %v2396, %v2397
        %v2399 = vand.u32 %v2398, 4294901760
        %2400 = vmatpush1.msra.mxu0 %v2399
        %v2401 = vand.u32 %v1929, 4294901760
        %v2402 = vsub.f32 %v1929, %v2401
        %v2403 = vand.u32 %v2402, 4294901760
        %v2404 = vsub.f32 %v2402, %v2403
        %v2405 = vand.u32 %v2404, 4294901760
        %2406 = vmatprep.subr.mxu0 %v2405
        %v2407 = vand.u32 %v1928, 4294901760
        %v2408 = vsub.f32 %v1928, %v2407
        %v2409 = vand.u32 %v2408, 4294901760
        %v2410 = vsub.f32 %v2408, %v2409
        %v2411 = vand.u32 %v2410, 4294901760
        %2412 = vmatpush1.msra.mxu0 %v2411
        %v2413 = vand.u32 %v1931, 4294901760
        %v2414 = vsub.f32 %v1931, %v2413
        %v2415 = vand.u32 %v2414, 4294901760
        %v2416 = vsub.f32 %v2414, %v2415
        %v2417 = vand.u32 %v2416, 4294901760
        %2418 = vmatprep.subr.mxu0 %v2417
        %v2419 = vand.u32 %v1930, 4294901760
        %v2420 = vsub.f32 %v1930, %v2419
        %v2421 = vand.u32 %v2420, 4294901760
        %v2422 = vsub.f32 %v2420, %v2421
        %v2423 = vand.u32 %v2422, 4294901760
        %2424 = vmatpush1.msra.mxu0 %v2423
        %v2425 = vand.u32 %v1933, 4294901760
        %v2426 = vsub.f32 %v1933, %v2425
        %v2427 = vand.u32 %v2426, 4294901760
        %v2428 = vsub.f32 %v2426, %v2427
        %v2429 = vand.u32 %v2428, 4294901760
        %2430 = vmatprep.subr.mxu0 %v2429
        %v2431 = vand.u32 %v1932, 4294901760
        %v2432 = vsub.f32 %v1932, %v2431
        %v2433 = vand.u32 %v2432, 4294901760
        %v2434 = vsub.f32 %v2432, %v2433
        %v2435 = vand.u32 %v2434, 4294901760
        %2436 = vmatpush1.msra.mxu0 %v2435
        %v2437 = vand.u32 %v1935, 4294901760
        %v2438 = vsub.f32 %v1935, %v2437
        %v2439 = vand.u32 %v2438, 4294901760
        %v2440 = vsub.f32 %v2438, %v2439
        %v2441 = vand.u32 %v2440, 4294901760
        %2442 = vmatprep.subr.mxu0 %v2441
        %v2443 = vand.u32 %v1934, 4294901760
        %v2444 = vsub.f32 %v1934, %v2443
        %v2445 = vand.u32 %v2444, 4294901760
        %v2446 = vsub.f32 %v2444, %v2445
        %v2447 = vand.u32 %v2446, 4294901760
        %2448 = vmatpush1.msra.mxu0 %v2447
        %v2449 = vand.u32 %v1937, 4294901760
        %v2450 = vsub.f32 %v1937, %v2449
        %v2451 = vand.u32 %v2450, 4294901760
        %v2452 = vsub.f32 %v2450, %v2451
        %v2453 = vand.u32 %v2452, 4294901760
        %2454 = vmatprep.subr.mxu0 %v2453
        %v2455 = vand.u32 %v1936, 4294901760
        %v2456 = vsub.f32 %v1936, %v2455
        %v2457 = vand.u32 %v2456, 4294901760
        %v2458 = vsub.f32 %v2456, %v2457
        %v2459 = vand.u32 %v2458, 4294901760
        %2460 = vmatpush1.msra.mxu0 %v2459
        %v2461 = vand.u32 %v1939, 4294901760
        %v2462 = vsub.f32 %v1939, %v2461
        %v2463 = vand.u32 %v2462, 4294901760
        %v2464 = vsub.f32 %v2462, %v2463
        %v2465 = vand.u32 %v2464, 4294901760
        %2466 = vmatprep.subr.mxu0 %v2465
        %v2467 = vand.u32 %v1938, 4294901760
        %v2468 = vsub.f32 %v1938, %v2467
        %v2469 = vand.u32 %v2468, 4294901760
        %v2470 = vsub.f32 %v2468, %v2469
        %v2471 = vand.u32 %v2470, 4294901760
        %2472 = vmatpush1.msra.mxu0 %v2471
        %v2473 = vand.u32 %v1941, 4294901760
        %v2474 = vsub.f32 %v1941, %v2473
        %v2475 = vand.u32 %v2474, 4294901760
        %v2476 = vsub.f32 %v2474, %v2475
        %v2477 = vand.u32 %v2476, 4294901760
        %2478 = vmatprep.subr.mxu0 %v2477
        %v2479 = vand.u32 %v1940, 4294901760
        %v2480 = vsub.f32 %v1940, %v2479
        %v2481 = vand.u32 %v2480, 4294901760
        %v2482 = vsub.f32 %v2480, %v2481
        %v2483 = vand.u32 %v2482, 4294901760
        %2484 = vmatpush1.msra.mxu0 %v2483
        %v2485 = vand.u32 %v1943, 4294901760
        %v2486 = vsub.f32 %v1943, %v2485
        %v2487 = vand.u32 %v2486, 4294901760
        %v2488 = vsub.f32 %v2486, %v2487
        %v2489 = vand.u32 %v2488, 4294901760
        %2490 = vmatprep.subr.mxu0 %v2489
        %v2491 = vand.u32 %v1942, 4294901760
        %v2492 = vsub.f32 %v1942, %v2491
        %v2493 = vand.u32 %v2492, 4294901760
        %v2494 = vsub.f32 %v2492, %v2493
        %v2495 = vand.u32 %v2494, 4294901760
        %2496 = vmatpush1.msra.mxu0 %v2495
        %v2497 = vand.u32 %v1945, 4294901760
        %v2498 = vsub.f32 %v1945, %v2497
        %v2499 = vand.u32 %v2498, 4294901760
        %v2500 = vsub.f32 %v2498, %v2499
        %v2501 = vand.u32 %v2500, 4294901760
        %2502 = vmatprep.subr.mxu0 %v2501
        %v2503 = vand.u32 %v1944, 4294901760
        %v2504 = vsub.f32 %v1944, %v2503
        %v2505 = vand.u32 %v2504, 4294901760
        %v2506 = vsub.f32 %v2504, %v2505
        %v2507 = vand.u32 %v2506, 4294901760
        %2508 = vmatpush1.msra.mxu0 %v2507
        %v2509 = vand.u32 %v1947, 4294901760
        %v2510 = vsub.f32 %v1947, %v2509
        %v2511 = vand.u32 %v2510, 4294901760
        %v2512 = vsub.f32 %v2510, %v2511
        %v2513 = vand.u32 %v2512, 4294901760
        %2514 = vmatprep.subr.mxu0 %v2513
        %v2515 = vand.u32 %v1946, 4294901760
        %v2516 = vsub.f32 %v1946, %v2515
        %v2517 = vand.u32 %v2516, 4294901760
        %v2518 = vsub.f32 %v2516, %v2517
        %v2519 = vand.u32 %v2518, 4294901760
        %2520 = vmatpush1.msra.mxu0 %v2519
        %v2521 = vand.u32 %v1949, 4294901760
        %v2522 = vsub.f32 %v1949, %v2521
        %v2523 = vand.u32 %v2522, 4294901760
        %v2524 = vsub.f32 %v2522, %v2523
        %v2525 = vand.u32 %v2524, 4294901760
        %2526 = vmatprep.subr.mxu0 %v2525
        %v2527 = vand.u32 %v1948, 4294901760
        %v2528 = vsub.f32 %v1948, %v2527
        %v2529 = vand.u32 %v2528, 4294901760
        %v2530 = vsub.f32 %v2528, %v2529
        %v2531 = vand.u32 %v2530, 4294901760
        %2532 = vmatpush1.msra.mxu0 %v2531
        %v2533 = vand.u32 %v1951, 4294901760
        %v2534 = vsub.f32 %v1951, %v2533
        %v2535 = vand.u32 %v2534, 4294901760
        %v2536 = vsub.f32 %v2534, %v2535
        %v2537 = vand.u32 %v2536, 4294901760
        %2538 = vmatprep.subr.mxu0 %v2537
        %v2539 = vand.u32 %v1950, 4294901760
        %v2540 = vsub.f32 %v1950, %v2539
        %v2541 = vand.u32 %v2540, 4294901760
        %v2542 = vsub.f32 %v2540, %v2541
        %v2543 = vand.u32 %v2542, 4294901760
        %2544 = vmatpush1.msra.mxu0 %v2543
        %v2545 = vand.u32 %v1869, 4294901760
        %2546 = vmatprep.mubr.f32.mxu0 %v2545
        %v2547 = vand.u32 %v1868, 4294901760
        %2548 = vmatmul.mubr.f32.gmra.mrb[0].mxu0 %v2547
        %v2549 = vpop.f32.mrb[0].mxu0
        %v2550 = vadd.f32 %v2157, %v2549
        %v2551 = vpop.f32.mrb[0].mxu0
        %v2552 = vadd.f32 %v2159, %v2551
        %2553 = vdwg.mxu0
        %v2554 = vand.u32 %v1889, 4294901760
        %v2555 = vsub.f32 %v1889, %v2554
        %2556 = vmatprep.subr.mxu0 %v2555
        %v2557 = vand.u32 %v1888, 4294901760
        %v2558 = vsub.f32 %v1888, %v2557
        %2559 = vmatpush1.msra.mxu0 %v2558
        %v2560 = vand.u32 %v1891, 4294901760
        %v2561 = vsub.f32 %v1891, %v2560
        %2562 = vmatprep.subr.mxu0 %v2561
        %v2563 = vand.u32 %v1890, 4294901760
        %v2564 = vsub.f32 %v1890, %v2563
        %2565 = vmatpush1.msra.mxu0 %v2564
        %v2566 = vand.u32 %v1893, 4294901760
        %v2567 = vsub.f32 %v1893, %v2566
        %2568 = vmatprep.subr.mxu0 %v2567
        %v2569 = vand.u32 %v1892, 4294901760
        %v2570 = vsub.f32 %v1892, %v2569
        %2571 = vmatpush1.msra.mxu0 %v2570
        %v2572 = vand.u32 %v1895, 4294901760
        %v2573 = vsub.f32 %v1895, %v2572
        %2574 = vmatprep.subr.mxu0 %v2573
        %v2575 = vand.u32 %v1894, 4294901760
        %v2576 = vsub.f32 %v1894, %v2575
        %2577 = vmatpush1.msra.mxu0 %v2576
        %v2578 = vand.u32 %v1897, 4294901760
        %v2579 = vsub.f32 %v1897, %v2578
        %2580 = vmatprep.subr.mxu0 %v2579
        %v2581 = vand.u32 %v1896, 4294901760
        %v2582 = vsub.f32 %v1896, %v2581
        %2583 = vmatpush1.msra.mxu0 %v2582
        %v2584 = vand.u32 %v1899, 4294901760
        %v2585 = vsub.f32 %v1899, %v2584
        %2586 = vmatprep.subr.mxu0 %v2585
        %v2587 = vand.u32 %v1898, 4294901760
        %v2588 = vsub.f32 %v1898, %v2587
        %2589 = vmatpush1.msra.mxu0 %v2588
        %v2590 = vand.u32 %v1901, 4294901760
        %v2591 = vsub.f32 %v1901, %v2590
        %2592 = vmatprep.subr.mxu0 %v2591
        %v2593 = vand.u32 %v1900, 4294901760
        %v2594 = vsub.f32 %v1900, %v2593
        %2595 = vmatpush1.msra.mxu0 %v2594
        %v2596 = vand.u32 %v1903, 4294901760
        %v2597 = vsub.f32 %v1903, %v2596
        %2598 = vmatprep.subr.mxu0 %v2597
        %v2599 = vand.u32 %v1902, 4294901760
        %v2600 = vsub.f32 %v1902, %v2599
        %2601 = vmatpush1.msra.mxu0 %v2600
        %v2602 = vand.u32 %v1905, 4294901760
        %v2603 = vsub.f32 %v1905, %v2602
        %2604 = vmatprep.subr.mxu0 %v2603
        %v2605 = vand.u32 %v1904, 4294901760
        %v2606 = vsub.f32 %v1904, %v2605
        %2607 = vmatpush1.msra.mxu0 %v2606
        %v2608 = vand.u32 %v1907, 4294901760
        %v2609 = vsub.f32 %v1907, %v2608
        %2610 = vmatprep.subr.mxu0 %v2609
        %v2611 = vand.u32 %v1906, 4294901760
        %v2612 = vsub.f32 %v1906, %v2611
        %2613 = vmatpush1.msra.mxu0 %v2612
        %v2614 = vand.u32 %v1909, 4294901760
        %v2615 = vsub.f32 %v1909, %v2614
        %2616 = vmatprep.subr.mxu0 %v2615
        %v2617 = vand.u32 %v1908, 4294901760
        %v2618 = vsub.f32 %v1908, %v2617
        %2619 = vmatpush1.msra.mxu0 %v2618
        %v2620 = vand.u32 %v1911, 4294901760
        %v2621 = vsub.f32 %v1911, %v2620
        %2622 = vmatprep.subr.mxu0 %v2621
        %v2623 = vand.u32 %v1910, 4294901760
        %v2624 = vsub.f32 %v1910, %v2623
        %2625 = vmatpush1.msra.mxu0 %v2624
        %v2626 = vand.u32 %v1913, 4294901760
        %v2627 = vsub.f32 %v1913, %v2626
        %2628 = vmatprep.subr.mxu0 %v2627
        %v2629 = vand.u32 %v1912, 4294901760
        %v2630 = vsub.f32 %v1912, %v2629
        %2631 = vmatpush1.msra.mxu0 %v2630
        %v2632 = vand.u32 %v1915, 4294901760
        %v2633 = vsub.f32 %v1915, %v2632
        %2634 = vmatprep.subr.mxu0 %v2633
        %v2635 = vand.u32 %v1914, 4294901760
        %v2636 = vsub.f32 %v1914, %v2635
        %2637 = vmatpush1.msra.mxu0 %v2636
        %v2638 = vand.u32 %v1917, 4294901760
        %v2639 = vsub.f32 %v1917, %v2638
        %2640 = vmatprep.subr.mxu0 %v2639
        %v2641 = vand.u32 %v1916, 4294901760
        %v2642 = vsub.f32 %v1916, %v2641
        %2643 = vmatpush1.msra.mxu0 %v2642
        %v2644 = vand.u32 %v1919, 4294901760
        %v2645 = vsub.f32 %v1919, %v2644
        %2646 = vmatprep.subr.mxu0 %v2645
        %v2647 = vand.u32 %v1918, 4294901760
        %v2648 = vsub.f32 %v1918, %v2647
        %2649 = vmatpush1.msra.mxu0 %v2648
        %v2650 = vand.u32 %v1921, 4294901760
        %v2651 = vsub.f32 %v1921, %v2650
        %2652 = vmatprep.subr.mxu0 %v2651
        %v2653 = vand.u32 %v1920, 4294901760
        %v2654 = vsub.f32 %v1920, %v2653
        %2655 = vmatpush1.msra.mxu0 %v2654
        %v2656 = vand.u32 %v1923, 4294901760
        %v2657 = vsub.f32 %v1923, %v2656
        %2658 = vmatprep.subr.mxu0 %v2657
        %v2659 = vand.u32 %v1922, 4294901760
        %v2660 = vsub.f32 %v1922, %v2659
        %2661 = vmatpush1.msra.mxu0 %v2660
        %v2662 = vand.u32 %v1925, 4294901760
        %v2663 = vsub.f32 %v1925, %v2662
        %2664 = vmatprep.subr.mxu0 %v2663
        %v2665 = vand.u32 %v1924, 4294901760
        %v2666 = vsub.f32 %v1924, %v2665
        %2667 = vmatpush1.msra.mxu0 %v2666
        %v2668 = vand.u32 %v1927, 4294901760
        %v2669 = vsub.f32 %v1927, %v2668
        %2670 = vmatprep.subr.mxu0 %v2669
        %v2671 = vand.u32 %v1926, 4294901760
        %v2672 = vsub.f32 %v1926, %v2671
        %2673 = vmatpush1.msra.mxu0 %v2672
        %v2674 = vand.u32 %v1929, 4294901760
        %v2675 = vsub.f32 %v1929, %v2674
        %2676 = vmatprep.subr.mxu0 %v2675
        %v2677 = vand.u32 %v1928, 4294901760
        %v2678 = vsub.f32 %v1928, %v2677
        %2679 = vmatpush1.msra.mxu0 %v2678
        %v2680 = vand.u32 %v1931, 4294901760
        %v2681 = vsub.f32 %v1931, %v2680
        %2682 = vmatprep.subr.mxu0 %v2681
        %v2683 = vand.u32 %v1930, 4294901760
        %v2684 = vsub.f32 %v1930, %v2683
        %2685 = vmatpush1.msra.mxu0 %v2684
        %v2686 = vand.u32 %v1933, 4294901760
        %v2687 = vsub.f32 %v1933, %v2686
        %2688 = vmatprep.subr.mxu0 %v2687
        %v2689 = vand.u32 %v1932, 4294901760
        %v2690 = vsub.f32 %v1932, %v2689
        %2691 = vmatpush1.msra.mxu0 %v2690
        %v2692 = vand.u32 %v1935, 4294901760
        %v2693 = vsub.f32 %v1935, %v2692
        %2694 = vmatprep.subr.mxu0 %v2693
        %v2695 = vand.u32 %v1934, 4294901760
        %v2696 = vsub.f32 %v1934, %v2695
        %2697 = vmatpush1.msra.mxu0 %v2696
        %v2698 = vand.u32 %v1937, 4294901760
        %v2699 = vsub.f32 %v1937, %v2698
        %2700 = vmatprep.subr.mxu0 %v2699
        %v2701 = vand.u32 %v1936, 4294901760
        %v2702 = vsub.f32 %v1936, %v2701
        %2703 = vmatpush1.msra.mxu0 %v2702
        %v2704 = vand.u32 %v1939, 4294901760
        %v2705 = vsub.f32 %v1939, %v2704
        %2706 = vmatprep.subr.mxu0 %v2705
        %v2707 = vand.u32 %v1938, 4294901760
        %v2708 = vsub.f32 %v1938, %v2707
        %2709 = vmatpush1.msra.mxu0 %v2708
        %v2710 = vand.u32 %v1941, 4294901760
        %v2711 = vsub.f32 %v1941, %v2710
        %2712 = vmatprep.subr.mxu0 %v2711
        %v2713 = vand.u32 %v1940, 4294901760
        %v2714 = vsub.f32 %v1940, %v2713
        %2715 = vmatpush1.msra.mxu0 %v2714
        %v2716 = vand.u32 %v1943, 4294901760
        %v2717 = vsub.f32 %v1943, %v2716
        %2718 = vmatprep.subr.mxu0 %v2717
        %v2719 = vand.u32 %v1942, 4294901760
        %v2720 = vsub.f32 %v1942, %v2719
        %2721 = vmatpush1.msra.mxu0 %v2720
        %v2722 = vand.u32 %v1945, 4294901760
        %v2723 = vsub.f32 %v1945, %v2722
        %2724 = vmatprep.subr.mxu0 %v2723
        %v2725 = vand.u32 %v1944, 4294901760
        %v2726 = vsub.f32 %v1944, %v2725
        %2727 = vmatpush1.msra.mxu0 %v2726
        %v2728 = vand.u32 %v1947, 4294901760
        %v2729 = vsub.f32 %v1947, %v2728
        %2730 = vmatprep.subr.mxu0 %v2729
        %v2731 = vand.u32 %v1946, 4294901760
        %v2732 = vsub.f32 %v1946, %v2731
        %2733 = vmatpush1.msra.mxu0 %v2732
        %v2734 = vand.u32 %v1949, 4294901760
        %v2735 = vsub.f32 %v1949, %v2734
        %2736 = vmatprep.subr.mxu0 %v2735
        %v2737 = vand.u32 %v1948, 4294901760
        %v2738 = vsub.f32 %v1948, %v2737
        %2739 = vmatpush1.msra.mxu0 %v2738
        %v2740 = vand.u32 %v1951, 4294901760
        %v2741 = vsub.f32 %v1951, %v2740
        %2742 = vmatprep.subr.mxu0 %v2741
        %v2743 = vand.u32 %v1950, 4294901760
        %v2744 = vsub.f32 %v1950, %v2743
        %2745 = vmatpush1.msra.mxu0 %v2744
        %v2746 = vand.u32 %v1869, 4294901760
        %v2747 = vsub.f32 %v1869, %v2746
        %2748 = vmatprep.mubr.f32.mxu0 %v2747
        %v2749 = vand.u32 %v1868, 4294901760
        %v2750 = vsub.f32 %v1868, %v2749
        %2751 = vmatmul.mubr.f32.gmra.mrb[0].mxu0 %v2750
        %v2752 = vpop.f32.mrb[0].mxu0
        %v2753 = vadd.f32 %v2550, %v2752
        %v2754 = vpop.f32.mrb[0].mxu0
        %v2755 = vadd.f32 %v2552, %v2754
        %2756 = vdwg.mxu0
        %v2757 = vand.u32 %v1889, 4294901760
        %2758 = vmatprep.subr.mxu0 %v2757
        %v2759 = vand.u32 %v1888, 4294901760
        %2760 = vmatpush1.msra.mxu0 %v2759
        %v2761 = vand.u32 %v1891, 4294901760
        %2762 = vmatprep.subr.mxu0 %v2761
        %v2763 = vand.u32 %v1890, 4294901760
        %2764 = vmatpush1.msra.mxu0 %v2763
        %v2765 = vand.u32 %v1893, 4294901760
        %2766 = vmatprep.subr.mxu0 %v2765
        %v2767 = vand.u32 %v1892, 4294901760
        %2768 = vmatpush1.msra.mxu0 %v2767
        %v2769 = vand.u32 %v1895, 4294901760
        %2770 = vmatprep.subr.mxu0 %v2769
        %v2771 = vand.u32 %v1894, 4294901760
        %2772 = vmatpush1.msra.mxu0 %v2771
        %v2773 = vand.u32 %v1897, 4294901760
        %2774 = vmatprep.subr.mxu0 %v2773
        %v2775 = vand.u32 %v1896, 4294901760
        %2776 = vmatpush1.msra.mxu0 %v2775
        %v2777 = vand.u32 %v1899, 4294901760
        %2778 = vmatprep.subr.mxu0 %v2777
        %v2779 = vand.u32 %v1898, 4294901760
        %2780 = vmatpush1.msra.mxu0 %v2779
        %v2781 = vand.u32 %v1901, 4294901760
        %2782 = vmatprep.subr.mxu0 %v2781
        %v2783 = vand.u32 %v1900, 4294901760
        %2784 = vmatpush1.msra.mxu0 %v2783
        %v2785 = vand.u32 %v1903, 4294901760
        %2786 = vmatprep.subr.mxu0 %v2785
        %v2787 = vand.u32 %v1902, 4294901760
        %2788 = vmatpush1.msra.mxu0 %v2787
        %v2789 = vand.u32 %v1905, 4294901760
        %2790 = vmatprep.subr.mxu0 %v2789
        %v2791 = vand.u32 %v1904, 4294901760
        %2792 = vmatpush1.msra.mxu0 %v2791
        %v2793 = vand.u32 %v1907, 4294901760
        %2794 = vmatprep.subr.mxu0 %v2793
        %v2795 = vand.u32 %v1906, 4294901760
        %2796 = vmatpush1.msra.mxu0 %v2795
        %v2797 = vand.u32 %v1909, 4294901760
        %2798 = vmatprep.subr.mxu0 %v2797
        %v2799 = vand.u32 %v1908, 4294901760
        %2800 = vmatpush1.msra.mxu0 %v2799
        %v2801 = vand.u32 %v1911, 4294901760
        %2802 = vmatprep.subr.mxu0 %v2801
        %v2803 = vand.u32 %v1910, 4294901760
        %2804 = vmatpush1.msra.mxu0 %v2803
        %v2805 = vand.u32 %v1913, 4294901760
        %2806 = vmatprep.subr.mxu0 %v2805
        %v2807 = vand.u32 %v1912, 4294901760
        %2808 = vmatpush1.msra.mxu0 %v2807
        %v2809 = vand.u32 %v1915, 4294901760
        %2810 = vmatprep.subr.mxu0 %v2809
        %v2811 = vand.u32 %v1914, 4294901760
        %2812 = vmatpush1.msra.mxu0 %v2811
        %v2813 = vand.u32 %v1917, 4294901760
        %2814 = vmatprep.subr.mxu0 %v2813
        %v2815 = vand.u32 %v1916, 4294901760
        %2816 = vmatpush1.msra.mxu0 %v2815
        %v2817 = vand.u32 %v1919, 4294901760
        %2818 = vmatprep.subr.mxu0 %v2817
        %v2819 = vand.u32 %v1918, 4294901760
        %2820 = vmatpush1.msra.mxu0 %v2819
        %v2821 = vand.u32 %v1921, 4294901760
        %2822 = vmatprep.subr.mxu0 %v2821
        %v2823 = vand.u32 %v1920, 4294901760
        %2824 = vmatpush1.msra.mxu0 %v2823
        %v2825 = vand.u32 %v1923, 4294901760
        %2826 = vmatprep.subr.mxu0 %v2825
        %v2827 = vand.u32 %v1922, 4294901760
        %2828 = vmatpush1.msra.mxu0 %v2827
        %v2829 = vand.u32 %v1925, 4294901760
        %2830 = vmatprep.subr.mxu0 %v2829
        %v2831 = vand.u32 %v1924, 4294901760
        %2832 = vmatpush1.msra.mxu0 %v2831
        %v2833 = vand.u32 %v1927, 4294901760
        %2834 = vmatprep.subr.mxu0 %v2833
        %v2835 = vand.u32 %v1926, 4294901760
        %2836 = vmatpush1.msra.mxu0 %v2835
        %v2837 = vand.u32 %v1929, 4294901760
        %2838 = vmatprep.subr.mxu0 %v2837
        %v2839 = vand.u32 %v1928, 4294901760
        %2840 = vmatpush1.msra.mxu0 %v2839
        %v2841 = vand.u32 %v1931, 4294901760
        %2842 = vmatprep.subr.mxu0 %v2841
        %v2843 = vand.u32 %v1930, 4294901760
        %2844 = vmatpush1.msra.mxu0 %v2843
        %v2845 = vand.u32 %v1933, 4294901760
        %2846 = vmatprep.subr.mxu0 %v2845
        %v2847 = vand.u32 %v1932, 4294901760
        %2848 = vmatpush1.msra.mxu0 %v2847
        %v2849 = vand.u32 %v1935, 4294901760
        %2850 = vmatprep.subr.mxu0 %v2849
        %v2851 = vand.u32 %v1934, 4294901760
        %2852 = vmatpush1.msra.mxu0 %v2851
        %v2853 = vand.u32 %v1937, 4294901760
        %2854 = vmatprep.subr.mxu0 %v2853
        %v2855 = vand.u32 %v1936, 4294901760
        %2856 = vmatpush1.msra.mxu0 %v2855
        %v2857 = vand.u32 %v1939, 4294901760
        %2858 = vmatprep.subr.mxu0 %v2857
        %v2859 = vand.u32 %v1938, 4294901760
        %2860 = vmatpush1.msra.mxu0 %v2859
        %v2861 = vand.u32 %v1941, 4294901760
        %2862 = vmatprep.subr.mxu0 %v2861
        %v2863 = vand.u32 %v1940, 4294901760
        %2864 = vmatpush1.msra.mxu0 %v2863
        %v2865 = vand.u32 %v1943, 4294901760
        %2866 = vmatprep.subr.mxu0 %v2865
        %v2867 = vand.u32 %v1942, 4294901760
        %2868 = vmatpush1.msra.mxu0 %v2867
        %v2869 = vand.u32 %v1945, 4294901760
        %2870 = vmatprep.subr.mxu0 %v2869
        %v2871 = vand.u32 %v1944, 4294901760
        %2872 = vmatpush1.msra.mxu0 %v2871
        %v2873 = vand.u32 %v1947, 4294901760
        %2874 = vmatprep.subr.mxu0 %v2873
        %v2875 = vand.u32 %v1946, 4294901760
        %2876 = vmatpush1.msra.mxu0 %v2875
        %v2877 = vand.u32 %v1949, 4294901760
        %2878 = vmatprep.subr.mxu0 %v2877
        %v2879 = vand.u32 %v1948, 4294901760
        %2880 = vmatpush1.msra.mxu0 %v2879
        %v2881 = vand.u32 %v1951, 4294901760
        %2882 = vmatprep.subr.mxu0 %v2881
        %v2883 = vand.u32 %v1950, 4294901760
        %2884 = vmatpush1.msra.mxu0 %v2883
        %v2885 = vand.u32 %v1869, 4294901760
        %v2886 = vsub.f32 %v1869, %v2885
        %v2887 = vand.u32 %v2886, 4294901760
        %2888 = vmatprep.mubr.f32.mxu0 %v2887
        %v2889 = vand.u32 %v1868, 4294901760
        %v2890 = vsub.f32 %v1868, %v2889
        %v2891 = vand.u32 %v2890, 4294901760
        %2892 = vmatmul.mubr.f32.gmra.mrb[0].mxu0 %v2891
        %v2893 = vpop.f32.mrb[0].mxu0
        %v2894 = vadd.f32 %v2753, %v2893
        %v2895 = vpop.f32.mrb[0].mxu0
        %v2896 = vadd.f32 %v2755, %v2895
        %2897 = vdwg.mxu0
        %v2898 = vand.u32 %v1889, 4294901760
        %v2899 = vsub.f32 %v1889, %v2898
        %v2900 = vand.u32 %v2899, 4294901760
        %2901 = vmatprep.subr.mxu0 %v2900
        %v2902 = vand.u32 %v1888, 4294901760
        %v2903 = vsub.f32 %v1888, %v2902
        %v2904 = vand.u32 %v2903, 4294901760
        %2905 = vmatpush1.msra.mxu0 %v2904
        %v2906 = vand.u32 %v1891, 4294901760
        %v2907 = vsub.f32 %v1891, %v2906
        %v2908 = vand.u32 %v2907, 4294901760
        %2909 = vmatprep.subr.mxu0 %v2908
        %v2910 = vand.u32 %v1890, 4294901760
        %v2911 = vsub.f32 %v1890, %v2910
        %v2912 = vand.u32 %v2911, 4294901760
        %2913 = vmatpush1.msra.mxu0 %v2912
        %v2914 = vand.u32 %v1893, 4294901760
        %v2915 = vsub.f32 %v1893, %v2914
        %v2916 = vand.u32 %v2915, 4294901760
        %2917 = vmatprep.subr.mxu0 %v2916
        %v2918 = vand.u32 %v1892, 4294901760
        %v2919 = vsub.f32 %v1892, %v2918
        %v2920 = vand.u32 %v2919, 4294901760
        %2921 = vmatpush1.msra.mxu0 %v2920
        %v2922 = vand.u32 %v1895, 4294901760
        %v2923 = vsub.f32 %v1895, %v2922
        %v2924 = vand.u32 %v2923, 4294901760
        %2925 = vmatprep.subr.mxu0 %v2924
        %v2926 = vand.u32 %v1894, 4294901760
        %v2927 = vsub.f32 %v1894, %v2926
        %v2928 = vand.u32 %v2927, 4294901760
        %2929 = vmatpush1.msra.mxu0 %v2928
        %v2930 = vand.u32 %v1897, 4294901760
        %v2931 = vsub.f32 %v1897, %v2930
        %v2932 = vand.u32 %v2931, 4294901760
        %2933 = vmatprep.subr.mxu0 %v2932
        %v2934 = vand.u32 %v1896, 4294901760
        %v2935 = vsub.f32 %v1896, %v2934
        %v2936 = vand.u32 %v2935, 4294901760
        %2937 = vmatpush1.msra.mxu0 %v2936
        %v2938 = vand.u32 %v1899, 4294901760
        %v2939 = vsub.f32 %v1899, %v2938
        %v2940 = vand.u32 %v2939, 4294901760
        %2941 = vmatprep.subr.mxu0 %v2940
        %v2942 = vand.u32 %v1898, 4294901760
        %v2943 = vsub.f32 %v1898, %v2942
        %v2944 = vand.u32 %v2943, 4294901760
        %2945 = vmatpush1.msra.mxu0 %v2944
        %v2946 = vand.u32 %v1901, 4294901760
        %v2947 = vsub.f32 %v1901, %v2946
        %v2948 = vand.u32 %v2947, 4294901760
        %2949 = vmatprep.subr.mxu0 %v2948
        %v2950 = vand.u32 %v1900, 4294901760
        %v2951 = vsub.f32 %v1900, %v2950
        %v2952 = vand.u32 %v2951, 4294901760
        %2953 = vmatpush1.msra.mxu0 %v2952
        %v2954 = vand.u32 %v1903, 4294901760
        %v2955 = vsub.f32 %v1903, %v2954
        %v2956 = vand.u32 %v2955, 4294901760
        %2957 = vmatprep.subr.mxu0 %v2956
        %v2958 = vand.u32 %v1902, 4294901760
        %v2959 = vsub.f32 %v1902, %v2958
        %v2960 = vand.u32 %v2959, 4294901760
        %2961 = vmatpush1.msra.mxu0 %v2960
        %v2962 = vand.u32 %v1905, 4294901760
        %v2963 = vsub.f32 %v1905, %v2962
        %v2964 = vand.u32 %v2963, 4294901760
        %2965 = vmatprep.subr.mxu0 %v2964
        %v2966 = vand.u32 %v1904, 4294901760
        %v2967 = vsub.f32 %v1904, %v2966
        %v2968 = vand.u32 %v2967, 4294901760
        %2969 = vmatpush1.msra.mxu0 %v2968
        %v2970 = vand.u32 %v1907, 4294901760
        %v2971 = vsub.f32 %v1907, %v2970
        %v2972 = vand.u32 %v2971, 4294901760
        %2973 = vmatprep.subr.mxu0 %v2972
        %v2974 = vand.u32 %v1906, 4294901760
        %v2975 = vsub.f32 %v1906, %v2974
        %v2976 = vand.u32 %v2975, 4294901760
        %2977 = vmatpush1.msra.mxu0 %v2976
        %v2978 = vand.u32 %v1909, 4294901760
        %v2979 = vsub.f32 %v1909, %v2978
        %v2980 = vand.u32 %v2979, 4294901760
        %2981 = vmatprep.subr.mxu0 %v2980
        %v2982 = vand.u32 %v1908, 4294901760
        %v2983 = vsub.f32 %v1908, %v2982
        %v2984 = vand.u32 %v2983, 4294901760
        %2985 = vmatpush1.msra.mxu0 %v2984
        %v2986 = vand.u32 %v1911, 4294901760
        %v2987 = vsub.f32 %v1911, %v2986
        %v2988 = vand.u32 %v2987, 4294901760
        %2989 = vmatprep.subr.mxu0 %v2988
        %v2990 = vand.u32 %v1910, 4294901760
        %v2991 = vsub.f32 %v1910, %v2990
        %v2992 = vand.u32 %v2991, 4294901760
        %2993 = vmatpush1.msra.mxu0 %v2992
        %v2994 = vand.u32 %v1913, 4294901760
        %v2995 = vsub.f32 %v1913, %v2994
        %v2996 = vand.u32 %v2995, 4294901760
        %2997 = vmatprep.subr.mxu0 %v2996
        %v2998 = vand.u32 %v1912, 4294901760
        %v2999 = vsub.f32 %v1912, %v2998
        %v3000 = vand.u32 %v2999, 4294901760
        %3001 = vmatpush1.msra.mxu0 %v3000
        %v3002 = vand.u32 %v1915, 4294901760
        %v3003 = vsub.f32 %v1915, %v3002
        %v3004 = vand.u32 %v3003, 4294901760
        %3005 = vmatprep.subr.mxu0 %v3004
        %v3006 = vand.u32 %v1914, 4294901760
        %v3007 = vsub.f32 %v1914, %v3006
        %v3008 = vand.u32 %v3007, 4294901760
        %3009 = vmatpush1.msra.mxu0 %v3008
        %v3010 = vand.u32 %v1917, 4294901760
        %v3011 = vsub.f32 %v1917, %v3010
        %v3012 = vand.u32 %v3011, 4294901760
        %3013 = vmatprep.subr.mxu0 %v3012
        %v3014 = vand.u32 %v1916, 4294901760
        %v3015 = vsub.f32 %v1916, %v3014
        %v3016 = vand.u32 %v3015, 4294901760
        %3017 = vmatpush1.msra.mxu0 %v3016
        %v3018 = vand.u32 %v1919, 4294901760
        %v3019 = vsub.f32 %v1919, %v3018
        %v3020 = vand.u32 %v3019, 4294901760
        %3021 = vmatprep.subr.mxu0 %v3020
        %v3022 = vand.u32 %v1918, 4294901760
        %v3023 = vsub.f32 %v1918, %v3022
        %v3024 = vand.u32 %v3023, 4294901760
        %3025 = vmatpush1.msra.mxu0 %v3024
        %v3026 = vand.u32 %v1921, 4294901760
        %v3027 = vsub.f32 %v1921, %v3026
        %v3028 = vand.u32 %v3027, 4294901760
        %3029 = vmatprep.subr.mxu0 %v3028
        %v3030 = vand.u32 %v1920, 4294901760
        %v3031 = vsub.f32 %v1920, %v3030
        %v3032 = vand.u32 %v3031, 4294901760
        %3033 = vmatpush1.msra.mxu0 %v3032
        %v3034 = vand.u32 %v1923, 4294901760
        %v3035 = vsub.f32 %v1923, %v3034
        %v3036 = vand.u32 %v3035, 4294901760
        %3037 = vmatprep.subr.mxu0 %v3036
        %v3038 = vand.u32 %v1922, 4294901760
        %v3039 = vsub.f32 %v1922, %v3038
        %v3040 = vand.u32 %v3039, 4294901760
        %3041 = vmatpush1.msra.mxu0 %v3040
        %v3042 = vand.u32 %v1925, 4294901760
        %v3043 = vsub.f32 %v1925, %v3042
        %v3044 = vand.u32 %v3043, 4294901760
        %3045 = vmatprep.subr.mxu0 %v3044
        %v3046 = vand.u32 %v1924, 4294901760
        %v3047 = vsub.f32 %v1924, %v3046
        %v3048 = vand.u32 %v3047, 4294901760
        %3049 = vmatpush1.msra.mxu0 %v3048
        %v3050 = vand.u32 %v1927, 4294901760
        %v3051 = vsub.f32 %v1927, %v3050
        %v3052 = vand.u32 %v3051, 4294901760
        %3053 = vmatprep.subr.mxu0 %v3052
        %v3054 = vand.u32 %v1926, 4294901760
        %v3055 = vsub.f32 %v1926, %v3054
        %v3056 = vand.u32 %v3055, 4294901760
        %3057 = vmatpush1.msra.mxu0 %v3056
        %v3058 = vand.u32 %v1929, 4294901760
        %v3059 = vsub.f32 %v1929, %v3058
        %v3060 = vand.u32 %v3059, 4294901760
        %3061 = vmatprep.subr.mxu0 %v3060
        %v3062 = vand.u32 %v1928, 4294901760
        %v3063 = vsub.f32 %v1928, %v3062
        %v3064 = vand.u32 %v3063, 4294901760
        %3065 = vmatpush1.msra.mxu0 %v3064
        %v3066 = vand.u32 %v1931, 4294901760
        %v3067 = vsub.f32 %v1931, %v3066
        %v3068 = vand.u32 %v3067, 4294901760
        %3069 = vmatprep.subr.mxu0 %v3068
        %v3070 = vand.u32 %v1930, 4294901760
        %v3071 = vsub.f32 %v1930, %v3070
        %v3072 = vand.u32 %v3071, 4294901760
        %3073 = vmatpush1.msra.mxu0 %v3072
        %v3074 = vand.u32 %v1933, 4294901760
        %v3075 = vsub.f32 %v1933, %v3074
        %v3076 = vand.u32 %v3075, 4294901760
        %3077 = vmatprep.subr.mxu0 %v3076
        %v3078 = vand.u32 %v1932, 4294901760
        %v3079 = vsub.f32 %v1932, %v3078
        %v3080 = vand.u32 %v3079, 4294901760
        %3081 = vmatpush1.msra.mxu0 %v3080
        %v3082 = vand.u32 %v1935, 4294901760
        %v3083 = vsub.f32 %v1935, %v3082
        %v3084 = vand.u32 %v3083, 4294901760
        %3085 = vmatprep.subr.mxu0 %v3084
        %v3086 = vand.u32 %v1934, 4294901760
        %v3087 = vsub.f32 %v1934, %v3086
        %v3088 = vand.u32 %v3087, 4294901760
        %3089 = vmatpush1.msra.mxu0 %v3088
        %v3090 = vand.u32 %v1937, 4294901760
        %v3091 = vsub.f32 %v1937, %v3090
        %v3092 = vand.u32 %v3091, 4294901760
        %3093 = vmatprep.subr.mxu0 %v3092
        %v3094 = vand.u32 %v1936, 4294901760
        %v3095 = vsub.f32 %v1936, %v3094
        %v3096 = vand.u32 %v3095, 4294901760
        %3097 = vmatpush1.msra.mxu0 %v3096
        %v3098 = vand.u32 %v1939, 4294901760
        %v3099 = vsub.f32 %v1939, %v3098
        %v3100 = vand.u32 %v3099, 4294901760
        %3101 = vmatprep.subr.mxu0 %v3100
        %v3102 = vand.u32 %v1938, 4294901760
        %v3103 = vsub.f32 %v1938, %v3102
        %v3104 = vand.u32 %v3103, 4294901760
        %3105 = vmatpush1.msra.mxu0 %v3104
        %v3106 = vand.u32 %v1941, 4294901760
        %v3107 = vsub.f32 %v1941, %v3106
        %v3108 = vand.u32 %v3107, 4294901760
        %3109 = vmatprep.subr.mxu0 %v3108
        %v3110 = vand.u32 %v1940, 4294901760
        %v3111 = vsub.f32 %v1940, %v3110
        %v3112 = vand.u32 %v3111, 4294901760
        %3113 = vmatpush1.msra.mxu0 %v3112
        %v3114 = vand.u32 %v1943, 4294901760
        %v3115 = vsub.f32 %v1943, %v3114
        %v3116 = vand.u32 %v3115, 4294901760
        %3117 = vmatprep.subr.mxu0 %v3116
        %v3118 = vand.u32 %v1942, 4294901760
        %v3119 = vsub.f32 %v1942, %v3118
        %v3120 = vand.u32 %v3119, 4294901760
        %3121 = vmatpush1.msra.mxu0 %v3120
        %v3122 = vand.u32 %v1945, 4294901760
        %v3123 = vsub.f32 %v1945, %v3122
        %v3124 = vand.u32 %v3123, 4294901760
        %3125 = vmatprep.subr.mxu0 %v3124
        %v3126 = vand.u32 %v1944, 4294901760
        %v3127 = vsub.f32 %v1944, %v3126
        %v3128 = vand.u32 %v3127, 4294901760
        %3129 = vmatpush1.msra.mxu0 %v3128
        %v3130 = vand.u32 %v1947, 4294901760
        %v3131 = vsub.f32 %v1947, %v3130
        %v3132 = vand.u32 %v3131, 4294901760
        %3133 = vmatprep.subr.mxu0 %v3132
        %v3134 = vand.u32 %v1946, 4294901760
        %v3135 = vsub.f32 %v1946, %v3134
        %v3136 = vand.u32 %v3135, 4294901760
        %3137 = vmatpush1.msra.mxu0 %v3136
        %v3138 = vand.u32 %v1949, 4294901760
        %v3139 = vsub.f32 %v1949, %v3138
        %v3140 = vand.u32 %v3139, 4294901760
        %3141 = vmatprep.subr.mxu0 %v3140
        %v3142 = vand.u32 %v1948, 4294901760
        %v3143 = vsub.f32 %v1948, %v3142
        %v3144 = vand.u32 %v3143, 4294901760
        %3145 = vmatpush1.msra.mxu0 %v3144
        %v3146 = vand.u32 %v1951, 4294901760
        %v3147 = vsub.f32 %v1951, %v3146
        %v3148 = vand.u32 %v3147, 4294901760
        %3149 = vmatprep.subr.mxu0 %v3148
        %v3150 = vand.u32 %v1950, 4294901760
        %v3151 = vsub.f32 %v1950, %v3150
        %v3152 = vand.u32 %v3151, 4294901760
        %3153 = vmatpush1.msra.mxu0 %v3152
        %v3154 = vand.u32 %v1869, 4294901760
        %3155 = vmatprep.mubr.f32.mxu0 %v3154
        %v3156 = vand.u32 %v1868, 4294901760
        %3157 = vmatmul.mubr.f32.gmra.mrb[0].mxu0 %v3156
        %v3158 = vpop.f32.mrb[0].mxu0
        %v3159 = vadd.f32 %v2894, %v3158
        %v3160 = vpop.f32.mrb[0].mxu0
        %v3161 = vadd.f32 %v2896, %v3160
        %3162 = vdwg.mxu0
        %v3163 = vand.u32 %v1889, 4294901760
        %3164 = vmatprep.subr.mxu0 %v3163
        %v3165 = vand.u32 %v1888, 4294901760
        %3166 = vmatpush1.msra.mxu0 %v3165
        %v3167 = vand.u32 %v1891, 4294901760
        %3168 = vmatprep.subr.mxu0 %v3167
        %v3169 = vand.u32 %v1890, 4294901760
        %3170 = vmatpush1.msra.mxu0 %v3169
        %v3171 = vand.u32 %v1893, 4294901760
        %3172 = vmatprep.subr.mxu0 %v3171
        %v3173 = vand.u32 %v1892, 4294901760
        %3174 = vmatpush1.msra.mxu0 %v3173
        %v3175 = vand.u32 %v1895, 4294901760
        %3176 = vmatprep.subr.mxu0 %v3175
        %v3177 = vand.u32 %v1894, 4294901760
        %3178 = vmatpush1.msra.mxu0 %v3177
        %v3179 = vand.u32 %v1897, 4294901760
        %3180 = vmatprep.subr.mxu0 %v3179
        %v3181 = vand.u32 %v1896, 4294901760
        %3182 = vmatpush1.msra.mxu0 %v3181
        %v3183 = vand.u32 %v1899, 4294901760
        %3184 = vmatprep.subr.mxu0 %v3183
        %v3185 = vand.u32 %v1898, 4294901760
        %3186 = vmatpush1.msra.mxu0 %v3185
        %v3187 = vand.u32 %v1901, 4294901760
        %3188 = vmatprep.subr.mxu0 %v3187
        %v3189 = vand.u32 %v1900, 4294901760
        %3190 = vmatpush1.msra.mxu0 %v3189
        %v3191 = vand.u32 %v1903, 4294901760
        %3192 = vmatprep.subr.mxu0 %v3191
        %v3193 = vand.u32 %v1902, 4294901760
        %3194 = vmatpush1.msra.mxu0 %v3193
        %v3195 = vand.u32 %v1905, 4294901760
        %3196 = vmatprep.subr.mxu0 %v3195
        %v3197 = vand.u32 %v1904, 4294901760
        %3198 = vmatpush1.msra.mxu0 %v3197
        %v3199 = vand.u32 %v1907, 4294901760
        %3200 = vmatprep.subr.mxu0 %v3199
        %v3201 = vand.u32 %v1906, 4294901760
        %3202 = vmatpush1.msra.mxu0 %v3201
        %v3203 = vand.u32 %v1909, 4294901760
        %3204 = vmatprep.subr.mxu0 %v3203
        %v3205 = vand.u32 %v1908, 4294901760
        %3206 = vmatpush1.msra.mxu0 %v3205
        %v3207 = vand.u32 %v1911, 4294901760
        %3208 = vmatprep.subr.mxu0 %v3207
        %v3209 = vand.u32 %v1910, 4294901760
        %3210 = vmatpush1.msra.mxu0 %v3209
        %v3211 = vand.u32 %v1913, 4294901760
        %3212 = vmatprep.subr.mxu0 %v3211
        %v3213 = vand.u32 %v1912, 4294901760
        %3214 = vmatpush1.msra.mxu0 %v3213
        %v3215 = vand.u32 %v1915, 4294901760
        %3216 = vmatprep.subr.mxu0 %v3215
        %v3217 = vand.u32 %v1914, 4294901760
        %3218 = vmatpush1.msra.mxu0 %v3217
        %v3219 = vand.u32 %v1917, 4294901760
        %3220 = vmatprep.subr.mxu0 %v3219
        %v3221 = vand.u32 %v1916, 4294901760
        %3222 = vmatpush1.msra.mxu0 %v3221
        %v3223 = vand.u32 %v1919, 4294901760
        %3224 = vmatprep.subr.mxu0 %v3223
        %v3225 = vand.u32 %v1918, 4294901760
        %3226 = vmatpush1.msra.mxu0 %v3225
        %v3227 = vand.u32 %v1921, 4294901760
        %3228 = vmatprep.subr.mxu0 %v3227
        %v3229 = vand.u32 %v1920, 4294901760
        %3230 = vmatpush1.msra.mxu0 %v3229
        %v3231 = vand.u32 %v1923, 4294901760
        %3232 = vmatprep.subr.mxu0 %v3231
        %v3233 = vand.u32 %v1922, 4294901760
        %3234 = vmatpush1.msra.mxu0 %v3233
        %v3235 = vand.u32 %v1925, 4294901760
        %3236 = vmatprep.subr.mxu0 %v3235
        %v3237 = vand.u32 %v1924, 4294901760
        %3238 = vmatpush1.msra.mxu0 %v3237
        %v3239 = vand.u32 %v1927, 4294901760
        %3240 = vmatprep.subr.mxu0 %v3239
        %v3241 = vand.u32 %v1926, 4294901760
        %3242 = vmatpush1.msra.mxu0 %v3241
        %v3243 = vand.u32 %v1929, 4294901760
        %3244 = vmatprep.subr.mxu0 %v3243
        %v3245 = vand.u32 %v1928, 4294901760
        %3246 = vmatpush1.msra.mxu0 %v3245
        %v3247 = vand.u32 %v1931, 4294901760
        %3248 = vmatprep.subr.mxu0 %v3247
        %v3249 = vand.u32 %v1930, 4294901760
        %3250 = vmatpush1.msra.mxu0 %v3249
        %v3251 = vand.u32 %v1933, 4294901760
        %3252 = vmatprep.subr.mxu0 %v3251
        %v3253 = vand.u32 %v1932, 4294901760
        %3254 = vmatpush1.msra.mxu0 %v3253
        %v3255 = vand.u32 %v1935, 4294901760
        %3256 = vmatprep.subr.mxu0 %v3255
        %v3257 = vand.u32 %v1934, 4294901760
        %3258 = vmatpush1.msra.mxu0 %v3257
        %v3259 = vand.u32 %v1937, 4294901760
        %3260 = vmatprep.subr.mxu0 %v3259
        %v3261 = vand.u32 %v1936, 4294901760
        %3262 = vmatpush1.msra.mxu0 %v3261
        %v3263 = vand.u32 %v1939, 4294901760
        %3264 = vmatprep.subr.mxu0 %v3263
        %v3265 = vand.u32 %v1938, 4294901760
        %3266 = vmatpush1.msra.mxu0 %v3265
        %v3267 = vand.u32 %v1941, 4294901760
        %3268 = vmatprep.subr.mxu0 %v3267
        %v3269 = vand.u32 %v1940, 4294901760
        %3270 = vmatpush1.msra.mxu0 %v3269
        %v3271 = vand.u32 %v1943, 4294901760
        %3272 = vmatprep.subr.mxu0 %v3271
        %v3273 = vand.u32 %v1942, 4294901760
        %3274 = vmatpush1.msra.mxu0 %v3273
        %v3275 = vand.u32 %v1945, 4294901760
        %3276 = vmatprep.subr.mxu0 %v3275
        %v3277 = vand.u32 %v1944, 4294901760
        %3278 = vmatpush1.msra.mxu0 %v3277
        %v3279 = vand.u32 %v1947, 4294901760
        %3280 = vmatprep.subr.mxu0 %v3279
        %v3281 = vand.u32 %v1946, 4294901760
        %3282 = vmatpush1.msra.mxu0 %v3281
        %v3283 = vand.u32 %v1949, 4294901760
        %3284 = vmatprep.subr.mxu0 %v3283
        %v3285 = vand.u32 %v1948, 4294901760
        %3286 = vmatpush1.msra.mxu0 %v3285
        %v3287 = vand.u32 %v1951, 4294901760
        %3288 = vmatprep.subr.mxu0 %v3287
        %v3289 = vand.u32 %v1950, 4294901760
        %3290 = vmatpush1.msra.mxu0 %v3289
        %v3291 = vand.u32 %v1869, 4294901760
        %3292 = vmatprep.mubr.f32.mxu0 %v3291
        %v3293 = vand.u32 %v1868, 4294901760
        %3294 = vmatmul.mubr.f32.gmra.mrb[0].mxu0 %v3293
        %v3295 = vpop.f32.mrb[0].mxu0
        %v3296 = vadd.f32 %v3159, %v3295
        %v3297 = vpop.f32.mrb[0].mxu0
        %v3298 = vadd.f32 %v3161, %v3297
        %3299 = vdwg.mxu0
        %v3300 = vand.u32 %v1953, 4294901760
        %3301 = vmatprep.subr.mxu0 %v3300
        %v3302 = vand.u32 %v1952, 4294901760
        %3303 = vmatpush1.msra.mxu0 %v3302
        %v3304 = vand.u32 %v1955, 4294901760
        %3305 = vmatprep.subr.mxu0 %v3304
        %v3306 = vand.u32 %v1954, 4294901760
        %3307 = vmatpush1.msra.mxu0 %v3306
        %v3308 = vand.u32 %v1957, 4294901760
        %3309 = vmatprep.subr.mxu0 %v3308
        %v3310 = vand.u32 %v1956, 4294901760
        %3311 = vmatpush1.msra.mxu0 %v3310
        %v3312 = vand.u32 %v1959, 4294901760
        %3313 = vmatprep.subr.mxu0 %v3312
        %v3314 = vand.u32 %v1958, 4294901760
        %3315 = vmatpush1.msra.mxu0 %v3314
        %v3316 = vand.u32 %v1961, 4294901760
        %3317 = vmatprep.subr.mxu0 %v3316
        %v3318 = vand.u32 %v1960, 4294901760
        %3319 = vmatpush1.msra.mxu0 %v3318
        %v3320 = vand.u32 %v1963, 4294901760
        %3321 = vmatprep.subr.mxu0 %v3320
        %v3322 = vand.u32 %v1962, 4294901760
        %3323 = vmatpush1.msra.mxu0 %v3322
        %v3324 = vand.u32 %v1965, 4294901760
        %3325 = vmatprep.subr.mxu0 %v3324
        %v3326 = vand.u32 %v1964, 4294901760
        %3327 = vmatpush1.msra.mxu0 %v3326
        %v3328 = vand.u32 %v1967, 4294901760
        %3329 = vmatprep.subr.mxu0 %v3328
        %v3330 = vand.u32 %v1966, 4294901760
        %3331 = vmatpush1.msra.mxu0 %v3330
        %v3332 = vand.u32 %v1969, 4294901760
        %3333 = vmatprep.subr.mxu0 %v3332
        %v3334 = vand.u32 %v1968, 4294901760
        %3335 = vmatpush1.msra.mxu0 %v3334
        %v3336 = vand.u32 %v1971, 4294901760
        %3337 = vmatprep.subr.mxu0 %v3336
        %v3338 = vand.u32 %v1970, 4294901760
        %3339 = vmatpush1.msra.mxu0 %v3338
        %v3340 = vand.u32 %v1973, 4294901760
        %3341 = vmatprep.subr.mxu0 %v3340
        %v3342 = vand.u32 %v1972, 4294901760
        %3343 = vmatpush1.msra.mxu0 %v3342
        %v3344 = vand.u32 %v1975, 4294901760
        %3345 = vmatprep.subr.mxu0 %v3344
        %v3346 = vand.u32 %v1974, 4294901760
        %3347 = vmatpush1.msra.mxu0 %v3346
        %v3348 = vand.u32 %v1977, 4294901760
        %3349 = vmatprep.subr.mxu0 %v3348
        %v3350 = vand.u32 %v1976, 4294901760
        %3351 = vmatpush1.msra.mxu0 %v3350
        %v3352 = vand.u32 %v1979, 4294901760
        %3353 = vmatprep.subr.mxu0 %v3352
        %v3354 = vand.u32 %v1978, 4294901760
        %3355 = vmatpush1.msra.mxu0 %v3354
        %v3356 = vand.u32 %v1981, 4294901760
        %3357 = vmatprep.subr.mxu0 %v3356
        %v3358 = vand.u32 %v1980, 4294901760
        %3359 = vmatpush1.msra.mxu0 %v3358
        %v3360 = vand.u32 %v1983, 4294901760
        %3361 = vmatprep.subr.mxu0 %v3360
        %v3362 = vand.u32 %v1982, 4294901760
        %3363 = vmatpush1.msra.mxu0 %v3362
        %v3364 = vand.u32 %v1985, 4294901760
        %3365 = vmatprep.subr.mxu0 %v3364
        %v3366 = vand.u32 %v1984, 4294901760
        %3367 = vmatpush1.msra.mxu0 %v3366
        %v3368 = vand.u32 %v1987, 4294901760
        %3369 = vmatprep.subr.mxu0 %v3368
        %v3370 = vand.u32 %v1986, 4294901760
        %3371 = vmatpush1.msra.mxu0 %v3370
        %v3372 = vand.u32 %v1989, 4294901760
        %3373 = vmatprep.subr.mxu0 %v3372
        %v3374 = vand.u32 %v1988, 4294901760
        %3375 = vmatpush1.msra.mxu0 %v3374
        %v3376 = vand.u32 %v1991, 4294901760
        %3377 = vmatprep.subr.mxu0 %v3376
        %v3378 = vand.u32 %v1990, 4294901760
        %3379 = vmatpush1.msra.mxu0 %v3378
        %v3380 = vand.u32 %v1993, 4294901760
        %3381 = vmatprep.subr.mxu0 %v3380
        %v3382 = vand.u32 %v1992, 4294901760
        %3383 = vmatpush1.msra.mxu0 %v3382
        %v3384 = vand.u32 %v1995, 4294901760
        %3385 = vmatprep.subr.mxu0 %v3384
        %v3386 = vand.u32 %v1994, 4294901760
        %3387 = vmatpush1.msra.mxu0 %v3386
        %v3388 = vand.u32 %v1997, 4294901760
        %3389 = vmatprep.subr.mxu0 %v3388
        %v3390 = vand.u32 %v1996, 4294901760
        %3391 = vmatpush1.msra.mxu0 %v3390
        %v3392 = vand.u32 %v1999, 4294901760
        %3393 = vmatprep.subr.mxu0 %v3392
        %v3394 = vand.u32 %v1998, 4294901760
        %3395 = vmatpush1.msra.mxu0 %v3394
        %v3396 = vand.u32 %v2001, 4294901760
        %3397 = vmatprep.subr.mxu0 %v3396
        %v3398 = vand.u32 %v2000, 4294901760
        %3399 = vmatpush1.msra.mxu0 %v3398
        %v3400 = vand.u32 %v2003, 4294901760
        %3401 = vmatprep.subr.mxu0 %v3400
        %v3402 = vand.u32 %v2002, 4294901760
        %3403 = vmatpush1.msra.mxu0 %v3402
        %v3404 = vand.u32 %v2005, 4294901760
        %3405 = vmatprep.subr.mxu0 %v3404
        %v3406 = vand.u32 %v2004, 4294901760
        %3407 = vmatpush1.msra.mxu0 %v3406
        %v3408 = vand.u32 %v2007, 4294901760
        %3409 = vmatprep.subr.mxu0 %v3408
        %v3410 = vand.u32 %v2006, 4294901760
        %3411 = vmatpush1.msra.mxu0 %v3410
        %v3412 = vand.u32 %v2009, 4294901760
        %3413 = vmatprep.subr.mxu0 %v3412
        %v3414 = vand.u32 %v2008, 4294901760
        %3415 = vmatpush1.msra.mxu0 %v3414
        %v3416 = vand.u32 %v2011, 4294901760
        %3417 = vmatprep.subr.mxu0 %v3416
        %v3418 = vand.u32 %v2010, 4294901760
        %3419 = vmatpush1.msra.mxu0 %v3418
        %v3420 = vand.u32 %v2013, 4294901760
        %3421 = vmatprep.subr.mxu0 %v3420
        %v3422 = vand.u32 %v2012, 4294901760
        %3423 = vmatpush1.msra.mxu0 %v3422
        %v3424 = vand.u32 %v2015, 4294901760
        %3425 = vmatprep.subr.mxu0 %v3424
        %v3426 = vand.u32 %v2014, 4294901760
        %3427 = vmatpush1.msra.mxu0 %v3426
        %v3428 = vand.u32 %v1887, 4294901760
        %v3429 = vsub.f32 %v1887, %v3428
        %v3430 = vand.u32 %v3429, 4294901760
        %v3431 = vsub.f32 %v3429, %v3430
        %v3432 = vand.u32 %v3431, 4294901760
        %3433 = vmatprep.mubr.f32.mxu0 %v3432
        %v3434 = vand.u32 %v1878, 4294901760
        %v3435 = vsub.f32 %v1878, %v3434
        %v3436 = vand.u32 %v3435, 4294901760
        %v3437 = vsub.f32 %v3435, %v3436
        %v3438 = vand.u32 %v3437, 4294901760
        %3439 = vmatmul.mubr.f32.gmra.mrb[0].mxu0 %v3438
        %v3440 = vpop.f32.mrb[0].mxu0
        %v3441 = vadd.f32 %v3296, %v3440
        %v3442 = vpop.f32.mrb[0].mxu0
        %v3443 = vadd.f32 %v3298, %v3442
        %3444 = vdwg.mxu0
        %v3445 = vand.u32 %v1953, 4294901760
        %v3446 = vsub.f32 %v1953, %v3445
        %v3447 = vand.u32 %v3446, 4294901760
        %v3448 = vsub.f32 %v3446, %v3447
        %v3449 = vand.u32 %v3448, 4294901760
        %3450 = vmatprep.subr.mxu0 %v3449
        %v3451 = vand.u32 %v1952, 4294901760
        %v3452 = vsub.f32 %v1952, %v3451
        %v3453 = vand.u32 %v3452, 4294901760
        %v3454 = vsub.f32 %v3452, %v3453
        %v3455 = vand.u32 %v3454, 4294901760
        %3456 = vmatpush1.msra.mxu0 %v3455
        %v3457 = vand.u32 %v1955, 4294901760
        %v3458 = vsub.f32 %v1955, %v3457
        %v3459 = vand.u32 %v3458, 4294901760
        %v3460 = vsub.f32 %v3458, %v3459
        %v3461 = vand.u32 %v3460, 4294901760
        %3462 = vmatprep.subr.mxu0 %v3461
        %v3463 = vand.u32 %v1954, 4294901760
        %v3464 = vsub.f32 %v1954, %v3463
        %v3465 = vand.u32 %v3464, 4294901760
        %v3466 = vsub.f32 %v3464, %v3465
        %v3467 = vand.u32 %v3466, 4294901760
        %3468 = vmatpush1.msra.mxu0 %v3467
        %v3469 = vand.u32 %v1957, 4294901760
        %v3470 = vsub.f32 %v1957, %v3469
        %v3471 = vand.u32 %v3470, 4294901760
        %v3472 = vsub.f32 %v3470, %v3471
        %v3473 = vand.u32 %v3472, 4294901760
        %3474 = vmatprep.subr.mxu0 %v3473
        %v3475 = vand.u32 %v1956, 4294901760
        %v3476 = vsub.f32 %v1956, %v3475
        %v3477 = vand.u32 %v3476, 4294901760
        %v3478 = vsub.f32 %v3476, %v3477
        %v3479 = vand.u32 %v3478, 4294901760
        %3480 = vmatpush1.msra.mxu0 %v3479
        %v3481 = vand.u32 %v1959, 4294901760
        %v3482 = vsub.f32 %v1959, %v3481
        %v3483 = vand.u32 %v3482, 4294901760
        %v3484 = vsub.f32 %v3482, %v3483
        %v3485 = vand.u32 %v3484, 4294901760
        %3486 = vmatprep.subr.mxu0 %v3485
        %v3487 = vand.u32 %v1958, 4294901760
        %v3488 = vsub.f32 %v1958, %v3487
        %v3489 = vand.u32 %v3488, 4294901760
        %v3490 = vsub.f32 %v3488, %v3489
        %v3491 = vand.u32 %v3490, 4294901760
        %3492 = vmatpush1.msra.mxu0 %v3491
        %v3493 = vand.u32 %v1961, 4294901760
        %v3494 = vsub.f32 %v1961, %v3493
        %v3495 = vand.u32 %v3494, 4294901760
        %v3496 = vsub.f32 %v3494, %v3495
        %v3497 = vand.u32 %v3496, 4294901760
        %3498 = vmatprep.subr.mxu0 %v3497
        %v3499 = vand.u32 %v1960, 4294901760
        %v3500 = vsub.f32 %v1960, %v3499
        %v3501 = vand.u32 %v3500, 4294901760
        %v3502 = vsub.f32 %v3500, %v3501
        %v3503 = vand.u32 %v3502, 4294901760
        %3504 = vmatpush1.msra.mxu0 %v3503
        %v3505 = vand.u32 %v1963, 4294901760
        %v3506 = vsub.f32 %v1963, %v3505
        %v3507 = vand.u32 %v3506, 4294901760
        %v3508 = vsub.f32 %v3506, %v3507
        %v3509 = vand.u32 %v3508, 4294901760
        %3510 = vmatprep.subr.mxu0 %v3509
        %v3511 = vand.u32 %v1962, 4294901760
        %v3512 = vsub.f32 %v1962, %v3511
        %v3513 = vand.u32 %v3512, 4294901760
        %v3514 = vsub.f32 %v3512, %v3513
        %v3515 = vand.u32 %v3514, 4294901760
        %3516 = vmatpush1.msra.mxu0 %v3515
        %v3517 = vand.u32 %v1965, 4294901760
        %v3518 = vsub.f32 %v1965, %v3517
        %v3519 = vand.u32 %v3518, 4294901760
        %v3520 = vsub.f32 %v3518, %v3519
        %v3521 = vand.u32 %v3520, 4294901760
        %3522 = vmatprep.subr.mxu0 %v3521
        %v3523 = vand.u32 %v1964, 4294901760
        %v3524 = vsub.f32 %v1964, %v3523
        %v3525 = vand.u32 %v3524, 4294901760
        %v3526 = vsub.f32 %v3524, %v3525
        %v3527 = vand.u32 %v3526, 4294901760
        %3528 = vmatpush1.msra.mxu0 %v3527
        %v3529 = vand.u32 %v1967, 4294901760
        %v3530 = vsub.f32 %v1967, %v3529
        %v3531 = vand.u32 %v3530, 4294901760
        %v3532 = vsub.f32 %v3530, %v3531
        %v3533 = vand.u32 %v3532, 4294901760
        %3534 = vmatprep.subr.mxu0 %v3533
        %v3535 = vand.u32 %v1966, 4294901760
        %v3536 = vsub.f32 %v1966, %v3535
        %v3537 = vand.u32 %v3536, 4294901760
        %v3538 = vsub.f32 %v3536, %v3537
        %v3539 = vand.u32 %v3538, 4294901760
        %3540 = vmatpush1.msra.mxu0 %v3539
        %v3541 = vand.u32 %v1969, 4294901760
        %v3542 = vsub.f32 %v1969, %v3541
        %v3543 = vand.u32 %v3542, 4294901760
        %v3544 = vsub.f32 %v3542, %v3543
        %v3545 = vand.u32 %v3544, 4294901760
        %3546 = vmatprep.subr.mxu0 %v3545
        %v3547 = vand.u32 %v1968, 4294901760
        %v3548 = vsub.f32 %v1968, %v3547
        %v3549 = vand.u32 %v3548, 4294901760
        %v3550 = vsub.f32 %v3548, %v3549
        %v3551 = vand.u32 %v3550, 4294901760
        %3552 = vmatpush1.msra.mxu0 %v3551
        %v3553 = vand.u32 %v1971, 4294901760
        %v3554 = vsub.f32 %v1971, %v3553
        %v3555 = vand.u32 %v3554, 4294901760
        %v3556 = vsub.f32 %v3554, %v3555
        %v3557 = vand.u32 %v3556, 4294901760
        %3558 = vmatprep.subr.mxu0 %v3557
        %v3559 = vand.u32 %v1970, 4294901760
        %v3560 = vsub.f32 %v1970, %v3559
        %v3561 = vand.u32 %v3560, 4294901760
        %v3562 = vsub.f32 %v3560, %v3561
        %v3563 = vand.u32 %v3562, 4294901760
        %3564 = vmatpush1.msra.mxu0 %v3563
        %v3565 = vand.u32 %v1973, 4294901760
        %v3566 = vsub.f32 %v1973, %v3565
        %v3567 = vand.u32 %v3566, 4294901760
        %v3568 = vsub.f32 %v3566, %v3567
        %v3569 = vand.u32 %v3568, 4294901760
        %3570 = vmatprep.subr.mxu0 %v3569
        %v3571 = vand.u32 %v1972, 4294901760
        %v3572 = vsub.f32 %v1972, %v3571
        %v3573 = vand.u32 %v3572, 4294901760
        %v3574 = vsub.f32 %v3572, %v3573
        %v3575 = vand.u32 %v3574, 4294901760
        %3576 = vmatpush1.msra.mxu0 %v3575
        %v3577 = vand.u32 %v1975, 4294901760
        %v3578 = vsub.f32 %v1975, %v3577
        %v3579 = vand.u32 %v3578, 4294901760
        %v3580 = vsub.f32 %v3578, %v3579
        %v3581 = vand.u32 %v3580, 4294901760
        %3582 = vmatprep.subr.mxu0 %v3581
        %v3583 = vand.u32 %v1974, 4294901760
        %v3584 = vsub.f32 %v1974, %v3583
        %v3585 = vand.u32 %v3584, 4294901760
        %v3586 = vsub.f32 %v3584, %v3585
        %v3587 = vand.u32 %v3586, 4294901760
        %3588 = vmatpush1.msra.mxu0 %v3587
        %v3589 = vand.u32 %v1977, 4294901760
        %v3590 = vsub.f32 %v1977, %v3589
        %v3591 = vand.u32 %v3590, 4294901760
        %v3592 = vsub.f32 %v3590, %v3591
        %v3593 = vand.u32 %v3592, 4294901760
        %3594 = vmatprep.subr.mxu0 %v3593
        %v3595 = vand.u32 %v1976, 4294901760
        %v3596 = vsub.f32 %v1976, %v3595
        %v3597 = vand.u32 %v3596, 4294901760
        %v3598 = vsub.f32 %v3596, %v3597
        %v3599 = vand.u32 %v3598, 4294901760
        %3600 = vmatpush1.msra.mxu0 %v3599
        %v3601 = vand.u32 %v1979, 4294901760
        %v3602 = vsub.f32 %v1979, %v3601
        %v3603 = vand.u32 %v3602, 4294901760
        %v3604 = vsub.f32 %v3602, %v3603
        %v3605 = vand.u32 %v3604, 4294901760
        %3606 = vmatprep.subr.mxu0 %v3605
        %v3607 = vand.u32 %v1978, 4294901760
        %v3608 = vsub.f32 %v1978, %v3607
        %v3609 = vand.u32 %v3608, 4294901760
        %v3610 = vsub.f32 %v3608, %v3609
        %v3611 = vand.u32 %v3610, 4294901760
        %3612 = vmatpush1.msra.mxu0 %v3611
        %v3613 = vand.u32 %v1981, 4294901760
        %v3614 = vsub.f32 %v1981, %v3613
        %v3615 = vand.u32 %v3614, 4294901760
        %v3616 = vsub.f32 %v3614, %v3615
        %v3617 = vand.u32 %v3616, 4294901760
        %3618 = vmatprep.subr.mxu0 %v3617
        %v3619 = vand.u32 %v1980, 4294901760
        %v3620 = vsub.f32 %v1980, %v3619
        %v3621 = vand.u32 %v3620, 4294901760
        %v3622 = vsub.f32 %v3620, %v3621
        %v3623 = vand.u32 %v3622, 4294901760
        %3624 = vmatpush1.msra.mxu0 %v3623
        %v3625 = vand.u32 %v1983, 4294901760
        %v3626 = vsub.f32 %v1983, %v3625
        %v3627 = vand.u32 %v3626, 4294901760
        %v3628 = vsub.f32 %v3626, %v3627
        %v3629 = vand.u32 %v3628, 4294901760
        %3630 = vmatprep.subr.mxu0 %v3629
        %v3631 = vand.u32 %v1982, 4294901760
        %v3632 = vsub.f32 %v1982, %v3631
        %v3633 = vand.u32 %v3632, 4294901760
        %v3634 = vsub.f32 %v3632, %v3633
        %v3635 = vand.u32 %v3634, 4294901760
        %3636 = vmatpush1.msra.mxu0 %v3635
        %v3637 = vand.u32 %v1985, 4294901760
        %v3638 = vsub.f32 %v1985, %v3637
        %v3639 = vand.u32 %v3638, 4294901760
        %v3640 = vsub.f32 %v3638, %v3639
        %v3641 = vand.u32 %v3640, 4294901760
        %3642 = vmatprep.subr.mxu0 %v3641
        %v3643 = vand.u32 %v1984, 4294901760
        %v3644 = vsub.f32 %v1984, %v3643
        %v3645 = vand.u32 %v3644, 4294901760
        %v3646 = vsub.f32 %v3644, %v3645
        %v3647 = vand.u32 %v3646, 4294901760
        %3648 = vmatpush1.msra.mxu0 %v3647
        %v3649 = vand.u32 %v1987, 4294901760
        %v3650 = vsub.f32 %v1987, %v3649
        %v3651 = vand.u32 %v3650, 4294901760
        %v3652 = vsub.f32 %v3650, %v3651
        %v3653 = vand.u32 %v3652, 4294901760
        %3654 = vmatprep.subr.mxu0 %v3653
        %v3655 = vand.u32 %v1986, 4294901760
        %v3656 = vsub.f32 %v1986, %v3655
        %v3657 = vand.u32 %v3656, 4294901760
        %v3658 = vsub.f32 %v3656, %v3657
        %v3659 = vand.u32 %v3658, 4294901760
        %3660 = vmatpush1.msra.mxu0 %v3659
        %v3661 = vand.u32 %v1989, 4294901760
        %v3662 = vsub.f32 %v1989, %v3661
        %v3663 = vand.u32 %v3662, 4294901760
        %v3664 = vsub.f32 %v3662, %v3663
        %v3665 = vand.u32 %v3664, 4294901760
        %3666 = vmatprep.subr.mxu0 %v3665
        %v3667 = vand.u32 %v1988, 4294901760
        %v3668 = vsub.f32 %v1988, %v3667
        %v3669 = vand.u32 %v3668, 4294901760
        %v3670 = vsub.f32 %v3668, %v3669
        %v3671 = vand.u32 %v3670, 4294901760
        %3672 = vmatpush1.msra.mxu0 %v3671
        %v3673 = vand.u32 %v1991, 4294901760
        %v3674 = vsub.f32 %v1991, %v3673
        %v3675 = vand.u32 %v3674, 4294901760
        %v3676 = vsub.f32 %v3674, %v3675
        %v3677 = vand.u32 %v3676, 4294901760
        %3678 = vmatprep.subr.mxu0 %v3677
        %v3679 = vand.u32 %v1990, 4294901760
        %v3680 = vsub.f32 %v1990, %v3679
        %v3681 = vand.u32 %v3680, 4294901760
        %v3682 = vsub.f32 %v3680, %v3681
        %v3683 = vand.u32 %v3682, 4294901760
        %3684 = vmatpush1.msra.mxu0 %v3683
        %v3685 = vand.u32 %v1993, 4294901760
        %v3686 = vsub.f32 %v1993, %v3685
        %v3687 = vand.u32 %v3686, 4294901760
        %v3688 = vsub.f32 %v3686, %v3687
        %v3689 = vand.u32 %v3688, 4294901760
        %3690 = vmatprep.subr.mxu0 %v3689
        %v3691 = vand.u32 %v1992, 4294901760
        %v3692 = vsub.f32 %v1992, %v3691
        %v3693 = vand.u32 %v3692, 4294901760
        %v3694 = vsub.f32 %v3692, %v3693
        %v3695 = vand.u32 %v3694, 4294901760
        %3696 = vmatpush1.msra.mxu0 %v3695
        %v3697 = vand.u32 %v1995, 4294901760
        %v3698 = vsub.f32 %v1995, %v3697
        %v3699 = vand.u32 %v3698, 4294901760
        %v3700 = vsub.f32 %v3698, %v3699
        %v3701 = vand.u32 %v3700, 4294901760
        %3702 = vmatprep.subr.mxu0 %v3701
        %v3703 = vand.u32 %v1994, 4294901760
        %v3704 = vsub.f32 %v1994, %v3703
        %v3705 = vand.u32 %v3704, 4294901760
        %v3706 = vsub.f32 %v3704, %v3705
        %v3707 = vand.u32 %v3706, 4294901760
        %3708 = vmatpush1.msra.mxu0 %v3707
        %v3709 = vand.u32 %v1997, 4294901760
        %v3710 = vsub.f32 %v1997, %v3709
        %v3711 = vand.u32 %v3710, 4294901760
        %v3712 = vsub.f32 %v3710, %v3711
        %v3713 = vand.u32 %v3712, 4294901760
        %3714 = vmatprep.subr.mxu0 %v3713
        %v3715 = vand.u32 %v1996, 4294901760
        %v3716 = vsub.f32 %v1996, %v3715
        %v3717 = vand.u32 %v3716, 4294901760
        %v3718 = vsub.f32 %v3716, %v3717
        %v3719 = vand.u32 %v3718, 4294901760
        %3720 = vmatpush1.msra.mxu0 %v3719
        %v3721 = vand.u32 %v1999, 4294901760
        %v3722 = vsub.f32 %v1999, %v3721
        %v3723 = vand.u32 %v3722, 4294901760
        %v3724 = vsub.f32 %v3722, %v3723
        %v3725 = vand.u32 %v3724, 4294901760
        %3726 = vmatprep.subr.mxu0 %v3725
        %v3727 = vand.u32 %v1998, 4294901760
        %v3728 = vsub.f32 %v1998, %v3727
        %v3729 = vand.u32 %v3728, 4294901760
        %v3730 = vsub.f32 %v3728, %v3729
        %v3731 = vand.u32 %v3730, 4294901760
        %3732 = vmatpush1.msra.mxu0 %v3731
        %v3733 = vand.u32 %v2001, 4294901760
        %v3734 = vsub.f32 %v2001, %v3733
        %v3735 = vand.u32 %v3734, 4294901760
        %v3736 = vsub.f32 %v3734, %v3735
        %v3737 = vand.u32 %v3736, 4294901760
        %3738 = vmatprep.subr.mxu0 %v3737
        %v3739 = vand.u32 %v2000, 4294901760
        %v3740 = vsub.f32 %v2000, %v3739
        %v3741 = vand.u32 %v3740, 4294901760
        %v3742 = vsub.f32 %v3740, %v3741
        %v3743 = vand.u32 %v3742, 4294901760
        %3744 = vmatpush1.msra.mxu0 %v3743
        %v3745 = vand.u32 %v2003, 4294901760
        %v3746 = vsub.f32 %v2003, %v3745
        %v3747 = vand.u32 %v3746, 4294901760
        %v3748 = vsub.f32 %v3746, %v3747
        %v3749 = vand.u32 %v3748, 4294901760
        %3750 = vmatprep.subr.mxu0 %v3749
        %v3751 = vand.u32 %v2002, 4294901760
        %v3752 = vsub.f32 %v2002, %v3751
        %v3753 = vand.u32 %v3752, 4294901760
        %v3754 = vsub.f32 %v3752, %v3753
        %v3755 = vand.u32 %v3754, 4294901760
        %3756 = vmatpush1.msra.mxu0 %v3755
        %v3757 = vand.u32 %v2005, 4294901760
        %v3758 = vsub.f32 %v2005, %v3757
        %v3759 = vand.u32 %v3758, 4294901760
        %v3760 = vsub.f32 %v3758, %v3759
        %v3761 = vand.u32 %v3760, 4294901760
        %3762 = vmatprep.subr.mxu0 %v3761
        %v3763 = vand.u32 %v2004, 4294901760
        %v3764 = vsub.f32 %v2004, %v3763
        %v3765 = vand.u32 %v3764, 4294901760
        %v3766 = vsub.f32 %v3764, %v3765
        %v3767 = vand.u32 %v3766, 4294901760
        %3768 = vmatpush1.msra.mxu0 %v3767
        %v3769 = vand.u32 %v2007, 4294901760
        %v3770 = vsub.f32 %v2007, %v3769
        %v3771 = vand.u32 %v3770, 4294901760
        %v3772 = vsub.f32 %v3770, %v3771
        %v3773 = vand.u32 %v3772, 4294901760
        %3774 = vmatprep.subr.mxu0 %v3773
        %v3775 = vand.u32 %v2006, 4294901760
        %v3776 = vsub.f32 %v2006, %v3775
        %v3777 = vand.u32 %v3776, 4294901760
        %v3778 = vsub.f32 %v3776, %v3777
        %v3779 = vand.u32 %v3778, 4294901760
        %3780 = vmatpush1.msra.mxu0 %v3779
        %v3781 = vand.u32 %v2009, 4294901760
        %v3782 = vsub.f32 %v2009, %v3781
        %v3783 = vand.u32 %v3782, 4294901760
        %v3784 = vsub.f32 %v3782, %v3783
        %v3785 = vand.u32 %v3784, 4294901760
        %3786 = vmatprep.subr.mxu0 %v3785
        %v3787 = vand.u32 %v2008, 4294901760
        %v3788 = vsub.f32 %v2008, %v3787
        %v3789 = vand.u32 %v3788, 4294901760
        %v3790 = vsub.f32 %v3788, %v3789
        %v3791 = vand.u32 %v3790, 4294901760
        %3792 = vmatpush1.msra.mxu0 %v3791
        %v3793 = vand.u32 %v2011, 4294901760
        %v3794 = vsub.f32 %v2011, %v3793
        %v3795 = vand.u32 %v3794, 4294901760
        %v3796 = vsub.f32 %v3794, %v3795
        %v3797 = vand.u32 %v3796, 4294901760
        %3798 = vmatprep.subr.mxu0 %v3797
        %v3799 = vand.u32 %v2010, 4294901760
        %v3800 = vsub.f32 %v2010, %v3799
        %v3801 = vand.u32 %v3800, 4294901760
        %v3802 = vsub.f32 %v3800, %v3801
        %v3803 = vand.u32 %v3802, 4294901760
        %3804 = vmatpush1.msra.mxu0 %v3803
        %v3805 = vand.u32 %v2013, 4294901760
        %v3806 = vsub.f32 %v2013, %v3805
        %v3807 = vand.u32 %v3806, 4294901760
        %v3808 = vsub.f32 %v3806, %v3807
        %v3809 = vand.u32 %v3808, 4294901760
        %3810 = vmatprep.subr.mxu0 %v3809
        %v3811 = vand.u32 %v2012, 4294901760
        %v3812 = vsub.f32 %v2012, %v3811
        %v3813 = vand.u32 %v3812, 4294901760
        %v3814 = vsub.f32 %v3812, %v3813
        %v3815 = vand.u32 %v3814, 4294901760
        %3816 = vmatpush1.msra.mxu0 %v3815
        %v3817 = vand.u32 %v2015, 4294901760
        %v3818 = vsub.f32 %v2015, %v3817
        %v3819 = vand.u32 %v3818, 4294901760
        %v3820 = vsub.f32 %v3818, %v3819
        %v3821 = vand.u32 %v3820, 4294901760
        %3822 = vmatprep.subr.mxu0 %v3821
        %v3823 = vand.u32 %v2014, 4294901760
        %v3824 = vsub.f32 %v2014, %v3823
        %v3825 = vand.u32 %v3824, 4294901760
        %v3826 = vsub.f32 %v3824, %v3825
        %v3827 = vand.u32 %v3826, 4294901760
        %3828 = vmatpush1.msra.mxu0 %v3827
        %v3829 = vand.u32 %v1887, 4294901760
        %3830 = vmatprep.mubr.f32.mxu0 %v3829
        %v3831 = vand.u32 %v1878, 4294901760
        %3832 = vmatmul.mubr.f32.gmra.mrb[0].mxu0 %v3831
        %v3833 = vpop.f32.mrb[0].mxu0
        %v3834 = vadd.f32 %v3441, %v3833
        %v3835 = vpop.f32.mrb[0].mxu0
        %v3836 = vadd.f32 %v3443, %v3835
        %3837 = vdwg.mxu0
        %v3838 = vand.u32 %v1953, 4294901760
        %v3839 = vsub.f32 %v1953, %v3838
        %3840 = vmatprep.subr.mxu0 %v3839
        %v3841 = vand.u32 %v1952, 4294901760
        %v3842 = vsub.f32 %v1952, %v3841
        %3843 = vmatpush1.msra.mxu0 %v3842
        %v3844 = vand.u32 %v1955, 4294901760
        %v3845 = vsub.f32 %v1955, %v3844
        %3846 = vmatprep.subr.mxu0 %v3845
        %v3847 = vand.u32 %v1954, 4294901760
        %v3848 = vsub.f32 %v1954, %v3847
        %3849 = vmatpush1.msra.mxu0 %v3848
        %v3850 = vand.u32 %v1957, 4294901760
        %v3851 = vsub.f32 %v1957, %v3850
        %3852 = vmatprep.subr.mxu0 %v3851
        %v3853 = vand.u32 %v1956, 4294901760
        %v3854 = vsub.f32 %v1956, %v3853
        %3855 = vmatpush1.msra.mxu0 %v3854
        %v3856 = vand.u32 %v1959, 4294901760
        %v3857 = vsub.f32 %v1959, %v3856
        %3858 = vmatprep.subr.mxu0 %v3857
        %v3859 = vand.u32 %v1958, 4294901760
        %v3860 = vsub.f32 %v1958, %v3859
        %3861 = vmatpush1.msra.mxu0 %v3860
        %v3862 = vand.u32 %v1961, 4294901760
        %v3863 = vsub.f32 %v1961, %v3862
        %3864 = vmatprep.subr.mxu0 %v3863
        %v3865 = vand.u32 %v1960, 4294901760
        %v3866 = vsub.f32 %v1960, %v3865
        %3867 = vmatpush1.msra.mxu0 %v3866
        %v3868 = vand.u32 %v1963, 4294901760
        %v3869 = vsub.f32 %v1963, %v3868
        %3870 = vmatprep.subr.mxu0 %v3869
        %v3871 = vand.u32 %v1962, 4294901760
        %v3872 = vsub.f32 %v1962, %v3871
        %3873 = vmatpush1.msra.mxu0 %v3872
        %v3874 = vand.u32 %v1965, 4294901760
        %v3875 = vsub.f32 %v1965, %v3874
        %3876 = vmatprep.subr.mxu0 %v3875
        %v3877 = vand.u32 %v1964, 4294901760
        %v3878 = vsub.f32 %v1964, %v3877
        %3879 = vmatpush1.msra.mxu0 %v3878
        %v3880 = vand.u32 %v1967, 4294901760
        %v3881 = vsub.f32 %v1967, %v3880
        %3882 = vmatprep.subr.mxu0 %v3881
        %v3883 = vand.u32 %v1966, 4294901760
        %v3884 = vsub.f32 %v1966, %v3883
        %3885 = vmatpush1.msra.mxu0 %v3884
        %v3886 = vand.u32 %v1969, 4294901760
        %v3887 = vsub.f32 %v1969, %v3886
        %3888 = vmatprep.subr.mxu0 %v3887
        %v3889 = vand.u32 %v1968, 4294901760
        %v3890 = vsub.f32 %v1968, %v3889
        %3891 = vmatpush1.msra.mxu0 %v3890
        %v3892 = vand.u32 %v1971, 4294901760
        %v3893 = vsub.f32 %v1971, %v3892
        %3894 = vmatprep.subr.mxu0 %v3893
        %v3895 = vand.u32 %v1970, 4294901760
        %v3896 = vsub.f32 %v1970, %v3895
        %3897 = vmatpush1.msra.mxu0 %v3896
        %v3898 = vand.u32 %v1973, 4294901760
        %v3899 = vsub.f32 %v1973, %v3898
        %3900 = vmatprep.subr.mxu0 %v3899
        %v3901 = vand.u32 %v1972, 4294901760
        %v3902 = vsub.f32 %v1972, %v3901
        %3903 = vmatpush1.msra.mxu0 %v3902
        %v3904 = vand.u32 %v1975, 4294901760
        %v3905 = vsub.f32 %v1975, %v3904
        %3906 = vmatprep.subr.mxu0 %v3905
        %v3907 = vand.u32 %v1974, 4294901760
        %v3908 = vsub.f32 %v1974, %v3907
        %3909 = vmatpush1.msra.mxu0 %v3908
        %v3910 = vand.u32 %v1977, 4294901760
        %v3911 = vsub.f32 %v1977, %v3910
        %3912 = vmatprep.subr.mxu0 %v3911
        %v3913 = vand.u32 %v1976, 4294901760
        %v3914 = vsub.f32 %v1976, %v3913
        %3915 = vmatpush1.msra.mxu0 %v3914
        %v3916 = vand.u32 %v1979, 4294901760
        %v3917 = vsub.f32 %v1979, %v3916
        %3918 = vmatprep.subr.mxu0 %v3917
        %v3919 = vand.u32 %v1978, 4294901760
        %v3920 = vsub.f32 %v1978, %v3919
        %3921 = vmatpush1.msra.mxu0 %v3920
        %v3922 = vand.u32 %v1981, 4294901760
        %v3923 = vsub.f32 %v1981, %v3922
        %3924 = vmatprep.subr.mxu0 %v3923
        %v3925 = vand.u32 %v1980, 4294901760
        %v3926 = vsub.f32 %v1980, %v3925
        %3927 = vmatpush1.msra.mxu0 %v3926
        %v3928 = vand.u32 %v1983, 4294901760
        %v3929 = vsub.f32 %v1983, %v3928
        %3930 = vmatprep.subr.mxu0 %v3929
        %v3931 = vand.u32 %v1982, 4294901760
        %v3932 = vsub.f32 %v1982, %v3931
        %3933 = vmatpush1.msra.mxu0 %v3932
        %v3934 = vand.u32 %v1985, 4294901760
        %v3935 = vsub.f32 %v1985, %v3934
        %3936 = vmatprep.subr.mxu0 %v3935
        %v3937 = vand.u32 %v1984, 4294901760
        %v3938 = vsub.f32 %v1984, %v3937
        %3939 = vmatpush1.msra.mxu0 %v3938
        %v3940 = vand.u32 %v1987, 4294901760
        %v3941 = vsub.f32 %v1987, %v3940
        %3942 = vmatprep.subr.mxu0 %v3941
        %v3943 = vand.u32 %v1986, 4294901760
        %v3944 = vsub.f32 %v1986, %v3943
        %3945 = vmatpush1.msra.mxu0 %v3944
        %v3946 = vand.u32 %v1989, 4294901760
        %v3947 = vsub.f32 %v1989, %v3946
        %3948 = vmatprep.subr.mxu0 %v3947
        %v3949 = vand.u32 %v1988, 4294901760
        %v3950 = vsub.f32 %v1988, %v3949
        %3951 = vmatpush1.msra.mxu0 %v3950
        %v3952 = vand.u32 %v1991, 4294901760
        %v3953 = vsub.f32 %v1991, %v3952
        %3954 = vmatprep.subr.mxu0 %v3953
        %v3955 = vand.u32 %v1990, 4294901760
        %v3956 = vsub.f32 %v1990, %v3955
        %3957 = vmatpush1.msra.mxu0 %v3956
        %v3958 = vand.u32 %v1993, 4294901760
        %v3959 = vsub.f32 %v1993, %v3958
        %3960 = vmatprep.subr.mxu0 %v3959
        %v3961 = vand.u32 %v1992, 4294901760
        %v3962 = vsub.f32 %v1992, %v3961
        %3963 = vmatpush1.msra.mxu0 %v3962
        %v3964 = vand.u32 %v1995, 4294901760
        %v3965 = vsub.f32 %v1995, %v3964
        %3966 = vmatprep.subr.mxu0 %v3965
        %v3967 = vand.u32 %v1994, 4294901760
        %v3968 = vsub.f32 %v1994, %v3967
        %3969 = vmatpush1.msra.mxu0 %v3968
        %v3970 = vand.u32 %v1997, 4294901760
        %v3971 = vsub.f32 %v1997, %v3970
        %3972 = vmatprep.subr.mxu0 %v3971
        %v3973 = vand.u32 %v1996, 4294901760
        %v3974 = vsub.f32 %v1996, %v3973
        %3975 = vmatpush1.msra.mxu0 %v3974
        %v3976 = vand.u32 %v1999, 4294901760
        %v3977 = vsub.f32 %v1999, %v3976
        %3978 = vmatprep.subr.mxu0 %v3977
        %v3979 = vand.u32 %v1998, 4294901760
        %v3980 = vsub.f32 %v1998, %v3979
        %3981 = vmatpush1.msra.mxu0 %v3980
        %v3982 = vand.u32 %v2001, 4294901760
        %v3983 = vsub.f32 %v2001, %v3982
        %3984 = vmatprep.subr.mxu0 %v3983
        %v3985 = vand.u32 %v2000, 4294901760
        %v3986 = vsub.f32 %v2000, %v3985
        %3987 = vmatpush1.msra.mxu0 %v3986
        %v3988 = vand.u32 %v2003, 4294901760
        %v3989 = vsub.f32 %v2003, %v3988
        %3990 = vmatprep.subr.mxu0 %v3989
        %v3991 = vand.u32 %v2002, 4294901760
        %v3992 = vsub.f32 %v2002, %v3991
        %3993 = vmatpush1.msra.mxu0 %v3992
        %v3994 = vand.u32 %v2005, 4294901760
        %v3995 = vsub.f32 %v2005, %v3994
        %3996 = vmatprep.subr.mxu0 %v3995
        %v3997 = vand.u32 %v2004, 4294901760
        %v3998 = vsub.f32 %v2004, %v3997
        %3999 = vmatpush1.msra.mxu0 %v3998
        %v4000 = vand.u32 %v2007, 4294901760
        %v4001 = vsub.f32 %v2007, %v4000
        %4002 = vmatprep.subr.mxu0 %v4001
        %v4003 = vand.u32 %v2006, 4294901760
        %v4004 = vsub.f32 %v2006, %v4003
        %4005 = vmatpush1.msra.mxu0 %v4004
        %v4006 = vand.u32 %v2009, 4294901760
        %v4007 = vsub.f32 %v2009, %v4006
        %4008 = vmatprep.subr.mxu0 %v4007
        %v4009 = vand.u32 %v2008, 4294901760
        %v4010 = vsub.f32 %v2008, %v4009
        %4011 = vmatpush1.msra.mxu0 %v4010
        %v4012 = vand.u32 %v2011, 4294901760
        %v4013 = vsub.f32 %v2011, %v4012
        %4014 = vmatprep.subr.mxu0 %v4013
        %v4015 = vand.u32 %v2010, 4294901760
        %v4016 = vsub.f32 %v2010, %v4015
        %4017 = vmatpush1.msra.mxu0 %v4016
        %v4018 = vand.u32 %v2013, 4294901760
        %v4019 = vsub.f32 %v2013, %v4018
        %4020 = vmatprep.subr.mxu0 %v4019
        %v4021 = vand.u32 %v2012, 4294901760
        %v4022 = vsub.f32 %v2012, %v4021
        %4023 = vmatpush1.msra.mxu0 %v4022
        %v4024 = vand.u32 %v2015, 4294901760
        %v4025 = vsub.f32 %v2015, %v4024
        %4026 = vmatprep.subr.mxu0 %v4025
        %v4027 = vand.u32 %v2014, 4294901760
        %v4028 = vsub.f32 %v2014, %v4027
        %4029 = vmatpush1.msra.mxu0 %v4028
        %v4030 = vand.u32 %v1887, 4294901760
        %v4031 = vsub.f32 %v1887, %v4030
        %4032 = vmatprep.mubr.f32.mxu0 %v4031
        %v4033 = vand.u32 %v1878, 4294901760
        %v4034 = vsub.f32 %v1878, %v4033
        %4035 = vmatmul.mubr.f32.gmra.mrb[0].mxu0 %v4034
        %v4036 = vpop.f32.mrb[0].mxu0
        %v4037 = vadd.f32 %v3834, %v4036
        %v4038 = vpop.f32.mrb[0].mxu0
        %v4039 = vadd.f32 %v3836, %v4038
        %4040 = vdwg.mxu0
        %v4041 = vand.u32 %v1953, 4294901760
        %4042 = vmatprep.subr.mxu0 %v4041
        %v4043 = vand.u32 %v1952, 4294901760
        %4044 = vmatpush1.msra.mxu0 %v4043
        %v4045 = vand.u32 %v1955, 4294901760
        %4046 = vmatprep.subr.mxu0 %v4045
        %v4047 = vand.u32 %v1954, 4294901760
        %4048 = vmatpush1.msra.mxu0 %v4047
        %v4049 = vand.u32 %v1957, 4294901760
        %4050 = vmatprep.subr.mxu0 %v4049
        %v4051 = vand.u32 %v1956, 4294901760
        %4052 = vmatpush1.msra.mxu0 %v4051
        %v4053 = vand.u32 %v1959, 4294901760
        %4054 = vmatprep.subr.mxu0 %v4053
        %v4055 = vand.u32 %v1958, 4294901760
        %4056 = vmatpush1.msra.mxu0 %v4055
        %v4057 = vand.u32 %v1961, 4294901760
        %4058 = vmatprep.subr.mxu0 %v4057
        %v4059 = vand.u32 %v1960, 4294901760
        %4060 = vmatpush1.msra.mxu0 %v4059
        %v4061 = vand.u32 %v1963, 4294901760
        %4062 = vmatprep.subr.mxu0 %v4061
        %v4063 = vand.u32 %v1962, 4294901760
        %4064 = vmatpush1.msra.mxu0 %v4063
        %v4065 = vand.u32 %v1965, 4294901760
        %4066 = vmatprep.subr.mxu0 %v4065
        %v4067 = vand.u32 %v1964, 4294901760
        %4068 = vmatpush1.msra.mxu0 %v4067
        %v4069 = vand.u32 %v1967, 4294901760
        %4070 = vmatprep.subr.mxu0 %v4069
        %v4071 = vand.u32 %v1966, 4294901760
        %4072 = vmatpush1.msra.mxu0 %v4071
        %v4073 = vand.u32 %v1969, 4294901760
        %4074 = vmatprep.subr.mxu0 %v4073
        %v4075 = vand.u32 %v1968, 4294901760
        %4076 = vmatpush1.msra.mxu0 %v4075
        %v4077 = vand.u32 %v1971, 4294901760
        %4078 = vmatprep.subr.mxu0 %v4077
        %v4079 = vand.u32 %v1970, 4294901760
        %4080 = vmatpush1.msra.mxu0 %v4079
        %v4081 = vand.u32 %v1973, 4294901760
        %4082 = vmatprep.subr.mxu0 %v4081
        %v4083 = vand.u32 %v1972, 4294901760
        %4084 = vmatpush1.msra.mxu0 %v4083
        %v4085 = vand.u32 %v1975, 4294901760
        %4086 = vmatprep.subr.mxu0 %v4085
        %v4087 = vand.u32 %v1974, 4294901760
        %4088 = vmatpush1.msra.mxu0 %v4087
        %v4089 = vand.u32 %v1977, 4294901760
        %4090 = vmatprep.subr.mxu0 %v4089
        %v4091 = vand.u32 %v1976, 4294901760
        %4092 = vmatpush1.msra.mxu0 %v4091
        %v4093 = vand.u32 %v1979, 4294901760
        %4094 = vmatprep.subr.mxu0 %v4093
        %v4095 = vand.u32 %v1978, 4294901760
        %4096 = vmatpush1.msra.mxu0 %v4095
        %v4097 = vand.u32 %v1981, 4294901760
        %4098 = vmatprep.subr.mxu0 %v4097
        %v4099 = vand.u32 %v1980, 4294901760
        %4100 = vmatpush1.msra.mxu0 %v4099
        %v4101 = vand.u32 %v1983, 4294901760
        %4102 = vmatprep.subr.mxu0 %v4101
        %v4103 = vand.u32 %v1982, 4294901760
        %4104 = vmatpush1.msra.mxu0 %v4103
        %v4105 = vand.u32 %v1985, 4294901760
        %4106 = vmatprep.subr.mxu0 %v4105
        %v4107 = vand.u32 %v1984, 4294901760
        %4108 = vmatpush1.msra.mxu0 %v4107
        %v4109 = vand.u32 %v1987, 4294901760
        %4110 = vmatprep.subr.mxu0 %v4109
        %v4111 = vand.u32 %v1986, 4294901760
        %4112 = vmatpush1.msra.mxu0 %v4111
        %v4113 = vand.u32 %v1989, 4294901760
        %4114 = vmatprep.subr.mxu0 %v4113
        %v4115 = vand.u32 %v1988, 4294901760
        %4116 = vmatpush1.msra.mxu0 %v4115
        %v4117 = vand.u32 %v1991, 4294901760
        %4118 = vmatprep.subr.mxu0 %v4117
        %v4119 = vand.u32 %v1990, 4294901760
        %4120 = vmatpush1.msra.mxu0 %v4119
        %v4121 = vand.u32 %v1993, 4294901760
        %4122 = vmatprep.subr.mxu0 %v4121
        %v4123 = vand.u32 %v1992, 4294901760
        %4124 = vmatpush1.msra.mxu0 %v4123
        %v4125 = vand.u32 %v1995, 4294901760
        %4126 = vmatprep.subr.mxu0 %v4125
        %v4127 = vand.u32 %v1994, 4294901760
        %4128 = vmatpush1.msra.mxu0 %v4127
        %v4129 = vand.u32 %v1997, 4294901760
        %4130 = vmatprep.subr.mxu0 %v4129
        %v4131 = vand.u32 %v1996, 4294901760
        %4132 = vmatpush1.msra.mxu0 %v4131
        %v4133 = vand.u32 %v1999, 4294901760
        %4134 = vmatprep.subr.mxu0 %v4133
        %v4135 = vand.u32 %v1998, 4294901760
        %4136 = vmatpush1.msra.mxu0 %v4135
        %v4137 = vand.u32 %v2001, 4294901760
        %4138 = vmatprep.subr.mxu0 %v4137
        %v4139 = vand.u32 %v2000, 4294901760
        %4140 = vmatpush1.msra.mxu0 %v4139
        %v4141 = vand.u32 %v2003, 4294901760
        %4142 = vmatprep.subr.mxu0 %v4141
        %v4143 = vand.u32 %v2002, 4294901760
        %4144 = vmatpush1.msra.mxu0 %v4143
        %v4145 = vand.u32 %v2005, 4294901760
        %4146 = vmatprep.subr.mxu0 %v4145
        %v4147 = vand.u32 %v2004, 4294901760
        %4148 = vmatpush1.msra.mxu0 %v4147
        %v4149 = vand.u32 %v2007, 4294901760
        %4150 = vmatprep.subr.mxu0 %v4149
        %v4151 = vand.u32 %v2006, 4294901760
        %4152 = vmatpush1.msra.mxu0 %v4151
        %v4153 = vand.u32 %v2009, 4294901760
        %4154 = vmatprep.subr.mxu0 %v4153
        %v4155 = vand.u32 %v2008, 4294901760
        %4156 = vmatpush1.msra.mxu0 %v4155
        %v4157 = vand.u32 %v2011, 4294901760
        %4158 = vmatprep.subr.mxu0 %v4157
        %v4159 = vand.u32 %v2010, 4294901760
        %4160 = vmatpush1.msra.mxu0 %v4159
        %v4161 = vand.u32 %v2013, 4294901760
        %4162 = vmatprep.subr.mxu0 %v4161
        %v4163 = vand.u32 %v2012, 4294901760
        %4164 = vmatpush1.msra.mxu0 %v4163
        %v4165 = vand.u32 %v2015, 4294901760
        %4166 = vmatprep.subr.mxu0 %v4165
        %v4167 = vand.u32 %v2014, 4294901760
        %4168 = vmatpush1.msra.mxu0 %v4167
        %v4169 = vand.u32 %v1887, 4294901760
        %v4170 = vsub.f32 %v1887, %v4169
        %v4171 = vand.u32 %v4170, 4294901760
        %4172 = vmatprep.mubr.f32.mxu0 %v4171
        %v4173 = vand.u32 %v1878, 4294901760
        %v4174 = vsub.f32 %v1878, %v4173
        %v4175 = vand.u32 %v4174, 4294901760
        %4176 = vmatmul.mubr.f32.gmra.mrb[0].mxu0 %v4175
        %v4177 = vpop.f32.mrb[0].mxu0
        %v4178 = vadd.f32 %v4037, %v4177
        %v4179 = vpop.f32.mrb[0].mxu0
        %v4180 = vadd.f32 %v4039, %v4179
        %4181 = vdwg.mxu0
        %v4182 = vand.u32 %v1953, 4294901760
        %v4183 = vsub.f32 %v1953, %v4182
        %v4184 = vand.u32 %v4183, 4294901760
        %4185 = vmatprep.subr.mxu0 %v4184
        %v4186 = vand.u32 %v1952, 4294901760
        %v4187 = vsub.f32 %v1952, %v4186
        %v4188 = vand.u32 %v4187, 4294901760
        %4189 = vmatpush1.msra.mxu0 %v4188
        %v4190 = vand.u32 %v1955, 4294901760
        %v4191 = vsub.f32 %v1955, %v4190
        %v4192 = vand.u32 %v4191, 4294901760
        %4193 = vmatprep.subr.mxu0 %v4192
        %v4194 = vand.u32 %v1954, 4294901760
        %v4195 = vsub.f32 %v1954, %v4194
        %v4196 = vand.u32 %v4195, 4294901760
        %4197 = vmatpush1.msra.mxu0 %v4196
        %v4198 = vand.u32 %v1957, 4294901760
        %v4199 = vsub.f32 %v1957, %v4198
        %v4200 = vand.u32 %v4199, 4294901760
        %4201 = vmatprep.subr.mxu0 %v4200
        %v4202 = vand.u32 %v1956, 4294901760
        %v4203 = vsub.f32 %v1956, %v4202
        %v4204 = vand.u32 %v4203, 4294901760
        %4205 = vmatpush1.msra.mxu0 %v4204
        %v4206 = vand.u32 %v1959, 4294901760
        %v4207 = vsub.f32 %v1959, %v4206
        %v4208 = vand.u32 %v4207, 4294901760
        %4209 = vmatprep.subr.mxu0 %v4208
        %v4210 = vand.u32 %v1958, 4294901760
        %v4211 = vsub.f32 %v1958, %v4210
        %v4212 = vand.u32 %v4211, 4294901760
        %4213 = vmatpush1.msra.mxu0 %v4212
        %v4214 = vand.u32 %v1961, 4294901760
        %v4215 = vsub.f32 %v1961, %v4214
        %v4216 = vand.u32 %v4215, 4294901760
        %4217 = vmatprep.subr.mxu0 %v4216
        %v4218 = vand.u32 %v1960, 4294901760
        %v4219 = vsub.f32 %v1960, %v4218
        %v4220 = vand.u32 %v4219, 4294901760
        %4221 = vmatpush1.msra.mxu0 %v4220
        %v4222 = vand.u32 %v1963, 4294901760
        %v4223 = vsub.f32 %v1963, %v4222
        %v4224 = vand.u32 %v4223, 4294901760
        %4225 = vmatprep.subr.mxu0 %v4224
        %v4226 = vand.u32 %v1962, 4294901760
        %v4227 = vsub.f32 %v1962, %v4226
        %v4228 = vand.u32 %v4227, 4294901760
        %4229 = vmatpush1.msra.mxu0 %v4228
        %v4230 = vand.u32 %v1965, 4294901760
        %v4231 = vsub.f32 %v1965, %v4230
        %v4232 = vand.u32 %v4231, 4294901760
        %4233 = vmatprep.subr.mxu0 %v4232
        %v4234 = vand.u32 %v1964, 4294901760
        %v4235 = vsub.f32 %v1964, %v4234
        %v4236 = vand.u32 %v4235, 4294901760
        %4237 = vmatpush1.msra.mxu0 %v4236
        %v4238 = vand.u32 %v1967, 4294901760
        %v4239 = vsub.f32 %v1967, %v4238
        %v4240 = vand.u32 %v4239, 4294901760
        %4241 = vmatprep.subr.mxu0 %v4240
        %v4242 = vand.u32 %v1966, 4294901760
        %v4243 = vsub.f32 %v1966, %v4242
        %v4244 = vand.u32 %v4243, 4294901760
        %4245 = vmatpush1.msra.mxu0 %v4244
        %v4246 = vand.u32 %v1969, 4294901760
        %v4247 = vsub.f32 %v1969, %v4246
        %v4248 = vand.u32 %v4247, 4294901760
        %4249 = vmatprep.subr.mxu0 %v4248
        %v4250 = vand.u32 %v1968, 4294901760
        %v4251 = vsub.f32 %v1968, %v4250
        %v4252 = vand.u32 %v4251, 4294901760
        %4253 = vmatpush1.msra.mxu0 %v4252
        %v4254 = vand.u32 %v1971, 4294901760
        %v4255 = vsub.f32 %v1971, %v4254
        %v4256 = vand.u32 %v4255, 4294901760
        %4257 = vmatprep.subr.mxu0 %v4256
        %v4258 = vand.u32 %v1970, 4294901760
        %v4259 = vsub.f32 %v1970, %v4258
        %v4260 = vand.u32 %v4259, 4294901760
        %4261 = vmatpush1.msra.mxu0 %v4260
        %v4262 = vand.u32 %v1973, 4294901760
        %v4263 = vsub.f32 %v1973, %v4262
        %v4264 = vand.u32 %v4263, 4294901760
        %4265 = vmatprep.subr.mxu0 %v4264
        %v4266 = vand.u32 %v1972, 4294901760
        %v4267 = vsub.f32 %v1972, %v4266
        %v4268 = vand.u32 %v4267, 4294901760
        %4269 = vmatpush1.msra.mxu0 %v4268
        %v4270 = vand.u32 %v1975, 4294901760
        %v4271 = vsub.f32 %v1975, %v4270
        %v4272 = vand.u32 %v4271, 4294901760
        %4273 = vmatprep.subr.mxu0 %v4272
        %v4274 = vand.u32 %v1974, 4294901760
        %v4275 = vsub.f32 %v1974, %v4274
        %v4276 = vand.u32 %v4275, 4294901760
        %4277 = vmatpush1.msra.mxu0 %v4276
        %v4278 = vand.u32 %v1977, 4294901760
        %v4279 = vsub.f32 %v1977, %v4278
        %v4280 = vand.u32 %v4279, 4294901760
        %4281 = vmatprep.subr.mxu0 %v4280
        %v4282 = vand.u32 %v1976, 4294901760
        %v4283 = vsub.f32 %v1976, %v4282
        %v4284 = vand.u32 %v4283, 4294901760
        %4285 = vmatpush1.msra.mxu0 %v4284
        %v4286 = vand.u32 %v1979, 4294901760
        %v4287 = vsub.f32 %v1979, %v4286
        %v4288 = vand.u32 %v4287, 4294901760
        %4289 = vmatprep.subr.mxu0 %v4288
        %v4290 = vand.u32 %v1978, 4294901760
        %v4291 = vsub.f32 %v1978, %v4290
        %v4292 = vand.u32 %v4291, 4294901760
        %4293 = vmatpush1.msra.mxu0 %v4292
        %v4294 = vand.u32 %v1981, 4294901760
        %v4295 = vsub.f32 %v1981, %v4294
        %v4296 = vand.u32 %v4295, 4294901760
        %4297 = vmatprep.subr.mxu0 %v4296
        %v4298 = vand.u32 %v1980, 4294901760
        %v4299 = vsub.f32 %v1980, %v4298
        %v4300 = vand.u32 %v4299, 4294901760
        %4301 = vmatpush1.msra.mxu0 %v4300
        %v4302 = vand.u32 %v1983, 4294901760
        %v4303 = vsub.f32 %v1983, %v4302
        %v4304 = vand.u32 %v4303, 4294901760
        %4305 = vmatprep.subr.mxu0 %v4304
        %v4306 = vand.u32 %v1982, 4294901760
        %v4307 = vsub.f32 %v1982, %v4306
        %v4308 = vand.u32 %v4307, 4294901760
        %4309 = vmatpush1.msra.mxu0 %v4308
        %v4310 = vand.u32 %v1985, 4294901760
        %v4311 = vsub.f32 %v1985, %v4310
        %v4312 = vand.u32 %v4311, 4294901760
        %4313 = vmatprep.subr.mxu0 %v4312
        %v4314 = vand.u32 %v1984, 4294901760
        %v4315 = vsub.f32 %v1984, %v4314
        %v4316 = vand.u32 %v4315, 4294901760
        %4317 = vmatpush1.msra.mxu0 %v4316
        %v4318 = vand.u32 %v1987, 4294901760
        %v4319 = vsub.f32 %v1987, %v4318
        %v4320 = vand.u32 %v4319, 4294901760
        %4321 = vmatprep.subr.mxu0 %v4320
        %v4322 = vand.u32 %v1986, 4294901760
        %v4323 = vsub.f32 %v1986, %v4322
        %v4324 = vand.u32 %v4323, 4294901760
        %4325 = vmatpush1.msra.mxu0 %v4324
        %v4326 = vand.u32 %v1989, 4294901760
        %v4327 = vsub.f32 %v1989, %v4326
        %v4328 = vand.u32 %v4327, 4294901760
        %4329 = vmatprep.subr.mxu0 %v4328
        %v4330 = vand.u32 %v1988, 4294901760
        %v4331 = vsub.f32 %v1988, %v4330
        %v4332 = vand.u32 %v4331, 4294901760
        %4333 = vmatpush1.msra.mxu0 %v4332
        %v4334 = vand.u32 %v1991, 4294901760
        %v4335 = vsub.f32 %v1991, %v4334
        %v4336 = vand.u32 %v4335, 4294901760
        %4337 = vmatprep.subr.mxu0 %v4336
        %v4338 = vand.u32 %v1990, 4294901760
        %v4339 = vsub.f32 %v1990, %v4338
        %v4340 = vand.u32 %v4339, 4294901760
        %4341 = vmatpush1.msra.mxu0 %v4340
        %v4342 = vand.u32 %v1993, 4294901760
        %v4343 = vsub.f32 %v1993, %v4342
        %v4344 = vand.u32 %v4343, 4294901760
        %4345 = vmatprep.subr.mxu0 %v4344
        %v4346 = vand.u32 %v1992, 4294901760
        %v4347 = vsub.f32 %v1992, %v4346
        %v4348 = vand.u32 %v4347, 4294901760
        %4349 = vmatpush1.msra.mxu0 %v4348
        %v4350 = vand.u32 %v1995, 4294901760
        %v4351 = vsub.f32 %v1995, %v4350
        %v4352 = vand.u32 %v4351, 4294901760
        %4353 = vmatprep.subr.mxu0 %v4352
        %v4354 = vand.u32 %v1994, 4294901760
        %v4355 = vsub.f32 %v1994, %v4354
        %v4356 = vand.u32 %v4355, 4294901760
        %4357 = vmatpush1.msra.mxu0 %v4356
        %v4358 = vand.u32 %v1997, 4294901760
        %v4359 = vsub.f32 %v1997, %v4358
        %v4360 = vand.u32 %v4359, 4294901760
        %4361 = vmatprep.subr.mxu0 %v4360
        %v4362 = vand.u32 %v1996, 4294901760
        %v4363 = vsub.f32 %v1996, %v4362
        %v4364 = vand.u32 %v4363, 4294901760
        %4365 = vmatpush1.msra.mxu0 %v4364
        %v4366 = vand.u32 %v1999, 4294901760
        %v4367 = vsub.f32 %v1999, %v4366
        %v4368 = vand.u32 %v4367, 4294901760
        %4369 = vmatprep.subr.mxu0 %v4368
        %v4370 = vand.u32 %v1998, 4294901760
        %v4371 = vsub.f32 %v1998, %v4370
        %v4372 = vand.u32 %v4371, 4294901760
        %4373 = vmatpush1.msra.mxu0 %v4372
        %v4374 = vand.u32 %v2001, 4294901760
        %v4375 = vsub.f32 %v2001, %v4374
        %v4376 = vand.u32 %v4375, 4294901760
        %4377 = vmatprep.subr.mxu0 %v4376
        %v4378 = vand.u32 %v2000, 4294901760
        %v4379 = vsub.f32 %v2000, %v4378
        %v4380 = vand.u32 %v4379, 4294901760
        %4381 = vmatpush1.msra.mxu0 %v4380
        %v4382 = vand.u32 %v2003, 4294901760
        %v4383 = vsub.f32 %v2003, %v4382
        %v4384 = vand.u32 %v4383, 4294901760
        %4385 = vmatprep.subr.mxu0 %v4384
        %v4386 = vand.u32 %v2002, 4294901760
        %v4387 = vsub.f32 %v2002, %v4386
        %v4388 = vand.u32 %v4387, 4294901760
        %4389 = vmatpush1.msra.mxu0 %v4388
        %v4390 = vand.u32 %v2005, 4294901760
        %v4391 = vsub.f32 %v2005, %v4390
        %v4392 = vand.u32 %v4391, 4294901760
        %4393 = vmatprep.subr.mxu0 %v4392
        %v4394 = vand.u32 %v2004, 4294901760
        %v4395 = vsub.f32 %v2004, %v4394
        %v4396 = vand.u32 %v4395, 4294901760
        %4397 = vmatpush1.msra.mxu0 %v4396
        %v4398 = vand.u32 %v2007, 4294901760
        %v4399 = vsub.f32 %v2007, %v4398
        %v4400 = vand.u32 %v4399, 4294901760
        %4401 = vmatprep.subr.mxu0 %v4400
        %v4402 = vand.u32 %v2006, 4294901760
        %v4403 = vsub.f32 %v2006, %v4402
        %v4404 = vand.u32 %v4403, 4294901760
        %4405 = vmatpush1.msra.mxu0 %v4404
        %v4406 = vand.u32 %v2009, 4294901760
        %v4407 = vsub.f32 %v2009, %v4406
        %v4408 = vand.u32 %v4407, 4294901760
        %4409 = vmatprep.subr.mxu0 %v4408
        %v4410 = vand.u32 %v2008, 4294901760
        %v4411 = vsub.f32 %v2008, %v4410
        %v4412 = vand.u32 %v4411, 4294901760
        %4413 = vmatpush1.msra.mxu0 %v4412
        %v4414 = vand.u32 %v2011, 4294901760
        %v4415 = vsub.f32 %v2011, %v4414
        %v4416 = vand.u32 %v4415, 4294901760
        %4417 = vmatprep.subr.mxu0 %v4416
        %v4418 = vand.u32 %v2010, 4294901760
        %v4419 = vsub.f32 %v2010, %v4418
        %v4420 = vand.u32 %v4419, 4294901760
        %4421 = vmatpush1.msra.mxu0 %v4420
        %v4422 = vand.u32 %v2013, 4294901760
        %v4423 = vsub.f32 %v2013, %v4422
        %v4424 = vand.u32 %v4423, 4294901760
        %4425 = vmatprep.subr.mxu0 %v4424
        %v4426 = vand.u32 %v2012, 4294901760
        %v4427 = vsub.f32 %v2012, %v4426
        %v4428 = vand.u32 %v4427, 4294901760
        %4429 = vmatpush1.msra.mxu0 %v4428
        %v4430 = vand.u32 %v2015, 4294901760
        %v4431 = vsub.f32 %v2015, %v4430
        %v4432 = vand.u32 %v4431, 4294901760
        %4433 = vmatprep.subr.mxu0 %v4432
        %v4434 = vand.u32 %v2014, 4294901760
        %v4435 = vsub.f32 %v2014, %v4434
        %v4436 = vand.u32 %v4435, 4294901760
        %4437 = vmatpush1.msra.mxu0 %v4436
        %v4438 = vand.u32 %v1887, 4294901760
        %4439 = vmatprep.mubr.f32.mxu0 %v4438
        %v4440 = vand.u32 %v1878, 4294901760
        %4441 = vmatmul.mubr.f32.gmra.mrb[0].mxu0 %v4440
        %v4442 = vpop.f32.mrb[0].mxu0
        %v4443 = vadd.f32 %v4178, %v4442
        %v4444 = vpop.f32.mrb[0].mxu0
        %v4445 = vadd.f32 %v4180, %v4444
        %4446 = vdwg.mxu0
        %v4447 = vand.u32 %v1953, 4294901760
        %4448 = vmatprep.subr.mxu0 %v4447
        %v4449 = vand.u32 %v1952, 4294901760
        %4450 = vmatpush1.msra.mxu0 %v4449
        %v4451 = vand.u32 %v1955, 4294901760
        %4452 = vmatprep.subr.mxu0 %v4451
        %v4453 = vand.u32 %v1954, 4294901760
        %4454 = vmatpush1.msra.mxu0 %v4453
        %v4455 = vand.u32 %v1957, 4294901760
        %4456 = vmatprep.subr.mxu0 %v4455
        %v4457 = vand.u32 %v1956, 4294901760
        %4458 = vmatpush1.msra.mxu0 %v4457
        %v4459 = vand.u32 %v1959, 4294901760
        %4460 = vmatprep.subr.mxu0 %v4459
        %v4461 = vand.u32 %v1958, 4294901760
        %4462 = vmatpush1.msra.mxu0 %v4461
        %v4463 = vand.u32 %v1961, 4294901760
        %4464 = vmatprep.subr.mxu0 %v4463
        %v4465 = vand.u32 %v1960, 4294901760
        %4466 = vmatpush1.msra.mxu0 %v4465
        %v4467 = vand.u32 %v1963, 4294901760
        %4468 = vmatprep.subr.mxu0 %v4467
        %v4469 = vand.u32 %v1962, 4294901760
        %4470 = vmatpush1.msra.mxu0 %v4469
        %v4471 = vand.u32 %v1965, 4294901760
        %4472 = vmatprep.subr.mxu0 %v4471
        %v4473 = vand.u32 %v1964, 4294901760
        %4474 = vmatpush1.msra.mxu0 %v4473
        %v4475 = vand.u32 %v1967, 4294901760
        %4476 = vmatprep.subr.mxu0 %v4475
        %v4477 = vand.u32 %v1966, 4294901760
        %4478 = vmatpush1.msra.mxu0 %v4477
        %v4479 = vand.u32 %v1969, 4294901760
        %4480 = vmatprep.subr.mxu0 %v4479
        %v4481 = vand.u32 %v1968, 4294901760
        %4482 = vmatpush1.msra.mxu0 %v4481
        %v4483 = vand.u32 %v1971, 4294901760
        %4484 = vmatprep.subr.mxu0 %v4483
        %v4485 = vand.u32 %v1970, 4294901760
        %4486 = vmatpush1.msra.mxu0 %v4485
        %v4487 = vand.u32 %v1973, 4294901760
        %4488 = vmatprep.subr.mxu0 %v4487
        %v4489 = vand.u32 %v1972, 4294901760
        %4490 = vmatpush1.msra.mxu0 %v4489
        %v4491 = vand.u32 %v1975, 4294901760
        %4492 = vmatprep.subr.mxu0 %v4491
        %v4493 = vand.u32 %v1974, 4294901760
        %4494 = vmatpush1.msra.mxu0 %v4493
        %v4495 = vand.u32 %v1977, 4294901760
        %4496 = vmatprep.subr.mxu0 %v4495
        %v4497 = vand.u32 %v1976, 4294901760
        %4498 = vmatpush1.msra.mxu0 %v4497
        %v4499 = vand.u32 %v1979, 4294901760
        %4500 = vmatprep.subr.mxu0 %v4499
        %v4501 = vand.u32 %v1978, 4294901760
        %4502 = vmatpush1.msra.mxu0 %v4501
        %v4503 = vand.u32 %v1981, 4294901760
        %4504 = vmatprep.subr.mxu0 %v4503
        %v4505 = vand.u32 %v1980, 4294901760
        %4506 = vmatpush1.msra.mxu0 %v4505
        %v4507 = vand.u32 %v1983, 4294901760
        %4508 = vmatprep.subr.mxu0 %v4507
        %v4509 = vand.u32 %v1982, 4294901760
        %4510 = vmatpush1.msra.mxu0 %v4509
        %v4511 = vand.u32 %v1985, 4294901760
        %4512 = vmatprep.subr.mxu0 %v4511
        %v4513 = vand.u32 %v1984, 4294901760
        %4514 = vmatpush1.msra.mxu0 %v4513
        %v4515 = vand.u32 %v1987, 4294901760
        %4516 = vmatprep.subr.mxu0 %v4515
        %v4517 = vand.u32 %v1986, 4294901760
        %4518 = vmatpush1.msra.mxu0 %v4517
        %v4519 = vand.u32 %v1989, 4294901760
        %4520 = vmatprep.subr.mxu0 %v4519
        %v4521 = vand.u32 %v1988, 4294901760
        %4522 = vmatpush1.msra.mxu0 %v4521
        %v4523 = vand.u32 %v1991, 4294901760
        %4524 = vmatprep.subr.mxu0 %v4523
        %v4525 = vand.u32 %v1990, 4294901760
        %4526 = vmatpush1.msra.mxu0 %v4525
        %v4527 = vand.u32 %v1993, 4294901760
        %4528 = vmatprep.subr.mxu0 %v4527
        %v4529 = vand.u32 %v1992, 4294901760
        %4530 = vmatpush1.msra.mxu0 %v4529
        %v4531 = vand.u32 %v1995, 4294901760
        %4532 = vmatprep.subr.mxu0 %v4531
        %v4533 = vand.u32 %v1994, 4294901760
        %4534 = vmatpush1.msra.mxu0 %v4533
        %v4535 = vand.u32 %v1997, 4294901760
        %4536 = vmatprep.subr.mxu0 %v4535
        %v4537 = vand.u32 %v1996, 4294901760
        %4538 = vmatpush1.msra.mxu0 %v4537
        %v4539 = vand.u32 %v1999, 4294901760
        %4540 = vmatprep.subr.mxu0 %v4539
        %v4541 = vand.u32 %v1998, 4294901760
        %4542 = vmatpush1.msra.mxu0 %v4541
        %v4543 = vand.u32 %v2001, 4294901760
        %4544 = vmatprep.subr.mxu0 %v4543
        %v4545 = vand.u32 %v2000, 4294901760
        %4546 = vmatpush1.msra.mxu0 %v4545
        %v4547 = vand.u32 %v2003, 4294901760
        %4548 = vmatprep.subr.mxu0 %v4547
        %v4549 = vand.u32 %v2002, 4294901760
        %4550 = vmatpush1.msra.mxu0 %v4549
        %v4551 = vand.u32 %v2005, 4294901760
        %4552 = vmatprep.subr.mxu0 %v4551
        %v4553 = vand.u32 %v2004, 4294901760
        %4554 = vmatpush1.msra.mxu0 %v4553
        %v4555 = vand.u32 %v2007, 4294901760
        %4556 = vmatprep.subr.mxu0 %v4555
        %v4557 = vand.u32 %v2006, 4294901760
        %4558 = vmatpush1.msra.mxu0 %v4557
        %v4559 = vand.u32 %v2009, 4294901760
        %4560 = vmatprep.subr.mxu0 %v4559
        %v4561 = vand.u32 %v2008, 4294901760
        %4562 = vmatpush1.msra.mxu0 %v4561
        %v4563 = vand.u32 %v2011, 4294901760
        %4564 = vmatprep.subr.mxu0 %v4563
        %v4565 = vand.u32 %v2010, 4294901760
        %4566 = vmatpush1.msra.mxu0 %v4565
        %v4567 = vand.u32 %v2013, 4294901760
        %4568 = vmatprep.subr.mxu0 %v4567
        %v4569 = vand.u32 %v2012, 4294901760
        %4570 = vmatpush1.msra.mxu0 %v4569
        %v4571 = vand.u32 %v2015, 4294901760
        %4572 = vmatprep.subr.mxu0 %v4571
        %v4573 = vand.u32 %v2014, 4294901760
        %4574 = vmatpush1.msra.mxu0 %v4573
        %v4575 = vand.u32 %v1887, 4294901760
        %4576 = vmatprep.mubr.f32.mxu0 %v4575
        %v4577 = vand.u32 %v1878, 4294901760
        %4578 = vmatmul.mubr.f32.gmra.mrb[0].mxu0 %v4577
        %v4579 = vpop.f32.mrb[0].mxu0
        %v4580 = vadd.f32 %v4443, %v4579
        %v4581 = vpop.f32.mrb[0].mxu0
        %v4582 = vadd.f32 %v4445, %v4581
        %4583 = vdwg.mxu0
        %v4584 = vxor.u32 %v4580, 2147483648
        %v4585 = vxor.u32 %v4582, 2147483648
        %v4586 = vmul.f32 %v4584, 1.442695
        %v4587 = vpow.pop %v4586
        %v4588 = vmul.f32 %v4585, 1.442695
        %v4589 = vpow.pop %v4588
        %v4590 = vadd.f32 %v4587, 1.0
        %v4591 = vadd.f32 %v4589, 1.0
        %v4592 = vrcp.pop %v4590
        %v4593 = vmul.f32 1.0, %v4592
        %v4594 = vrcp.pop %v4591
        %v4595 = vmul.f32 1.0, %v4594
        %v4596 = vlaneseq
        %v4597 = vshrl.u32 %v4596, 7
        %v4598 = vsub.s32 0, %v4597
        %v4599 = vrot.slane %v4593, %v4598
        %v4600 = vlaneseq
        %v4601 = vshrl.u32 %v4600, 7
        %v4602 = vsub.s32 0, %v4601
        %v4603 = vrot.slane %v4595, %v4602
        %v4604 = vmul.f32 %v1841, %v4599
        %v4605 = vmul.f32 %v1842, %v4603
        %v4606 = vmul.f32 %v1843, %v4599
        %v4607 = vmul.f32 %v1844, %v4603
        %v4608 = vmul.f32 %v1845, %v4599
        %v4609 = vmul.f32 %v1846, %v4603
        %v4610 = vmul.f32 %v1847, %v4599
        %v4611 = vmul.f32 %v1848, %v4603
        %4612 = vst [vmem:[%s284] sm:$0xff] %v4604
        %4613 = vst [vmem:[%s284 + $0x8] sm:$0xff] %v4605
        %4614 = vst [vmem:[%s284 + $0x10] sm:$0xff] %v4606
        %4615 = vst [vmem:[%s284 + $0x18] sm:$0xff] %v4607
        %4616 = vst [vmem:[%s284 + $0x20] sm:$0xff] %v4608
        %4617 = vst [vmem:[%s284 + $0x28] sm:$0xff] %v4609
        %4618 = vst [vmem:[%s284 + $0x30] sm:$0xff] %v4610
        %4619 = vst [vmem:[%s284 + $0x38] sm:$0xff] %v4611
        %s4620 = sand.u32 %s163, 1
        %s4621 = scalar_lea.sflag [#allocation4], %s4620
        %s4622 = sand.u32 %s163, 1
        %s4623 = smul.addr %s4622, 64
        %s4624 = scalar_lea.vmem [#allocation7], %s4623
        // Predicated region
        $region53: #{tpu_custom_call.1} parent=43 // pred_check
          %p4625 = pneg %p173
        $region54: #{tpu_custom_call.1} parent=43 // pred_check_branch
          %4627 = sbr.rel (%p4625) target = $region56
        $region55: #{tpu_custom_call.1} parent=43 // pred_region
          %s4629 = ssub.s32 1024, 1024
          %4630 = vsyncadd %s4621, %s4629
          %s4631 = smul.addr %s24, 8
          %s4632 = smul.addr %s4631, 128
          %s4633 = scalar_lea.hbm %s6, %s4632
          %s4634 = sshll.u32 %s4624, 4
          %s4635 = int_to_ptr.vmem [resolvable:$true] %s4634
          %4640 = dma.vmem_to_hbm [thread:$0]  %s4635, 1024, %s4633, %s4621, 256, 256, 16
        $region56: #{tpu_custom_call.1} parent=43 // pred_fallthru
          _
      $region44: #{tpu_custom_call.1} parent=5 // pred_fallthru
        _
      %p4641 = scmp.le.s32.totalorder 2, %s19
      // Predicated region
      $region57: #{tpu_custom_call.1} parent=5 // pred_check
        %p4642 = pneg %p4641
      $region58: #{tpu_custom_call.1} parent=5 // pred_check_branch
        %4644 = sbr.rel (%p4642) target = $region60
      $region59: #{tpu_custom_call.1} parent=5 // pred_region
        %s4645 = ssub.s32 %s19, 2
        // Predicated region
        $region61: #{tpu_custom_call.1} parent=59 // pred_check
          %p4646 = pneg %p179
        $region62: #{tpu_custom_call.1} parent=59 // pred_check_branch
          %4648 = sbr.rel (%p4646) target = $region64
        $region63: #{tpu_custom_call.1} parent=59 // pred_region
          %s4649 = sand.u32 %s164, 1
          %s4650 = scalar_lea.sflag [#allocation4], %s4649
          %s4651 = sand.u32 %s164, 1
          %s4652 = smul.addr %s4651, 64
          %s4653 = scalar_lea.vmem [#allocation7], %s4652
          %4654 = dma.done %s4650, 1024
        $region64: #{tpu_custom_call.1} parent=59 // pred_fallthru
          _
      $region60: #{tpu_custom_call.1} parent=5 // pred_fallthru
        _
    $region6: #{tpu_custom_call.1} parent=1 // loop_footer
      %s23 = sadd.s32 1, %s19
    $region7: #{tpu_custom_call.1} parent=1 // loop_footer_branch
      %18 = sbr.rel target = $region3
    $region8: #{tpu_custom_call.1} parent=1 // loop_exit
      _
    %4655 = vsyncpa [#allocation3], 1
    %s4656 = scalar_lea.sflag [#allocation3], 1
    %4657 = vsyncpa %s4656, 1
    %4658 = vsyncpa [#allocation6], 1
    %4659 = vsyncpa [#allocation4], 1
    %s4660 = scalar_lea.sflag [#allocation4], 1
    %4661 = vsyncpa %s4660, 1

// kernel: tpu_custom_call.1
$region0: #{tpu_custom_call.1}
  #allocation0 [shape = 'u32[]', space=smem, size = 0x4, offset = 0x4, fixed_abs, tag = 'smem constant byte address 0x4 - core index']
  #allocation1 [shape = 'u32[144,128]{1,0:T(1,128)}', space=vmem, size = 0x12000, scoped, tag = 'internal scratch']
  %s0 = inlined_call_operand.hbm [shape: f32[2,32,256], index: 0, kind: input, shape index: {}]
  %s1 = inlined_call_operand.vmem [shape: f32[32,2], index: 1, kind: input, shape index: {}]
  %s2 = inlined_call_operand.vmem [shape: f32[1,2], index: 2, kind: input, shape index: {}]
  %s3 = inlined_call_operand.vmem [shape: f32[2,32], index: 3, kind: input, shape index: {}]
  %s4 = inlined_call_operand.vmem [shape: f32[1,32], index: 4, kind: input, shape index: {}]
  %s5 = inlined_call_operand.hbm [shape: f32[512,256], index: 5, kind: input, shape index: {}]
  %s6 = inlined_call_operand.hbm [shape: f32[2,32,256], index: 6, kind: output, shape index: {}]
  %s7 = sld [smem:[#allocation0]]
  $region65: #{tpu_custom_call.1} parent=0
    _
  %s9 = ssub.s32 1, %s7
  %s10 = scalar_select 0, %s9, %s7
  $region1: #{tpu_custom_call.1} parent=0
    #allocation2 [shape = 'u8[65536]{0}', space=vmem, size = 0x10000, scoped, tag = 'input window, operand 0']
    #allocation3 [shape = 's32[2]{0}', space=sflag, size = 0x8, scoped, tag = 'scoped memory for tpu_custom_call.1']
    #allocation4 [shape = 's32[2]{0}', space=sflag, size = 0x8, scoped, tag = 'scoped memory for tpu_custom_call.1']
    #allocation5 [shape = 'u8[524288]{0}', space=vmem, size = 0x80000, scoped, tag = 'input window, operand 5, single buffered']
    #allocation6 [shape = 's32[1]{0}', space=sflag, size = 0x4, scoped, tag = 'scoped memory for tpu_custom_call.1']
    #allocation7 [shape = 'u8[65536]{0}', space=vmem, size = 0x10000, scoped, tag = 'output window, operand 0']
    %11 = vsyncpa [#allocation3], 0
    %s12 = scalar_lea.sflag [#allocation3], 1
    %13 = vsyncpa %s12, 0
    %14 = vsyncpa [#allocation6], 0
    %15 = vsyncpa [#allocation4], 0
    %s16 = scalar_lea.sflag [#allocation4], 1
    %17 = vsyncpa %s16, 0
    loop: start=0, step=1, limit=4
    $region2: #{tpu_custom_call.1} parent=1 // loop_pre_header
      _
    $region3: #{tpu_custom_call.1} parent=1 // loop_header
      %s19 = sphi 0, %s23
      %p20 = scmp.ge.s32.totalorder %s19, 4
      %s29 = sphi 0, %s31
      %s32 = sphi 0, %s29
      %s33 = sphi 0, %s32
      %s49 = sphi 0, %s33
      %s53 = sphi 0, %s53
      %s55 = sphi 0, %s53
      %s56 = sphi 0, %s55
      %s70 = sphi 0, %s56
      %s74 = sphi 0, %s74
      %s76 = sphi 0, %s74
      %s77 = sphi 0, %s76
      %s91 = sphi 0, %s77
      %s95 = sphi 0, %s95
      %s97 = sphi 0, %s95
      %s98 = sphi 0, %s97
      %s112 = sphi 0, %s98
      %s116 = sphi 0, %s116
      %s118 = sphi 0, %s116
      %s119 = sphi 0, %s118
      %s133 = sphi 0, %s119
      %s137 = sphi 0, %s137
      %s139 = sphi 0, %s137
      %s140 = sphi 0, %s139
      %s154 = sphi 0, %s140
      %s160 = sphi 0, %s162
      %s163 = sphi 0, %s160
      %s164 = sphi 0, %s163
      %s180 = sphi 0, %s164
    $region4: #{tpu_custom_call.1} parent=1 // loop_header_branch
      %22 = sbr.rel (%p20) target = $region8
    $region5: #{tpu_custom_call.1} parent=1 // loop_body
      %s24 = ssub.s32 %s19, 1
      %s25 = ssub.s32 %s19, 2
      %s26 = sadd.s32 %s19, 1
      %s27 = ssub.s32 %s19, %s26
      %p28 = scmp.eq.s32.totalorder %s27, 0
      %s30 = sadd.s32 %s29, 1
      %s31 = scalar_select %p28, %s29, %s30
      %p34 = pneg %p28
      %p35 = scmp.eq.s32.totalorder %s19, 1
      %p36 = por %p34, %p35
      %p37 = scmp.ne.s32.totalorder %s29, %s32
      %p38 = scmp.eq.s32.totalorder %s19, 0
      %p39 = por %p37, %p38
      %p40 = scmp.ne.s32.totalorder %s29, %s32
      %p41 = scmp.eq.s32.totalorder %s24, 1
      %p42 = por %p40, %p41
      %p43 = scmp.ne.s32.totalorder %s32, %s33
      %p44 = scmp.eq.s32.totalorder %s24, 0
      %p45 = por %p43, %p44
      %p46 = scmp.ne.s32.totalorder %s32, %s33
      %p47 = scmp.eq.s32.totalorder %s25, 1
      %p48 = por %p46, %p47
      %p50 = scmp.ne.s32.totalorder %s33, %s49
      %p51 = scmp.eq.s32.totalorder %s25, 0
      %p52 = por %p50, %p51
      %s54 = sadd.s32 %s53, 1
      %p57 = scmp.eq.s32.totalorder %s19, 1
      %p58 = scmp.ne.s32.totalorder %s53, %s55
      %p59 = scmp.eq.s32.totalorder %s19, 0
      %p60 = por %p58, %p59
      %p61 = scmp.ne.s32.totalorder %s53, %s55
      %p62 = scmp.eq.s32.totalorder %s24, 1
      %p63 = por %p61, %p62
      %p64 = scmp.ne.s32.totalorder %s55, %s56
      %p65 = scmp.eq.s32.totalorder %s24, 0
      %p66 = por %p64, %p65
      %p67 = scmp.ne.s32.totalorder %s55, %s56
      %p68 = scmp.eq.s32.totalorder %s25, 1
      %p69 = por %p67, %p68
      %p71 = scmp.ne.s32.totalorder %s56, %s70
      %p72 = scmp.eq.s32.totalorder %s25, 0
      %p73 = por %p71, %p72
      %s75 = sadd.s32 %s74, 1
      %p78 = scmp.eq.s32.totalorder %s19, 1
      %p79 = scmp.ne.s32.totalorder %s74, %s76
      %p80 = scmp.eq.s32.totalorder %s19, 0
      %p81 = por %p79, %p80
      %p82 = scmp.ne.s32.totalorder %s74, %s76
      %p83 = scmp.eq.s32.totalorder %s24, 1
      %p84 = por %p82, %p83
      %p85 = scmp.ne.s32.totalorder %s76, %s77
      %p86 = scmp.eq.s32.totalorder %s24, 0
      %p87 = por %p85, %p86
      %p88 = scmp.ne.s32.totalorder %s76, %s77
      %p89 = scmp.eq.s32.totalorder %s25, 1
      %p90 = por %p88, %p89
      %p92 = scmp.ne.s32.totalorder %s77, %s91
      %p93 = scmp.eq.s32.totalorder %s25, 0
      %p94 = por %p92, %p93
      %s96 = sadd.s32 %s95, 1
      %p99 = scmp.eq.s32.totalorder %s19, 1
      %p100 = scmp.ne.s32.totalorder %s95, %s97
      %p101 = scmp.eq.s32.totalorder %s19, 0
      %p102 = por %p100, %p101
      %p103 = scmp.ne.s32.totalorder %s95, %s97
      %p104 = scmp.eq.s32.totalorder %s24, 1
      %p105 = por %p103, %p104
      %p106 = scmp.ne.s32.totalorder %s97, %s98
      %p107 = scmp.eq.s32.totalorder %s24, 0
      %p108 = por %p106, %p107
      %p109 = scmp.ne.s32.totalorder %s97, %s98
      %p110 = scmp.eq.s32.totalorder %s25, 1
      %p111 = por %p109, %p110
      %p113 = scmp.ne.s32.totalorder %s98, %s112
      %p114 = scmp.eq.s32.totalorder %s25, 0
      %p115 = por %p113, %p114
      %s117 = sadd.s32 %s116, 1
      %p120 = scmp.eq.s32.totalorder %s19, 1
      %p121 = scmp.ne.s32.totalorder %s116, %s118
      %p122 = scmp.eq.s32.totalorder %s19, 0
      %p123 = por %p121, %p122
      %p124 = scmp.ne.s32.totalorder %s116, %s118
      %p125 = scmp.eq.s32.totalorder %s24, 1
      %p126 = por %p124, %p125
      %p127 = scmp.ne.s32.totalorder %s118, %s119
      %p128 = scmp.eq.s32.totalorder %s24, 0
      %p129 = por %p127, %p128
      %p130 = scmp.ne.s32.totalorder %s118, %s119
      %p131 = scmp.eq.s32.totalorder %s25, 1
      %p132 = por %p130, %p131
      %p134 = scmp.ne.s32.totalorder %s119, %s133
      %p135 = scmp.eq.s32.totalorder %s25, 0
      %p136 = por %p134, %p135
      %s138 = sadd.s32 %s137, 1
      %p141 = scmp.eq.s32.totalorder %s19, 1
      %p142 = scmp.ne.s32.totalorder %s137, %s139
      %p143 = scmp.eq.s32.totalorder %s19, 0
      %p144 = por %p142, %p143
      %p145 = scmp.ne.s32.totalorder %s137, %s139
      %p146 = scmp.eq.s32.totalorder %s24, 1
      %p147 = por %p145, %p146
      %p148 = scmp.ne.s32.totalorder %s139, %s140
      %p149 = scmp.eq.s32.totalorder %s24, 0
      %p150 = por %p148, %p149
      %p151 = scmp.ne.s32.totalorder %s139, %s140
      %p152 = scmp.eq.s32.totalorder %s25, 1
      %p153 = por %p151, %p152
      %p155 = scmp.ne.s32.totalorder %s140, %s154
      %p156 = scmp.eq.s32.totalorder %s25, 0
      %p157 = por %p155, %p156
      %s158 = ssub.s32 %s19, %s26
      %p159 = scmp.eq.s32.totalorder %s158, 0
      %s161 = sadd.s32 %s160, 1
      %s162 = scalar_select %p159, %s160, %s161
      %p165 = pneg %p159
      %p166 = scmp.eq.s32.totalorder %s19, 1
      %p167 = por %p165, %p166
      %p168 = scmp.ne.s32.totalorder %s160, %s163
      %p169 = scmp.eq.s32.totalorder %s19, 0
      %p170 = por %p168, %p169
      %p171 = scmp.ne.s32.totalorder %s160, %s163
      %p172 = scmp.eq.s32.totalorder %s24, 1
      %p173 = por %p171, %p172
      %p174 = scmp.ne.s32.totalorder %s163, %s164
      %p175 = scmp.eq.s32.totalorder %s24, 0
      %p176 = por %p174, %p175
      %p177 = scmp.ne.s32.totalorder %s163, %s164
      %p178 = scmp.eq.s32.totalorder %s25, 1
      %p179 = por %p177, %p178
      %p181 = scmp.ne.s32.totalorder %s164, %s180
      %p182 = scmp.eq.s32.totalorder %s25, 0
      %p183 = por %p181, %p182
      %p184 = scmp.le.s32.totalorder 1, %s19
      %p185 = scmp.lt.s32.totalorder %s19, 3
      %p186 = pnand %p184, %p185
      %p187 = pneg %p186
      // Predicated region
      $region9: #{tpu_custom_call.1} parent=5 // pred_check
        _
      $region10: #{tpu_custom_call.1} parent=5 // pred_check_branch
        %189 = sbr.rel (%p186) target = $region12
      $region11: #{tpu_custom_call.1} parent=5 // pred_region
        %s190 = ssub.s32 %s19, 1
        // Predicated region
        $region13: #{tpu_custom_call.1} parent=11 // pred_check
          %p191 = pneg %p66
        $region14: #{tpu_custom_call.1} parent=11 // pred_check_branch
          %193 = sbr.rel (%p191) target = $region16
        $region15: #{tpu_custom_call.1} parent=11 // pred_region
          _
        $region16: #{tpu_custom_call.1} parent=11 // pred_fallthru
          _
        // Predicated region
        $region17: #{tpu_custom_call.1} parent=11 // pred_check
          %p194 = pneg %p87
        $region18: #{tpu_custom_call.1} parent=11 // pred_check_branch
          %196 = sbr.rel (%p194) target = $region20
        $region19: #{tpu_custom_call.1} parent=11 // pred_region
          _
        $region20: #{tpu_custom_call.1} parent=11 // pred_fallthru
          _
        // Predicated region
        $region21: #{tpu_custom_call.1} parent=11 // pred_check
          %p197 = pneg %p108
        $region22: #{tpu_custom_call.1} parent=11 // pred_check_branch
          %199 = sbr.rel (%p197) target = $region24
        $region23: #{tpu_custom_call.1} parent=11 // pred_region
          _
        $region24: #{tpu_custom_call.1} parent=11 // pred_fallthru
          _
        // Predicated region
        $region25: #{tpu_custom_call.1} parent=11 // pred_check
          %p200 = pneg %p129
        $region26: #{tpu_custom_call.1} parent=11 // pred_check_branch
          %202 = sbr.rel (%p200) target = $region28
        $region27: #{tpu_custom_call.1} parent=11 // pred_region
          _
        $region28: #{tpu_custom_call.1} parent=11 // pred_fallthru
          _
        // Predicated region
        $region29: #{tpu_custom_call.1} parent=11 // pred_check
          %p203 = pneg %p150
        $region30: #{tpu_custom_call.1} parent=11 // pred_check_branch
          %205 = sbr.rel (%p203) target = $region32
        $region31: #{tpu_custom_call.1} parent=11 // pred_region
          %s207 = ssub.s32 16384, 16384
          %208 = vsyncadd [#allocation6], %s207
          %s209 = sshll.u32 [#allocation5], 4
          %s210 = int_to_ptr.vmem [resolvable:$true] %s209
          %215 = dma.hbm_to_vmem [thread:$0]  %s5, 16384, %s210, [#allocation6], 256, 256, 16
        $region32: #{tpu_custom_call.1} parent=11 // pred_fallthru
          _
      $region12: #{tpu_custom_call.1} parent=5 // pred_fallthru
        _
      %p216 = scmp.lt.s32.totalorder %s19, 2
      // Predicated region
      $region33: #{tpu_custom_call.1} parent=5 // pred_check
        %p217 = pneg %p216
      $region34: #{tpu_custom_call.1} parent=5 // pred_check_branch
        %219 = sbr.rel (%p217) target = $region36
      $region35: #{tpu_custom_call.1} parent=5 // pred_region
        // Predicated region
        $region37: #{tpu_custom_call.1} parent=35 // pred_check
          %p220 = pneg %p39
        $region38: #{tpu_custom_call.1} parent=35 // pred_check_branch
          %222 = sbr.rel (%p220) target = $region40
        $region39: #{tpu_custom_call.1} parent=35 // pred_region
          %s223 = sand.u32 %s29, 1
          %s224 = scalar_lea.sflag [#allocation3], %s223
          %s225 = sand.u32 %s29, 1
          %s226 = smul.addr %s225, 64
          %s227 = scalar_lea.vmem [#allocation2], %s226
          %s229 = ssub.s32 1024, 1024
          %230 = vsyncadd %s224, %s229
          %s231 = smul.addr %s19, 8
          %s232 = smul.addr %s231, 128
          %s233 = scalar_lea.hbm %s0, %s232
          %s234 = sshll.u32 %s227, 4
          %s235 = int_to_ptr.vmem [resolvable:$true] %s234
          %240 = dma.hbm_to_vmem [thread:$0]  %s233, 1024, %s235, %s224, 256, 256, 16
        $region40: #{tpu_custom_call.1} parent=35 // pred_fallthru
          _
      $region36: #{tpu_custom_call.1} parent=5 // pred_fallthru
        _
      %p241 = scmp.le.s32.totalorder 1, %s19
      %p242 = scmp.lt.s32.totalorder %s19, 3
      %p243 = pnand %p241, %p242
      %p244 = pneg %p243
      // Predicated region
      $region41: #{tpu_custom_call.1} parent=5 // pred_check
        _
      $region42: #{tpu_custom_call.1} parent=5 // pred_check_branch
        %246 = sbr.rel (%p243) target = $region44
      $region43: #{tpu_custom_call.1} parent=5 // pred_region
        %s247 = ssub.s32 %s19, 1
        %s248 = sand.u32 %s32, 1
        %s249 = scalar_lea.sflag [#allocation3], %s248
        %s250 = sand.u32 %s32, 1
        %s251 = smul.addr %s250, 64
        %s252 = scalar_lea.vmem [#allocation2], %s251
        // Predicated region
        $region45: #{tpu_custom_call.1} parent=43 // pred_check
          %p253 = pneg %p45
        $region46: #{tpu_custom_call.1} parent=43 // pred_check_branch
          %255 = sbr.rel (%p253) target = $region48
        $region47: #{tpu_custom_call.1} parent=43 // pred_region
          %256 = dma.done %s249, 1024
        $region48: #{tpu_custom_call.1} parent=43 // pred_fallthru
          _
        // Predicated region
        $region49: #{tpu_custom_call.1} parent=43 // pred_check
          %p257 = pneg %p150
        $region50: #{tpu_custom_call.1} parent=43 // pred_check_branch
          %259 = sbr.rel (%p257) target = $region52
        $region51: #{tpu_custom_call.1} parent=43 // pred_region
          %260 = dma.done [#allocation6], 16384
        $region52: #{tpu_custom_call.1} parent=43 // pred_fallthru
          _
        %s261 = sand.u32 %s32, 1
        %s262 = scalar_lea.sflag [#allocation3], %s261
        %s263 = sand.u32 %s32, 1
        %s264 = smul.addr %s263, 64
        %s265 = scalar_lea.vmem [#allocation2], %s264
        %p266 = pneg %p45
        %p267 = pneg %p42
        %p268 = pneg %p66
        %p269 = pneg %p63
        %p270 = pneg %p87
        %p271 = pneg %p84
        %p272 = pneg %p108
        %p273 = pneg %p105
        %p274 = pneg %p129
        %p275 = pneg %p126
        %p276 = pneg %p150
        %p277 = pneg %p147
        %p278 = pneg %p176
        %p279 = pneg %p173
        %s280 = sand.u32 %s163, 1
        %s281 = scalar_lea.sflag [#allocation4], %s280
        %s282 = sand.u32 %s163, 1
        %s283 = smul.addr %s282, 64
        %s284 = scalar_lea.vmem [#allocation7], %s283
        %v285 = vld [vmem:[%s252] sm:$0xff]
        %v286 = vld [vmem:[%s252 + $0x8] sm:$0xff]
        %v287 = vld [vmem:[%s252 + $0x10] sm:$0xff]
        %v288 = vld [vmem:[%s252 + $0x18] sm:$0xff]
        %v289 = vld [vmem:[%s252 + $0x20] sm:$0xff]
        %v290 = vld [vmem:[%s252 + $0x28] sm:$0xff]
        %v291 = vld [vmem:[%s252 + $0x30] sm:$0xff]
        %v292 = vld [vmem:[%s252 + $0x38] sm:$0xff]
        %v293 = vadd.f32 %v285, %v286
        %294 = vadd.xlane.f32.xlu0 %v293
        %v295 = vpop.xlane.xlu0 %294
        %v296 = vadd.f32 %v287, %v288
        %297 = vadd.xlane.f32.xlu0 %v296
        %v298 = vpop.xlane.xlu0 %297
        %v299 = vadd.f32 %v289, %v290
        %300 = vadd.xlane.f32.xlu0 %v299
        %v301 = vpop.xlane.xlu0 %300
        %v302 = vadd.f32 %v291, %v292
        %303 = vadd.xlane.f32.xlu0 %v302
        %v304 = vpop.xlane.xlu0 %303
        %v305 = vrcp.pop 256.0
        %v306 = vmul.f32 %v295, %v305
        %v307 = vmul.f32 %v298, %v305
        %v308 = vmul.f32 %v301, %v305
        %v309 = vmul.f32 %v304, %v305
        %v310 = vmax.f32 %v285, %v286
        %311 = vmax.xlane.f32.xlu0 %v310
        %v312 = vpop.xlane.xlu0 %311
        %v313 = vmax.f32 %v287, %v288
        %314 = vmax.xlane.f32.xlu0 %v313
        %v315 = vpop.xlane.xlu0 %314
        %v316 = vmax.f32 %v289, %v290
        %317 = vmax.xlane.f32.xlu0 %v316
        %v318 = vpop.xlane.xlu0 %317
        %v319 = vmax.f32 %v291, %v292
        %320 = vmax.xlane.f32.xlu0 %v319
        %v321 = vpop.xlane.xlu0 %320
        %v322 = vld [vmem:[%s1] sm:$0xff]
        %v323 = vld [vmem:[%s1 + $0x8] sm:$0xff]
        %v324 = vld [vmem:[%s1 + $0x10] sm:$0xff]
        %v325 = vld [vmem:[%s1 + $0x18] sm:$0xff]
        %v326 = vld [vmem:[%s2] sm:$0x1]
        %v327 = vld [vmem:[%s3] sm:$0x3]
        %v328 = vld [vmem:[%s4] sm:$0x1]
        %v333 = vlaneseq
        %v334 = vand.u32 %v333, 127
        %v335 = vlaneseq
        %v336 = vshrl.u32 %v335, 7
        %v337 = vsub.s32 %v334, %v336
        %v338 = vrot.slane %v306, %v337
        %v339 = vadd.s32 %v334, 4294967288
        %v340 = vlaneseq
        %v341 = vshrl.u32 %v340, 7
        %v342 = vsub.s32 %v339, %v341
        %v343 = vrot.slane %v307, %v342
        %vm344 = vcmask 130112
        %v345 = vsel %vm344, %v343, %v338
        %v346 = vadd.s32 %v334, 4294967280
        %v347 = vlaneseq
        %v348 = vshrl.u32 %v347, 7
        %v349 = vsub.s32 %v346, %v348
        %v350 = vrot.slane %v308, %v349
        %vm351 = vcmask 195712
        %v352 = vsel %vm351, %v350, %v345
        %v353 = vadd.s32 %v334, 4294967272
        %v354 = vlaneseq
        %v355 = vshrl.u32 %v354, 7
        %v356 = vsub.s32 %v353, %v355
        %v357 = vrot.slane %v309, %v356
        %vm358 = vcmask 261312
        %v359 = vsel %vm358, %v357, %v352
        %vm360 = vcmask 261120
        %v361 = vsel %vm360, %v359, 0
        %363 = vmatprep.subr.mxu0 0.0
        %v364 = vand.u32 %v322, 4294901760
        %365 = vmatpush1.msra.mxu0 %v364
        %366 = vmatprep.subr.mxu0 0.0
        %v367 = vand.u32 %v323, 4294901760
        %368 = vmatpush1.msra.mxu0 %v367
        %369 = vmatprep.subr.mxu0 0.0
        %v370 = vand.u32 %v324, 4294901760
        %371 = vmatpush1.msra.mxu0 %v370
        %372 = vmatprep.subr.mxu0 0.0
        %v373 = vand.u32 %v325, 4294901760
        %374 = vmatpush1.msra.mxu0 %v373
        %375 = vmatprep.subr.mxu0 0.0
        %376 = vmatpush1.msra.mxu0 0.0
        %377 = vmatprep.subr.mxu0 0.0
        %378 = vmatpush1.msra.mxu0 0.0
        %379 = vmatprep.subr.mxu0 0.0
        %380 = vmatpush1.msra.mxu0 0.0
        %381 = vmatprep.subr.mxu0 0.0
        %382 = vmatpush1.msra.mxu0 0.0
        %383 = vmatprep.subr.mxu0 0.0
        %384 = vmatpush1.msra.mxu0 0.0
        %385 = vmatprep.subr.mxu0 0.0
        %386 = vmatpush1.msra.mxu0 0.0
        %387 = vmatprep.subr.mxu0 0.0
        %388 = vmatpush1.msra.mxu0 0.0
        %389 = vmatprep.subr.mxu0 0.0
        %390 = vmatpush1.msra.mxu0 0.0
        %391 = vmatprep.subr.mxu0 0.0
        %392 = vmatpush1.msra.mxu0 0.0
        %393 = vmatprep.subr.mxu0 0.0
        %394 = vmatpush1.msra.mxu0 0.0
        %395 = vmatprep.subr.mxu0 0.0
        %396 = vmatpush1.msra.mxu0 0.0
        %397 = vmatprep.subr.mxu0 0.0
        %398 = vmatpush1.msra.mxu0 0.0
        %399 = vmatprep.subr.mxu0 0.0
        %400 = vmatpush1.msra.mxu0 0.0
        %401 = vmatprep.subr.mxu0 0.0
        %402 = vmatpush1.msra.mxu0 0.0
        %403 = vmatprep.subr.mxu0 0.0
        %404 = vmatpush1.msra.mxu0 0.0
        %405 = vmatprep.subr.mxu0 0.0
        %406 = vmatpush1.msra.mxu0 0.0
        %407 = vmatprep.subr.mxu0 0.0
        %408 = vmatpush1.msra.mxu0 0.0
        %409 = vmatprep.subr.mxu0 0.0
        %410 = vmatpush1.msra.mxu0 0.0
        %411 = vmatprep.subr.mxu0 0.0
        %412 = vmatpush1.msra.mxu0 0.0
        %413 = vmatprep.subr.mxu0 0.0
        %414 = vmatpush1.msra.mxu0 0.0
        %415 = vmatprep.subr.mxu0 0.0
        %416 = vmatpush1.msra.mxu0 0.0
        %417 = vmatprep.subr.mxu0 0.0
        %418 = vmatpush1.msra.mxu0 0.0
        %419 = vmatprep.subr.mxu0 0.0
        %420 = vmatpush1.msra.mxu0 0.0
        %421 = vmatprep.subr.mxu0 0.0
        %422 = vmatpush1.msra.mxu0 0.0
        %423 = vmatprep.subr.mxu0 0.0
        %424 = vmatpush1.msra.mxu0 0.0
        %425 = vmatprep.subr.mxu0 0.0
        %426 = vmatpush1.msra.mxu0 0.0
        %427 = vmatprep.subr.mxu0 0.0
        %428 = vmatpush1.msra.mxu0 0.0
        %429 = vmatprep.subr.mxu0 0.0
        %430 = vmatpush1.msra.mxu0 0.0
        %431 = vmatprep.mubr.f32.mxu0 0.0
        %v432 = vand.u32 %v361, 4294901760
        %v433 = vsub.f32 %v361, %v432
        %v434 = vand.u32 %v433, 4294901760
        %v435 = vsub.f32 %v433, %v434
        %v436 = vand.u32 %v435, 4294901760
        %437 = vmatmul.mubr.f32.gmra.mrb[0].mxu0 %v436
        %v438 = vpop.f32.mrb[0].mxu0
        %v439 = vadd.f32 %v326, %v438
        %v440 = vpop.f32.mrb[0].mxu0
        %441 = vdwg.mxu0
        %442 = vmatprep.subr.mxu0 0.0
        %v443 = vand.u32 %v322, 4294901760
        %v444 = vsub.f32 %v322, %v443
        %v445 = vand.u32 %v444, 4294901760
        %v446 = vsub.f32 %v444, %v445
        %v447 = vand.u32 %v446, 4294901760
        %448 = vmatpush1.msra.mxu0 %v447
        %449 = vmatprep.subr.mxu0 0.0
        %v450 = vand.u32 %v323, 4294901760
        %v451 = vsub.f32 %v323, %v450
        %v452 = vand.u32 %v451, 4294901760
        %v453 = vsub.f32 %v451, %v452
        %v454 = vand.u32 %v453, 4294901760
        %455 = vmatpush1.msra.mxu0 %v454
        %456 = vmatprep.subr.mxu0 0.0
        %v457 = vand.u32 %v324, 4294901760
        %v458 = vsub.f32 %v324, %v457
        %v459 = vand.u32 %v458, 4294901760
        %v460 = vsub.f32 %v458, %v459
        %v461 = vand.u32 %v460, 4294901760
        %462 = vmatpush1.msra.mxu0 %v461
        %463 = vmatprep.subr.mxu0 0.0
        %v464 = vand.u32 %v325, 4294901760
        %v465 = vsub.f32 %v325, %v464
        %v466 = vand.u32 %v465, 4294901760
        %v467 = vsub.f32 %v465, %v466
        %v468 = vand.u32 %v467, 4294901760
        %469 = vmatpush1.msra.mxu0 %v468
        %470 = vmatprep.subr.mxu0 0.0
        %471 = vmatpush1.msra.mxu0 0.0
        %472 = vmatprep.subr.mxu0 0.0
        %473 = vmatpush1.msra.mxu0 0.0
        %474 = vmatprep.subr.mxu0 0.0
        %475 = vmatpush1.msra.mxu0 0.0
        %476 = vmatprep.subr.mxu0 0.0
        %477 = vmatpush1.msra.mxu0 0.0
        %478 = vmatprep.subr.mxu0 0.0
        %479 = vmatpush1.msra.mxu0 0.0
        %480 = vmatprep.subr.mxu0 0.0
        %481 = vmatpush1.msra.mxu0 0.0
        %482 = vmatprep.subr.mxu0 0.0
        %483 = vmatpush1.msra.mxu0 0.0
        %484 = vmatprep.subr.mxu0 0.0
        %485 = vmatpush1.msra.mxu0 0.0
        %486 = vmatprep.subr.mxu0 0.0
        %487 = vmatpush1.msra.mxu0 0.0
        %488 = vmatprep.subr.mxu0 0.0
        %489 = vmatpush1.msra.mxu0 0.0
        %490 = vmatprep.subr.mxu0 0.0
        %491 = vmatpush1.msra.mxu0 0.0
        %492 = vmatprep.subr.mxu0 0.0
        %493 = vmatpush1.msra.mxu0 0.0
        %494 = vmatprep.subr.mxu0 0.0
        %495 = vmatpush1.msra.mxu0 0.0
        %496 = vmatprep.subr.mxu0 0.0
        %497 = vmatpush1.msra.mxu0 0.0
        %498 = vmatprep.subr.mxu0 0.0
        %499 = vmatpush1.msra.mxu0 0.0
        %500 = vmatprep.subr.mxu0 0.0
        %501 = vmatpush1.msra.mxu0 0.0
        %502 = vmatprep.subr.mxu0 0.0
        %503 = vmatpush1.msra.mxu0 0.0
        %504 = vmatprep.subr.mxu0 0.0
        %505 = vmatpush1.msra.mxu0 0.0
        %506 = vmatprep.subr.mxu0 0.0
        %507 = vmatpush1.msra.mxu0 0.0
        %508 = vmatprep.subr.mxu0 0.0
        %509 = vmatpush1.msra.mxu0 0.0
        %510 = vmatprep.subr.mxu0 0.0
        %511 = vmatpush1.msra.mxu0 0.0
        %512 = vmatprep.subr.mxu0 0.0
        %513 = vmatpush1.msra.mxu0 0.0
        %514 = vmatprep.subr.mxu0 0.0
        %515 = vmatpush1.msra.mxu0 0.0
        %516 = vmatprep.subr.mxu0 0.0
        %517 = vmatpush1.msra.mxu0 0.0
        %518 = vmatprep.subr.mxu0 0.0
        %519 = vmatpush1.msra.mxu0 0.0
        %520 = vmatprep.subr.mxu0 0.0
        %521 = vmatpush1.msra.mxu0 0.0
        %522 = vmatprep.subr.mxu0 0.0
        %523 = vmatpush1.msra.mxu0 0.0
        %524 = vmatprep.subr.mxu0 0.0
        %525 = vmatpush1.msra.mxu0 0.0
        %526 = vmatprep.mubr.f32.mxu0 0.0
        %v527 = vand.u32 %v361, 4294901760
        %528 = vmatmul.mubr.f32.gmra.mrb[0].mxu0 %v527
        %v529 = vpop.f32.mrb[0].mxu0
        %v530 = vadd.f32 %v439, %v529
        %v531 = vpop.f32.mrb[0].mxu0
        %532 = vdwg.mxu0
        %533 = vmatprep.subr.mxu0 0.0
        %v534 = vand.u32 %v322, 4294901760
        %v535 = vsub.f32 %v322, %v534
        %536 = vmatpush1.msra.mxu0 %v535
        %537 = vmatprep.subr.mxu0 0.0
        %v538 = vand.u32 %v323, 4294901760
        %v539 = vsub.f32 %v323, %v538
        %540 = vmatpush1.msra.mxu0 %v539
        %541 = vmatprep.subr.mxu0 0.0
        %v542 = vand.u32 %v324, 4294901760
        %v543 = vsub.f32 %v324, %v542
        %544 = vmatpush1.msra.mxu0 %v543
        %545 = vmatprep.subr.mxu0 0.0
        %v546 = vand.u32 %v325, 4294901760
        %v547 = vsub.f32 %v325, %v546
        %548 = vmatpush1.msra.mxu0 %v547
        %549 = vmatprep.subr.mxu0 0.0
        %550 = vmatpush1.msra.mxu0 0.0
        %551 = vmatprep.subr.mxu0 0.0
        %552 = vmatpush1.msra.mxu0 0.0
        %553 = vmatprep.subr.mxu0 0.0
        %554 = vmatpush1.msra.mxu0 0.0
        %555 = vmatprep.subr.mxu0 0.0
        %556 = vmatpush1.msra.mxu0 0.0
        %557 = vmatprep.subr.mxu0 0.0
        %558 = vmatpush1.msra.mxu0 0.0
        %559 = vmatprep.subr.mxu0 0.0
        %560 = vmatpush1.msra.mxu0 0.0
        %561 = vmatprep.subr.mxu0 0.0
        %562 = vmatpush1.msra.mxu0 0.0
        %563 = vmatprep.subr.mxu0 0.0
        %564 = vmatpush1.msra.mxu0 0.0
        %565 = vmatprep.subr.mxu0 0.0
        %566 = vmatpush1.msra.mxu0 0.0
        %567 = vmatprep.subr.mxu0 0.0
        %568 = vmatpush1.msra.mxu0 0.0
        %569 = vmatprep.subr.mxu0 0.0
        %570 = vmatpush1.msra.mxu0 0.0
        %571 = vmatprep.subr.mxu0 0.0
        %572 = vmatpush1.msra.mxu0 0.0
        %573 = vmatprep.subr.mxu0 0.0
        %574 = vmatpush1.msra.mxu0 0.0
        %575 = vmatprep.subr.mxu0 0.0
        %576 = vmatpush1.msra.mxu0 0.0
        %577 = vmatprep.subr.mxu0 0.0
        %578 = vmatpush1.msra.mxu0 0.0
        %579 = vmatprep.subr.mxu0 0.0
        %580 = vmatpush1.msra.mxu0 0.0
        %581 = vmatprep.subr.mxu0 0.0
        %582 = vmatpush1.msra.mxu0 0.0
        %583 = vmatprep.subr.mxu0 0.0
        %584 = vmatpush1.msra.mxu0 0.0
        %585 = vmatprep.subr.mxu0 0.0
        %586 = vmatpush1.msra.mxu0 0.0
        %587 = vmatprep.subr.mxu0 0.0
        %588 = vmatpush1.msra.mxu0 0.0
        %589 = vmatprep.subr.mxu0 0.0
        %590 = vmatpush1.msra.mxu0 0.0
        %591 = vmatprep.subr.mxu0 0.0
        %592 = vmatpush1.msra.mxu0 0.0
        %593 = vmatprep.subr.mxu0 0.0
        %594 = vmatpush1.msra.mxu0 0.0
        %595 = vmatprep.subr.mxu0 0.0
        %596 = vmatpush1.msra.mxu0 0.0
        %597 = vmatprep.subr.mxu0 0.0
        %598 = vmatpush1.msra.mxu0 0.0
        %599 = vmatprep.subr.mxu0 0.0
        %600 = vmatpush1.msra.mxu0 0.0
        %601 = vmatprep.subr.mxu0 0.0
        %602 = vmatpush1.msra.mxu0 0.0
        %603 = vmatprep.subr.mxu0 0.0
        %604 = vmatpush1.msra.mxu0 0.0
        %605 = vmatprep.mubr.f32.mxu0 0.0
        %v606 = vand.u32 %v361, 4294901760
        %v607 = vsub.f32 %v361, %v606
        %608 = vmatmul.mubr.f32.gmra.mrb[0].mxu0 %v607
        %v609 = vpop.f32.mrb[0].mxu0
        %v610 = vadd.f32 %v530, %v609
        %v611 = vpop.f32.mrb[0].mxu0
        %612 = vdwg.mxu0
        %613 = vmatprep.subr.mxu0 0.0
        %v614 = vand.u32 %v322, 4294901760
        %615 = vmatpush1.msra.mxu0 %v614
        %616 = vmatprep.subr.mxu0 0.0
        %v617 = vand.u32 %v323, 4294901760
        %618 = vmatpush1.msra.mxu0 %v617
        %619 = vmatprep.subr.mxu0 0.0
        %v620 = vand.u32 %v324, 4294901760
        %621 = vmatpush1.msra.mxu0 %v620
        %622 = vmatprep.subr.mxu0 0.0
        %v623 = vand.u32 %v325, 4294901760
        %624 = vmatpush1.msra.mxu0 %v623
        %625 = vmatprep.subr.mxu0 0.0
        %626 = vmatpush1.msra.mxu0 0.0
        %627 = vmatprep.subr.mxu0 0.0
        %628 = vmatpush1.msra.mxu0 0.0
        %629 = vmatprep.subr.mxu0 0.0
        %630 = vmatpush1.msra.mxu0 0.0
        %631 = vmatprep.subr.mxu0 0.0
        %632 = vmatpush1.msra.mxu0 0.0
        %633 = vmatprep.subr.mxu0 0.0
        %634 = vmatpush1.msra.mxu0 0.0
        %635 = vmatprep.subr.mxu0 0.0
        %636 = vmatpush1.msra.mxu0 0.0
        %637 = vmatprep.subr.mxu0 0.0
        %638 = vmatpush1.msra.mxu0 0.0
        %639 = vmatprep.subr.mxu0 0.0
        %640 = vmatpush1.msra.mxu0 0.0
        %641 = vmatprep.subr.mxu0 0.0
        %642 = vmatpush1.msra.mxu0 0.0
        %643 = vmatprep.subr.mxu0 0.0
        %644 = vmatpush1.msra.mxu0 0.0
        %645 = vmatprep.subr.mxu0 0.0
        %646 = vmatpush1.msra.mxu0 0.0
        %647 = vmatprep.subr.mxu0 0.0
        %648 = vmatpush1.msra.mxu0 0.0
        %649 = vmatprep.subr.mxu0 0.0
        %650 = vmatpush1.msra.mxu0 0.0
        %651 = vmatprep.subr.mxu0 0.0
        %652 = vmatpush1.msra.mxu0 0.0
        %653 = vmatprep.subr.mxu0 0.0
        %654 = vmatpush1.msra.mxu0 0.0
        %655 = vmatprep.subr.mxu0 0.0
        %656 = vmatpush1.msra.mxu0 0.0
        %657 = vmatprep.subr.mxu0 0.0
        %658 = vmatpush1.msra.mxu0 0.0
        %659 = vmatprep.subr.mxu0 0.0
        %660 = vmatpush1.msra.mxu0 0.0
        %661 = vmatprep.subr.mxu0 0.0
        %662 = vmatpush1.msra.mxu0 0.0
        %663 = vmatprep.subr.mxu0 0.0
        %664 = vmatpush1.msra.mxu0 0.0
        %665 = vmatprep.subr.mxu0 0.0
        %666 = vmatpush1.msra.mxu0 0.0
        %667 = vmatprep.subr.mxu0 0.0
        %668 = vmatpush1.msra.mxu0 0.0
        %669 = vmatprep.subr.mxu0 0.0
        %670 = vmatpush1.msra.mxu0 0.0
        %671 = vmatprep.subr.mxu0 0.0
        %672 = vmatpush1.msra.mxu0 0.0
        %673 = vmatprep.subr.mxu0 0.0
        %674 = vmatpush1.msra.mxu0 0.0
        %675 = vmatprep.subr.mxu0 0.0
        %676 = vmatpush1.msra.mxu0 0.0
        %677 = vmatprep.subr.mxu0 0.0
        %678 = vmatpush1.msra.mxu0 0.0
        %679 = vmatprep.subr.mxu0 0.0
        %680 = vmatpush1.msra.mxu0 0.0
        %681 = vmatprep.mubr.f32.mxu0 0.0
        %v682 = vand.u32 %v361, 4294901760
        %v683 = vsub.f32 %v361, %v682
        %v684 = vand.u32 %v683, 4294901760
        %685 = vmatmul.mubr.f32.gmra.mrb[0].mxu0 %v684
        %v686 = vpop.f32.mrb[0].mxu0
        %v687 = vadd.f32 %v610, %v686
        %v688 = vpop.f32.mrb[0].mxu0
        %689 = vdwg.mxu0
        %690 = vmatprep.subr.mxu0 0.0
        %v691 = vand.u32 %v322, 4294901760
        %v692 = vsub.f32 %v322, %v691
        %v693 = vand.u32 %v692, 4294901760
        %694 = vmatpush1.msra.mxu0 %v693
        %695 = vmatprep.subr.mxu0 0.0
        %v696 = vand.u32 %v323, 4294901760
        %v697 = vsub.f32 %v323, %v696
        %v698 = vand.u32 %v697, 4294901760
        %699 = vmatpush1.msra.mxu0 %v698
        %700 = vmatprep.subr.mxu0 0.0
        %v701 = vand.u32 %v324, 4294901760
        %v702 = vsub.f32 %v324, %v701
        %v703 = vand.u32 %v702, 4294901760
        %704 = vmatpush1.msra.mxu0 %v703
        %705 = vmatprep.subr.mxu0 0.0
        %v706 = vand.u32 %v325, 4294901760
        %v707 = vsub.f32 %v325, %v706
        %v708 = vand.u32 %v707, 4294901760
        %709 = vmatpush1.msra.mxu0 %v708
        %710 = vmatprep.subr.mxu0 0.0
        %711 = vmatpush1.msra.mxu0 0.0
        %712 = vmatprep.subr.mxu0 0.0
        %713 = vmatpush1.msra.mxu0 0.0
        %714 = vmatprep.subr.mxu0 0.0
        %715 = vmatpush1.msra.mxu0 0.0
        %716 = vmatprep.subr.mxu0 0.0
        %717 = vmatpush1.msra.mxu0 0.0
        %718 = vmatprep.subr.mxu0 0.0
        %719 = vmatpush1.msra.mxu0 0.0
        %720 = vmatprep.subr.mxu0 0.0
        %721 = vmatpush1.msra.mxu0 0.0
        %722 = vmatprep.subr.mxu0 0.0
        %723 = vmatpush1.msra.mxu0 0.0
        %724 = vmatprep.subr.mxu0 0.0
        %725 = vmatpush1.msra.mxu0 0.0
        %726 = vmatprep.subr.mxu0 0.0
        %727 = vmatpush1.msra.mxu0 0.0
        %728 = vmatprep.subr.mxu0 0.0
        %729 = vmatpush1.msra.mxu0 0.0
        %730 = vmatprep.subr.mxu0 0.0
        %731 = vmatpush1.msra.mxu0 0.0
        %732 = vmatprep.subr.mxu0 0.0
        %733 = vmatpush1.msra.mxu0 0.0
        %734 = vmatprep.subr.mxu0 0.0
        %735 = vmatpush1.msra.mxu0 0.0
        %736 = vmatprep.subr.mxu0 0.0
        %737 = vmatpush1.msra.mxu0 0.0
        %738 = vmatprep.subr.mxu0 0.0
        %739 = vmatpush1.msra.mxu0 0.0
        %740 = vmatprep.subr.mxu0 0.0
        %741 = vmatpush1.msra.mxu0 0.0
        %742 = vmatprep.subr.mxu0 0.0
        %743 = vmatpush1.msra.mxu0 0.0
        %744 = vmatprep.subr.mxu0 0.0
        %745 = vmatpush1.msra.mxu0 0.0
        %746 = vmatprep.subr.mxu0 0.0
        %747 = vmatpush1.msra.mxu0 0.0
        %748 = vmatprep.subr.mxu0 0.0
        %749 = vmatpush1.msra.mxu0 0.0
        %750 = vmatprep.subr.mxu0 0.0
        %751 = vmatpush1.msra.mxu0 0.0
        %752 = vmatprep.subr.mxu0 0.0
        %753 = vmatpush1.msra.mxu0 0.0
        %754 = vmatprep.subr.mxu0 0.0
        %755 = vmatpush1.msra.mxu0 0.0
        %756 = vmatprep.subr.mxu0 0.0
        %757 = vmatpush1.msra.mxu0 0.0
        %758 = vmatprep.subr.mxu0 0.0
        %759 = vmatpush1.msra.mxu0 0.0
        %760 = vmatprep.subr.mxu0 0.0
        %761 = vmatpush1.msra.mxu0 0.0
        %762 = vmatprep.subr.mxu0 0.0
        %763 = vmatpush1.msra.mxu0 0.0
        %764 = vmatprep.subr.mxu0 0.0
        %765 = vmatpush1.msra.mxu0 0.0
        %766 = vmatprep.mubr.f32.mxu0 0.0
        %v767 = vand.u32 %v361, 4294901760
        %768 = vmatmul.mubr.f32.gmra.mrb[0].mxu0 %v767
        %v769 = vpop.f32.mrb[0].mxu0
        %v770 = vadd.f32 %v687, %v769
        %v771 = vpop.f32.mrb[0].mxu0
        %772 = vdwg.mxu0
        %773 = vmatprep.subr.mxu0 0.0
        %v774 = vand.u32 %v322, 4294901760
        %775 = vmatpush1.msra.mxu0 %v774
        %776 = vmatprep.subr.mxu0 0.0
        %v777 = vand.u32 %v323, 4294901760
        %778 = vmatpush1.msra.mxu0 %v777
        %779 = vmatprep.subr.mxu0 0.0
        %v780 = vand.u32 %v324, 4294901760
        %781 = vmatpush1.msra.mxu0 %v780
        %782 = vmatprep.subr.mxu0 0.0
        %v783 = vand.u32 %v325, 4294901760
        %784 = vmatpush1.msra.mxu0 %v783
        %785 = vmatprep.subr.mxu0 0.0
        %786 = vmatpush1.msra.mxu0 0.0
        %787 = vmatprep.subr.mxu0 0.0
        %788 = vmatpush1.msra.mxu0 0.0
        %789 = vmatprep.subr.mxu0 0.0
        %790 = vmatpush1.msra.mxu0 0.0
        %791 = vmatprep.subr.mxu0 0.0
        %792 = vmatpush1.msra.mxu0 0.0
        %793 = vmatprep.subr.mxu0 0.0
        %794 = vmatpush1.msra.mxu0 0.0
        %795 = vmatprep.subr.mxu0 0.0
        %796 = vmatpush1.msra.mxu0 0.0
        %797 = vmatprep.subr.mxu0 0.0
        %798 = vmatpush1.msra.mxu0 0.0
        %799 = vmatprep.subr.mxu0 0.0
        %800 = vmatpush1.msra.mxu0 0.0
        %801 = vmatprep.subr.mxu0 0.0
        %802 = vmatpush1.msra.mxu0 0.0
        %803 = vmatprep.subr.mxu0 0.0
        %804 = vmatpush1.msra.mxu0 0.0
        %805 = vmatprep.subr.mxu0 0.0
        %806 = vmatpush1.msra.mxu0 0.0
        %807 = vmatprep.subr.mxu0 0.0
        %808 = vmatpush1.msra.mxu0 0.0
        %809 = vmatprep.subr.mxu0 0.0
        %810 = vmatpush1.msra.mxu0 0.0
        %811 = vmatprep.subr.mxu0 0.0
        %812 = vmatpush1.msra.mxu0 0.0
        %813 = vmatprep.subr.mxu0 0.0
        %814 = vmatpush1.msra.mxu0 0.0
        %815 = vmatprep.subr.mxu0 0.0
        %816 = vmatpush1.msra.mxu0 0.0
        %817 = vmatprep.subr.mxu0 0.0
        %818 = vmatpush1.msra.mxu0 0.0
        %819 = vmatprep.subr.mxu0 0.0
        %820 = vmatpush1.msra.mxu0 0.0
        %821 = vmatprep.subr.mxu0 0.0
        %822 = vmatpush1.msra.mxu0 0.0
        %823 = vmatprep.subr.mxu0 0.0
        %824 = vmatpush1.msra.mxu0 0.0
        %825 = vmatprep.subr.mxu0 0.0
        %826 = vmatpush1.msra.mxu0 0.0
        %827 = vmatprep.subr.mxu0 0.0
        %828 = vmatpush1.msra.mxu0 0.0
        %829 = vmatprep.subr.mxu0 0.0
        %830 = vmatpush1.msra.mxu0 0.0
        %831 = vmatprep.subr.mxu0 0.0
        %832 = vmatpush1.msra.mxu0 0.0
        %833 = vmatprep.subr.mxu0 0.0
        %834 = vmatpush1.msra.mxu0 0.0
        %835 = vmatprep.subr.mxu0 0.0
        %836 = vmatpush1.msra.mxu0 0.0
        %837 = vmatprep.subr.mxu0 0.0
        %838 = vmatpush1.msra.mxu0 0.0
        %839 = vmatprep.subr.mxu0 0.0
        %840 = vmatpush1.msra.mxu0 0.0
        %841 = vmatprep.mubr.f32.mxu0 0.0
        %v842 = vand.u32 %v361, 4294901760
        %843 = vmatmul.mubr.f32.gmra.mrb[0].mxu0 %v842
        %v844 = vpop.f32.mrb[0].mxu0
        %v845 = vadd.f32 %v770, %v844
        %v846 = vpop.f32.mrb[0].mxu0
        %847 = vdwg.mxu0
        %v848 = vmax.f32 %v845, 0.0
        %v853 = vlaneseq
        %v854 = vshrl.u32 %v853, 7
        %v855 = vsub.s32 %v334, %v854
        %v856 = vrot.slane %v312, %v855
        %v857 = vlaneseq
        %v858 = vshrl.u32 %v857, 7
        %v859 = vsub.s32 %v339, %v858
        %v860 = vrot.slane %v315, %v859
        %v861 = vsel %vm344, %v860, %v856
        %v862 = vlaneseq
        %v863 = vshrl.u32 %v862, 7
        %v864 = vsub.s32 %v346, %v863
        %v865 = vrot.slane %v318, %v864
        %v866 = vsel %vm351, %v865, %v861
        %v867 = vlaneseq
        %v868 = vshrl.u32 %v867, 7
        %v869 = vsub.s32 %v353, %v868
        %v870 = vrot.slane %v321, %v869
        %v871 = vsel %vm358, %v870, %v866
        %v872 = vsel %vm360, %v871, 0
        %874 = vmatprep.subr.mxu0 0.0
        %v875 = vand.u32 %v322, 4294901760
        %876 = vmatpush1.msra.mxu0 %v875
        %877 = vmatprep.subr.mxu0 0.0
        %v878 = vand.u32 %v323, 4294901760
        %879 = vmatpush1.msra.mxu0 %v878
        %880 = vmatprep.subr.mxu0 0.0
        %v881 = vand.u32 %v324, 4294901760
        %882 = vmatpush1.msra.mxu0 %v881
        %883 = vmatprep.subr.mxu0 0.0
        %v884 = vand.u32 %v325, 4294901760
        %885 = vmatpush1.msra.mxu0 %v884
        %886 = vmatprep.subr.mxu0 0.0
        %887 = vmatpush1.msra.mxu0 0.0
        %888 = vmatprep.subr.mxu0 0.0
        %889 = vmatpush1.msra.mxu0 0.0
        %890 = vmatprep.subr.mxu0 0.0
        %891 = vmatpush1.msra.mxu0 0.0
        %892 = vmatprep.subr.mxu0 0.0
        %893 = vmatpush1.msra.mxu0 0.0
        %894 = vmatprep.subr.mxu0 0.0
        %895 = vmatpush1.msra.mxu0 0.0
        %896 = vmatprep.subr.mxu0 0.0
        %897 = vmatpush1.msra.mxu0 0.0
        %898 = vmatprep.subr.mxu0 0.0
        %899 = vmatpush1.msra.mxu0 0.0
        %900 = vmatprep.subr.mxu0 0.0
        %901 = vmatpush1.msra.mxu0 0.0
        %902 = vmatprep.subr.mxu0 0.0
        %903 = vmatpush1.msra.mxu0 0.0
        %904 = vmatprep.subr.mxu0 0.0
        %905 = vmatpush1.msra.mxu0 0.0
        %906 = vmatprep.subr.mxu0 0.0
        %907 = vmatpush1.msra.mxu0 0.0
        %908 = vmatprep.subr.mxu0 0.0
        %909 = vmatpush1.msra.mxu0 0.0
        %910 = vmatprep.subr.mxu0 0.0
        %911 = vmatpush1.msra.mxu0 0.0
        %912 = vmatprep.subr.mxu0 0.0
        %913 = vmatpush1.msra.mxu0 0.0
        %914 = vmatprep.subr.mxu0 0.0
        %915 = vmatpush1.msra.mxu0 0.0
        %916 = vmatprep.subr.mxu0 0.0
        %917 = vmatpush1.msra.mxu0 0.0
        %918 = vmatprep.subr.mxu0 0.0
        %919 = vmatpush1.msra.mxu0 0.0
        %920 = vmatprep.subr.mxu0 0.0
        %921 = vmatpush1.msra.mxu0 0.0
        %922 = vmatprep.subr.mxu0 0.0
        %923 = vmatpush1.msra.mxu0 0.0
        %924 = vmatprep.subr.mxu0 0.0
        %925 = vmatpush1.msra.mxu0 0.0
        %926 = vmatprep.subr.mxu0 0.0
        %927 = vmatpush1.msra.mxu0 0.0
        %928 = vmatprep.subr.mxu0 0.0
        %929 = vmatpush1.msra.mxu0 0.0
        %930 = vmatprep.subr.mxu0 0.0
        %931 = vmatpush1.msra.mxu0 0.0
        %932 = vmatprep.subr.mxu0 0.0
        %933 = vmatpush1.msra.mxu0 0.0
        %934 = vmatprep.subr.mxu0 0.0
        %935 = vmatpush1.msra.mxu0 0.0
        %936 = vmatprep.subr.mxu0 0.0
        %937 = vmatpush1.msra.mxu0 0.0
        %938 = vmatprep.subr.mxu0 0.0
        %939 = vmatpush1.msra.mxu0 0.0
        %940 = vmatprep.subr.mxu0 0.0
        %941 = vmatpush1.msra.mxu0 0.0
        %942 = vmatprep.mubr.f32.mxu0 0.0
        %v943 = vand.u32 %v872, 4294901760
        %v944 = vsub.f32 %v872, %v943
        %v945 = vand.u32 %v944, 4294901760
        %v946 = vsub.f32 %v944, %v945
        %v947 = vand.u32 %v946, 4294901760
        %948 = vmatmul.mubr.f32.gmra.mrb[0].mxu0 %v947
        %v949 = vpop.f32.mrb[0].mxu0
        %v950 = vadd.f32 %v326, %v949
        %v951 = vpop.f32.mrb[0].mxu0
        %952 = vdwg.mxu0
        %953 = vmatprep.subr.mxu0 0.0
        %v954 = vand.u32 %v322, 4294901760
        %v955 = vsub.f32 %v322, %v954
        %v956 = vand.u32 %v955, 4294901760
        %v957 = vsub.f32 %v955, %v956
        %v958 = vand.u32 %v957, 4294901760
        %959 = vmatpush1.msra.mxu0 %v958
        %960 = vmatprep.subr.mxu0 0.0
        %v961 = vand.u32 %v323, 4294901760
        %v962 = vsub.f32 %v323, %v961
        %v963 = vand.u32 %v962, 4294901760
        %v964 = vsub.f32 %v962, %v963
        %v965 = vand.u32 %v964, 4294901760
        %966 = vmatpush1.msra.mxu0 %v965
        %967 = vmatprep.subr.mxu0 0.0
        %v968 = vand.u32 %v324, 4294901760
        %v969 = vsub.f32 %v324, %v968
        %v970 = vand.u32 %v969, 4294901760
        %v971 = vsub.f32 %v969, %v970
        %v972 = vand.u32 %v971, 4294901760
        %973 = vmatpush1.msra.mxu0 %v972
        %974 = vmatprep.subr.mxu0 0.0
        %v975 = vand.u32 %v325, 4294901760
        %v976 = vsub.f32 %v325, %v975
        %v977 = vand.u32 %v976, 4294901760
        %v978 = vsub.f32 %v976, %v977
        %v979 = vand.u32 %v978, 4294901760
        %980 = vmatpush1.msra.mxu0 %v979
        %981 = vmatprep.subr.mxu0 0.0
        %982 = vmatpush1.msra.mxu0 0.0
        %983 = vmatprep.subr.mxu0 0.0
        %984 = vmatpush1.msra.mxu0 0.0
        %985 = vmatprep.subr.mxu0 0.0
        %986 = vmatpush1.msra.mxu0 0.0
        %987 = vmatprep.subr.mxu0 0.0
        %988 = vmatpush1.msra.mxu0 0.0
        %989 = vmatprep.subr.mxu0 0.0
        %990 = vmatpush1.msra.mxu0 0.0
        %991 = vmatprep.subr.mxu0 0.0
        %992 = vmatpush1.msra.mxu0 0.0
        %993 = vmatprep.subr.mxu0 0.0
        %994 = vmatpush1.msra.mxu0 0.0
        %995 = vmatprep.subr.mxu0 0.0
        %996 = vmatpush1.msra.mxu0 0.0
        %997 = vmatprep.subr.mxu0 0.0
        %998 = vmatpush1.msra.mxu0 0.0
        %999 = vmatprep.subr.mxu0 0.0
        %1000 = vmatpush1.msra.mxu0 0.0
        %1001 = vmatprep.subr.mxu0 0.0
        %1002 = vmatpush1.msra.mxu0 0.0
        %1003 = vmatprep.subr.mxu0 0.0
        %1004 = vmatpush1.msra.mxu0 0.0
        %1005 = vmatprep.subr.mxu0 0.0
        %1006 = vmatpush1.msra.mxu0 0.0
        %1007 = vmatprep.subr.mxu0 0.0
        %1008 = vmatpush1.msra.mxu0 0.0
        %1009 = vmatprep.subr.mxu0 0.0
        %1010 = vmatpush1.msra.mxu0 0.0
        %1011 = vmatprep.subr.mxu0 0.0
        %1012 = vmatpush1.msra.mxu0 0.0
        %1013 = vmatprep.subr.mxu0 0.0
        %1014 = vmatpush1.msra.mxu0 0.0
        %1015 = vmatprep.subr.mxu0 0.0
        %1016 = vmatpush1.msra.mxu0 0.0
        %1017 = vmatprep.subr.mxu0 0.0
        %1018 = vmatpush1.msra.mxu0 0.0
        %1019 = vmatprep.subr.mxu0 0.0
        %1020 = vmatpush1.msra.mxu0 0.0
        %1021 = vmatprep.subr.mxu0 0.0
        %1022 = vmatpush1.msra.mxu0 0.0
        %1023 = vmatprep.subr.mxu0 0.0
        %1024 = vmatpush1.msra.mxu0 0.0
        %1025 = vmatprep.subr.mxu0 0.0
        %1026 = vmatpush1.msra.mxu0 0.0
        %1027 = vmatprep.subr.mxu0 0.0
        %1028 = vmatpush1.msra.mxu0 0.0
        %1029 = vmatprep.subr.mxu0 0.0
        %1030 = vmatpush1.msra.mxu0 0.0
        %1031 = vmatprep.subr.mxu0 0.0
        %1032 = vmatpush1.msra.mxu0 0.0
        %1033 = vmatprep.subr.mxu0 0.0
        %1034 = vmatpush1.msra.mxu0 0.0
        %1035 = vmatprep.subr.mxu0 0.0
        %1036 = vmatpush1.msra.mxu0 0.0
        %1037 = vmatprep.mubr.f32.mxu0 0.0
        %v1038 = vand.u32 %v872, 4294901760
        %1039 = vmatmul.mubr.f32.gmra.mrb[0].mxu0 %v1038
        %v1040 = vpop.f32.mrb[0].mxu0
        %v1041 = vadd.f32 %v950, %v1040
        %v1042 = vpop.f32.mrb[0].mxu0
        %1043 = vdwg.mxu0
        %1044 = vmatprep.subr.mxu0 0.0
        %v1045 = vand.u32 %v322, 4294901760
        %v1046 = vsub.f32 %v322, %v1045
        %1047 = vmatpush1.msra.mxu0 %v1046
        %1048 = vmatprep.subr.mxu0 0.0
        %v1049 = vand.u32 %v323, 4294901760
        %v1050 = vsub.f32 %v323, %v1049
        %1051 = vmatpush1.msra.mxu0 %v1050
        %1052 = vmatprep.subr.mxu0 0.0
        %v1053 = vand.u32 %v324, 4294901760
        %v1054 = vsub.f32 %v324, %v1053
        %1055 = vmatpush1.msra.mxu0 %v1054
        %1056 = vmatprep.subr.mxu0 0.0
        %v1057 = vand.u32 %v325, 4294901760
        %v1058 = vsub.f32 %v325, %v1057
        %1059 = vmatpush1.msra.mxu0 %v1058
        %1060 = vmatprep.subr.mxu0 0.0
        %1061 = vmatpush1.msra.mxu0 0.0
        %1062 = vmatprep.subr.mxu0 0.0
        %1063 = vmatpush1.msra.mxu0 0.0
        %1064 = vmatprep.subr.mxu0 0.0
        %1065 = vmatpush1.msra.mxu0 0.0
        %1066 = vmatprep.subr.mxu0 0.0
        %1067 = vmatpush1.msra.mxu0 0.0
        %1068 = vmatprep.subr.mxu0 0.0
        %1069 = vmatpush1.msra.mxu0 0.0
        %1070 = vmatprep.subr.mxu0 0.0
        %1071 = vmatpush1.msra.mxu0 0.0
        %1072 = vmatprep.subr.mxu0 0.0
        %1073 = vmatpush1.msra.mxu0 0.0
        %1074 = vmatprep.subr.mxu0 0.0
        %1075 = vmatpush1.msra.mxu0 0.0
        %1076 = vmatprep.subr.mxu0 0.0
        %1077 = vmatpush1.msra.mxu0 0.0
        %1078 = vmatprep.subr.mxu0 0.0
        %1079 = vmatpush1.msra.mxu0 0.0
        %1080 = vmatprep.subr.mxu0 0.0
        %1081 = vmatpush1.msra.mxu0 0.0
        %1082 = vmatprep.subr.mxu0 0.0
        %1083 = vmatpush1.msra.mxu0 0.0
        %1084 = vmatprep.subr.mxu0 0.0
        %1085 = vmatpush1.msra.mxu0 0.0
        %1086 = vmatprep.subr.mxu0 0.0
        %1087 = vmatpush1.msra.mxu0 0.0
        %1088 = vmatprep.subr.mxu0 0.0
        %1089 = vmatpush1.msra.mxu0 0.0
        %1090 = vmatprep.subr.mxu0 0.0
        %1091 = vmatpush1.msra.mxu0 0.0
        %1092 = vmatprep.subr.mxu0 0.0
        %1093 = vmatpush1.msra.mxu0 0.0
        %1094 = vmatprep.subr.mxu0 0.0
        %1095 = vmatpush1.msra.mxu0 0.0
        %1096 = vmatprep.subr.mxu0 0.0
        %1097 = vmatpush1.msra.mxu0 0.0
        %1098 = vmatprep.subr.mxu0 0.0
        %1099 = vmatpush1.msra.mxu0 0.0
        %1100 = vmatprep.subr.mxu0 0.0
        %1101 = vmatpush1.msra.mxu0 0.0
        %1102 = vmatprep.subr.mxu0 0.0
        %1103 = vmatpush1.msra.mxu0 0.0
        %1104 = vmatprep.subr.mxu0 0.0
        %1105 = vmatpush1.msra.mxu0 0.0
        %1106 = vmatprep.subr.mxu0 0.0
        %1107 = vmatpush1.msra.mxu0 0.0
        %1108 = vmatprep.subr.mxu0 0.0
        %1109 = vmatpush1.msra.mxu0 0.0
        %1110 = vmatprep.subr.mxu0 0.0
        %1111 = vmatpush1.msra.mxu0 0.0
        %1112 = vmatprep.subr.mxu0 0.0
        %1113 = vmatpush1.msra.mxu0 0.0
        %1114 = vmatprep.subr.mxu0 0.0
        %1115 = vmatpush1.msra.mxu0 0.0
        %1116 = vmatprep.mubr.f32.mxu0 0.0
        %v1117 = vand.u32 %v872, 4294901760
        %v1118 = vsub.f32 %v872, %v1117
        %1119 = vmatmul.mubr.f32.gmra.mrb[0].mxu0 %v1118
        %v1120 = vpop.f32.mrb[0].mxu0
        %v1121 = vadd.f32 %v1041, %v1120
        %v1122 = vpop.f32.mrb[0].mxu0
        %1123 = vdwg.mxu0
        %1124 = vmatprep.subr.mxu0 0.0
        %v1125 = vand.u32 %v322, 4294901760
        %1126 = vmatpush1.msra.mxu0 %v1125
        %1127 = vmatprep.subr.mxu0 0.0
        %v1128 = vand.u32 %v323, 4294901760
        %1129 = vmatpush1.msra.mxu0 %v1128
        %1130 = vmatprep.subr.mxu0 0.0
        %v1131 = vand.u32 %v324, 4294901760
        %1132 = vmatpush1.msra.mxu0 %v1131
        %1133 = vmatprep.subr.mxu0 0.0
        %v1134 = vand.u32 %v325, 4294901760
        %1135 = vmatpush1.msra.mxu0 %v1134
        %1136 = vmatprep.subr.mxu0 0.0
        %1137 = vmatpush1.msra.mxu0 0.0
        %1138 = vmatprep.subr.mxu0 0.0
        %1139 = vmatpush1.msra.mxu0 0.0
        %1140 = vmatprep.subr.mxu0 0.0
        %1141 = vmatpush1.msra.mxu0 0.0
        %1142 = vmatprep.subr.mxu0 0.0
        %1143 = vmatpush1.msra.mxu0 0.0
        %1144 = vmatprep.subr.mxu0 0.0
        %1145 = vmatpush1.msra.mxu0 0.0
        %1146 = vmatprep.subr.mxu0 0.0
        %1147 = vmatpush1.msra.mxu0 0.0
        %1148 = vmatprep.subr.mxu0 0.0
        %1149 = vmatpush1.msra.mxu0 0.0
        %1150 = vmatprep.subr.mxu0 0.0
        %1151 = vmatpush1.msra.mxu0 0.0
        %1152 = vmatprep.subr.mxu0 0.0
        %1153 = vmatpush1.msra.mxu0 0.0
        %1154 = vmatprep.subr.mxu0 0.0
        %1155 = vmatpush1.msra.mxu0 0.0
        %1156 = vmatprep.subr.mxu0 0.0
        %1157 = vmatpush1.msra.mxu0 0.0
        %1158 = vmatprep.subr.mxu0 0.0
        %1159 = vmatpush1.msra.mxu0 0.0
        %1160 = vmatprep.subr.mxu0 0.0
        %1161 = vmatpush1.msra.mxu0 0.0
        %1162 = vmatprep.subr.mxu0 0.0
        %1163 = vmatpush1.msra.mxu0 0.0
        %1164 = vmatprep.subr.mxu0 0.0
        %1165 = vmatpush1.msra.mxu0 0.0
        %1166 = vmatprep.subr.mxu0 0.0
        %1167 = vmatpush1.msra.mxu0 0.0
        %1168 = vmatprep.subr.mxu0 0.0
        %1169 = vmatpush1.msra.mxu0 0.0
        %1170 = vmatprep.subr.mxu0 0.0
        %1171 = vmatpush1.msra.mxu0 0.0
        %1172 = vmatprep.subr.mxu0 0.0
        %1173 = vmatpush1.msra.mxu0 0.0
        %1174 = vmatprep.subr.mxu0 0.0
        %1175 = vmatpush1.msra.mxu0 0.0
        %1176 = vmatprep.subr.mxu0 0.0
        %1177 = vmatpush1.msra.mxu0 0.0
        %1178 = vmatprep.subr.mxu0 0.0
        %1179 = vmatpush1.msra.mxu0 0.0
        %1180 = vmatprep.subr.mxu0 0.0
        %1181 = vmatpush1.msra.mxu0 0.0
        %1182 = vmatprep.subr.mxu0 0.0
        %1183 = vmatpush1.msra.mxu0 0.0
        %1184 = vmatprep.subr.mxu0 0.0
        %1185 = vmatpush1.msra.mxu0 0.0
        %1186 = vmatprep.subr.mxu0 0.0
        %1187 = vmatpush1.msra.mxu0 0.0
        %1188 = vmatprep.subr.mxu0 0.0
        %1189 = vmatpush1.msra.mxu0 0.0
        %1190 = vmatprep.subr.mxu0 0.0
        %1191 = vmatpush1.msra.mxu0 0.0
        %1192 = vmatprep.mubr.f32.mxu0 0.0
        %v1193 = vand.u32 %v872, 4294901760
        %v1194 = vsub.f32 %v872, %v1193
        %v1195 = vand.u32 %v1194, 4294901760
        %1196 = vmatmul.mubr.f32.gmra.mrb[0].mxu0 %v1195
        %v1197 = vpop.f32.mrb[0].mxu0
        %v1198 = vadd.f32 %v1121, %v1197
        %v1199 = vpop.f32.mrb[0].mxu0
        %1200 = vdwg.mxu0
        %1201 = vmatprep.subr.mxu0 0.0
        %v1202 = vand.u32 %v322, 4294901760
        %v1203 = vsub.f32 %v322, %v1202
        %v1204 = vand.u32 %v1203, 4294901760
        %1205 = vmatpush1.msra.mxu0 %v1204
        %1206 = vmatprep.subr.mxu0 0.0
        %v1207 = vand.u32 %v323, 4294901760
        %v1208 = vsub.f32 %v323, %v1207
        %v1209 = vand.u32 %v1208, 4294901760
        %1210 = vmatpush1.msra.mxu0 %v1209
        %1211 = vmatprep.subr.mxu0 0.0
        %v1212 = vand.u32 %v324, 4294901760
        %v1213 = vsub.f32 %v324, %v1212
        %v1214 = vand.u32 %v1213, 4294901760
        %1215 = vmatpush1.msra.mxu0 %v1214
        %1216 = vmatprep.subr.mxu0 0.0
        %v1217 = vand.u32 %v325, 4294901760
        %v1218 = vsub.f32 %v325, %v1217
        %v1219 = vand.u32 %v1218, 4294901760
        %1220 = vmatpush1.msra.mxu0 %v1219
        %1221 = vmatprep.subr.mxu0 0.0
        %1222 = vmatpush1.msra.mxu0 0.0
        %1223 = vmatprep.subr.mxu0 0.0
        %1224 = vmatpush1.msra.mxu0 0.0
        %1225 = vmatprep.subr.mxu0 0.0
        %1226 = vmatpush1.msra.mxu0 0.0
        %1227 = vmatprep.subr.mxu0 0.0
        %1228 = vmatpush1.msra.mxu0 0.0
        %1229 = vmatprep.subr.mxu0 0.0
        %1230 = vmatpush1.msra.mxu0 0.0
        %1231 = vmatprep.subr.mxu0 0.0
        %1232 = vmatpush1.msra.mxu0 0.0
        %1233 = vmatprep.subr.mxu0 0.0
        %1234 = vmatpush1.msra.mxu0 0.0
        %1235 = vmatprep.subr.mxu0 0.0
        %1236 = vmatpush1.msra.mxu0 0.0
        %1237 = vmatprep.subr.mxu0 0.0
        %1238 = vmatpush1.msra.mxu0 0.0
        %1239 = vmatprep.subr.mxu0 0.0
        %1240 = vmatpush1.msra.mxu0 0.0
        %1241 = vmatprep.subr.mxu0 0.0
        %1242 = vmatpush1.msra.mxu0 0.0
        %1243 = vmatprep.subr.mxu0 0.0
        %1244 = vmatpush1.msra.mxu0 0.0
        %1245 = vmatprep.subr.mxu0 0.0
        %1246 = vmatpush1.msra.mxu0 0.0
        %1247 = vmatprep.subr.mxu0 0.0
        %1248 = vmatpush1.msra.mxu0 0.0
        %1249 = vmatprep.subr.mxu0 0.0
        %1250 = vmatpush1.msra.mxu0 0.0
        %1251 = vmatprep.subr.mxu0 0.0
        %1252 = vmatpush1.msra.mxu0 0.0
        %1253 = vmatprep.subr.mxu0 0.0
        %1254 = vmatpush1.msra.mxu0 0.0
        %1255 = vmatprep.subr.mxu0 0.0
        %1256 = vmatpush1.msra.mxu0 0.0
        %1257 = vmatprep.subr.mxu0 0.0
        %1258 = vmatpush1.msra.mxu0 0.0
        %1259 = vmatprep.subr.mxu0 0.0
        %1260 = vmatpush1.msra.mxu0 0.0
        %1261 = vmatprep.subr.mxu0 0.0
        %1262 = vmatpush1.msra.mxu0 0.0
        %1263 = vmatprep.subr.mxu0 0.0
        %1264 = vmatpush1.msra.mxu0 0.0
        %1265 = vmatprep.subr.mxu0 0.0
        %1266 = vmatpush1.msra.mxu0 0.0
        %1267 = vmatprep.subr.mxu0 0.0
        %1268 = vmatpush1.msra.mxu0 0.0
        %1269 = vmatprep.subr.mxu0 0.0
        %1270 = vmatpush1.msra.mxu0 0.0
        %1271 = vmatprep.subr.mxu0 0.0
        %1272 = vmatpush1.msra.mxu0 0.0
        %1273 = vmatprep.subr.mxu0 0.0
        %1274 = vmatpush1.msra.mxu0 0.0
        %1275 = vmatprep.subr.mxu0 0.0
        %1276 = vmatpush1.msra.mxu0 0.0
        %1277 = vmatprep.mubr.f32.mxu0 0.0
        %v1278 = vand.u32 %v872, 4294901760
        %1279 = vmatmul.mubr.f32.gmra.mrb[0].mxu0 %v1278
        %v1280 = vpop.f32.mrb[0].mxu0
        %v1281 = vadd.f32 %v1198, %v1280
        %v1282 = vpop.f32.mrb[0].mxu0
        %1283 = vdwg.mxu0
        %1284 = vmatprep.subr.mxu0 0.0
        %v1285 = vand.u32 %v322, 4294901760
        %1286 = vmatpush1.msra.mxu0 %v1285
        %1287 = vmatprep.subr.mxu0 0.0
        %v1288 = vand.u32 %v323, 4294901760
        %1289 = vmatpush1.msra.mxu0 %v1288
        %1290 = vmatprep.subr.mxu0 0.0
        %v1291 = vand.u32 %v324, 4294901760
        %1292 = vmatpush1.msra.mxu0 %v1291
        %1293 = vmatprep.subr.mxu0 0.0
        %v1294 = vand.u32 %v325, 4294901760
        %1295 = vmatpush1.msra.mxu0 %v1294
        %1296 = vmatprep.subr.mxu0 0.0
        %1297 = vmatpush1.msra.mxu0 0.0
        %1298 = vmatprep.subr.mxu0 0.0
        %1299 = vmatpush1.msra.mxu0 0.0
        %1300 = vmatprep.subr.mxu0 0.0
        %1301 = vmatpush1.msra.mxu0 0.0
        %1302 = vmatprep.subr.mxu0 0.0
        %1303 = vmatpush1.msra.mxu0 0.0
        %1304 = vmatprep.subr.mxu0 0.0
        %1305 = vmatpush1.msra.mxu0 0.0
        %1306 = vmatprep.subr.mxu0 0.0
        %1307 = vmatpush1.msra.mxu0 0.0
        %1308 = vmatprep.subr.mxu0 0.0
        %1309 = vmatpush1.msra.mxu0 0.0
        %1310 = vmatprep.subr.mxu0 0.0
        %1311 = vmatpush1.msra.mxu0 0.0
        %1312 = vmatprep.subr.mxu0 0.0
        %1313 = vmatpush1.msra.mxu0 0.0
        %1314 = vmatprep.subr.mxu0 0.0
        %1315 = vmatpush1.msra.mxu0 0.0
        %1316 = vmatprep.subr.mxu0 0.0
        %1317 = vmatpush1.msra.mxu0 0.0
        %1318 = vmatprep.subr.mxu0 0.0
        %1319 = vmatpush1.msra.mxu0 0.0
        %1320 = vmatprep.subr.mxu0 0.0
        %1321 = vmatpush1.msra.mxu0 0.0
        %1322 = vmatprep.subr.mxu0 0.0
        %1323 = vmatpush1.msra.mxu0 0.0
        %1324 = vmatprep.subr.mxu0 0.0
        %1325 = vmatpush1.msra.mxu0 0.0
        %1326 = vmatprep.subr.mxu0 0.0
        %1327 = vmatpush1.msra.mxu0 0.0
        %1328 = vmatprep.subr.mxu0 0.0
        %1329 = vmatpush1.msra.mxu0 0.0
        %1330 = vmatprep.subr.mxu0 0.0
        %1331 = vmatpush1.msra.mxu0 0.0
        %1332 = vmatprep.subr.mxu0 0.0
        %1333 = vmatpush1.msra.mxu0 0.0
        %1334 = vmatprep.subr.mxu0 0.0
        %1335 = vmatpush1.msra.mxu0 0.0
        %1336 = vmatprep.subr.mxu0 0.0
        %1337 = vmatpush1.msra.mxu0 0.0
        %1338 = vmatprep.subr.mxu0 0.0
        %1339 = vmatpush1.msra.mxu0 0.0
        %1340 = vmatprep.subr.mxu0 0.0
        %1341 = vmatpush1.msra.mxu0 0.0
        %1342 = vmatprep.subr.mxu0 0.0
        %1343 = vmatpush1.msra.mxu0 0.0
        %1344 = vmatprep.subr.mxu0 0.0
        %1345 = vmatpush1.msra.mxu0 0.0
        %1346 = vmatprep.subr.mxu0 0.0
        %1347 = vmatpush1.msra.mxu0 0.0
        %1348 = vmatprep.subr.mxu0 0.0
        %1349 = vmatpush1.msra.mxu0 0.0
        %1350 = vmatprep.subr.mxu0 0.0
        %1351 = vmatpush1.msra.mxu0 0.0
        %1352 = vmatprep.mubr.f32.mxu0 0.0
        %v1353 = vand.u32 %v872, 4294901760
        %1354 = vmatmul.mubr.f32.gmra.mrb[0].mxu0 %v1353
        %v1355 = vpop.f32.mrb[0].mxu0
        %v1356 = vadd.f32 %v1281, %v1355
        %v1357 = vpop.f32.mrb[0].mxu0
        %1358 = vdwg.mxu0
        %v1359 = vmax.f32 %v1356, 0.0
        %v1360 = vadd.f32 %v848, %v1359
        %v1361 = vmul.f32 %v328, 2.0
        %vm1362 = vcmask 15360
        %v1364 = vsel %vm1362, %v1360, 0
        %vm1366 = vcmask 1041408
        %v1368 = vsel %vm1366, %v327, 0
        %1370 = vmatprep.subr.mxu0 0.0
        %v1371 = vand.u32 %v1368, 4294901760
        %1372 = vmatpush1.msra.mxu0 %v1371
        %1373 = vmatprep.subr.mxu0 0.0
        %1374 = vmatpush1.msra.mxu0 0.0
        %1375 = vmatprep.subr.mxu0 0.0
        %1376 = vmatpush1.msra.mxu0 0.0
        %1377 = vmatprep.subr.mxu0 0.0
        %1378 = vmatpush1.msra.mxu0 0.0
        %1379 = vmatprep.subr.mxu0 0.0
        %1380 = vmatpush1.msra.mxu0 0.0
        %1381 = vmatprep.subr.mxu0 0.0
        %1382 = vmatpush1.msra.mxu0 0.0
        %1383 = vmatprep.subr.mxu0 0.0
        %1384 = vmatpush1.msra.mxu0 0.0
        %1385 = vmatprep.subr.mxu0 0.0
        %1386 = vmatpush1.msra.mxu0 0.0
        %1387 = vmatprep.subr.mxu0 0.0
        %1388 = vmatpush1.msra.mxu0 0.0
        %1389 = vmatprep.subr.mxu0 0.0
        %1390 = vmatpush1.msra.mxu0 0.0
        %1391 = vmatprep.subr.mxu0 0.0
        %1392 = vmatpush1.msra.mxu0 0.0
        %1393 = vmatprep.subr.mxu0 0.0
        %1394 = vmatpush1.msra.mxu0 0.0
        %1395 = vmatprep.subr.mxu0 0.0
        %1396 = vmatpush1.msra.mxu0 0.0
        %1397 = vmatprep.subr.mxu0 0.0
        %1398 = vmatpush1.msra.mxu0 0.0
        %1399 = vmatprep.subr.mxu0 0.0
        %1400 = vmatpush1.msra.mxu0 0.0
        %1401 = vmatprep.subr.mxu0 0.0
        %1402 = vmatpush1.msra.mxu0 0.0
        %1403 = vmatprep.subr.mxu0 0.0
        %1404 = vmatpush1.msra.mxu0 0.0
        %1405 = vmatprep.subr.mxu0 0.0
        %1406 = vmatpush1.msra.mxu0 0.0
        %1407 = vmatprep.subr.mxu0 0.0
        %1408 = vmatpush1.msra.mxu0 0.0
        %1409 = vmatprep.subr.mxu0 0.0
        %1410 = vmatpush1.msra.mxu0 0.0
        %1411 = vmatprep.subr.mxu0 0.0
        %1412 = vmatpush1.msra.mxu0 0.0
        %1413 = vmatprep.subr.mxu0 0.0
        %1414 = vmatpush1.msra.mxu0 0.0
        %1415 = vmatprep.subr.mxu0 0.0
        %1416 = vmatpush1.msra.mxu0 0.0
        %1417 = vmatprep.subr.mxu0 0.0
        %1418 = vmatpush1.msra.mxu0 0.0
        %1419 = vmatprep.subr.mxu0 0.0
        %1420 = vmatpush1.msra.mxu0 0.0
        %1421 = vmatprep.subr.mxu0 0.0
        %1422 = vmatpush1.msra.mxu0 0.0
        %1423 = vmatprep.subr.mxu0 0.0
        %1424 = vmatpush1.msra.mxu0 0.0
        %1425 = vmatprep.subr.mxu0 0.0
        %1426 = vmatpush1.msra.mxu0 0.0
        %1427 = vmatprep.subr.mxu0 0.0
        %1428 = vmatpush1.msra.mxu0 0.0
        %1429 = vmatprep.subr.mxu0 0.0
        %1430 = vmatpush1.msra.mxu0 0.0
        %1431 = vmatprep.subr.mxu0 0.0
        %1432 = vmatpush1.msra.mxu0 0.0
        %1433 = vmatprep.subr.mxu0 0.0
        %1434 = vmatpush1.msra.mxu0 0.0
        %1435 = vmatprep.mubr.f32.mxu0 0.0
        %v1436 = vand.u32 %v1364, 4294901760
        %v1437 = vsub.f32 %v1364, %v1436
        %v1438 = vand.u32 %v1437, 4294901760
        %v1439 = vsub.f32 %v1437, %v1438
        %v1440 = vand.u32 %v1439, 4294901760
        %1441 = vmatmul.mubr.f32.gmra.mrb[0].mxu0 %v1440
        %v1442 = vpop.f32.mrb[0].mxu0
        %v1443 = vadd.f32 %v1361, %v1442
        %v1444 = vpop.f32.mrb[0].mxu0
        %1445 = vdwg.mxu0
        %1446 = vmatprep.subr.mxu0 0.0
        %v1447 = vand.u32 %v1368, 4294901760
        %v1448 = vsub.f32 %v1368, %v1447
        %v1449 = vand.u32 %v1448, 4294901760
        %v1450 = vsub.f32 %v1448, %v1449
        %v1451 = vand.u32 %v1450, 4294901760
        %1452 = vmatpush1.msra.mxu0 %v1451
        %1453 = vmatprep.subr.mxu0 0.0
        %1454 = vmatpush1.msra.mxu0 0.0
        %1455 = vmatprep.subr.mxu0 0.0
        %1456 = vmatpush1.msra.mxu0 0.0
        %1457 = vmatprep.subr.mxu0 0.0
        %1458 = vmatpush1.msra.mxu0 0.0
        %1459 = vmatprep.subr.mxu0 0.0
        %1460 = vmatpush1.msra.mxu0 0.0
        %1461 = vmatprep.subr.mxu0 0.0
        %1462 = vmatpush1.msra.mxu0 0.0
        %1463 = vmatprep.subr.mxu0 0.0
        %1464 = vmatpush1.msra.mxu0 0.0
        %1465 = vmatprep.subr.mxu0 0.0
        %1466 = vmatpush1.msra.mxu0 0.0
        %1467 = vmatprep.subr.mxu0 0.0
        %1468 = vmatpush1.msra.mxu0 0.0
        %1469 = vmatprep.subr.mxu0 0.0
        %1470 = vmatpush1.msra.mxu0 0.0
        %1471 = vmatprep.subr.mxu0 0.0
        %1472 = vmatpush1.msra.mxu0 0.0
        %1473 = vmatprep.subr.mxu0 0.0
        %1474 = vmatpush1.msra.mxu0 0.0
        %1475 = vmatprep.subr.mxu0 0.0
        %1476 = vmatpush1.msra.mxu0 0.0
        %1477 = vmatprep.subr.mxu0 0.0
        %1478 = vmatpush1.msra.mxu0 0.0
        %1479 = vmatprep.subr.mxu0 0.0
        %1480 = vmatpush1.msra.mxu0 0.0
        %1481 = vmatprep.subr.mxu0 0.0
        %1482 = vmatpush1.msra.mxu0 0.0
        %1483 = vmatprep.subr.mxu0 0.0
        %1484 = vmatpush1.msra.mxu0 0.0
        %1485 = vmatprep.subr.mxu0 0.0
        %1486 = vmatpush1.msra.mxu0 0.0
        %1487 = vmatprep.subr.mxu0 0.0
        %1488 = vmatpush1.msra.mxu0 0.0
        %1489 = vmatprep.subr.mxu0 0.0
        %1490 = vmatpush1.msra.mxu0 0.0
        %1491 = vmatprep.subr.mxu0 0.0
        %1492 = vmatpush1.msra.mxu0 0.0
        %1493 = vmatprep.subr.mxu0 0.0
        %1494 = vmatpush1.msra.mxu0 0.0
        %1495 = vmatprep.subr.mxu0 0.0
        %1496 = vmatpush1.msra.mxu0 0.0
        %1497 = vmatprep.subr.mxu0 0.0
        %1498 = vmatpush1.msra.mxu0 0.0
        %1499 = vmatprep.subr.mxu0 0.0
        %1500 = vmatpush1.msra.mxu0 0.0
        %1501 = vmatprep.subr.mxu0 0.0
        %1502 = vmatpush1.msra.mxu0 0.0
        %1503 = vmatprep.subr.mxu0 0.0
        %1504 = vmatpush1.msra.mxu0 0.0
        %1505 = vmatprep.subr.mxu0 0.0
        %1506 = vmatpush1.msra.mxu0 0.0
        %1507 = vmatprep.subr.mxu0 0.0
        %1508 = vmatpush1.msra.mxu0 0.0
        %1509 = vmatprep.subr.mxu0 0.0
        %1510 = vmatpush1.msra.mxu0 0.0
        %1511 = vmatprep.subr.mxu0 0.0
        %1512 = vmatpush1.msra.mxu0 0.0
        %1513 = vmatprep.subr.mxu0 0.0
        %1514 = vmatpush1.msra.mxu0 0.0
        %1515 = vmatprep.mubr.f32.mxu0 0.0
        %v1516 = vand.u32 %v1364, 4294901760
        %1517 = vmatmul.mubr.f32.gmra.mrb[0].mxu0 %v1516
        %v1518 = vpop.f32.mrb[0].mxu0
        %v1519 = vadd.f32 %v1443, %v1518
        %v1520 = vpop.f32.mrb[0].mxu0
        %1521 = vdwg.mxu0
        %1522 = vmatprep.subr.mxu0 0.0
        %v1523 = vand.u32 %v1368, 4294901760
        %v1524 = vsub.f32 %v1368, %v1523
        %1525 = vmatpush1.msra.mxu0 %v1524
        %1526 = vmatprep.subr.mxu0 0.0
        %1527 = vmatpush1.msra.mxu0 0.0
        %1528 = vmatprep.subr.mxu0 0.0
        %1529 = vmatpush1.msra.mxu0 0.0
        %1530 = vmatprep.subr.mxu0 0.0
        %1531 = vmatpush1.msra.mxu0 0.0
        %1532 = vmatprep.subr.mxu0 0.0
        %1533 = vmatpush1.msra.mxu0 0.0
        %1534 = vmatprep.subr.mxu0 0.0
        %1535 = vmatpush1.msra.mxu0 0.0
        %1536 = vmatprep.subr.mxu0 0.0
        %1537 = vmatpush1.msra.mxu0 0.0
        %1538 = vmatprep.subr.mxu0 0.0
        %1539 = vmatpush1.msra.mxu0 0.0
        %1540 = vmatprep.subr.mxu0 0.0
        %1541 = vmatpush1.msra.mxu0 0.0
        %1542 = vmatprep.subr.mxu0 0.0
        %1543 = vmatpush1.msra.mxu0 0.0
        %1544 = vmatprep.subr.mxu0 0.0
        %1545 = vmatpush1.msra.mxu0 0.0
        %1546 = vmatprep.subr.mxu0 0.0
        %1547 = vmatpush1.msra.mxu0 0.0
        %1548 = vmatprep.subr.mxu0 0.0
        %1549 = vmatpush1.msra.mxu0 0.0
        %1550 = vmatprep.subr.mxu0 0.0
        %1551 = vmatpush1.msra.mxu0 0.0
        %1552 = vmatprep.subr.mxu0 0.0
        %1553 = vmatpush1.msra.mxu0 0.0
        %1554 = vmatprep.subr.mxu0 0.0
        %1555 = vmatpush1.msra.mxu0 0.0
        %1556 = vmatprep.subr.mxu0 0.0
        %1557 = vmatpush1.msra.mxu0 0.0
        %1558 = vmatprep.subr.mxu0 0.0
        %1559 = vmatpush1.msra.mxu0 0.0
        %1560 = vmatprep.subr.mxu0 0.0
        %1561 = vmatpush1.msra.mxu0 0.0
        %1562 = vmatprep.subr.mxu0 0.0
        %1563 = vmatpush1.msra.mxu0 0.0
        %1564 = vmatprep.subr.mxu0 0.0
        %1565 = vmatpush1.msra.mxu0 0.0
        %1566 = vmatprep.subr.mxu0 0.0
        %1567 = vmatpush1.msra.mxu0 0.0
        %1568 = vmatprep.subr.mxu0 0.0
        %1569 = vmatpush1.msra.mxu0 0.0
        %1570 = vmatprep.subr.mxu0 0.0
        %1571 = vmatpush1.msra.mxu0 0.0
        %1572 = vmatprep.subr.mxu0 0.0
        %1573 = vmatpush1.msra.mxu0 0.0
        %1574 = vmatprep.subr.mxu0 0.0
        %1575 = vmatpush1.msra.mxu0 0.0
        %1576 = vmatprep.subr.mxu0 0.0
        %1577 = vmatpush1.msra.mxu0 0.0
        %1578 = vmatprep.subr.mxu0 0.0
        %1579 = vmatpush1.msra.mxu0 0.0
        %1580 = vmatprep.subr.mxu0 0.0
        %1581 = vmatpush1.msra.mxu0 0.0
        %1582 = vmatprep.subr.mxu0 0.0
        %1583 = vmatpush1.msra.mxu0 0.0
        %1584 = vmatprep.subr.mxu0 0.0
        %1585 = vmatpush1.msra.mxu0 0.0
        %1586 = vmatprep.subr.mxu0 0.0
        %1587 = vmatpush1.msra.mxu0 0.0
        %1588 = vmatprep.mubr.f32.mxu0 0.0
        %v1589 = vand.u32 %v1364, 4294901760
        %v1590 = vsub.f32 %v1364, %v1589
        %1591 = vmatmul.mubr.f32.gmra.mrb[0].mxu0 %v1590
        %v1592 = vpop.f32.mrb[0].mxu0
        %v1593 = vadd.f32 %v1519, %v1592
        %v1594 = vpop.f32.mrb[0].mxu0
        %1595 = vdwg.mxu0
        %1596 = vmatprep.subr.mxu0 0.0
        %v1597 = vand.u32 %v1368, 4294901760
        %1598 = vmatpush1.msra.mxu0 %v1597
        %1599 = vmatprep.subr.mxu0 0.0
        %1600 = vmatpush1.msra.mxu0 0.0
        %1601 = vmatprep.subr.mxu0 0.0
        %1602 = vmatpush1.msra.mxu0 0.0
        %1603 = vmatprep.subr.mxu0 0.0
        %1604 = vmatpush1.msra.mxu0 0.0
        %1605 = vmatprep.subr.mxu0 0.0
        %1606 = vmatpush1.msra.mxu0 0.0
        %1607 = vmatprep.subr.mxu0 0.0
        %1608 = vmatpush1.msra.mxu0 0.0
        %1609 = vmatprep.subr.mxu0 0.0
        %1610 = vmatpush1.msra.mxu0 0.0
        %1611 = vmatprep.subr.mxu0 0.0
        %1612 = vmatpush1.msra.mxu0 0.0
        %1613 = vmatprep.subr.mxu0 0.0
        %1614 = vmatpush1.msra.mxu0 0.0
        %1615 = vmatprep.subr.mxu0 0.0
        %1616 = vmatpush1.msra.mxu0 0.0
        %1617 = vmatprep.subr.mxu0 0.0
        %1618 = vmatpush1.msra.mxu0 0.0
        %1619 = vmatprep.subr.mxu0 0.0
        %1620 = vmatpush1.msra.mxu0 0.0
        %1621 = vmatprep.subr.mxu0 0.0
        %1622 = vmatpush1.msra.mxu0 0.0
        %1623 = vmatprep.subr.mxu0 0.0
        %1624 = vmatpush1.msra.mxu0 0.0
        %1625 = vmatprep.subr.mxu0 0.0
        %1626 = vmatpush1.msra.mxu0 0.0
        %1627 = vmatprep.subr.mxu0 0.0
        %1628 = vmatpush1.msra.mxu0 0.0
        %1629 = vmatprep.subr.mxu0 0.0
        %1630 = vmatpush1.msra.mxu0 0.0
        %1631 = vmatprep.subr.mxu0 0.0
        %1632 = vmatpush1.msra.mxu0 0.0
        %1633 = vmatprep.subr.mxu0 0.0
        %1634 = vmatpush1.msra.mxu0 0.0
        %1635 = vmatprep.subr.mxu0 0.0
        %1636 = vmatpush1.msra.mxu0 0.0
        %1637 = vmatprep.subr.mxu0 0.0
        %1638 = vmatpush1.msra.mxu0 0.0
        %1639 = vmatprep.subr.mxu0 0.0
        %1640 = vmatpush1.msra.mxu0 0.0
        %1641 = vmatprep.subr.mxu0 0.0
        %1642 = vmatpush1.msra.mxu0 0.0
        %1643 = vmatprep.subr.mxu0 0.0
        %1644 = vmatpush1.msra.mxu0 0.0
        %1645 = vmatprep.subr.mxu0 0.0
        %1646 = vmatpush1.msra.mxu0 0.0
        %1647 = vmatprep.subr.mxu0 0.0
        %1648 = vmatpush1.msra.mxu0 0.0
        %1649 = vmatprep.subr.mxu0 0.0
        %1650 = vmatpush1.msra.mxu0 0.0
        %1651 = vmatprep.subr.mxu0 0.0
        %1652 = vmatpush1.msra.mxu0 0.0
        %1653 = vmatprep.subr.mxu0 0.0
        %1654 = vmatpush1.msra.mxu0 0.0
        %1655 = vmatprep.subr.mxu0 0.0
        %1656 = vmatpush1.msra.mxu0 0.0
        %1657 = vmatprep.subr.mxu0 0.0
        %1658 = vmatpush1.msra.mxu0 0.0
        %1659 = vmatprep.subr.mxu0 0.0
        %1660 = vmatpush1.msra.mxu0 0.0
        %1661 = vmatprep.mubr.f32.mxu0 0.0
        %v1662 = vand.u32 %v1364, 4294901760
        %v1663 = vsub.f32 %v1364, %v1662
        %v1664 = vand.u32 %v1663, 4294901760
        %1665 = vmatmul.mubr.f32.gmra.mrb[0].mxu0 %v1664
        %v1666 = vpop.f32.mrb[0].mxu0
        %v1667 = vadd.f32 %v1593, %v1666
        %v1668 = vpop.f32.mrb[0].mxu0
        %1669 = vdwg.mxu0
        %1670 = vmatprep.subr.mxu0 0.0
        %v1671 = vand.u32 %v1368, 4294901760
        %v1672 = vsub.f32 %v1368, %v1671
        %v1673 = vand.u32 %v1672, 4294901760
        %1674 = vmatpush1.msra.mxu0 %v1673
        %1675 = vmatprep.subr.mxu0 0.0
        %1676 = vmatpush1.msra.mxu0 0.0
        %1677 = vmatprep.subr.mxu0 0.0
        %1678 = vmatpush1.msra.mxu0 0.0
        %1679 = vmatprep.subr.mxu0 0.0
        %1680 = vmatpush1.msra.mxu0 0.0
        %1681 = vmatprep.subr.mxu0 0.0
        %1682 = vmatpush1.msra.mxu0 0.0
        %1683 = vmatprep.subr.mxu0 0.0
        %1684 = vmatpush1.msra.mxu0 0.0
        %1685 = vmatprep.subr.mxu0 0.0
        %1686 = vmatpush1.msra.mxu0 0.0
        %1687 = vmatprep.subr.mxu0 0.0
        %1688 = vmatpush1.msra.mxu0 0.0
        %1689 = vmatprep.subr.mxu0 0.0
        %1690 = vmatpush1.msra.mxu0 0.0
        %1691 = vmatprep.subr.mxu0 0.0
        %1692 = vmatpush1.msra.mxu0 0.0
        %1693 = vmatprep.subr.mxu0 0.0
        %1694 = vmatpush1.msra.mxu0 0.0
        %1695 = vmatprep.subr.mxu0 0.0
        %1696 = vmatpush1.msra.mxu0 0.0
        %1697 = vmatprep.subr.mxu0 0.0
        %1698 = vmatpush1.msra.mxu0 0.0
        %1699 = vmatprep.subr.mxu0 0.0
        %1700 = vmatpush1.msra.mxu0 0.0
        %1701 = vmatprep.subr.mxu0 0.0
        %1702 = vmatpush1.msra.mxu0 0.0
        %1703 = vmatprep.subr.mxu0 0.0
        %1704 = vmatpush1.msra.mxu0 0.0
        %1705 = vmatprep.subr.mxu0 0.0
        %1706 = vmatpush1.msra.mxu0 0.0
        %1707 = vmatprep.subr.mxu0 0.0
        %1708 = vmatpush1.msra.mxu0 0.0
        %1709 = vmatprep.subr.mxu0 0.0
        %1710 = vmatpush1.msra.mxu0 0.0
        %1711 = vmatprep.subr.mxu0 0.0
        %1712 = vmatpush1.msra.mxu0 0.0
        %1713 = vmatprep.subr.mxu0 0.0
        %1714 = vmatpush1.msra.mxu0 0.0
        %1715 = vmatprep.subr.mxu0 0.0
        %1716 = vmatpush1.msra.mxu0 0.0
        %1717 = vmatprep.subr.mxu0 0.0
        %1718 = vmatpush1.msra.mxu0 0.0
        %1719 = vmatprep.subr.mxu0 0.0
        %1720 = vmatpush1.msra.mxu0 0.0
        %1721 = vmatprep.subr.mxu0 0.0
        %1722 = vmatpush1.msra.mxu0 0.0
        %1723 = vmatprep.subr.mxu0 0.0
        %1724 = vmatpush1.msra.mxu0 0.0
        %1725 = vmatprep.subr.mxu0 0.0
        %1726 = vmatpush1.msra.mxu0 0.0
        %1727 = vmatprep.subr.mxu0 0.0
        %1728 = vmatpush1.msra.mxu0 0.0
        %1729 = vmatprep.subr.mxu0 0.0
        %1730 = vmatpush1.msra.mxu0 0.0
        %1731 = vmatprep.subr.mxu0 0.0
        %1732 = vmatpush1.msra.mxu0 0.0
        %1733 = vmatprep.subr.mxu0 0.0
        %1734 = vmatpush1.msra.mxu0 0.0
        %1735 = vmatprep.subr.mxu0 0.0
        %1736 = vmatpush1.msra.mxu0 0.0
        %1737 = vmatprep.mubr.f32.mxu0 0.0
        %v1738 = vand.u32 %v1364, 4294901760
        %1739 = vmatmul.mubr.f32.gmra.mrb[0].mxu0 %v1738
        %v1740 = vpop.f32.mrb[0].mxu0
        %v1741 = vadd.f32 %v1667, %v1740
        %v1742 = vpop.f32.mrb[0].mxu0
        %1743 = vdwg.mxu0
        %1744 = vmatprep.subr.mxu0 0.0
        %v1745 = vand.u32 %v1368, 4294901760
        %1746 = vmatpush1.msra.mxu0 %v1745
        %1747 = vmatprep.subr.mxu0 0.0
        %1748 = vmatpush1.msra.mxu0 0.0
        %1749 = vmatprep.subr.mxu0 0.0
        %1750 = vmatpush1.msra.mxu0 0.0
        %1751 = vmatprep.subr.mxu0 0.0
        %1752 = vmatpush1.msra.mxu0 0.0
        %1753 = vmatprep.subr.mxu0 0.0
        %1754 = vmatpush1.msra.mxu0 0.0
        %1755 = vmatprep.subr.mxu0 0.0
        %1756 = vmatpush1.msra.mxu0 0.0
        %1757 = vmatprep.subr.mxu0 0.0
        %1758 = vmatpush1.msra.mxu0 0.0
        %1759 = vmatprep.subr.mxu0 0.0
        %1760 = vmatpush1.msra.mxu0 0.0
        %1761 = vmatprep.subr.mxu0 0.0
        %1762 = vmatpush1.msra.mxu0 0.0
        %1763 = vmatprep.subr.mxu0 0.0
        %1764 = vmatpush1.msra.mxu0 0.0
        %1765 = vmatprep.subr.mxu0 0.0
        %1766 = vmatpush1.msra.mxu0 0.0
        %1767 = vmatprep.subr.mxu0 0.0
        %1768 = vmatpush1.msra.mxu0 0.0
        %1769 = vmatprep.subr.mxu0 0.0
        %1770 = vmatpush1.msra.mxu0 0.0
        %1771 = vmatprep.subr.mxu0 0.0
        %1772 = vmatpush1.msra.mxu0 0.0
        %1773 = vmatprep.subr.mxu0 0.0
        %1774 = vmatpush1.msra.mxu0 0.0
        %1775 = vmatprep.subr.mxu0 0.0
        %1776 = vmatpush1.msra.mxu0 0.0
        %1777 = vmatprep.subr.mxu0 0.0
        %1778 = vmatpush1.msra.mxu0 0.0
        %1779 = vmatprep.subr.mxu0 0.0
        %1780 = vmatpush1.msra.mxu0 0.0
        %1781 = vmatprep.subr.mxu0 0.0
        %1782 = vmatpush1.msra.mxu0 0.0
        %1783 = vmatprep.subr.mxu0 0.0
        %1784 = vmatpush1.msra.mxu0 0.0
        %1785 = vmatprep.subr.mxu0 0.0
        %1786 = vmatpush1.msra.mxu0 0.0
        %1787 = vmatprep.subr.mxu0 0.0
        %1788 = vmatpush1.msra.mxu0 0.0
        %1789 = vmatprep.subr.mxu0 0.0
        %1790 = vmatpush1.msra.mxu0 0.0
        %1791 = vmatprep.subr.mxu0 0.0
        %1792 = vmatpush1.msra.mxu0 0.0
        %1793 = vmatprep.subr.mxu0 0.0
        %1794 = vmatpush1.msra.mxu0 0.0
        %1795 = vmatprep.subr.mxu0 0.0
        %1796 = vmatpush1.msra.mxu0 0.0
        %1797 = vmatprep.subr.mxu0 0.0
        %1798 = vmatpush1.msra.mxu0 0.0
        %1799 = vmatprep.subr.mxu0 0.0
        %1800 = vmatpush1.msra.mxu0 0.0
        %1801 = vmatprep.subr.mxu0 0.0
        %1802 = vmatpush1.msra.mxu0 0.0
        %1803 = vmatprep.subr.mxu0 0.0
        %1804 = vmatpush1.msra.mxu0 0.0
        %1805 = vmatprep.subr.mxu0 0.0
        %1806 = vmatpush1.msra.mxu0 0.0
        %1807 = vmatprep.subr.mxu0 0.0
        %1808 = vmatpush1.msra.mxu0 0.0
        %1809 = vmatprep.mubr.f32.mxu0 0.0
        %v1810 = vand.u32 %v1364, 4294901760
        %1811 = vmatmul.mubr.f32.gmra.mrb[0].mxu0 %v1810
        %v1812 = vpop.f32.mrb[0].mxu0
        %v1813 = vadd.f32 %v1741, %v1812
        %v1814 = vpop.f32.mrb[0].mxu0
        %1815 = vdwg.mxu0
        %v1816 = vxor.u32 %v1813, 2147483648
        %v1817 = vmul.f32 %v1816, 1.442695
        %v1818 = vpow.pop %v1817
        %v1819 = vadd.f32 %v1818, 1.0
        %v1820 = vrcp.pop %v1819
        %v1821 = vmul.f32 1.0, %v1820
        %v1822 = vlaneseq
        %v1823 = vshrl.u32 %v1822, 7
        %v1824 = vsub.s32 0, %v1823
        %v1825 = vrot.slane %v1821, %v1824
        %1827 = vbcast.lane.b32.xlu0 %v1825, 256
        %v1828 = vpop.permute.xlu0 %1827
        %s1830 = sor.u32 256, 8
        %1831 = vbcast.lane.b32.xlu0 %v1825, %s1830
        %v1832 = vpop.permute.xlu0 %1831
        %s1834 = sor.u32 256, 16
        %1835 = vbcast.lane.b32.xlu0 %v1825, %s1834
        %v1836 = vpop.permute.xlu0 %1835
        %s1838 = sor.u32 256, 24
        %1839 = vbcast.lane.b32.xlu0 %v1825, %s1838
        %v1840 = vpop.permute.xlu0 %1839
        %v1841 = vmul.f32 %v285, %v1828
        %v1842 = vmul.f32 %v286, %v1828
        %v1843 = vmul.f32 %v287, %v1832
        %v1844 = vmul.f32 %v288, %v1832
        %v1845 = vmul.f32 %v289, %v1836
        %v1846 = vmul.f32 %v290, %v1836
        %v1847 = vmul.f32 %v291, %v1840
        %v1848 = vmul.f32 %v292, %v1840
        %v1849 = vadd.f32 %v1841, %v1843
        %v1850 = vadd.f32 %v1849, %v1845
        %v1851 = vadd.f32 %v1850, %v1847
        %v1852 = vrot.slane %v1851, 4
        %v1853 = vadd.f32 %v1851, %v1852
        %v1854 = vrot.slane %v1853, 2
        %v1855 = vadd.f32 %v1853, %v1854
        %v1856 = vrot.slane %v1855, 1
        %v1857 = vadd.f32 %v1855, %v1856
        %v1858 = vadd.f32 %v1842, %v1844
        %v1859 = vadd.f32 %v1858, %v1846
        %v1860 = vadd.f32 %v1859, %v1848
        %v1861 = vrot.slane %v1860, 4
        %v1862 = vadd.f32 %v1860, %v1861
        %v1863 = vrot.slane %v1862, 2
        %v1864 = vadd.f32 %v1862, %v1863
        %v1865 = vrot.slane %v1864, 1
        %v1866 = vadd.f32 %v1864, %v1865
        %v1867 = vrcp.pop 32.0
        %v1868 = vmul.f32 %v1857, %v1867
        %v1869 = vmul.f32 %v1866, %v1867
        %v1870 = vmax.f32 %v1841, %v1845
        %v1871 = vmax.f32 %v1843, %v1847
        %v1872 = vmax.f32 %v1870, %v1871
        %v1873 = vrot.slane %v1872, 4
        %v1874 = vmax.f32 %v1872, %v1873
        %v1875 = vrot.slane %v1874, 2
        %v1876 = vmax.f32 %v1874, %v1875
        %v1877 = vrot.slane %v1876, 1
        %v1878 = vmax.f32 %v1876, %v1877
        %v1879 = vmax.f32 %v1842, %v1846
        %v1880 = vmax.f32 %v1844, %v1848
        %v1881 = vmax.f32 %v1879, %v1880
        %v1882 = vrot.slane %v1881, 4
        %v1883 = vmax.f32 %v1881, %v1882
        %v1884 = vrot.slane %v1883, 2
        %v1885 = vmax.f32 %v1883, %v1884
        %v1886 = vrot.slane %v1885, 1
        %v1887 = vmax.f32 %v1885, %v1886
        %v1888 = vld [vmem:[#allocation5] sm:$0xff]
        %v1889 = vld [vmem:[#allocation5 + $0x8] sm:$0xff]
        %v1890 = vld [vmem:[#allocation5 + $0x10] sm:$0xff]
        %v1891 = vld [vmem:[#allocation5 + $0x18] sm:$0xff]
        %v1892 = vld [vmem:[#allocation5 + $0x20] sm:$0xff]
        %v1893 = vld [vmem:[#allocation5 + $0x28] sm:$0xff]
        %v1894 = vld [vmem:[#allocation5 + $0x30] sm:$0xff]
        %v1895 = vld [vmem:[#allocation5 + $0x38] sm:$0xff]
        %v1896 = vld [vmem:[#allocation5 + $0x40] sm:$0xff]
        %v1897 = vld [vmem:[#allocation5 + $0x48] sm:$0xff]
        %v1898 = vld [vmem:[#allocation5 + $0x50] sm:$0xff]
        %v1899 = vld [vmem:[#allocation5 + $0x58] sm:$0xff]
        %v1900 = vld [vmem:[#allocation5 + $0x60] sm:$0xff]
        %v1901 = vld [vmem:[#allocation5 + $0x68] sm:$0xff]
        %v1902 = vld [vmem:[#allocation5 + $0x70] sm:$0xff]
        %v1903 = vld [vmem:[#allocation5 + $0x78] sm:$0xff]
        %v1904 = vld [vmem:[#allocation5 + $0x80] sm:$0xff]
        %v1905 = vld [vmem:[#allocation5 + $0x88] sm:$0xff]
        %v1906 = vld [vmem:[#allocation5 + $0x90] sm:$0xff]
        %v1907 = vld [vmem:[#allocation5 + $0x98] sm:$0xff]
        %v1908 = vld [vmem:[#allocation5 + $0xa0] sm:$0xff]
        %v1909 = vld [vmem:[#allocation5 + $0xa8] sm:$0xff]
        %v1910 = vld [vmem:[#allocation5 + $0xb0] sm:$0xff]
        %v1911 = vld [vmem:[#allocation5 + $0xb8] sm:$0xff]
        %v1912 = vld [vmem:[#allocation5 + $0xc0] sm:$0xff]
        %v1913 = vld [vmem:[#allocation5 + $0xc8] sm:$0xff]
        %v1914 = vld [vmem:[#allocation5 + $0xd0] sm:$0xff]
        %v1915 = vld [vmem:[#allocation5 + $0xd8] sm:$0xff]
        %v1916 = vld [vmem:[#allocation5 + $0xe0] sm:$0xff]
        %v1917 = vld [vmem:[#allocation5 + $0xe8] sm:$0xff]
        %v1918 = vld [vmem:[#allocation5 + $0xf0] sm:$0xff]
        %v1919 = vld [vmem:[#allocation5 + $0xf8] sm:$0xff]
        %v1920 = vld [vmem:[#allocation5 + $0x100] sm:$0xff]
        %v1921 = vld [vmem:[#allocation5 + $0x108] sm:$0xff]
        %v1922 = vld [vmem:[#allocation5 + $0x110] sm:$0xff]
        %v1923 = vld [vmem:[#allocation5 + $0x118] sm:$0xff]
        %v1924 = vld [vmem:[#allocation5 + $0x120] sm:$0xff]
        %v1925 = vld [vmem:[#allocation5 + $0x128] sm:$0xff]
        %v1926 = vld [vmem:[#allocation5 + $0x130] sm:$0xff]
        %v1927 = vld [vmem:[#allocation5 + $0x138] sm:$0xff]
        %v1928 = vld [vmem:[#allocation5 + $0x140] sm:$0xff]
        %v1929 = vld [vmem:[#allocation5 + $0x148] sm:$0xff]
        %v1930 = vld [vmem:[#allocation5 + $0x150] sm:$0xff]
        %v1931 = vld [vmem:[#allocation5 + $0x158] sm:$0xff]
        %v1932 = vld [vmem:[#allocation5 + $0x160] sm:$0xff]
        %v1933 = vld [vmem:[#allocation5 + $0x168] sm:$0xff]
        %v1934 = vld [vmem:[#allocation5 + $0x170] sm:$0xff]
        %v1935 = vld [vmem:[#allocation5 + $0x178] sm:$0xff]
        %v1936 = vld [vmem:[#allocation5 + $0x180] sm:$0xff]
        %v1937 = vld [vmem:[#allocation5 + $0x188] sm:$0xff]
        %v1938 = vld [vmem:[#allocation5 + $0x190] sm:$0xff]
        %v1939 = vld [vmem:[#allocation5 + $0x198] sm:$0xff]
        %v1940 = vld [vmem:[#allocation5 + $0x1a0] sm:$0xff]
        %v1941 = vld [vmem:[#allocation5 + $0x1a8] sm:$0xff]
        %v1942 = vld [vmem:[#allocation5 + $0x1b0] sm:$0xff]
        %v1943 = vld [vmem:[#allocation5 + $0x1b8] sm:$0xff]
        %v1944 = vld [vmem:[#allocation5 + $0x1c0] sm:$0xff]
        %v1945 = vld [vmem:[#allocation5 + $0x1c8] sm:$0xff]
        %v1946 = vld [vmem:[#allocation5 + $0x1d0] sm:$0xff]
        %v1947 = vld [vmem:[#allocation5 + $0x1d8] sm:$0xff]
        %v1948 = vld [vmem:[#allocation5 + $0x1e0] sm:$0xff]
        %v1949 = vld [vmem:[#allocation5 + $0x1e8] sm:$0xff]
        %v1950 = vld [vmem:[#allocation5 + $0x1f0] sm:$0xff]
        %v1951 = vld [vmem:[#allocation5 + $0x1f8] sm:$0xff]
        %v1952 = vld [vmem:[#allocation5 + $0x200] sm:$0xff]
        %v1953 = vld [vmem:[#allocation5 + $0x208] sm:$0xff]
        %v1954 = vld [vmem:[#allocation5 + $0x210] sm:$0xff]
        %v1955 = vld [vmem:[#allocation5 + $0x218] sm:$0xff]
        %v1956 = vld [vmem:[#allocation5 + $0x220] sm:$0xff]
        %v1957 = vld [vmem:[#allocation5 + $0x228] sm:$0xff]
        %v1958 = vld [vmem:[#allocation5 + $0x230] sm:$0xff]
        %v1959 = vld [vmem:[#allocation5 + $0x238] sm:$0xff]
        %v1960 = vld [vmem:[#allocation5 + $0x240] sm:$0xff]
        %v1961 = vld [vmem:[#allocation5 + $0x248] sm:$0xff]
        %v1962 = vld [vmem:[#allocation5 + $0x250] sm:$0xff]
        %v1963 = vld [vmem:[#allocation5 + $0x258] sm:$0xff]
        %v1964 = vld [vmem:[#allocation5 + $0x260] sm:$0xff]
        %v1965 = vld [vmem:[#allocation5 + $0x268] sm:$0xff]
        %v1966 = vld [vmem:[#allocation5 + $0x270] sm:$0xff]
        %v1967 = vld [vmem:[#allocation5 + $0x278] sm:$0xff]
        %v1968 = vld [vmem:[#allocation5 + $0x280] sm:$0xff]
        %v1969 = vld [vmem:[#allocation5 + $0x288] sm:$0xff]
        %v1970 = vld [vmem:[#allocation5 + $0x290] sm:$0xff]
        %v1971 = vld [vmem:[#allocation5 + $0x298] sm:$0xff]
        %v1972 = vld [vmem:[#allocation5 + $0x2a0] sm:$0xff]
        %v1973 = vld [vmem:[#allocation5 + $0x2a8] sm:$0xff]
        %v1974 = vld [vmem:[#allocation5 + $0x2b0] sm:$0xff]
        %v1975 = vld [vmem:[#allocation5 + $0x2b8] sm:$0xff]
        %v1976 = vld [vmem:[#allocation5 + $0x2c0] sm:$0xff]
        %v1977 = vld [vmem:[#allocation5 + $0x2c8] sm:$0xff]
        %v1978 = vld [vmem:[#allocation5 + $0x2d0] sm:$0xff]
        %v1979 = vld [vmem:[#allocation5 + $0x2d8] sm:$0xff]
        %v1980 = vld [vmem:[#allocation5 + $0x2e0] sm:$0xff]
        %v1981 = vld [vmem:[#allocation5 + $0x2e8] sm:$0xff]
        %v1982 = vld [vmem:[#allocation5 + $0x2f0] sm:$0xff]
        %v1983 = vld [vmem:[#allocation5 + $0x2f8] sm:$0xff]
        %v1984 = vld [vmem:[#allocation5 + $0x300] sm:$0xff]
        %v1985 = vld [vmem:[#allocation5 + $0x308] sm:$0xff]
        %v1986 = vld [vmem:[#allocation5 + $0x310] sm:$0xff]
        %v1987 = vld [vmem:[#allocation5 + $0x318] sm:$0xff]
        %v1988 = vld [vmem:[#allocation5 + $0x320] sm:$0xff]
        %v1989 = vld [vmem:[#allocation5 + $0x328] sm:$0xff]
        %v1990 = vld [vmem:[#allocation5 + $0x330] sm:$0xff]
        %v1991 = vld [vmem:[#allocation5 + $0x338] sm:$0xff]
        %v1992 = vld [vmem:[#allocation5 + $0x340] sm:$0xff]
        %v1993 = vld [vmem:[#allocation5 + $0x348] sm:$0xff]
        %v1994 = vld [vmem:[#allocation5 + $0x350] sm:$0xff]
        %v1995 = vld [vmem:[#allocation5 + $0x358] sm:$0xff]
        %v1996 = vld [vmem:[#allocation5 + $0x360] sm:$0xff]
        %v1997 = vld [vmem:[#allocation5 + $0x368] sm:$0xff]
        %v1998 = vld [vmem:[#allocation5 + $0x370] sm:$0xff]
        %v1999 = vld [vmem:[#allocation5 + $0x378] sm:$0xff]
        %v2000 = vld [vmem:[#allocation5 + $0x380] sm:$0xff]
        %v2001 = vld [vmem:[#allocation5 + $0x388] sm:$0xff]
        %v2002 = vld [vmem:[#allocation5 + $0x390] sm:$0xff]
        %v2003 = vld [vmem:[#allocation5 + $0x398] sm:$0xff]
        %v2004 = vld [vmem:[#allocation5 + $0x3a0] sm:$0xff]
        %v2005 = vld [vmem:[#allocation5 + $0x3a8] sm:$0xff]
        %v2006 = vld [vmem:[#allocation5 + $0x3b0] sm:$0xff]
        %v2007 = vld [vmem:[#allocation5 + $0x3b8] sm:$0xff]
        %v2008 = vld [vmem:[#allocation5 + $0x3c0] sm:$0xff]
        %v2009 = vld [vmem:[#allocation5 + $0x3c8] sm:$0xff]
        %v2010 = vld [vmem:[#allocation5 + $0x3d0] sm:$0xff]
        %v2011 = vld [vmem:[#allocation5 + $0x3d8] sm:$0xff]
        %v2012 = vld [vmem:[#allocation5 + $0x3e0] sm:$0xff]
        %v2013 = vld [vmem:[#allocation5 + $0x3e8] sm:$0xff]
        %v2014 = vld [vmem:[#allocation5 + $0x3f0] sm:$0xff]
        %v2015 = vld [vmem:[#allocation5 + $0x3f8] sm:$0xff]
        %v2016 = vand.u32 %v1889, 4294901760
        %2017 = vmatprep.subr.mxu0 %v2016
        %v2018 = vand.u32 %v1888, 4294901760
        %2019 = vmatpush1.msra.mxu0 %v2018
        %v2020 = vand.u32 %v1891, 4294901760
        %2021 = vmatprep.subr.mxu0 %v2020
        %v2022 = vand.u32 %v1890, 4294901760
        %2023 = vmatpush1.msra.mxu0 %v2022
        %v2024 = vand.u32 %v1893, 4294901760
        %2025 = vmatprep.subr.mxu0 %v2024
        %v2026 = vand.u32 %v1892, 4294901760
        %2027 = vmatpush1.msra.mxu0 %v2026
        %v2028 = vand.u32 %v1895, 4294901760
        %2029 = vmatprep.subr.mxu0 %v2028
        %v2030 = vand.u32 %v1894, 4294901760
        %2031 = vmatpush1.msra.mxu0 %v2030
        %v2032 = vand.u32 %v1897, 4294901760
        %2033 = vmatprep.subr.mxu0 %v2032
        %v2034 = vand.u32 %v1896, 4294901760
        %2035 = vmatpush1.msra.mxu0 %v2034
        %v2036 = vand.u32 %v1899, 4294901760
        %2037 = vmatprep.subr.mxu0 %v2036
        %v2038 = vand.u32 %v1898, 4294901760
        %2039 = vmatpush1.msra.mxu0 %v2038
        %v2040 = vand.u32 %v1901, 4294901760
        %2041 = vmatprep.subr.mxu0 %v2040
        %v2042 = vand.u32 %v1900, 4294901760
        %2043 = vmatpush1.msra.mxu0 %v2042
        %v2044 = vand.u32 %v1903, 4294901760
        %2045 = vmatprep.subr.mxu0 %v2044
        %v2046 = vand.u32 %v1902, 4294901760
        %2047 = vmatpush1.msra.mxu0 %v2046
        %v2048 = vand.u32 %v1905, 4294901760
        %2049 = vmatprep.subr.mxu0 %v2048
        %v2050 = vand.u32 %v1904, 4294901760
        %2051 = vmatpush1.msra.mxu0 %v2050
        %v2052 = vand.u32 %v1907, 4294901760
        %2053 = vmatprep.subr.mxu0 %v2052
        %v2054 = vand.u32 %v1906, 4294901760
        %2055 = vmatpush1.msra.mxu0 %v2054
        %v2056 = vand.u32 %v1909, 4294901760
        %2057 = vmatprep.subr.mxu0 %v2056
        %v2058 = vand.u32 %v1908, 4294901760
        %2059 = vmatpush1.msra.mxu0 %v2058
        %v2060 = vand.u32 %v1911, 4294901760
        %2061 = vmatprep.subr.mxu0 %v2060
        %v2062 = vand.u32 %v1910, 4294901760
        %2063 = vmatpush1.msra.mxu0 %v2062
        %v2064 = vand.u32 %v1913, 4294901760
        %2065 = vmatprep.subr.mxu0 %v2064
        %v2066 = vand.u32 %v1912, 4294901760
        %2067 = vmatpush1.msra.mxu0 %v2066
        %v2068 = vand.u32 %v1915, 4294901760
        %2069 = vmatprep.subr.mxu0 %v2068
        %v2070 = vand.u32 %v1914, 4294901760
        %2071 = vmatpush1.msra.mxu0 %v2070
        %v2072 = vand.u32 %v1917, 4294901760
        %2073 = vmatprep.subr.mxu0 %v2072
        %v2074 = vand.u32 %v1916, 4294901760
        %2075 = vmatpush1.msra.mxu0 %v2074
        %v2076 = vand.u32 %v1919, 4294901760
        %2077 = vmatprep.subr.mxu0 %v2076
        %v2078 = vand.u32 %v1918, 4294901760
        %2079 = vmatpush1.msra.mxu0 %v2078
        %v2080 = vand.u32 %v1921, 4294901760
        %2081 = vmatprep.subr.mxu0 %v2080
        %v2082 = vand.u32 %v1920, 4294901760
        %2083 = vmatpush1.msra.mxu0 %v2082
        %v2084 = vand.u32 %v1923, 4294901760
        %2085 = vmatprep.subr.mxu0 %v2084
        %v2086 = vand.u32 %v1922, 4294901760
        %2087 = vmatpush1.msra.mxu0 %v2086
        %v2088 = vand.u32 %v1925, 4294901760
        %2089 = vmatprep.subr.mxu0 %v2088
        %v2090 = vand.u32 %v1924, 4294901760
        %2091 = vmatpush1.msra.mxu0 %v2090
        %v2092 = vand.u32 %v1927, 4294901760
        %2093 = vmatprep.subr.mxu0 %v2092
        %v2094 = vand.u32 %v1926, 4294901760
        %2095 = vmatpush1.msra.mxu0 %v2094
        %v2096 = vand.u32 %v1929, 4294901760
        %2097 = vmatprep.subr.mxu0 %v2096
        %v2098 = vand.u32 %v1928, 4294901760
        %2099 = vmatpush1.msra.mxu0 %v2098
        %v2100 = vand.u32 %v1931, 4294901760
        %2101 = vmatprep.subr.mxu0 %v2100
        %v2102 = vand.u32 %v1930, 4294901760
        %2103 = vmatpush1.msra.mxu0 %v2102
        %v2104 = vand.u32 %v1933, 4294901760
        %2105 = vmatprep.subr.mxu0 %v2104
        %v2106 = vand.u32 %v1932, 4294901760
        %2107 = vmatpush1.msra.mxu0 %v2106
        %v2108 = vand.u32 %v1935, 4294901760
        %2109 = vmatprep.subr.mxu0 %v2108
        %v2110 = vand.u32 %v1934, 4294901760
        %2111 = vmatpush1.msra.mxu0 %v2110
        %v2112 = vand.u32 %v1937, 4294901760
        %2113 = vmatprep.subr.mxu0 %v2112
        %v2114 = vand.u32 %v1936, 4294901760
        %2115 = vmatpush1.msra.mxu0 %v2114
        %v2116 = vand.u32 %v1939, 4294901760
        %2117 = vmatprep.subr.mxu0 %v2116
        %v2118 = vand.u32 %v1938, 4294901760
        %2119 = vmatpush1.msra.mxu0 %v2118
        %v2120 = vand.u32 %v1941, 4294901760
        %2121 = vmatprep.subr.mxu0 %v2120
        %v2122 = vand.u32 %v1940, 4294901760
        %2123 = vmatpush1.msra.mxu0 %v2122
        %v2124 = vand.u32 %v1943, 4294901760
        %2125 = vmatprep.subr.mxu0 %v2124
        %v2126 = vand.u32 %v1942, 4294901760
        %2127 = vmatpush1.msra.mxu0 %v2126
        %v2128 = vand.u32 %v1945, 4294901760
        %2129 = vmatprep.subr.mxu0 %v2128
        %v2130 = vand.u32 %v1944, 4294901760
        %2131 = vmatpush1.msra.mxu0 %v2130
        %v2132 = vand.u32 %v1947, 4294901760
        %2133 = vmatprep.subr.mxu0 %v2132
        %v2134 = vand.u32 %v1946, 4294901760
        %2135 = vmatpush1.msra.mxu0 %v2134
        %v2136 = vand.u32 %v1949, 4294901760
        %2137 = vmatprep.subr.mxu0 %v2136
        %v2138 = vand.u32 %v1948, 4294901760
        %2139 = vmatpush1.msra.mxu0 %v2138
        %v2140 = vand.u32 %v1951, 4294901760
        %2141 = vmatprep.subr.mxu0 %v2140
        %v2142 = vand.u32 %v1950, 4294901760
        %2143 = vmatpush1.msra.mxu0 %v2142
        %v2144 = vand.u32 %v1869, 4294901760
        %v2145 = vsub.f32 %v1869, %v2144
        %v2146 = vand.u32 %v2145, 4294901760
        %v2147 = vsub.f32 %v2145, %v2146
        %v2148 = vand.u32 %v2147, 4294901760
        %2149 = vmatprep.mubr.f32.mxu0 %v2148
        %v2150 = vand.u32 %v1868, 4294901760
        %v2151 = vsub.f32 %v1868, %v2150
        %v2152 = vand.u32 %v2151, 4294901760
        %v2153 = vsub.f32 %v2151, %v2152
        %v2154 = vand.u32 %v2153, 4294901760
        %2155 = vmatmul.mubr.f32.gmra.mrb[0].mxu0 %v2154
        %v2156 = vpop.f32.mrb[0].mxu0
        %v2157 = vadd.f32 0.0, %v2156
        %v2158 = vpop.f32.mrb[0].mxu0
        %v2159 = vadd.f32 0.0, %v2158
        %2160 = vdwg.mxu0
        %v2161 = vand.u32 %v1889, 4294901760
        %v2162 = vsub.f32 %v1889, %v2161
        %v2163 = vand.u32 %v2162, 4294901760
        %v2164 = vsub.f32 %v2162, %v2163
        %v2165 = vand.u32 %v2164, 4294901760
        %2166 = vmatprep.subr.mxu0 %v2165
        %v2167 = vand.u32 %v1888, 4294901760
        %v2168 = vsub.f32 %v1888, %v2167
        %v2169 = vand.u32 %v2168, 4294901760
        %v2170 = vsub.f32 %v2168, %v2169
        %v2171 = vand.u32 %v2170, 4294901760
        %2172 = vmatpush1.msra.mxu0 %v2171
        %v2173 = vand.u32 %v1891, 4294901760
        %v2174 = vsub.f32 %v1891, %v2173
        %v2175 = vand.u32 %v2174, 4294901760
        %v2176 = vsub.f32 %v2174, %v2175
        %v2177 = vand.u32 %v2176, 4294901760
        %2178 = vmatprep.subr.mxu0 %v2177
        %v2179 = vand.u32 %v1890, 4294901760
        %v2180 = vsub.f32 %v1890, %v2179
        %v2181 = vand.u32 %v2180, 4294901760
        %v2182 = vsub.f32 %v2180, %v2181
        %v2183 = vand.u32 %v2182, 4294901760
        %2184 = vmatpush1.msra.mxu0 %v2183
        %v2185 = vand.u32 %v1893, 4294901760
        %v2186 = vsub.f32 %v1893, %v2185
        %v2187 = vand.u32 %v2186, 4294901760
        %v2188 = vsub.f32 %v2186, %v2187
        %v2189 = vand.u32 %v2188, 4294901760
        %2190 = vmatprep.subr.mxu0 %v2189
        %v2191 = vand.u32 %v1892, 4294901760
        %v2192 = vsub.f32 %v1892, %v2191
        %v2193 = vand.u32 %v2192, 4294901760
        %v2194 = vsub.f32 %v2192, %v2193
        %v2195 = vand.u32 %v2194, 4294901760
        %2196 = vmatpush1.msra.mxu0 %v2195
        %v2197 = vand.u32 %v1895, 4294901760
        %v2198 = vsub.f32 %v1895, %v2197
        %v2199 = vand.u32 %v2198, 4294901760
        %v2200 = vsub.f32 %v2198, %v2199
        %v2201 = vand.u32 %v2200, 4294901760
        %2202 = vmatprep.subr.mxu0 %v2201
        %v2203 = vand.u32 %v1894, 4294901760
        %v2204 = vsub.f32 %v1894, %v2203
        %v2205 = vand.u32 %v2204, 4294901760
        %v2206 = vsub.f32 %v2204, %v2205
        %v2207 = vand.u32 %v2206, 4294901760
        %2208 = vmatpush1.msra.mxu0 %v2207
        %v2209 = vand.u32 %v1897, 4294901760
        %v2210 = vsub.f32 %v1897, %v2209
        %v2211 = vand.u32 %v2210, 4294901760
        %v2212 = vsub.f32 %v2210, %v2211
        %v2213 = vand.u32 %v2212, 4294901760
        %2214 = vmatprep.subr.mxu0 %v2213
        %v2215 = vand.u32 %v1896, 4294901760
        %v2216 = vsub.f32 %v1896, %v2215
        %v2217 = vand.u32 %v2216, 4294901760
        %v2218 = vsub.f32 %v2216, %v2217
        %v2219 = vand.u32 %v2218, 4294901760
        %2220 = vmatpush1.msra.mxu0 %v2219
        %v2221 = vand.u32 %v1899, 4294901760
        %v2222 = vsub.f32 %v1899, %v2221
        %v2223 = vand.u32 %v2222, 4294901760
        %v2224 = vsub.f32 %v2222, %v2223
        %v2225 = vand.u32 %v2224, 4294901760
        %2226 = vmatprep.subr.mxu0 %v2225
        %v2227 = vand.u32 %v1898, 4294901760
        %v2228 = vsub.f32 %v1898, %v2227
        %v2229 = vand.u32 %v2228, 4294901760
        %v2230 = vsub.f32 %v2228, %v2229
        %v2231 = vand.u32 %v2230, 4294901760
        %2232 = vmatpush1.msra.mxu0 %v2231
        %v2233 = vand.u32 %v1901, 4294901760
        %v2234 = vsub.f32 %v1901, %v2233
        %v2235 = vand.u32 %v2234, 4294901760
        %v2236 = vsub.f32 %v2234, %v2235
        %v2237 = vand.u32 %v2236, 4294901760
        %2238 = vmatprep.subr.mxu0 %v2237
        %v2239 = vand.u32 %v1900, 4294901760
        %v2240 = vsub.f32 %v1900, %v2239
        %v2241 = vand.u32 %v2240, 4294901760
        %v2242 = vsub.f32 %v2240, %v2241
        %v2243 = vand.u32 %v2242, 4294901760
        %2244 = vmatpush1.msra.mxu0 %v2243
        %v2245 = vand.u32 %v1903, 4294901760
        %v2246 = vsub.f32 %v1903, %v2245
        %v2247 = vand.u32 %v2246, 4294901760
        %v2248 = vsub.f32 %v2246, %v2247
        %v2249 = vand.u32 %v2248, 4294901760
        %2250 = vmatprep.subr.mxu0 %v2249
        %v2251 = vand.u32 %v1902, 4294901760
        %v2252 = vsub.f32 %v1902, %v2251
        %v2253 = vand.u32 %v2252, 4294901760
        %v2254 = vsub.f32 %v2252, %v2253
        %v2255 = vand.u32 %v2254, 4294901760
        %2256 = vmatpush1.msra.mxu0 %v2255
        %v2257 = vand.u32 %v1905, 4294901760
        %v2258 = vsub.f32 %v1905, %v2257
        %v2259 = vand.u32 %v2258, 4294901760
        %v2260 = vsub.f32 %v2258, %v2259
        %v2261 = vand.u32 %v2260, 4294901760
        %2262 = vmatprep.subr.mxu0 %v2261
        %v2263 = vand.u32 %v1904, 4294901760
        %v2264 = vsub.f32 %v1904, %v2263
        %v2265 = vand.u32 %v2264, 4294901760
        %v2266 = vsub.f32 %v2264, %v2265
        %v2267 = vand.u32 %v2266, 4294901760
        %2268 = vmatpush1.msra.mxu0 %v2267
        %v2269 = vand.u32 %v1907, 4294901760
        %v2270 = vsub.f32 %v1907, %v2269
        %v2271 = vand.u32 %v2270, 4294901760
        %v2272 = vsub.f32 %v2270, %v2271
        %v2273 = vand.u32 %v2272, 4294901760
        %2274 = vmatprep.subr.mxu0 %v2273
        %v2275 = vand.u32 %v1906, 4294901760
        %v2276 = vsub.f32 %v1906, %v2275
        %v2277 = vand.u32 %v2276, 4294901760
        %v2278 = vsub.f32 %v2276, %v2277
        %v2279 = vand.u32 %v2278, 4294901760
        %2280 = vmatpush1.msra.mxu0 %v2279
        %v2281 = vand.u32 %v1909, 4294901760
        %v2282 = vsub.f32 %v1909, %v2281
        %v2283 = vand.u32 %v2282, 4294901760
        %v2284 = vsub.f32 %v2282, %v2283
        %v2285 = vand.u32 %v2284, 4294901760
        %2286 = vmatprep.subr.mxu0 %v2285
        %v2287 = vand.u32 %v1908, 4294901760
        %v2288 = vsub.f32 %v1908, %v2287
        %v2289 = vand.u32 %v2288, 4294901760
        %v2290 = vsub.f32 %v2288, %v2289
        %v2291 = vand.u32 %v2290, 4294901760
        %2292 = vmatpush1.msra.mxu0 %v2291
        %v2293 = vand.u32 %v1911, 4294901760
        %v2294 = vsub.f32 %v1911, %v2293
        %v2295 = vand.u32 %v2294, 4294901760
        %v2296 = vsub.f32 %v2294, %v2295
        %v2297 = vand.u32 %v2296, 4294901760
        %2298 = vmatprep.subr.mxu0 %v2297
        %v2299 = vand.u32 %v1910, 4294901760
        %v2300 = vsub.f32 %v1910, %v2299
        %v2301 = vand.u32 %v2300, 4294901760
        %v2302 = vsub.f32 %v2300, %v2301
        %v2303 = vand.u32 %v2302, 4294901760
        %2304 = vmatpush1.msra.mxu0 %v2303
        %v2305 = vand.u32 %v1913, 4294901760
        %v2306 = vsub.f32 %v1913, %v2305
        %v2307 = vand.u32 %v2306, 4294901760
        %v2308 = vsub.f32 %v2306, %v2307
        %v2309 = vand.u32 %v2308, 4294901760
        %2310 = vmatprep.subr.mxu0 %v2309
        %v2311 = vand.u32 %v1912, 4294901760
        %v2312 = vsub.f32 %v1912, %v2311
        %v2313 = vand.u32 %v2312, 4294901760
        %v2314 = vsub.f32 %v2312, %v2313
        %v2315 = vand.u32 %v2314, 4294901760
        %2316 = vmatpush1.msra.mxu0 %v2315
        %v2317 = vand.u32 %v1915, 4294901760
        %v2318 = vsub.f32 %v1915, %v2317
        %v2319 = vand.u32 %v2318, 4294901760
        %v2320 = vsub.f32 %v2318, %v2319
        %v2321 = vand.u32 %v2320, 4294901760
        %2322 = vmatprep.subr.mxu0 %v2321
        %v2323 = vand.u32 %v1914, 4294901760
        %v2324 = vsub.f32 %v1914, %v2323
        %v2325 = vand.u32 %v2324, 4294901760
        %v2326 = vsub.f32 %v2324, %v2325
        %v2327 = vand.u32 %v2326, 4294901760
        %2328 = vmatpush1.msra.mxu0 %v2327
        %v2329 = vand.u32 %v1917, 4294901760
        %v2330 = vsub.f32 %v1917, %v2329
        %v2331 = vand.u32 %v2330, 4294901760
        %v2332 = vsub.f32 %v2330, %v2331
        %v2333 = vand.u32 %v2332, 4294901760
        %2334 = vmatprep.subr.mxu0 %v2333
        %v2335 = vand.u32 %v1916, 4294901760
        %v2336 = vsub.f32 %v1916, %v2335
        %v2337 = vand.u32 %v2336, 4294901760
        %v2338 = vsub.f32 %v2336, %v2337
        %v2339 = vand.u32 %v2338, 4294901760
        %2340 = vmatpush1.msra.mxu0 %v2339
        %v2341 = vand.u32 %v1919, 4294901760
        %v2342 = vsub.f32 %v1919, %v2341
        %v2343 = vand.u32 %v2342, 4294901760
        %v2344 = vsub.f32 %v2342, %v2343
        %v2345 = vand.u32 %v2344, 4294901760
        %2346 = vmatprep.subr.mxu0 %v2345
        %v2347 = vand.u32 %v1918, 4294901760
        %v2348 = vsub.f32 %v1918, %v2347
        %v2349 = vand.u32 %v2348, 4294901760
        %v2350 = vsub.f32 %v2348, %v2349
        %v2351 = vand.u32 %v2350, 4294901760
        %2352 = vmatpush1.msra.mxu0 %v2351
        %v2353 = vand.u32 %v1921, 4294901760
        %v2354 = vsub.f32 %v1921, %v2353
        %v2355 = vand.u32 %v2354, 4294901760
        %v2356 = vsub.f32 %v2354, %v2355
        %v2357 = vand.u32 %v2356, 4294901760
        %2358 = vmatprep.subr.mxu0 %v2357
        %v2359 = vand.u32 %v1920, 4294901760
        %v2360 = vsub.f32 %v1920, %v2359
        %v2361 = vand.u32 %v2360, 4294901760
        %v2362 = vsub.f32 %v2360, %v2361
        %v2363 = vand.u32 %v2362, 4294901760
        %2364 = vmatpush1.msra.mxu0 %v2363
        %v2365 = vand.u32 %v1923, 4294901760
        %v2366 = vsub.f32 %v1923, %v2365
        %v2367 = vand.u32 %v2366, 4294901760
        %v2368 = vsub.f32 %v2366, %v2367
        %v2369 = vand.u32 %v2368, 4294901760
        %2370 = vmatprep.subr.mxu0 %v2369
        %v2371 = vand.u32 %v1922, 4294901760
        %v2372 = vsub.f32 %v1922, %v2371
        %v2373 = vand.u32 %v2372, 4294901760
        %v2374 = vsub.f32 %v2372, %v2373
        %v2375 = vand.u32 %v2374, 4294901760
        %2376 = vmatpush1.msra.mxu0 %v2375
        %v2377 = vand.u32 %v1925, 4294901760
        %v2378 = vsub.f32 %v1925, %v2377
        %v2379 = vand.u32 %v2378, 4294901760
        %v2380 = vsub.f32 %v2378, %v2379
        %v2381 = vand.u32 %v2380, 4294901760
        %2382 = vmatprep.subr.mxu0 %v2381
        %v2383 = vand.u32 %v1924, 4294901760
        %v2384 = vsub.f32 %v1924, %v2383
        %v2385 = vand.u32 %v2384, 4294901760
        %v2386 = vsub.f32 %v2384, %v2385
        %v2387 = vand.u32 %v2386, 4294901760
        %2388 = vmatpush1.msra.mxu0 %v2387
        %v2389 = vand.u32 %v1927, 4294901760
        %v2390 = vsub.f32 %v1927, %v2389
        %v2391 = vand.u32 %v2390, 4294901760
        %v2392 = vsub.f32 %v2390, %v2391
        %v2393 = vand.u32 %v2392, 4294901760
        %2394 = vmatprep.subr.mxu0 %v2393
        %v2395 = vand.u32 %v1926, 4294901760
        %v2396 = vsub.f32 %v1926, %v2395
        %v2397 = vand.u32 %v2396, 4294901760
        %v2398 = vsub.f32 %v2396, %v2397
        %v2399 = vand.u32 %v2398, 4294901760
        %2400 = vmatpush1.msra.mxu0 %v2399
        %v2401 = vand.u32 %v1929, 4294901760
        %v2402 = vsub.f32 %v1929, %v2401
        %v2403 = vand.u32 %v2402, 4294901760
        %v2404 = vsub.f32 %v2402, %v2403
        %v2405 = vand.u32 %v2404, 4294901760
        %2406 = vmatprep.subr.mxu0 %v2405
        %v2407 = vand.u32 %v1928, 4294901760
        %v2408 = vsub.f32 %v1928, %v2407
        %v2409 = vand.u32 %v2408, 4294901760
        %v2410 = vsub.f32 %v2408, %v2409
        %v2411 = vand.u32 %v2410, 4294901760
        %2412 = vmatpush1.msra.mxu0 %v2411
        %v2413 = vand.u32 %v1931, 4294901760
        %v2414 = vsub.f32 %v1931, %v2413
        %v2415 = vand.u32 %v2414, 4294901760
        %v2416 = vsub.f32 %v2414, %v2415
        %v2417 = vand.u32 %v2416, 4294901760
        %2418 = vmatprep.subr.mxu0 %v2417
        %v2419 = vand.u32 %v1930, 4294901760
        %v2420 = vsub.f32 %v1930, %v2419
        %v2421 = vand.u32 %v2420, 4294901760
        %v2422 = vsub.f32 %v2420, %v2421
        %v2423 = vand.u32 %v2422, 4294901760
        %2424 = vmatpush1.msra.mxu0 %v2423
        %v2425 = vand.u32 %v1933, 4294901760
        %v2426 = vsub.f32 %v1933, %v2425
        %v2427 = vand.u32 %v2426, 4294901760
        %v2428 = vsub.f32 %v2426, %v2427
        %v2429 = vand.u32 %v2428, 4294901760
        %2430 = vmatprep.subr.mxu0 %v2429
        %v2431 = vand.u32 %v1932, 4294901760
        %v2432 = vsub.f32 %v1932, %v2431
        %v2433 = vand.u32 %v2432, 4294901760
        %v2434 = vsub.f32 %v2432, %v2433
        %v2435 = vand.u32 %v2434, 4294901760
        %2436 = vmatpush1.msra.mxu0 %v2435
        %v2437 = vand.u32 %v1935, 4294901760
        %v2438 = vsub.f32 %v1935, %v2437
        %v2439 = vand.u32 %v2438, 4294901760
        %v2440 = vsub.f32 %v2438, %v2439
        %v2441 = vand.u32 %v2440, 4294901760
        %2442 = vmatprep.subr.mxu0 %v2441
        %v2443 = vand.u32 %v1934, 4294901760
        %v2444 = vsub.f32 %v1934, %v2443
        %v2445 = vand.u32 %v2444, 4294901760
        %v2446 = vsub.f32 %v2444, %v2445
        %v2447 = vand.u32 %v2446, 4294901760
        %2448 = vmatpush1.msra.mxu0 %v2447
        %v2449 = vand.u32 %v1937, 4294901760
        %v2450 = vsub.f32 %v1937, %v2449
        %v2451 = vand.u32 %v2450, 4294901760
        %v2452 = vsub.f32 %v2450, %v2451
        %v2453 = vand.u32 %v2452, 4294901760
        %2454 = vmatprep.subr.mxu0 %v2453
        %v2455 = vand.u32 %v1936, 4294901760
        %v2456 = vsub.f32 %v1936, %v2455
        %v2457 = vand.u32 %v2456, 4294901760
        %v2458 = vsub.f32 %v2456, %v2457
        %v2459 = vand.u32 %v2458, 4294901760
        %2460 = vmatpush1.msra.mxu0 %v2459
        %v2461 = vand.u32 %v1939, 4294901760
        %v2462 = vsub.f32 %v1939, %v2461
        %v2463 = vand.u32 %v2462, 4294901760
        %v2464 = vsub.f32 %v2462, %v2463
        %v2465 = vand.u32 %v2464, 4294901760
        %2466 = vmatprep.subr.mxu0 %v2465
        %v2467 = vand.u32 %v1938, 4294901760
        %v2468 = vsub.f32 %v1938, %v2467
        %v2469 = vand.u32 %v2468, 4294901760
        %v2470 = vsub.f32 %v2468, %v2469
        %v2471 = vand.u32 %v2470, 4294901760
        %2472 = vmatpush1.msra.mxu0 %v2471
        %v2473 = vand.u32 %v1941, 4294901760
        %v2474 = vsub.f32 %v1941, %v2473
        %v2475 = vand.u32 %v2474, 4294901760
        %v2476 = vsub.f32 %v2474, %v2475
        %v2477 = vand.u32 %v2476, 4294901760
        %2478 = vmatprep.subr.mxu0 %v2477
        %v2479 = vand.u32 %v1940, 4294901760
        %v2480 = vsub.f32 %v1940, %v2479
        %v2481 = vand.u32 %v2480, 4294901760
        %v2482 = vsub.f32 %v2480, %v2481
        %v2483 = vand.u32 %v2482, 4294901760
        %2484 = vmatpush1.msra.mxu0 %v2483
        %v2485 = vand.u32 %v1943, 4294901760
        %v2486 = vsub.f32 %v1943, %v2485
        %v2487 = vand.u32 %v2486, 4294901760
        %v2488 = vsub.f32 %v2486, %v2487
        %v2489 = vand.u32 %v2488, 4294901760
        %2490 = vmatprep.subr.mxu0 %v2489
        %v2491 = vand.u32 %v1942, 4294901760
        %v2492 = vsub.f32 %v1942, %v2491
        %v2493 = vand.u32 %v2492, 4294901760
        %v2494 = vsub.f32 %v2492, %v2493
        %v2495 = vand.u32 %v2494, 4294901760
        %2496 = vmatpush1.msra.mxu0 %v2495
        %v2497 = vand.u32 %v1945, 4294901760
        %v2498 = vsub.f32 %v1945, %v2497
        %v2499 = vand.u32 %v2498, 4294901760
        %v2500 = vsub.f32 %v2498, %v2499
        %v2501 = vand.u32 %v2500, 4294901760
        %2502 = vmatprep.subr.mxu0 %v2501
        %v2503 = vand.u32 %v1944, 4294901760
        %v2504 = vsub.f32 %v1944, %v2503
        %v2505 = vand.u32 %v2504, 4294901760
        %v2506 = vsub.f32 %v2504, %v2505
        %v2507 = vand.u32 %v2506, 4294901760
        %2508 = vmatpush1.msra.mxu0 %v2507
        %v2509 = vand.u32 %v1947, 4294901760
        %v2510 = vsub.f32 %v1947, %v2509
        %v2511 = vand.u32 %v2510, 4294901760
        %v2512 = vsub.f32 %v2510, %v2511
        %v2513 = vand.u32 %v2512, 4294901760
        %2514 = vmatprep.subr.mxu0 %v2513
        %v2515 = vand.u32 %v1946, 4294901760
        %v2516 = vsub.f32 %v1946, %v2515
        %v2517 = vand.u32 %v2516, 4294901760
        %v2518 = vsub.f32 %v2516, %v2517
        %v2519 = vand.u32 %v2518, 4294901760
        %2520 = vmatpush1.msra.mxu0 %v2519
        %v2521 = vand.u32 %v1949, 4294901760
        %v2522 = vsub.f32 %v1949, %v2521
        %v2523 = vand.u32 %v2522, 4294901760
        %v2524 = vsub.f32 %v2522, %v2523
        %v2525 = vand.u32 %v2524, 4294901760
        %2526 = vmatprep.subr.mxu0 %v2525
        %v2527 = vand.u32 %v1948, 4294901760
        %v2528 = vsub.f32 %v1948, %v2527
        %v2529 = vand.u32 %v2528, 4294901760
        %v2530 = vsub.f32 %v2528, %v2529
        %v2531 = vand.u32 %v2530, 4294901760
        %2532 = vmatpush1.msra.mxu0 %v2531
        %v2533 = vand.u32 %v1951, 4294901760
        %v2534 = vsub.f32 %v1951, %v2533
        %v2535 = vand.u32 %v2534, 4294901760
        %v2536 = vsub.f32 %v2534, %v2535
        %v2537 = vand.u32 %v2536, 4294901760
        %2538 = vmatprep.subr.mxu0 %v2537
        %v2539 = vand.u32 %v1950, 4294901760
        %v2540 = vsub.f32 %v1950, %v2539
        %v2541 = vand.u32 %v2540, 4294901760
        %v2542 = vsub.f32 %v2540, %v2541
        %v2543 = vand.u32 %v2542, 4294901760
        %2544 = vmatpush1.msra.mxu0 %v2543
        %v2545 = vand.u32 %v1869, 4294901760
        %2546 = vmatprep.mubr.f32.mxu0 %v2545
        %v2547 = vand.u32 %v1868, 4294901760
        %2548 = vmatmul.mubr.f32.gmra.mrb[0].mxu0 %v2547
        %v2549 = vpop.f32.mrb[0].mxu0
        %v2550 = vadd.f32 %v2157, %v2549
        %v2551 = vpop.f32.mrb[0].mxu0
        %v2552 = vadd.f32 %v2159, %v2551
        %2553 = vdwg.mxu0
        %v2554 = vand.u32 %v1889, 4294901760
        %v2555 = vsub.f32 %v1889, %v2554
        %2556 = vmatprep.subr.mxu0 %v2555
        %v2557 = vand.u32 %v1888, 4294901760
        %v2558 = vsub.f32 %v1888, %v2557
        %2559 = vmatpush1.msra.mxu0 %v2558
        %v2560 = vand.u32 %v1891, 4294901760
        %v2561 = vsub.f32 %v1891, %v2560
        %2562 = vmatprep.subr.mxu0 %v2561
        %v2563 = vand.u32 %v1890, 4294901760
        %v2564 = vsub.f32 %v1890, %v2563
        %2565 = vmatpush1.msra.mxu0 %v2564
        %v2566 = vand.u32 %v1893, 4294901760
        %v2567 = vsub.f32 %v1893, %v2566
        %2568 = vmatprep.subr.mxu0 %v2567
        %v2569 = vand.u32 %v1892, 4294901760
        %v2570 = vsub.f32 %v1892, %v2569
        %2571 = vmatpush1.msra.mxu0 %v2570
        %v2572 = vand.u32 %v1895, 4294901760
        %v2573 = vsub.f32 %v1895, %v2572
        %2574 = vmatprep.subr.mxu0 %v2573
        %v2575 = vand.u32 %v1894, 4294901760
        %v2576 = vsub.f32 %v1894, %v2575
        %2577 = vmatpush1.msra.mxu0 %v2576
        %v2578 = vand.u32 %v1897, 4294901760
        %v2579 = vsub.f32 %v1897, %v2578
        %2580 = vmatprep.subr.mxu0 %v2579
        %v2581 = vand.u32 %v1896, 4294901760
        %v2582 = vsub.f32 %v1896, %v2581
        %2583 = vmatpush1.msra.mxu0 %v2582
        %v2584 = vand.u32 %v1899, 4294901760
        %v2585 = vsub.f32 %v1899, %v2584
        %2586 = vmatprep.subr.mxu0 %v2585
        %v2587 = vand.u32 %v1898, 4294901760
        %v2588 = vsub.f32 %v1898, %v2587
        %2589 = vmatpush1.msra.mxu0 %v2588
        %v2590 = vand.u32 %v1901, 4294901760
        %v2591 = vsub.f32 %v1901, %v2590
        %2592 = vmatprep.subr.mxu0 %v2591
        %v2593 = vand.u32 %v1900, 4294901760
        %v2594 = vsub.f32 %v1900, %v2593
        %2595 = vmatpush1.msra.mxu0 %v2594
        %v2596 = vand.u32 %v1903, 4294901760
        %v2597 = vsub.f32 %v1903, %v2596
        %2598 = vmatprep.subr.mxu0 %v2597
        %v2599 = vand.u32 %v1902, 4294901760
        %v2600 = vsub.f32 %v1902, %v2599
        %2601 = vmatpush1.msra.mxu0 %v2600
        %v2602 = vand.u32 %v1905, 4294901760
        %v2603 = vsub.f32 %v1905, %v2602
        %2604 = vmatprep.subr.mxu0 %v2603
        %v2605 = vand.u32 %v1904, 4294901760
        %v2606 = vsub.f32 %v1904, %v2605
        %2607 = vmatpush1.msra.mxu0 %v2606
        %v2608 = vand.u32 %v1907, 4294901760
        %v2609 = vsub.f32 %v1907, %v2608
        %2610 = vmatprep.subr.mxu0 %v2609
        %v2611 = vand.u32 %v1906, 4294901760
        %v2612 = vsub.f32 %v1906, %v2611
        %2613 = vmatpush1.msra.mxu0 %v2612
        %v2614 = vand.u32 %v1909, 4294901760
        %v2615 = vsub.f32 %v1909, %v2614
        %2616 = vmatprep.subr.mxu0 %v2615
        %v2617 = vand.u32 %v1908, 4294901760
        %v2618 = vsub.f32 %v1908, %v2617
        %2619 = vmatpush1.msra.mxu0 %v2618
        %v2620 = vand.u32 %v1911, 4294901760
        %v2621 = vsub.f32 %v1911, %v2620
        %2622 = vmatprep.subr.mxu0 %v2621
        %v2623 = vand.u32 %v1910, 4294901760
        %v2624 = vsub.f32 %v1910, %v2623
        %2625 = vmatpush1.msra.mxu0 %v2624
        %v2626 = vand.u32 %v1913, 4294901760
        %v2627 = vsub.f32 %v1913, %v2626
        %2628 = vmatprep.subr.mxu0 %v2627
        %v2629 = vand.u32 %v1912, 4294901760
        %v2630 = vsub.f32 %v1912, %v2629
        %2631 = vmatpush1.msra.mxu0 %v2630
        %v2632 = vand.u32 %v1915, 4294901760
        %v2633 = vsub.f32 %v1915, %v2632
        %2634 = vmatprep.subr.mxu0 %v2633
        %v2635 = vand.u32 %v1914, 4294901760
        %v2636 = vsub.f32 %v1914, %v2635
        %2637 = vmatpush1.msra.mxu0 %v2636
        %v2638 = vand.u32 %v1917, 4294901760
        %v2639 = vsub.f32 %v1917, %v2638
        %2640 = vmatprep.subr.mxu0 %v2639
        %v2641 = vand.u32 %v1916, 4294901760
        %v2642 = vsub.f32 %v1916, %v2641
        %2643 = vmatpush1.msra.mxu0 %v2642
        %v2644 = vand.u32 %v1919, 4294901760
        %v2645 = vsub.f32 %v1919, %v2644
        %2646 = vmatprep.subr.mxu0 %v2645
        %v2647 = vand.u32 %v1918, 4294901760
        %v2648 = vsub.f32 %v1918, %v2647
        %2649 = vmatpush1.msra.mxu0 %v2648
        %v2650 = vand.u32 %v1921, 4294901760
        %v2651 = vsub.f32 %v1921, %v2650
        %2652 = vmatprep.subr.mxu0 %v2651
        %v2653 = vand.u32 %v1920, 4294901760
        %v2654 = vsub.f32 %v1920, %v2653
        %2655 = vmatpush1.msra.mxu0 %v2654
        %v2656 = vand.u32 %v1923, 4294901760
        %v2657 = vsub.f32 %v1923, %v2656
        %2658 = vmatprep.subr.mxu0 %v2657
        %v2659 = vand.u32 %v1922, 4294901760
        %v2660 = vsub.f32 %v1922, %v2659
        %2661 = vmatpush1.msra.mxu0 %v2660
        %v2662 = vand.u32 %v1925, 4294901760
        %v2663 = vsub.f32 %v1925, %v2662
        %2664 = vmatprep.subr.mxu0 %v2663
        %v2665 = vand.u32 %v1924, 4294901760
        %v2666 = vsub.f32 %v1924, %v2665
        %2667 = vmatpush1.msra.mxu0 %v2666
        %v2668 = vand.u32 %v1927, 4294901760
        %v2669 = vsub.f32 %v1927, %v2668
        %2670 = vmatprep.subr.mxu0 %v2669
        %v2671 = vand.u32 %v1926, 4294901760
        %v2672 = vsub.f32 %v1926, %v2671
        %2673 = vmatpush1.msra.mxu0 %v2672
        %v2674 = vand.u32 %v1929, 4294901760
        %v2675 = vsub.f32 %v1929, %v2674
        %2676 = vmatprep.subr.mxu0 %v2675
        %v2677 = vand.u32 %v1928, 4294901760
        %v2678 = vsub.f32 %v1928, %v2677
        %2679 = vmatpush1.msra.mxu0 %v2678
        %v2680 = vand.u32 %v1931, 4294901760
        %v2681 = vsub.f32 %v1931, %v2680
        %2682 = vmatprep.subr.mxu0 %v2681
        %v2683 = vand.u32 %v1930, 4294901760
        %v2684 = vsub.f32 %v1930, %v2683
        %2685 = vmatpush1.msra.mxu0 %v2684
        %v2686 = vand.u32 %v1933, 4294901760
        %v2687 = vsub.f32 %v1933, %v2686
        %2688 = vmatprep.subr.mxu0 %v2687
        %v2689 = vand.u32 %v1932, 4294901760
        %v2690 = vsub.f32 %v1932, %v2689
        %2691 = vmatpush1.msra.mxu0 %v2690
        %v2692 = vand.u32 %v1935, 4294901760
        %v2693 = vsub.f32 %v1935, %v2692
        %2694 = vmatprep.subr.mxu0 %v2693
        %v2695 = vand.u32 %v1934, 4294901760
        %v2696 = vsub.f32 %v1934, %v2695
        %2697 = vmatpush1.msra.mxu0 %v2696
        %v2698 = vand.u32 %v1937, 4294901760
        %v2699 = vsub.f32 %v1937, %v2698
        %2700 = vmatprep.subr.mxu0 %v2699
        %v2701 = vand.u32 %v1936, 4294901760
        %v2702 = vsub.f32 %v1936, %v2701
        %2703 = vmatpush1.msra.mxu0 %v2702
        %v2704 = vand.u32 %v1939, 4294901760
        %v2705 = vsub.f32 %v1939, %v2704
        %2706 = vmatprep.subr.mxu0 %v2705
        %v2707 = vand.u32 %v1938, 4294901760
        %v2708 = vsub.f32 %v1938, %v2707
        %2709 = vmatpush1.msra.mxu0 %v2708
        %v2710 = vand.u32 %v1941, 4294901760
        %v2711 = vsub.f32 %v1941, %v2710
        %2712 = vmatprep.subr.mxu0 %v2711
        %v2713 = vand.u32 %v1940, 4294901760
        %v2714 = vsub.f32 %v1940, %v2713
        %2715 = vmatpush1.msra.mxu0 %v2714
        %v2716 = vand.u32 %v1943, 4294901760
        %v2717 = vsub.f32 %v1943, %v2716
        %2718 = vmatprep.subr.mxu0 %v2717
        %v2719 = vand.u32 %v1942, 4294901760
        %v2720 = vsub.f32 %v1942, %v2719
        %2721 = vmatpush1.msra.mxu0 %v2720
        %v2722 = vand.u32 %v1945, 4294901760
        %v2723 = vsub.f32 %v1945, %v2722
        %2724 = vmatprep.subr.mxu0 %v2723
        %v2725 = vand.u32 %v1944, 4294901760
        %v2726 = vsub.f32 %v1944, %v2725
        %2727 = vmatpush1.msra.mxu0 %v2726
        %v2728 = vand.u32 %v1947, 4294901760
        %v2729 = vsub.f32 %v1947, %v2728
        %2730 = vmatprep.subr.mxu0 %v2729
        %v2731 = vand.u32 %v1946, 4294901760
        %v2732 = vsub.f32 %v1946, %v2731
        %2733 = vmatpush1.msra.mxu0 %v2732
        %v2734 = vand.u32 %v1949, 4294901760
        %v2735 = vsub.f32 %v1949, %v2734
        %2736 = vmatprep.subr.mxu0 %v2735
        %v2737 = vand.u32 %v1948, 4294901760
        %v2738 = vsub.f32 %v1948, %v2737
        %2739 = vmatpush1.msra.mxu0 %v2738
        %v2740 = vand.u32 %v1951, 4294901760
        %v2741 = vsub.f32 %v1951, %v2740
        %2742 = vmatprep.subr.mxu0 %v2741
        %v2743 = vand.u32 %v1950, 4294901760
        %v2744 = vsub.f32 %v1950, %v2743
        %2745 = vmatpush1.msra.mxu0 %v2744
        %v2746 = vand.u32 %v1869, 4294901760
        %v2747 = vsub.f32 %v1869, %v2746
        %2748 = vmatprep.mubr.f32.mxu0 %v2747
        %v2749 = vand.u32 %v1868, 4294901760
        %v2750 = vsub.f32 %v1868, %v2749
        %2751 = vmatmul.mubr.f32.gmra.mrb[0].mxu0 %v2750
        %v2752 = vpop.f32.mrb[0].mxu0
        %v2753 = vadd.f32 %v2550, %v2752
        %v2754 = vpop.f32.mrb[0].mxu0
        %v2755 = vadd.f32 %v2552, %v2754
        %2756 = vdwg.mxu0
        %v2757 = vand.u32 %v1889, 4294901760
        %2758 = vmatprep.subr.mxu0 %v2757
        %v2759 = vand.u32 %v1888, 4294901760
        %2760 = vmatpush1.msra.mxu0 %v2759
        %v2761 = vand.u32 %v1891, 4294901760
        %2762 = vmatprep.subr.mxu0 %v2761
        %v2763 = vand.u32 %v1890, 4294901760
        %2764 = vmatpush1.msra.mxu0 %v2763
        %v2765 = vand.u32 %v1893, 4294901760
        %2766 = vmatprep.subr.mxu0 %v2765
        %v2767 = vand.u32 %v1892, 4294901760
        %2768 = vmatpush1.msra.mxu0 %v2767
        %v2769 = vand.u32 %v1895, 4294901760
        %2770 = vmatprep.subr.mxu0 %v2769
        %v2771 = vand.u32 %v1894, 4294901760
        %2772 = vmatpush1.msra.mxu0 %v2771
        %v2773 = vand.u32 %v1897, 4294901760
        %2774 = vmatprep.subr.mxu0 %v2773
        %v2775 = vand.u32 %v1896, 4294901760
        %2776 = vmatpush1.msra.mxu0 %v2775
        %v2777 = vand.u32 %v1899, 4294901760
        %2778 = vmatprep.subr.mxu0 %v2777
        %v2779 = vand.u32 %v1898, 4294901760
        %2780 = vmatpush1.msra.mxu0 %v2779
        %v2781 = vand.u32 %v1901, 4294901760
        %2782 = vmatprep.subr.mxu0 %v2781
        %v2783 = vand.u32 %v1900, 4294901760
        %2784 = vmatpush1.msra.mxu0 %v2783
        %v2785 = vand.u32 %v1903, 4294901760
        %2786 = vmatprep.subr.mxu0 %v2785
        %v2787 = vand.u32 %v1902, 4294901760
        %2788 = vmatpush1.msra.mxu0 %v2787
        %v2789 = vand.u32 %v1905, 4294901760
        %2790 = vmatprep.subr.mxu0 %v2789
        %v2791 = vand.u32 %v1904, 4294901760
        %2792 = vmatpush1.msra.mxu0 %v2791
        %v2793 = vand.u32 %v1907, 4294901760
        %2794 = vmatprep.subr.mxu0 %v2793
        %v2795 = vand.u32 %v1906, 4294901760
        %2796 = vmatpush1.msra.mxu0 %v2795
        %v2797 = vand.u32 %v1909, 4294901760
        %2798 = vmatprep.subr.mxu0 %v2797
        %v2799 = vand.u32 %v1908, 4294901760
        %2800 = vmatpush1.msra.mxu0 %v2799
        %v2801 = vand.u32 %v1911, 4294901760
        %2802 = vmatprep.subr.mxu0 %v2801
        %v2803 = vand.u32 %v1910, 4294901760
        %2804 = vmatpush1.msra.mxu0 %v2803
        %v2805 = vand.u32 %v1913, 4294901760
        %2806 = vmatprep.subr.mxu0 %v2805
        %v2807 = vand.u32 %v1912, 4294901760
        %2808 = vmatpush1.msra.mxu0 %v2807
        %v2809 = vand.u32 %v1915, 4294901760
        %2810 = vmatprep.subr.mxu0 %v2809
        %v2811 = vand.u32 %v1914, 4294901760
        %2812 = vmatpush1.msra.mxu0 %v2811
        %v2813 = vand.u32 %v1917, 4294901760
        %2814 = vmatprep.subr.mxu0 %v2813
        %v2815 = vand.u32 %v1916, 4294901760
        %2816 = vmatpush1.msra.mxu0 %v2815
        %v2817 = vand.u32 %v1919, 4294901760
        %2818 = vmatprep.subr.mxu0 %v2817
        %v2819 = vand.u32 %v1918, 4294901760
        %2820 = vmatpush1.msra.mxu0 %v2819
        %v2821 = vand.u32 %v1921, 4294901760
        %2822 = vmatprep.subr.mxu0 %v2821
        %v2823 = vand.u32 %v1920, 4294901760
        %2824 = vmatpush1.msra.mxu0 %v2823
        %v2825 = vand.u32 %v1923, 4294901760
        %2826 = vmatprep.subr.mxu0 %v2825
        %v2827 = vand.u32 %v1922, 4294901760
        %2828 = vmatpush1.msra.mxu0 %v2827
        %v2829 = vand.u32 %v1925, 4294901760
        %2830 = vmatprep.subr.mxu0 %v2829
        %v2831 = vand.u32 %v1924, 4294901760
        %2832 = vmatpush1.msra.mxu0 %v2831
        %v2833 = vand.u32 %v1927, 4294901760
        %2834 = vmatprep.subr.mxu0 %v2833
        %v2835 = vand.u32 %v1926, 4294901760
        %2836 = vmatpush1.msra.mxu0 %v2835
        %v2837 = vand.u32 %v1929, 4294901760
        %2838 = vmatprep.subr.mxu0 %v2837
        %v2839 = vand.u32 %v1928, 4294901760
        %2840 = vmatpush1.msra.mxu0 %v2839
        %v2841 = vand.u32 %v1931, 4294901760
        %2842 = vmatprep.subr.mxu0 %v2841
        %v2843 = vand.u32 %v1930, 4294901760
        %2844 = vmatpush1.msra.mxu0 %v2843
        %v2845 = vand.u32 %v1933, 4294901760
        %2846 = vmatprep.subr.mxu0 %v2845
        %v2847 = vand.u32 %v1932, 4294901760
        %2848 = vmatpush1.msra.mxu0 %v2847
        %v2849 = vand.u32 %v1935, 4294901760
        %2850 = vmatprep.subr.mxu0 %v2849
        %v2851 = vand.u32 %v1934, 4294901760
        %2852 = vmatpush1.msra.mxu0 %v2851
        %v2853 = vand.u32 %v1937, 4294901760
        %2854 = vmatprep.subr.mxu0 %v2853
        %v2855 = vand.u32 %v1936, 4294901760
        %2856 = vmatpush1.msra.mxu0 %v2855
        %v2857 = vand.u32 %v1939, 4294901760
        %2858 = vmatprep.subr.mxu0 %v2857
        %v2859 = vand.u32 %v1938, 4294901760
        %2860 = vmatpush1.msra.mxu0 %v2859
        %v2861 = vand.u32 %v1941, 4294901760
        %2862 = vmatprep.subr.mxu0 %v2861
        %v2863 = vand.u32 %v1940, 4294901760
        %2864 = vmatpush1.msra.mxu0 %v2863
        %v2865 = vand.u32 %v1943, 4294901760
        %2866 = vmatprep.subr.mxu0 %v2865
        %v2867 = vand.u32 %v1942, 4294901760
        %2868 = vmatpush1.msra.mxu0 %v2867
        %v2869 = vand.u32 %v1945, 4294901760
        %2870 = vmatprep.subr.mxu0 %v2869
        %v2871 = vand.u32 %v1944, 4294901760
        %2872 = vmatpush1.msra.mxu0 %v2871
        %v2873 = vand.u32 %v1947, 4294901760
        %2874 = vmatprep.subr.mxu0 %v2873
        %v2875 = vand.u32 %v1946, 4294901760
        %2876 = vmatpush1.msra.mxu0 %v2875
        %v2877 = vand.u32 %v1949, 4294901760
        %2878 = vmatprep.subr.mxu0 %v2877
        %v2879 = vand.u32 %v1948, 4294901760
        %2880 = vmatpush1.msra.mxu0 %v2879
        %v2881 = vand.u32 %v1951, 4294901760
        %2882 = vmatprep.subr.mxu0 %v2881
        %v2883 = vand.u32 %v1950, 4294901760
        %2884 = vmatpush1.msra.mxu0 %v2883
        %v2885 = vand.u32 %v1869, 4294901760
        %v2886 = vsub.f32 %v1869, %v2885
        %v2887 = vand.u32 %v2886, 4294901760
        %2888 = vmatprep.mubr.f32.mxu0 %v2887
        %v2889 = vand.u32 %v1868, 4294901760
        %v2890 = vsub.f32 %v1868, %v2889
        %v2891 = vand.u32 %v2890, 4294901760
        %2892 = vmatmul.mubr.f32.gmra.mrb[0].mxu0 %v2891
        %v2893 = vpop.f32.mrb[0].mxu0
        %v2894 = vadd.f32 %v2753, %v2893
        %v2895 = vpop.f32.mrb[0].mxu0
        %v2896 = vadd.f32 %v2755, %v2895
        %2897 = vdwg.mxu0
        %v2898 = vand.u32 %v1889, 4294901760
        %v2899 = vsub.f32 %v1889, %v2898
        %v2900 = vand.u32 %v2899, 4294901760
        %2901 = vmatprep.subr.mxu0 %v2900
        %v2902 = vand.u32 %v1888, 4294901760
        %v2903 = vsub.f32 %v1888, %v2902
        %v2904 = vand.u32 %v2903, 4294901760
        %2905 = vmatpush1.msra.mxu0 %v2904
        %v2906 = vand.u32 %v1891, 4294901760
        %v2907 = vsub.f32 %v1891, %v2906
        %v2908 = vand.u32 %v2907, 4294901760
        %2909 = vmatprep.subr.mxu0 %v2908
        %v2910 = vand.u32 %v1890, 4294901760
        %v2911 = vsub.f32 %v1890, %v2910
        %v2912 = vand.u32 %v2911, 4294901760
        %2913 = vmatpush1.msra.mxu0 %v2912
        %v2914 = vand.u32 %v1893, 4294901760
        %v2915 = vsub.f32 %v1893, %v2914
        %v2916 = vand.u32 %v2915, 4294901760
        %2917 = vmatprep.subr.mxu0 %v2916
        %v2918 = vand.u32 %v1892, 4294901760
        %v2919 = vsub.f32 %v1892, %v2918
        %v2920 = vand.u32 %v2919, 4294901760
        %2921 = vmatpush1.msra.mxu0 %v2920
        %v2922 = vand.u32 %v1895, 4294901760
        %v2923 = vsub.f32 %v1895, %v2922
        %v2924 = vand.u32 %v2923, 4294901760
        %2925 = vmatprep.subr.mxu0 %v2924
        %v2926 = vand.u32 %v1894, 4294901760
        %v2927 = vsub.f32 %v1894, %v2926
        %v2928 = vand.u32 %v2927, 4294901760
        %2929 = vmatpush1.msra.mxu0 %v2928
        %v2930 = vand.u32 %v1897, 4294901760
        %v2931 = vsub.f32 %v1897, %v2930
        %v2932 = vand.u32 %v2931, 4294901760
        %2933 = vmatprep.subr.mxu0 %v2932
        %v2934 = vand.u32 %v1896, 4294901760
        %v2935 = vsub.f32 %v1896, %v2934
        %v2936 = vand.u32 %v2935, 4294901760
        %2937 = vmatpush1.msra.mxu0 %v2936
        %v2938 = vand.u32 %v1899, 4294901760
        %v2939 = vsub.f32 %v1899, %v2938
        %v2940 = vand.u32 %v2939, 4294901760
        %2941 = vmatprep.subr.mxu0 %v2940
        %v2942 = vand.u32 %v1898, 4294901760
        %v2943 = vsub.f32 %v1898, %v2942
        %v2944 = vand.u32 %v2943, 4294901760
        %2945 = vmatpush1.msra.mxu0 %v2944
        %v2946 = vand.u32 %v1901, 4294901760
        %v2947 = vsub.f32 %v1901, %v2946
        %v2948 = vand.u32 %v2947, 4294901760
        %2949 = vmatprep.subr.mxu0 %v2948
        %v2950 = vand.u32 %v1900, 4294901760
        %v2951 = vsub.f32 %v1900, %v2950
        %v2952 = vand.u32 %v2951, 4294901760
        %2953 = vmatpush1.msra.mxu0 %v2952
        %v2954 = vand.u32 %v1903, 4294901760
        %v2955 = vsub.f32 %v1903, %v2954
        %v2956 = vand.u32 %v2955, 4294901760
        %2957 = vmatprep.subr.mxu0 %v2956
        %v2958 = vand.u32 %v1902, 4294901760
        %v2959 = vsub.f32 %v1902, %v2958
        %v2960 = vand.u32 %v2959, 4294901760
        %2961 = vmatpush1.msra.mxu0 %v2960
        %v2962 = vand.u32 %v1905, 4294901760
        %v2963 = vsub.f32 %v1905, %v2962
        %v2964 = vand.u32 %v2963, 4294901760
        %2965 = vmatprep.subr.mxu0 %v2964
        %v2966 = vand.u32 %v1904, 4294901760
        %v2967 = vsub.f32 %v1904, %v2966
        %v2968 = vand.u32 %v2967, 4294901760
        %2969 = vmatpush1.msra.mxu0 %v2968
        %v2970 = vand.u32 %v1907, 4294901760
        %v2971 = vsub.f32 %v1907, %v2970
        %v2972 = vand.u32 %v2971, 4294901760
        %2973 = vmatprep.subr.mxu0 %v2972
        %v2974 = vand.u32 %v1906, 4294901760
        %v2975 = vsub.f32 %v1906, %v2974
        %v2976 = vand.u32 %v2975, 4294901760
        %2977 = vmatpush1.msra.mxu0 %v2976
        %v2978 = vand.u32 %v1909, 4294901760
        %v2979 = vsub.f32 %v1909, %v2978
        %v2980 = vand.u32 %v2979, 4294901760
        %2981 = vmatprep.subr.mxu0 %v2980
        %v2982 = vand.u32 %v1908, 4294901760
        %v2983 = vsub.f32 %v1908, %v2982
        %v2984 = vand.u32 %v2983, 4294901760
        %2985 = vmatpush1.msra.mxu0 %v2984
        %v2986 = vand.u32 %v1911, 4294901760
        %v2987 = vsub.f32 %v1911, %v2986
        %v2988 = vand.u32 %v2987, 4294901760
        %2989 = vmatprep.subr.mxu0 %v2988
        %v2990 = vand.u32 %v1910, 4294901760
        %v2991 = vsub.f32 %v1910, %v2990
        %v2992 = vand.u32 %v2991, 4294901760
        %2993 = vmatpush1.msra.mxu0 %v2992
        %v2994 = vand.u32 %v1913, 4294901760
        %v2995 = vsub.f32 %v1913, %v2994
        %v2996 = vand.u32 %v2995, 4294901760
        %2997 = vmatprep.subr.mxu0 %v2996
        %v2998 = vand.u32 %v1912, 4294901760
        %v2999 = vsub.f32 %v1912, %v2998
        %v3000 = vand.u32 %v2999, 4294901760
        %3001 = vmatpush1.msra.mxu0 %v3000
        %v3002 = vand.u32 %v1915, 4294901760
        %v3003 = vsub.f32 %v1915, %v3002
        %v3004 = vand.u32 %v3003, 4294901760
        %3005 = vmatprep.subr.mxu0 %v3004
        %v3006 = vand.u32 %v1914, 4294901760
        %v3007 = vsub.f32 %v1914, %v3006
        %v3008 = vand.u32 %v3007, 4294901760
        %3009 = vmatpush1.msra.mxu0 %v3008
        %v3010 = vand.u32 %v1917, 4294901760
        %v3011 = vsub.f32 %v1917, %v3010
        %v3012 = vand.u32 %v3011, 4294901760
        %3013 = vmatprep.subr.mxu0 %v3012
        %v3014 = vand.u32 %v1916, 4294901760
        %v3015 = vsub.f32 %v1916, %v3014
        %v3016 = vand.u32 %v3015, 4294901760
        %3017 = vmatpush1.msra.mxu0 %v3016
        %v3018 = vand.u32 %v1919, 4294901760
        %v3019 = vsub.f32 %v1919, %v3018
        %v3020 = vand.u32 %v3019, 4294901760
        %3021 = vmatprep.subr.mxu0 %v3020
        %v3022 = vand.u32 %v1918, 4294901760
        %v3023 = vsub.f32 %v1918, %v3022
        %v3024 = vand.u32 %v3023, 4294901760
        %3025 = vmatpush1.msra.mxu0 %v3024
        %v3026 = vand.u32 %v1921, 4294901760
        %v3027 = vsub.f32 %v1921, %v3026
        %v3028 = vand.u32 %v3027, 4294901760
        %3029 = vmatprep.subr.mxu0 %v3028
        %v3030 = vand.u32 %v1920, 4294901760
        %v3031 = vsub.f32 %v1920, %v3030
        %v3032 = vand.u32 %v3031, 4294901760
        %3033 = vmatpush1.msra.mxu0 %v3032
        %v3034 = vand.u32 %v1923, 4294901760
        %v3035 = vsub.f32 %v1923, %v3034
        %v3036 = vand.u32 %v3035, 4294901760
        %3037 = vmatprep.subr.mxu0 %v3036
        %v3038 = vand.u32 %v1922, 4294901760
        %v3039 = vsub.f32 %v1922, %v3038
        %v3040 = vand.u32 %v3039, 4294901760
        %3041 = vmatpush1.msra.mxu0 %v3040
        %v3042 = vand.u32 %v1925, 4294901760
        %v3043 = vsub.f32 %v1925, %v3042
        %v3044 = vand.u32 %v3043, 4294901760
        %3045 = vmatprep.subr.mxu0 %v3044
        %v3046 = vand.u32 %v1924, 4294901760
        %v3047 = vsub.f32 %v1924, %v3046
        %v3048 = vand.u32 %v3047, 4294901760
        %3049 = vmatpush1.msra.mxu0 %v3048
        %v3050 = vand.u32 %v1927, 4294901760
        %v3051 = vsub.f32 %v1927, %v3050
        %v3052 = vand.u32 %v3051, 4294901760
        %3053 = vmatprep.subr.mxu0 %v3052
        %v3054 = vand.u32 %v1926, 4294901760
        %v3055 = vsub.f32 %v1926, %v3054
        %v3056 = vand.u32 %v3055, 4294901760
        %3057 = vmatpush1.msra.mxu0 %v3056
        %v3058 = vand.u32 %v1929, 4294901760
        %v3059 = vsub.f32 %v1929, %v3058
        %v3060 = vand.u32 %v3059, 4294901760
        %3061 = vmatprep.subr.mxu0 %v3060
        %v3062 = vand.u32 %v1928, 4294901760
        %v3063 = vsub.f32 %v1928, %v3062
        %v3064 = vand.u32 %v3063, 4294901760
        %3065 = vmatpush1.msra.mxu0 %v3064
        %v3066 = vand.u32 %v1931, 4294901760
        %v3067 = vsub.f32 %v1931, %v3066
        %v3068 = vand.u32 %v3067, 4294901760
        %3069 = vmatprep.subr.mxu0 %v3068
        %v3070 = vand.u32 %v1930, 4294901760
        %v3071 = vsub.f32 %v1930, %v3070
        %v3072 = vand.u32 %v3071, 4294901760
        %3073 = vmatpush1.msra.mxu0 %v3072
        %v3074 = vand.u32 %v1933, 4294901760
        %v3075 = vsub.f32 %v1933, %v3074
        %v3076 = vand.u32 %v3075, 4294901760
        %3077 = vmatprep.subr.mxu0 %v3076
        %v3078 = vand.u32 %v1932, 4294901760
        %v3079 = vsub.f32 %v1932, %v3078
        %v3080 = vand.u32 %v3079, 4294901760
        %3081 = vmatpush1.msra.mxu0 %v3080
        %v3082 = vand.u32 %v1935, 4294901760
        %v3083 = vsub.f32 %v1935, %v3082
        %v3084 = vand.u32 %v3083, 4294901760
        %3085 = vmatprep.subr.mxu0 %v3084
        %v3086 = vand.u32 %v1934, 4294901760
        %v3087 = vsub.f32 %v1934, %v3086
        %v3088 = vand.u32 %v3087, 4294901760
        %3089 = vmatpush1.msra.mxu0 %v3088
        %v3090 = vand.u32 %v1937, 4294901760
        %v3091 = vsub.f32 %v1937, %v3090
        %v3092 = vand.u32 %v3091, 4294901760
        %3093 = vmatprep.subr.mxu0 %v3092
        %v3094 = vand.u32 %v1936, 4294901760
        %v3095 = vsub.f32 %v1936, %v3094
        %v3096 = vand.u32 %v3095, 4294901760
        %3097 = vmatpush1.msra.mxu0 %v3096
        %v3098 = vand.u32 %v1939, 4294901760
        %v3099 = vsub.f32 %v1939, %v3098
        %v3100 = vand.u32 %v3099, 4294901760
        %3101 = vmatprep.subr.mxu0 %v3100
        %v3102 = vand.u32 %v1938, 4294901760
        %v3103 = vsub.f32 %v1938, %v3102
        %v3104 = vand.u32 %v3103, 4294901760
        %3105 = vmatpush1.msra.mxu0 %v3104
        %v3106 = vand.u32 %v1941, 4294901760
        %v3107 = vsub.f32 %v1941, %v3106
        %v3108 = vand.u32 %v3107, 4294901760
        %3109 = vmatprep.subr.mxu0 %v3108
        %v3110 = vand.u32 %v1940, 4294901760
        %v3111 = vsub.f32 %v1940, %v3110
        %v3112 = vand.u32 %v3111, 4294901760
        %3113 = vmatpush1.msra.mxu0 %v3112
        %v3114 = vand.u32 %v1943, 4294901760
        %v3115 = vsub.f32 %v1943, %v3114
        %v3116 = vand.u32 %v3115, 4294901760
        %3117 = vmatprep.subr.mxu0 %v3116
        %v3118 = vand.u32 %v1942, 4294901760
        %v3119 = vsub.f32 %v1942, %v3118
        %v3120 = vand.u32 %v3119, 4294901760
        %3121 = vmatpush1.msra.mxu0 %v3120
        %v3122 = vand.u32 %v1945, 4294901760
        %v3123 = vsub.f32 %v1945, %v3122
        %v3124 = vand.u32 %v3123, 4294901760
        %3125 = vmatprep.subr.mxu0 %v3124
        %v3126 = vand.u32 %v1944, 4294901760
        %v3127 = vsub.f32 %v1944, %v3126
        %v3128 = vand.u32 %v3127, 4294901760
        %3129 = vmatpush1.msra.mxu0 %v3128
        %v3130 = vand.u32 %v1947, 4294901760
        %v3131 = vsub.f32 %v1947, %v3130
        %v3132 = vand.u32 %v3131, 4294901760
        %3133 = vmatprep.subr.mxu0 %v3132
        %v3134 = vand.u32 %v1946, 4294901760
        %v3135 = vsub.f32 %v1946, %v3134
        %v3136 = vand.u32 %v3135, 4294901760
        %3137 = vmatpush1.msra.mxu0 %v3136
        %v3138 = vand.u32 %v1949, 4294901760
        %v3139 = vsub.f32 %v1949, %v3138
        %v3140 = vand.u32 %v3139, 4294901760
        %3141 = vmatprep.subr.mxu0 %v3140
        %v3142 = vand.u32 %v1948, 4294901760
        %v3143 = vsub.f32 %v1948, %v3142
        %v3144 = vand.u32 %v3143, 4294901760
        %3145 = vmatpush1.msra.mxu0 %v3144
        %v3146 = vand.u32 %v1951, 4294901760
        %v3147 = vsub.f32 %v1951, %v3146
        %v3148 = vand.u32 %v3147, 4294901760
        %3149 = vmatprep.subr.mxu0 %v3148
        %v3150 = vand.u32 %v1950, 4294901760
        %v3151 = vsub.f32 %v1950, %v3150
        %v3152 = vand.u32 %v3151, 4294901760
        %3153 = vmatpush1.msra.mxu0 %v3152
        %v3154 = vand.u32 %v1869, 4294901760
        %3155 = vmatprep.mubr.f32.mxu0 %v3154
        %v3156 = vand.u32 %v1868, 4294901760
        %3157 = vmatmul.mubr.f32.gmra.mrb[0].mxu0 %v3156
        %v3158 = vpop.f32.mrb[0].mxu0
        %v3159 = vadd.f32 %v2894, %v3158
        %v3160 = vpop.f32.mrb[0].mxu0
        %v3161 = vadd.f32 %v2896, %v3160
        %3162 = vdwg.mxu0
        %v3163 = vand.u32 %v1889, 4294901760
        %3164 = vmatprep.subr.mxu0 %v3163
        %v3165 = vand.u32 %v1888, 4294901760
        %3166 = vmatpush1.msra.mxu0 %v3165
        %v3167 = vand.u32 %v1891, 4294901760
        %3168 = vmatprep.subr.mxu0 %v3167
        %v3169 = vand.u32 %v1890, 4294901760
        %3170 = vmatpush1.msra.mxu0 %v3169
        %v3171 = vand.u32 %v1893, 4294901760
        %3172 = vmatprep.subr.mxu0 %v3171
        %v3173 = vand.u32 %v1892, 4294901760
        %3174 = vmatpush1.msra.mxu0 %v3173
        %v3175 = vand.u32 %v1895, 4294901760
        %3176 = vmatprep.subr.mxu0 %v3175
        %v3177 = vand.u32 %v1894, 4294901760
        %3178 = vmatpush1.msra.mxu0 %v3177
        %v3179 = vand.u32 %v1897, 4294901760
        %3180 = vmatprep.subr.mxu0 %v3179
        %v3181 = vand.u32 %v1896, 4294901760
        %3182 = vmatpush1.msra.mxu0 %v3181
        %v3183 = vand.u32 %v1899, 4294901760
        %3184 = vmatprep.subr.mxu0 %v3183
        %v3185 = vand.u32 %v1898, 4294901760
        %3186 = vmatpush1.msra.mxu0 %v3185
        %v3187 = vand.u32 %v1901, 4294901760
        %3188 = vmatprep.subr.mxu0 %v3187
        %v3189 = vand.u32 %v1900, 4294901760
        %3190 = vmatpush1.msra.mxu0 %v3189
        %v3191 = vand.u32 %v1903, 4294901760
        %3192 = vmatprep.subr.mxu0 %v3191
        %v3193 = vand.u32 %v1902, 4294901760
        %3194 = vmatpush1.msra.mxu0 %v3193
        %v3195 = vand.u32 %v1905, 4294901760
        %3196 = vmatprep.subr.mxu0 %v3195
        %v3197 = vand.u32 %v1904, 4294901760
        %3198 = vmatpush1.msra.mxu0 %v3197
        %v3199 = vand.u32 %v1907, 4294901760
        %3200 = vmatprep.subr.mxu0 %v3199
        %v3201 = vand.u32 %v1906, 4294901760
        %3202 = vmatpush1.msra.mxu0 %v3201
        %v3203 = vand.u32 %v1909, 4294901760
        %3204 = vmatprep.subr.mxu0 %v3203
        %v3205 = vand.u32 %v1908, 4294901760
        %3206 = vmatpush1.msra.mxu0 %v3205
        %v3207 = vand.u32 %v1911, 4294901760
        %3208 = vmatprep.subr.mxu0 %v3207
        %v3209 = vand.u32 %v1910, 4294901760
        %3210 = vmatpush1.msra.mxu0 %v3209
        %v3211 = vand.u32 %v1913, 4294901760
        %3212 = vmatprep.subr.mxu0 %v3211
        %v3213 = vand.u32 %v1912, 4294901760
        %3214 = vmatpush1.msra.mxu0 %v3213
        %v3215 = vand.u32 %v1915, 4294901760
        %3216 = vmatprep.subr.mxu0 %v3215
        %v3217 = vand.u32 %v1914, 4294901760
        %3218 = vmatpush1.msra.mxu0 %v3217
        %v3219 = vand.u32 %v1917, 4294901760
        %3220 = vmatprep.subr.mxu0 %v3219
        %v3221 = vand.u32 %v1916, 4294901760
        %3222 = vmatpush1.msra.mxu0 %v3221
        %v3223 = vand.u32 %v1919, 4294901760
        %3224 = vmatprep.subr.mxu0 %v3223
        %v3225 = vand.u32 %v1918, 4294901760
        %3226 = vmatpush1.msra.mxu0 %v3225
        %v3227 = vand.u32 %v1921, 4294901760
        %3228 = vmatprep.subr.mxu0 %v3227
        %v3229 = vand.u32 %v1920, 4294901760
        %3230 = vmatpush1.msra.mxu0 %v3229
        %v3231 = vand.u32 %v1923, 4294901760
        %3232 = vmatprep.subr.mxu0 %v3231
        %v3233 = vand.u32 %v1922, 4294901760
        %3234 = vmatpush1.msra.mxu0 %v3233
        %v3235 = vand.u32 %v1925, 4294901760
        %3236 = vmatprep.subr.mxu0 %v3235
        %v3237 = vand.u32 %v1924, 4294901760
        %3238 = vmatpush1.msra.mxu0 %v3237
        %v3239 = vand.u32 %v1927, 4294901760
        %3240 = vmatprep.subr.mxu0 %v3239
        %v3241 = vand.u32 %v1926, 4294901760
        %3242 = vmatpush1.msra.mxu0 %v3241
        %v3243 = vand.u32 %v1929, 4294901760
        %3244 = vmatprep.subr.mxu0 %v3243
        %v3245 = vand.u32 %v1928, 4294901760
        %3246 = vmatpush1.msra.mxu0 %v3245
        %v3247 = vand.u32 %v1931, 4294901760
        %3248 = vmatprep.subr.mxu0 %v3247
        %v3249 = vand.u32 %v1930, 4294901760
        %3250 = vmatpush1.msra.mxu0 %v3249
        %v3251 = vand.u32 %v1933, 4294901760
        %3252 = vmatprep.subr.mxu0 %v3251
        %v3253 = vand.u32 %v1932, 4294901760
        %3254 = vmatpush1.msra.mxu0 %v3253
        %v3255 = vand.u32 %v1935, 4294901760
        %3256 = vmatprep.subr.mxu0 %v3255
        %v3257 = vand.u32 %v1934, 4294901760
        %3258 = vmatpush1.msra.mxu0 %v3257
        %v3259 = vand.u32 %v1937, 4294901760
        %3260 = vmatprep.subr.mxu0 %v3259
        %v3261 = vand.u32 %v1936, 4294901760
        %3262 = vmatpush1.msra.mxu0 %v3261
        %v3263 = vand.u32 %v1939, 4294901760
        %3264 = vmatprep.subr.mxu0 %v3263
        %v3265 = vand.u32 %v1938, 4294901760
        %3266 = vmatpush1.msra.mxu0 %v3265
        %v3267 = vand.u32 %v1941, 4294901760
        %3268 = vmatprep.subr.mxu0 %v3267
        %v3269 = vand.u32 %v1940, 4294901760
        %3270 = vmatpush1.msra.mxu0 %v3269
        %v3271 = vand.u32 %v1943, 4294901760
        %3272 = vmatprep.subr.mxu0 %v3271
        %v3273 = vand.u32 %v1942, 4294901760
        %3274 = vmatpush1.msra.mxu0 %v3273
        %v3275 = vand.u32 %v1945, 4294901760
        %3276 = vmatprep.subr.mxu0 %v3275
        %v3277 = vand.u32 %v1944, 4294901760
        %3278 = vmatpush1.msra.mxu0 %v3277
        %v3279 = vand.u32 %v1947, 4294901760
        %3280 = vmatprep.subr.mxu0 %v3279
        %v3281 = vand.u32 %v1946, 4294901760
        %3282 = vmatpush1.msra.mxu0 %v3281
        %v3283 = vand.u32 %v1949, 4294901760
        %3284 = vmatprep.subr.mxu0 %v3283
        %v3285 = vand.u32 %v1948, 4294901760
        %3286 = vmatpush1.msra.mxu0 %v3285
        %v3287 = vand.u32 %v1951, 4294901760
        %3288 = vmatprep.subr.mxu0 %v3287
        %v3289 = vand.u32 %v1950, 4294901760
        %3290 = vmatpush1.msra.mxu0 %v3289
        %v3291 = vand.u32 %v1869, 4294901760
        %3292 = vmatprep.mubr.f32.mxu0 %v3291
        %v3293 = vand.u32 %v1868, 4294901760
        %3294 = vmatmul.mubr.f32.gmra.mrb[0].mxu0 %v3293
        %v3295 = vpop.f32.mrb[0].mxu0
        %v3296 = vadd.f32 %v3159, %v3295
        %v3297 = vpop.f32.mrb[0].mxu0
        %v3298 = vadd.f32 %v3161, %v3297
        %3299 = vdwg.mxu0
        %v3300 = vand.u32 %v1953, 4294901760
        %3301 = vmatprep.subr.mxu0 %v3300
        %v3302 = vand.u32 %v1952, 4294901760
        %3303 = vmatpush1.msra.mxu0 %v3302
        %v3304 = vand.u32 %v1955, 4294901760
        %3305 = vmatprep.subr.mxu0 %v3304
        %v3306 = vand.u32 %v1954, 4294901760
        %3307 = vmatpush1.msra.mxu0 %v3306
        %v3308 = vand.u32 %v1957, 4294901760
        %3309 = vmatprep.subr.mxu0 %v3308
        %v3310 = vand.u32 %v1956, 4294901760
        %3311 = vmatpush1.msra.mxu0 %v3310
        %v3312 = vand.u32 %v1959, 4294901760
        %3313 = vmatprep.subr.mxu0 %v3312
        %v3314 = vand.u32 %v1958, 4294901760
        %3315 = vmatpush1.msra.mxu0 %v3314
        %v3316 = vand.u32 %v1961, 4294901760
        %3317 = vmatprep.subr.mxu0 %v3316
        %v3318 = vand.u32 %v1960, 4294901760
        %3319 = vmatpush1.msra.mxu0 %v3318
        %v3320 = vand.u32 %v1963, 4294901760
        %3321 = vmatprep.subr.mxu0 %v3320
        %v3322 = vand.u32 %v1962, 4294901760
        %3323 = vmatpush1.msra.mxu0 %v3322
        %v3324 = vand.u32 %v1965, 4294901760
        %3325 = vmatprep.subr.mxu0 %v3324
        %v3326 = vand.u32 %v1964, 4294901760
        %3327 = vmatpush1.msra.mxu0 %v3326
        %v3328 = vand.u32 %v1967, 4294901760
        %3329 = vmatprep.subr.mxu0 %v3328
        %v3330 = vand.u32 %v1966, 4294901760
        %3331 = vmatpush1.msra.mxu0 %v3330
        %v3332 = vand.u32 %v1969, 4294901760
        %3333 = vmatprep.subr.mxu0 %v3332
        %v3334 = vand.u32 %v1968, 4294901760
        %3335 = vmatpush1.msra.mxu0 %v3334
        %v3336 = vand.u32 %v1971, 4294901760
        %3337 = vmatprep.subr.mxu0 %v3336
        %v3338 = vand.u32 %v1970, 4294901760
        %3339 = vmatpush1.msra.mxu0 %v3338
        %v3340 = vand.u32 %v1973, 4294901760
        %3341 = vmatprep.subr.mxu0 %v3340
        %v3342 = vand.u32 %v1972, 4294901760
        %3343 = vmatpush1.msra.mxu0 %v3342
        %v3344 = vand.u32 %v1975, 4294901760
        %3345 = vmatprep.subr.mxu0 %v3344
        %v3346 = vand.u32 %v1974, 4294901760
        %3347 = vmatpush1.msra.mxu0 %v3346
        %v3348 = vand.u32 %v1977, 4294901760
        %3349 = vmatprep.subr.mxu0 %v3348
        %v3350 = vand.u32 %v1976, 4294901760
        %3351 = vmatpush1.msra.mxu0 %v3350
        %v3352 = vand.u32 %v1979, 4294901760
        %3353 = vmatprep.subr.mxu0 %v3352
        %v3354 = vand.u32 %v1978, 4294901760
        %3355 = vmatpush1.msra.mxu0 %v3354
        %v3356 = vand.u32 %v1981, 4294901760
        %3357 = vmatprep.subr.mxu0 %v3356
        %v3358 = vand.u32 %v1980, 4294901760
        %3359 = vmatpush1.msra.mxu0 %v3358
        %v3360 = vand.u32 %v1983, 4294901760
        %3361 = vmatprep.subr.mxu0 %v3360
        %v3362 = vand.u32 %v1982, 4294901760
        %3363 = vmatpush1.msra.mxu0 %v3362
        %v3364 = vand.u32 %v1985, 4294901760
        %3365 = vmatprep.subr.mxu0 %v3364
        %v3366 = vand.u32 %v1984, 4294901760
        %3367 = vmatpush1.msra.mxu0 %v3366
        %v3368 = vand.u32 %v1987, 4294901760
        %3369 = vmatprep.subr.mxu0 %v3368
        %v3370 = vand.u32 %v1986, 4294901760
        %3371 = vmatpush1.msra.mxu0 %v3370
        %v3372 = vand.u32 %v1989, 4294901760
        %3373 = vmatprep.subr.mxu0 %v3372
        %v3374 = vand.u32 %v1988, 4294901760
        %3375 = vmatpush1.msra.mxu0 %v3374
        %v3376 = vand.u32 %v1991, 4294901760
        %3377 = vmatprep.subr.mxu0 %v3376
        %v3378 = vand.u32 %v1990, 4294901760
        %3379 = vmatpush1.msra.mxu0 %v3378
        %v3380 = vand.u32 %v1993, 4294901760
        %3381 = vmatprep.subr.mxu0 %v3380
        %v3382 = vand.u32 %v1992, 4294901760
        %3383 = vmatpush1.msra.mxu0 %v3382
        %v3384 = vand.u32 %v1995, 4294901760
        %3385 = vmatprep.subr.mxu0 %v3384
        %v3386 = vand.u32 %v1994, 4294901760
        %3387 = vmatpush1.msra.mxu0 %v3386
        %v3388 = vand.u32 %v1997, 4294901760
        %3389 = vmatprep.subr.mxu0 %v3388
        %v3390 = vand.u32 %v1996, 4294901760
        %3391 = vmatpush1.msra.mxu0 %v3390
        %v3392 = vand.u32 %v1999, 4294901760
        %3393 = vmatprep.subr.mxu0 %v3392
        %v3394 = vand.u32 %v1998, 4294901760
        %3395 = vmatpush1.msra.mxu0 %v3394
        %v3396 = vand.u32 %v2001, 4294901760
        %3397 = vmatprep.subr.mxu0 %v3396
        %v3398 = vand.u32 %v2000, 4294901760
        %3399 = vmatpush1.msra.mxu0 %v3398
        %v3400 = vand.u32 %v2003, 4294901760
        %3401 = vmatprep.subr.mxu0 %v3400
        %v3402 = vand.u32 %v2002, 4294901760
        %3403 = vmatpush1.msra.mxu0 %v3402
        %v3404 = vand.u32 %v2005, 4294901760
        %3405 = vmatprep.subr.mxu0 %v3404
        %v3406 = vand.u32 %v2004, 4294901760
        %3407 = vmatpush1.msra.mxu0 %v3406
        %v3408 = vand.u32 %v2007, 4294901760
        %3409 = vmatprep.subr.mxu0 %v3408
        %v3410 = vand.u32 %v2006, 4294901760
        %3411 = vmatpush1.msra.mxu0 %v3410
        %v3412 = vand.u32 %v2009, 4294901760
        %3413 = vmatprep.subr.mxu0 %v3412
        %v3414 = vand.u32 %v2008, 4294901760
        %3415 = vmatpush1.msra.mxu0 %v3414
        %v3416 = vand.u32 %v2011, 4294901760
        %3417 = vmatprep.subr.mxu0 %v3416
        %v3418 = vand.u32 %v2010, 4294901760
        %3419 = vmatpush1.msra.mxu0 %v3418
        %v3420 = vand.u32 %v2013, 4294901760
        %3421 = vmatprep.subr.mxu0 %v3420
        %v3422 = vand.u32 %v2012, 4294901760
        %3423 = vmatpush1.msra.mxu0 %v3422
        %v3424 = vand.u32 %v2015, 4294901760
        %3425 = vmatprep.subr.mxu0 %v3424
        %v3426 = vand.u32 %v2014, 4294901760
        %3427 = vmatpush1.msra.mxu0 %v3426
        %v3428 = vand.u32 %v1887, 4294901760
        %v3429 = vsub.f32 %v1887, %v3428
        %v3430 = vand.u32 %v3429, 4294901760
        %v3431 = vsub.f32 %v3429, %v3430
        %v3432 = vand.u32 %v3431, 4294901760
        %3433 = vmatprep.mubr.f32.mxu0 %v3432
        %v3434 = vand.u32 %v1878, 4294901760
        %v3435 = vsub.f32 %v1878, %v3434
        %v3436 = vand.u32 %v3435, 4294901760
        %v3437 = vsub.f32 %v3435, %v3436
        %v3438 = vand.u32 %v3437, 4294901760
        %3439 = vmatmul.mubr.f32.gmra.mrb[0].mxu0 %v3438
        %v3440 = vpop.f32.mrb[0].mxu0
        %v3441 = vadd.f32 %v3296, %v3440
        %v3442 = vpop.f32.mrb[0].mxu0
        %v3443 = vadd.f32 %v3298, %v3442
        %3444 = vdwg.mxu0
        %v3445 = vand.u32 %v1953, 4294901760
        %v3446 = vsub.f32 %v1953, %v3445
        %v3447 = vand.u32 %v3446, 4294901760
        %v3448 = vsub.f32 %v3446, %v3447
        %v3449 = vand.u32 %v3448, 4294901760
        %3450 = vmatprep.subr.mxu0 %v3449
        %v3451 = vand.u32 %v1952, 4294901760
        %v3452 = vsub.f32 %v1952, %v3451
        %v3453 = vand.u32 %v3452, 4294901760
        %v3454 = vsub.f32 %v3452, %v3453
        %v3455 = vand.u32 %v3454, 4294901760
        %3456 = vmatpush1.msra.mxu0 %v3455
        %v3457 = vand.u32 %v1955, 4294901760
        %v3458 = vsub.f32 %v1955, %v3457
        %v3459 = vand.u32 %v3458, 4294901760
        %v3460 = vsub.f32 %v3458, %v3459
        %v3461 = vand.u32 %v3460, 4294901760
        %3462 = vmatprep.subr.mxu0 %v3461
        %v3463 = vand.u32 %v1954, 4294901760
        %v3464 = vsub.f32 %v1954, %v3463
        %v3465 = vand.u32 %v3464, 4294901760
        %v3466 = vsub.f32 %v3464, %v3465
        %v3467 = vand.u32 %v3466, 4294901760
        %3468 = vmatpush1.msra.mxu0 %v3467
        %v3469 = vand.u32 %v1957, 4294901760
        %v3470 = vsub.f32 %v1957, %v3469
        %v3471 = vand.u32 %v3470, 4294901760
        %v3472 = vsub.f32 %v3470, %v3471
        %v3473 = vand.u32 %v3472, 4294901760
        %3474 = vmatprep.subr.mxu0 %v3473
        %v3475 = vand.u32 %v1956, 4294901760
        %v3476 = vsub.f32 %v1956, %v3475
        %v3477 = vand.u32 %v3476, 4294901760
        %v3478 = vsub.f32 %v3476, %v3477
        %v3479 = vand.u32 %v3478, 4294901760
        %3480 = vmatpush1.msra.mxu0 %v3479
        %v3481 = vand.u32 %v1959, 4294901760
        %v3482 = vsub.f32 %v1959, %v3481
        %v3483 = vand.u32 %v3482, 4294901760
        %v3484 = vsub.f32 %v3482, %v3483
        %v3485 = vand.u32 %v3484, 4294901760
        %3486 = vmatprep.subr.mxu0 %v3485
        %v3487 = vand.u32 %v1958, 4294901760
        %v3488 = vsub.f32 %v1958, %v3487
        %v3489 = vand.u32 %v3488, 4294901760
        %v3490 = vsub.f32 %v3488, %v3489
        %v3491 = vand.u32 %v3490, 4294901760
        %3492 = vmatpush1.msra.mxu0 %v3491
        %v3493 = vand.u32 %v1961, 4294901760
        %v3494 = vsub.f32 %v1961, %v3493
        %v3495 = vand.u32 %v3494, 4294901760
        %v3496 = vsub.f32 %v3494, %v3495
        %v3497 = vand.u32 %v3496, 4294901760
        %3498 = vmatprep.subr.mxu0 %v3497
        %v3499 = vand.u32 %v1960, 4294901760
        %v3500 = vsub.f32 %v1960, %v3499
        %v3501 = vand.u32 %v3500, 4294901760
        %v3502 = vsub.f32 %v3500, %v3501
        %v3503 = vand.u32 %v3502, 4294901760
        %3504 = vmatpush1.msra.mxu0 %v3503
        %v3505 = vand.u32 %v1963, 4294901760
        %v3506 = vsub.f32 %v1963, %v3505
        %v3507 = vand.u32 %v3506, 4294901760
        %v3508 = vsub.f32 %v3506, %v3507
        %v3509 = vand.u32 %v3508, 4294901760
        %3510 = vmatprep.subr.mxu0 %v3509
        %v3511 = vand.u32 %v1962, 4294901760
        %v3512 = vsub.f32 %v1962, %v3511
        %v3513 = vand.u32 %v3512, 4294901760
        %v3514 = vsub.f32 %v3512, %v3513
        %v3515 = vand.u32 %v3514, 4294901760
        %3516 = vmatpush1.msra.mxu0 %v3515
        %v3517 = vand.u32 %v1965, 4294901760
        %v3518 = vsub.f32 %v1965, %v3517
        %v3519 = vand.u32 %v3518, 4294901760
        %v3520 = vsub.f32 %v3518, %v3519
        %v3521 = vand.u32 %v3520, 4294901760
        %3522 = vmatprep.subr.mxu0 %v3521
        %v3523 = vand.u32 %v1964, 4294901760
        %v3524 = vsub.f32 %v1964, %v3523
        %v3525 = vand.u32 %v3524, 4294901760
        %v3526 = vsub.f32 %v3524, %v3525
        %v3527 = vand.u32 %v3526, 4294901760
        %3528 = vmatpush1.msra.mxu0 %v3527
        %v3529 = vand.u32 %v1967, 4294901760
        %v3530 = vsub.f32 %v1967, %v3529
        %v3531 = vand.u32 %v3530, 4294901760
        %v3532 = vsub.f32 %v3530, %v3531
        %v3533 = vand.u32 %v3532, 4294901760
        %3534 = vmatprep.subr.mxu0 %v3533
        %v3535 = vand.u32 %v1966, 4294901760
        %v3536 = vsub.f32 %v1966, %v3535
        %v3537 = vand.u32 %v3536, 4294901760
        %v3538 = vsub.f32 %v3536, %v3537
        %v3539 = vand.u32 %v3538, 4294901760
        %3540 = vmatpush1.msra.mxu0 %v3539
        %v3541 = vand.u32 %v1969, 4294901760
        %v3542 = vsub.f32 %v1969, %v3541
        %v3543 = vand.u32 %v3542, 4294901760
        %v3544 = vsub.f32 %v3542, %v3543
        %v3545 = vand.u32 %v3544, 4294901760
        %3546 = vmatprep.subr.mxu0 %v3545
        %v3547 = vand.u32 %v1968, 4294901760
        %v3548 = vsub.f32 %v1968, %v3547
        %v3549 = vand.u32 %v3548, 4294901760
        %v3550 = vsub.f32 %v3548, %v3549
        %v3551 = vand.u32 %v3550, 4294901760
        %3552 = vmatpush1.msra.mxu0 %v3551
        %v3553 = vand.u32 %v1971, 4294901760
        %v3554 = vsub.f32 %v1971, %v3553
        %v3555 = vand.u32 %v3554, 4294901760
        %v3556 = vsub.f32 %v3554, %v3555
        %v3557 = vand.u32 %v3556, 4294901760
        %3558 = vmatprep.subr.mxu0 %v3557
        %v3559 = vand.u32 %v1970, 4294901760
        %v3560 = vsub.f32 %v1970, %v3559
        %v3561 = vand.u32 %v3560, 4294901760
        %v3562 = vsub.f32 %v3560, %v3561
        %v3563 = vand.u32 %v3562, 4294901760
        %3564 = vmatpush1.msra.mxu0 %v3563
        %v3565 = vand.u32 %v1973, 4294901760
        %v3566 = vsub.f32 %v1973, %v3565
        %v3567 = vand.u32 %v3566, 4294901760
        %v3568 = vsub.f32 %v3566, %v3567
        %v3569 = vand.u32 %v3568, 4294901760
        %3570 = vmatprep.subr.mxu0 %v3569
        %v3571 = vand.u32 %v1972, 4294901760
        %v3572 = vsub.f32 %v1972, %v3571
        %v3573 = vand.u32 %v3572, 4294901760
        %v3574 = vsub.f32 %v3572, %v3573
        %v3575 = vand.u32 %v3574, 4294901760
        %3576 = vmatpush1.msra.mxu0 %v3575
        %v3577 = vand.u32 %v1975, 4294901760
        %v3578 = vsub.f32 %v1975, %v3577
        %v3579 = vand.u32 %v3578, 4294901760
        %v3580 = vsub.f32 %v3578, %v3579
        %v3581 = vand.u32 %v3580, 4294901760
        %3582 = vmatprep.subr.mxu0 %v3581
        %v3583 = vand.u32 %v1974, 4294901760
        %v3584 = vsub.f32 %v1974, %v3583
        %v3585 = vand.u32 %v3584, 4294901760
        %v3586 = vsub.f32 %v3584, %v3585
        %v3587 = vand.u32 %v3586, 4294901760
        %3588 = vmatpush1.msra.mxu0 %v3587
        %v3589 = vand.u32 %v1977, 4294901760
        %v3590 = vsub.f32 %v1977, %v3589
        %v3591 = vand.u32 %v3590, 4294901760
        %v3592 = vsub.f32 %v3590, %v3591
        %v3593 = vand.u32 %v3592, 4294901760
        %3594 = vmatprep.subr.mxu0 %v3593
        %v3595 = vand.u32 %v1976, 4294901760
        %v3596 = vsub.f32 %v1976, %v3595
        %v3597 = vand.u32 %v3596, 4294901760
        %v3598 = vsub.f32 %v3596, %v3597
        %v3599 = vand.u32 %v3598, 4294901760
        %3600 = vmatpush1.msra.mxu0 %v3599
        %v3601 = vand.u32 %v1979, 4294901760
        %v3602 = vsub.f32 %v1979, %v3601
        %v3603 = vand.u32 %v3602, 4294901760
        %v3604 = vsub.f32 %v3602, %v3603
        %v3605 = vand.u32 %v3604, 4294901760
        %3606 = vmatprep.subr.mxu0 %v3605
        %v3607 = vand.u32 %v1978, 4294901760
        %v3608 = vsub.f32 %v1978, %v3607
        %v3609 = vand.u32 %v3608, 4294901760
        %v3610 = vsub.f32 %v3608, %v3609
        %v3611 = vand.u32 %v3610, 4294901760
        %3612 = vmatpush1.msra.mxu0 %v3611
        %v3613 = vand.u32 %v1981, 4294901760
        %v3614 = vsub.f32 %v1981, %v3613
        %v3615 = vand.u32 %v3614, 4294901760
        %v3616 = vsub.f32 %v3614, %v3615
        %v3617 = vand.u32 %v3616, 4294901760
        %3618 = vmatprep.subr.mxu0 %v3617
        %v3619 = vand.u32 %v1980, 4294901760
        %v3620 = vsub.f32 %v1980, %v3619
        %v3621 = vand.u32 %v3620, 4294901760
        %v3622 = vsub.f32 %v3620, %v3621
        %v3623 = vand.u32 %v3622, 4294901760
        %3624 = vmatpush1.msra.mxu0 %v3623
        %v3625 = vand.u32 %v1983, 4294901760
        %v3626 = vsub.f32 %v1983, %v3625
        %v3627 = vand.u32 %v3626, 4294901760
        %v3628 = vsub.f32 %v3626, %v3627
        %v3629 = vand.u32 %v3628, 4294901760
        %3630 = vmatprep.subr.mxu0 %v3629
        %v3631 = vand.u32 %v1982, 4294901760
        %v3632 = vsub.f32 %v1982, %v3631
        %v3633 = vand.u32 %v3632, 4294901760
        %v3634 = vsub.f32 %v3632, %v3633
        %v3635 = vand.u32 %v3634, 4294901760
        %3636 = vmatpush1.msra.mxu0 %v3635
        %v3637 = vand.u32 %v1985, 4294901760
        %v3638 = vsub.f32 %v1985, %v3637
        %v3639 = vand.u32 %v3638, 4294901760
        %v3640 = vsub.f32 %v3638, %v3639
        %v3641 = vand.u32 %v3640, 4294901760
        %3642 = vmatprep.subr.mxu0 %v3641
        %v3643 = vand.u32 %v1984, 4294901760
        %v3644 = vsub.f32 %v1984, %v3643
        %v3645 = vand.u32 %v3644, 4294901760
        %v3646 = vsub.f32 %v3644, %v3645
        %v3647 = vand.u32 %v3646, 4294901760
        %3648 = vmatpush1.msra.mxu0 %v3647
        %v3649 = vand.u32 %v1987, 4294901760
        %v3650 = vsub.f32 %v1987, %v3649
        %v3651 = vand.u32 %v3650, 4294901760
        %v3652 = vsub.f32 %v3650, %v3651
        %v3653 = vand.u32 %v3652, 4294901760
        %3654 = vmatprep.subr.mxu0 %v3653
        %v3655 = vand.u32 %v1986, 4294901760
        %v3656 = vsub.f32 %v1986, %v3655
        %v3657 = vand.u32 %v3656, 4294901760
        %v3658 = vsub.f32 %v3656, %v3657
        %v3659 = vand.u32 %v3658, 4294901760
        %3660 = vmatpush1.msra.mxu0 %v3659
        %v3661 = vand.u32 %v1989, 4294901760
        %v3662 = vsub.f32 %v1989, %v3661
        %v3663 = vand.u32 %v3662, 4294901760
        %v3664 = vsub.f32 %v3662, %v3663
        %v3665 = vand.u32 %v3664, 4294901760
        %3666 = vmatprep.subr.mxu0 %v3665
        %v3667 = vand.u32 %v1988, 4294901760
        %v3668 = vsub.f32 %v1988, %v3667
        %v3669 = vand.u32 %v3668, 4294901760
        %v3670 = vsub.f32 %v3668, %v3669
        %v3671 = vand.u32 %v3670, 4294901760
        %3672 = vmatpush1.msra.mxu0 %v3671
        %v3673 = vand.u32 %v1991, 4294901760
        %v3674 = vsub.f32 %v1991, %v3673
        %v3675 = vand.u32 %v3674, 4294901760
        %v3676 = vsub.f32 %v3674, %v3675
        %v3677 = vand.u32 %v3676, 4294901760
        %3678 = vmatprep.subr.mxu0 %v3677
        %v3679 = vand.u32 %v1990, 4294901760
        %v3680 = vsub.f32 %v1990, %v3679
        %v3681 = vand.u32 %v3680, 4294901760
        %v3682 = vsub.f32 %v3680, %v3681
        %v3683 = vand.u32 %v3682, 4294901760
        %3684 = vmatpush1.msra.mxu0 %v3683
        %v3685 = vand.u32 %v1993, 4294901760
        %v3686 = vsub.f32 %v1993, %v3685
        %v3687 = vand.u32 %v3686, 4294901760
        %v3688 = vsub.f32 %v3686, %v3687
        %v3689 = vand.u32 %v3688, 4294901760
        %3690 = vmatprep.subr.mxu0 %v3689
        %v3691 = vand.u32 %v1992, 4294901760
        %v3692 = vsub.f32 %v1992, %v3691
        %v3693 = vand.u32 %v3692, 4294901760
        %v3694 = vsub.f32 %v3692, %v3693
        %v3695 = vand.u32 %v3694, 4294901760
        %3696 = vmatpush1.msra.mxu0 %v3695
        %v3697 = vand.u32 %v1995, 4294901760
        %v3698 = vsub.f32 %v1995, %v3697
        %v3699 = vand.u32 %v3698, 4294901760
        %v3700 = vsub.f32 %v3698, %v3699
        %v3701 = vand.u32 %v3700, 4294901760
        %3702 = vmatprep.subr.mxu0 %v3701
        %v3703 = vand.u32 %v1994, 4294901760
        %v3704 = vsub.f32 %v1994, %v3703
        %v3705 = vand.u32 %v3704, 4294901760
        %v3706 = vsub.f32 %v3704, %v3705
        %v3707 = vand.u32 %v3706, 4294901760
        %3708 = vmatpush1.msra.mxu0 %v3707
        %v3709 = vand.u32 %v1997, 4294901760
        %v3710 = vsub.f32 %v1997, %v3709
        %v3711 = vand.u32 %v3710, 4294901760
        %v3712 = vsub.f32 %v3710, %v3711
        %v3713 = vand.u32 %v3712, 4294901760
        %3714 = vmatprep.subr.mxu0 %v3713
        %v3715 = vand.u32 %v1996, 4294901760
        %v3716 = vsub.f32 %v1996, %v3715
        %v3717 = vand.u32 %v3716, 4294901760
        %v3718 = vsub.f32 %v3716, %v3717
        %v3719 = vand.u32 %v3718, 4294901760
        %3720 = vmatpush1.msra.mxu0 %v3719
        %v3721 = vand.u32 %v1999, 4294901760
        %v3722 = vsub.f32 %v1999, %v3721
        %v3723 = vand.u32 %v3722, 4294901760
        %v3724 = vsub.f32 %v3722, %v3723
        %v3725 = vand.u32 %v3724, 4294901760
        %3726 = vmatprep.subr.mxu0 %v3725
        %v3727 = vand.u32 %v1998, 4294901760
        %v3728 = vsub.f32 %v1998, %v3727
        %v3729 = vand.u32 %v3728, 4294901760
        %v3730 = vsub.f32 %v3728, %v3729
        %v3731 = vand.u32 %v3730, 4294901760
        %3732 = vmatpush1.msra.mxu0 %v3731
        %v3733 = vand.u32 %v2001, 4294901760
        %v3734 = vsub.f32 %v2001, %v3733
        %v3735 = vand.u32 %v3734, 4294901760
        %v3736 = vsub.f32 %v3734, %v3735
        %v3737 = vand.u32 %v3736, 4294901760
        %3738 = vmatprep.subr.mxu0 %v3737
        %v3739 = vand.u32 %v2000, 4294901760
        %v3740 = vsub.f32 %v2000, %v3739
        %v3741 = vand.u32 %v3740, 4294901760
        %v3742 = vsub.f32 %v3740, %v3741
        %v3743 = vand.u32 %v3742, 4294901760
        %3744 = vmatpush1.msra.mxu0 %v3743
        %v3745 = vand.u32 %v2003, 4294901760
        %v3746 = vsub.f32 %v2003, %v3745
        %v3747 = vand.u32 %v3746, 4294901760
        %v3748 = vsub.f32 %v3746, %v3747
        %v3749 = vand.u32 %v3748, 4294901760
        %3750 = vmatprep.subr.mxu0 %v3749
        %v3751 = vand.u32 %v2002, 4294901760
        %v3752 = vsub.f32 %v2002, %v3751
        %v3753 = vand.u32 %v3752, 4294901760
        %v3754 = vsub.f32 %v3752, %v3753
        %v3755 = vand.u32 %v3754, 4294901760
        %3756 = vmatpush1.msra.mxu0 %v3755
        %v3757 = vand.u32 %v2005, 4294901760
        %v3758 = vsub.f32 %v2005, %v3757
        %v3759 = vand.u32 %v3758, 4294901760
        %v3760 = vsub.f32 %v3758, %v3759
        %v3761 = vand.u32 %v3760, 4294901760
        %3762 = vmatprep.subr.mxu0 %v3761
        %v3763 = vand.u32 %v2004, 4294901760
        %v3764 = vsub.f32 %v2004, %v3763
        %v3765 = vand.u32 %v3764, 4294901760
        %v3766 = vsub.f32 %v3764, %v3765
        %v3767 = vand.u32 %v3766, 4294901760
        %3768 = vmatpush1.msra.mxu0 %v3767
        %v3769 = vand.u32 %v2007, 4294901760
        %v3770 = vsub.f32 %v2007, %v3769
        %v3771 = vand.u32 %v3770, 4294901760
        %v3772 = vsub.f32 %v3770, %v3771
        %v3773 = vand.u32 %v3772, 4294901760
        %3774 = vmatprep.subr.mxu0 %v3773
        %v3775 = vand.u32 %v2006, 4294901760
        %v3776 = vsub.f32 %v2006, %v3775
        %v3777 = vand.u32 %v3776, 4294901760
        %v3778 = vsub.f32 %v3776, %v3777
        %v3779 = vand.u32 %v3778, 4294901760
        %3780 = vmatpush1.msra.mxu0 %v3779
        %v3781 = vand.u32 %v2009, 4294901760
        %v3782 = vsub.f32 %v2009, %v3781
        %v3783 = vand.u32 %v3782, 4294901760
        %v3784 = vsub.f32 %v3782, %v3783
        %v3785 = vand.u32 %v3784, 4294901760
        %3786 = vmatprep.subr.mxu0 %v3785
        %v3787 = vand.u32 %v2008, 4294901760
        %v3788 = vsub.f32 %v2008, %v3787
        %v3789 = vand.u32 %v3788, 4294901760
        %v3790 = vsub.f32 %v3788, %v3789
        %v3791 = vand.u32 %v3790, 4294901760
        %3792 = vmatpush1.msra.mxu0 %v3791
        %v3793 = vand.u32 %v2011, 4294901760
        %v3794 = vsub.f32 %v2011, %v3793
        %v3795 = vand.u32 %v3794, 4294901760
        %v3796 = vsub.f32 %v3794, %v3795
        %v3797 = vand.u32 %v3796, 4294901760
        %3798 = vmatprep.subr.mxu0 %v3797
        %v3799 = vand.u32 %v2010, 4294901760
        %v3800 = vsub.f32 %v2010, %v3799
        %v3801 = vand.u32 %v3800, 4294901760
        %v3802 = vsub.f32 %v3800, %v3801
        %v3803 = vand.u32 %v3802, 4294901760
        %3804 = vmatpush1.msra.mxu0 %v3803
        %v3805 = vand.u32 %v2013, 4294901760
        %v3806 = vsub.f32 %v2013, %v3805
        %v3807 = vand.u32 %v3806, 4294901760
        %v3808 = vsub.f32 %v3806, %v3807
        %v3809 = vand.u32 %v3808, 4294901760
        %3810 = vmatprep.subr.mxu0 %v3809
        %v3811 = vand.u32 %v2012, 4294901760
        %v3812 = vsub.f32 %v2012, %v3811
        %v3813 = vand.u32 %v3812, 4294901760
        %v3814 = vsub.f32 %v3812, %v3813
        %v3815 = vand.u32 %v3814, 4294901760
        %3816 = vmatpush1.msra.mxu0 %v3815
        %v3817 = vand.u32 %v2015, 4294901760
        %v3818 = vsub.f32 %v2015, %v3817
        %v3819 = vand.u32 %v3818, 4294901760
        %v3820 = vsub.f32 %v3818, %v3819
        %v3821 = vand.u32 %v3820, 4294901760
        %3822 = vmatprep.subr.mxu0 %v3821
        %v3823 = vand.u32 %v2014, 4294901760
        %v3824 = vsub.f32 %v2014, %v3823
        %v3825 = vand.u32 %v3824, 4294901760
        %v3826 = vsub.f32 %v3824, %v3825
        %v3827 = vand.u32 %v3826, 4294901760
        %3828 = vmatpush1.msra.mxu0 %v3827
        %v3829 = vand.u32 %v1887, 4294901760
        %3830 = vmatprep.mubr.f32.mxu0 %v3829
        %v3831 = vand.u32 %v1878, 4294901760
        %3832 = vmatmul.mubr.f32.gmra.mrb[0].mxu0 %v3831
        %v3833 = vpop.f32.mrb[0].mxu0
        %v3834 = vadd.f32 %v3441, %v3833
        %v3835 = vpop.f32.mrb[0].mxu0
        %v3836 = vadd.f32 %v3443, %v3835
        %3837 = vdwg.mxu0
        %v3838 = vand.u32 %v1953, 4294901760
        %v3839 = vsub.f32 %v1953, %v3838
        %3840 = vmatprep.subr.mxu0 %v3839
        %v3841 = vand.u32 %v1952, 4294901760
        %v3842 = vsub.f32 %v1952, %v3841
        %3843 = vmatpush1.msra.mxu0 %v3842
        %v3844 = vand.u32 %v1955, 4294901760
        %v3845 = vsub.f32 %v1955, %v3844
        %3846 = vmatprep.subr.mxu0 %v3845
        %v3847 = vand.u32 %v1954, 4294901760
        %v3848 = vsub.f32 %v1954, %v3847
        %3849 = vmatpush1.msra.mxu0 %v3848
        %v3850 = vand.u32 %v1957, 4294901760
        %v3851 = vsub.f32 %v1957, %v3850
        %3852 = vmatprep.subr.mxu0 %v3851
        %v3853 = vand.u32 %v1956, 4294901760
        %v3854 = vsub.f32 %v1956, %v3853
        %3855 = vmatpush1.msra.mxu0 %v3854
        %v3856 = vand.u32 %v1959, 4294901760
        %v3857 = vsub.f32 %v1959, %v3856
        %3858 = vmatprep.subr.mxu0 %v3857
        %v3859 = vand.u32 %v1958, 4294901760
        %v3860 = vsub.f32 %v1958, %v3859
        %3861 = vmatpush1.msra.mxu0 %v3860
        %v3862 = vand.u32 %v1961, 4294901760
        %v3863 = vsub.f32 %v1961, %v3862
        %3864 = vmatprep.subr.mxu0 %v3863
        %v3865 = vand.u32 %v1960, 4294901760
        %v3866 = vsub.f32 %v1960, %v3865
        %3867 = vmatpush1.msra.mxu0 %v3866
        %v3868 = vand.u32 %v1963, 4294901760
        %v3869 = vsub.f32 %v1963, %v3868
        %3870 = vmatprep.subr.mxu0 %v3869
        %v3871 = vand.u32 %v1962, 4294901760
        %v3872 = vsub.f32 %v1962, %v3871
        %3873 = vmatpush1.msra.mxu0 %v3872
        %v3874 = vand.u32 %v1965, 4294901760
        %v3875 = vsub.f32 %v1965, %v3874
        %3876 = vmatprep.subr.mxu0 %v3875
        %v3877 = vand.u32 %v1964, 4294901760
        %v3878 = vsub.f32 %v1964, %v3877
        %3879 = vmatpush1.msra.mxu0 %v3878
        %v3880 = vand.u32 %v1967, 4294901760
        %v3881 = vsub.f32 %v1967, %v3880
        %3882 = vmatprep.subr.mxu0 %v3881
        %v3883 = vand.u32 %v1966, 4294901760
        %v3884 = vsub.f32 %v1966, %v3883
        %3885 = vmatpush1.msra.mxu0 %v3884
        %v3886 = vand.u32 %v1969, 4294901760
        %v3887 = vsub.f32 %v1969, %v3886
        %3888 = vmatprep.subr.mxu0 %v3887
        %v3889 = vand.u32 %v1968, 4294901760
        %v3890 = vsub.f32 %v1968, %v3889
        %3891 = vmatpush1.msra.mxu0 %v3890
        %v3892 = vand.u32 %v1971, 4294901760
        %v3893 = vsub.f32 %v1971, %v3892
        %3894 = vmatprep.subr.mxu0 %v3893
        %v3895 = vand.u32 %v1970, 4294901760
        %v3896 = vsub.f32 %v1970, %v3895
        %3897 = vmatpush1.msra.mxu0 %v3896
        %v3898 = vand.u32 %v1973, 4294901760
        %v3899 = vsub.f32 %v1973, %v3898
        %3900 = vmatprep.subr.mxu0 %v3899
        %v3901 = vand.u32 %v1972, 4294901760
        %v3902 = vsub.f32 %v1972, %v3901
        %3903 = vmatpush1.msra.mxu0 %v3902
        %v3904 = vand.u32 %v1975, 4294901760
        %v3905 = vsub.f32 %v1975, %v3904
        %3906 = vmatprep.subr.mxu0 %v3905
        %v3907 = vand.u32 %v1974, 4294901760
        %v3908 = vsub.f32 %v1974, %v3907
        %3909 = vmatpush1.msra.mxu0 %v3908
        %v3910 = vand.u32 %v1977, 4294901760
        %v3911 = vsub.f32 %v1977, %v3910
        %3912 = vmatprep.subr.mxu0 %v3911
        %v3913 = vand.u32 %v1976, 4294901760
        %v3914 = vsub.f32 %v1976, %v3913
        %3915 = vmatpush1.msra.mxu0 %v3914
        %v3916 = vand.u32 %v1979, 4294901760
        %v3917 = vsub.f32 %v1979, %v3916
        %3918 = vmatprep.subr.mxu0 %v3917
        %v3919 = vand.u32 %v1978, 4294901760
        %v3920 = vsub.f32 %v1978, %v3919
        %3921 = vmatpush1.msra.mxu0 %v3920
        %v3922 = vand.u32 %v1981, 4294901760
        %v3923 = vsub.f32 %v1981, %v3922
        %3924 = vmatprep.subr.mxu0 %v3923
        %v3925 = vand.u32 %v1980, 4294901760
        %v3926 = vsub.f32 %v1980, %v3925
        %3927 = vmatpush1.msra.mxu0 %v3926
        %v3928 = vand.u32 %v1983, 4294901760
        %v3929 = vsub.f32 %v1983, %v3928
        %3930 = vmatprep.subr.mxu0 %v3929
        %v3931 = vand.u32 %v1982, 4294901760
        %v3932 = vsub.f32 %v1982, %v3931
        %3933 = vmatpush1.msra.mxu0 %v3932
        %v3934 = vand.u32 %v1985, 4294901760
        %v3935 = vsub.f32 %v1985, %v3934
        %3936 = vmatprep.subr.mxu0 %v3935
        %v3937 = vand.u32 %v1984, 4294901760
        %v3938 = vsub.f32 %v1984, %v3937
        %3939 = vmatpush1.msra.mxu0 %v3938
        %v3940 = vand.u32 %v1987, 4294901760
        %v3941 = vsub.f32 %v1987, %v3940
        %3942 = vmatprep.subr.mxu0 %v3941
        %v3943 = vand.u32 %v1986, 4294901760
        %v3944 = vsub.f32 %v1986, %v3943
        %3945 = vmatpush1.msra.mxu0 %v3944
        %v3946 = vand.u32 %v1989, 4294901760
        %v3947 = vsub.f32 %v1989, %v3946
        %3948 = vmatprep.subr.mxu0 %v3947
        %v3949 = vand.u32 %v1988, 4294901760
        %v3950 = vsub.f32 %v1988, %v3949
        %3951 = vmatpush1.msra.mxu0 %v3950
        %v3952 = vand.u32 %v1991, 4294901760
        %v3953 = vsub.f32 %v1991, %v3952
        %3954 = vmatprep.subr.mxu0 %v3953
        %v3955 = vand.u32 %v1990, 4294901760
        %v3956 = vsub.f32 %v1990, %v3955
        %3957 = vmatpush1.msra.mxu0 %v3956
        %v3958 = vand.u32 %v1993, 4294901760
        %v3959 = vsub.f32 %v1993, %v3958
        %3960 = vmatprep.subr.mxu0 %v3959
        %v3961 = vand.u32 %v1992, 4294901760
        %v3962 = vsub.f32 %v1992, %v3961
        %3963 = vmatpush1.msra.mxu0 %v3962
        %v3964 = vand.u32 %v1995, 4294901760
        %v3965 = vsub.f32 %v1995, %v3964
        %3966 = vmatprep.subr.mxu0 %v3965
        %v3967 = vand.u32 %v1994, 4294901760
        %v3968 = vsub.f32 %v1994, %v3967
        %3969 = vmatpush1.msra.mxu0 %v3968
        %v3970 = vand.u32 %v1997, 4294901760
        %v3971 = vsub.f32 %v1997, %v3970
        %3972 = vmatprep.subr.mxu0 %v3971
        %v3973 = vand.u32 %v1996, 4294901760
        %v3974 = vsub.f32 %v1996, %v3973
        %3975 = vmatpush1.msra.mxu0 %v3974
        %v3976 = vand.u32 %v1999, 4294901760
        %v3977 = vsub.f32 %v1999, %v3976
        %3978 = vmatprep.subr.mxu0 %v3977
        %v3979 = vand.u32 %v1998, 4294901760
        %v3980 = vsub.f32 %v1998, %v3979
        %3981 = vmatpush1.msra.mxu0 %v3980
        %v3982 = vand.u32 %v2001, 4294901760
        %v3983 = vsub.f32 %v2001, %v3982
        %3984 = vmatprep.subr.mxu0 %v3983
        %v3985 = vand.u32 %v2000, 4294901760
        %v3986 = vsub.f32 %v2000, %v3985
        %3987 = vmatpush1.msra.mxu0 %v3986
        %v3988 = vand.u32 %v2003, 4294901760
        %v3989 = vsub.f32 %v2003, %v3988
        %3990 = vmatprep.subr.mxu0 %v3989
        %v3991 = vand.u32 %v2002, 4294901760
        %v3992 = vsub.f32 %v2002, %v3991
        %3993 = vmatpush1.msra.mxu0 %v3992
        %v3994 = vand.u32 %v2005, 4294901760
        %v3995 = vsub.f32 %v2005, %v3994
        %3996 = vmatprep.subr.mxu0 %v3995
        %v3997 = vand.u32 %v2004, 4294901760
        %v3998 = vsub.f32 %v2004, %v3997
        %3999 = vmatpush1.msra.mxu0 %v3998
        %v4000 = vand.u32 %v2007, 4294901760
        %v4001 = vsub.f32 %v2007, %v4000
        %4002 = vmatprep.subr.mxu0 %v4001
        %v4003 = vand.u32 %v2006, 4294901760
        %v4004 = vsub.f32 %v2006, %v4003
        %4005 = vmatpush1.msra.mxu0 %v4004
        %v4006 = vand.u32 %v2009, 4294901760
        %v4007 = vsub.f32 %v2009, %v4006
        %4008 = vmatprep.subr.mxu0 %v4007
        %v4009 = vand.u32 %v2008, 4294901760
        %v4010 = vsub.f32 %v2008, %v4009
        %4011 = vmatpush1.msra.mxu0 %v4010
        %v4012 = vand.u32 %v2011, 4294901760
        %v4013 = vsub.f32 %v2011, %v4012
        %4014 = vmatprep.subr.mxu0 %v4013
        %v4015 = vand.u32 %v2010, 4294901760
        %v4016 = vsub.f32 %v2010, %v4015
        %4017 = vmatpush1.msra.mxu0 %v4016
        %v4018 = vand.u32 %v2013, 4294901760
        %v4019 = vsub.f32 %v2013, %v4018
        %4020 = vmatprep.subr.mxu0 %v4019
        %v4021 = vand.u32 %v2012, 4294901760
        %v4022 = vsub.f32 %v2012, %v4021
        %4023 = vmatpush1.msra.mxu0 %v4022
        %v4024 = vand.u32 %v2015, 4294901760
        %v4025 = vsub.f32 %v2015, %v4024
        %4026 = vmatprep.subr.mxu0 %v4025
        %v4027 = vand.u32 %v2014, 4294901760
        %v4028 = vsub.f32 %v2014, %v4027
        %4029 = vmatpush1.msra.mxu0 %v4028
        %v4030 = vand.u32 %v1887, 4294901760
        %v4031 = vsub.f32 %v1887, %v4030
        %4032 = vmatprep.mubr.f32.mxu0 %v4031
        %v4033 = vand.u32 %v1878, 4294901760
        %v4034 = vsub.f32 %v1878, %v4033
        %4035 = vmatmul.mubr.f32.gmra.mrb[0].mxu0 %v4034
        %v4036 = vpop.f32.mrb[0].mxu0
        %v4037 = vadd.f32 %v3834, %v4036
        %v4038 = vpop.f32.mrb[0].mxu0
        %v4039 = vadd.f32 %v3836, %v4038
        %4040 = vdwg.mxu0
        %v4041 = vand.u32 %v1953, 4294901760
        %4042 = vmatprep.subr.mxu0 %v4041
        %v4043 = vand.u32 %v1952, 4294901760
        %4044 = vmatpush1.msra.mxu0 %v4043
        %v4045 = vand.u32 %v1955, 4294901760
        %4046 = vmatprep.subr.mxu0 %v4045
        %v4047 = vand.u32 %v1954, 4294901760
        %4048 = vmatpush1.msra.mxu0 %v4047
        %v4049 = vand.u32 %v1957, 4294901760
        %4050 = vmatprep.subr.mxu0 %v4049
        %v4051 = vand.u32 %v1956, 4294901760
        %4052 = vmatpush1.msra.mxu0 %v4051
        %v4053 = vand.u32 %v1959, 4294901760
        %4054 = vmatprep.subr.mxu0 %v4053
        %v4055 = vand.u32 %v1958, 4294901760
        %4056 = vmatpush1.msra.mxu0 %v4055
        %v4057 = vand.u32 %v1961, 4294901760
        %4058 = vmatprep.subr.mxu0 %v4057
        %v4059 = vand.u32 %v1960, 4294901760
        %4060 = vmatpush1.msra.mxu0 %v4059
        %v4061 = vand.u32 %v1963, 4294901760
        %4062 = vmatprep.subr.mxu0 %v4061
        %v4063 = vand.u32 %v1962, 4294901760
        %4064 = vmatpush1.msra.mxu0 %v4063
        %v4065 = vand.u32 %v1965, 4294901760
        %4066 = vmatprep.subr.mxu0 %v4065
        %v4067 = vand.u32 %v1964, 4294901760
        %4068 = vmatpush1.msra.mxu0 %v4067
        %v4069 = vand.u32 %v1967, 4294901760
        %4070 = vmatprep.subr.mxu0 %v4069
        %v4071 = vand.u32 %v1966, 4294901760
        %4072 = vmatpush1.msra.mxu0 %v4071
        %v4073 = vand.u32 %v1969, 4294901760
        %4074 = vmatprep.subr.mxu0 %v4073
        %v4075 = vand.u32 %v1968, 4294901760
        %4076 = vmatpush1.msra.mxu0 %v4075
        %v4077 = vand.u32 %v1971, 4294901760
        %4078 = vmatprep.subr.mxu0 %v4077
        %v4079 = vand.u32 %v1970, 4294901760
        %4080 = vmatpush1.msra.mxu0 %v4079
        %v4081 = vand.u32 %v1973, 4294901760
        %4082 = vmatprep.subr.mxu0 %v4081
        %v4083 = vand.u32 %v1972, 4294901760
        %4084 = vmatpush1.msra.mxu0 %v4083
        %v4085 = vand.u32 %v1975, 4294901760
        %4086 = vmatprep.subr.mxu0 %v4085
        %v4087 = vand.u32 %v1974, 4294901760
        %4088 = vmatpush1.msra.mxu0 %v4087
        %v4089 = vand.u32 %v1977, 4294901760
        %4090 = vmatprep.subr.mxu0 %v4089
        %v4091 = vand.u32 %v1976, 4294901760
        %4092 = vmatpush1.msra.mxu0 %v4091
        %v4093 = vand.u32 %v1979, 4294901760
        %4094 = vmatprep.subr.mxu0 %v4093
        %v4095 = vand.u32 %v1978, 4294901760
        %4096 = vmatpush1.msra.mxu0 %v4095
        %v4097 = vand.u32 %v1981, 4294901760
        %4098 = vmatprep.subr.mxu0 %v4097
        %v4099 = vand.u32 %v1980, 4294901760
        %4100 = vmatpush1.msra.mxu0 %v4099
        %v4101 = vand.u32 %v1983, 4294901760
        %4102 = vmatprep.subr.mxu0 %v4101
        %v4103 = vand.u32 %v1982, 4294901760
        %4104 = vmatpush1.msra.mxu0 %v4103
        %v4105 = vand.u32 %v1985, 4294901760
        %4106 = vmatprep.subr.mxu0 %v4105
        %v4107 = vand.u32 %v1984, 4294901760
        %4108 = vmatpush1.msra.mxu0 %v4107
        %v4109 = vand.u32 %v1987, 4294901760
        %4110 = vmatprep.subr.mxu0 %v4109
        %v4111 = vand.u32 %v1986, 4294901760
        %4112 = vmatpush1.msra.mxu0 %v4111
        %v4113 = vand.u32 %v1989, 4294901760
        %4114 = vmatprep.subr.mxu0 %v4113
        %v4115 = vand.u32 %v1988, 4294901760
        %4116 = vmatpush1.msra.mxu0 %v4115
        %v4117 = vand.u32 %v1991, 4294901760
        %4118 = vmatprep.subr.mxu0 %v4117
        %v4119 = vand.u32 %v1990, 4294901760
        %4120 = vmatpush1.msra.mxu0 %v4119
        %v4121 = vand.u32 %v1993, 4294901760
        %4122 = vmatprep.subr.mxu0 %v4121
        %v4123 = vand.u32 %v1992, 4294901760
        %4124 = vmatpush1.msra.mxu0 %v4123
        %v4125 = vand.u32 %v1995, 4294901760
        %4126 = vmatprep.subr.mxu0 %v4125
        %v4127 = vand.u32 %v1994, 4294901760
        %4128 = vmatpush1.msra.mxu0 %v4127
        %v4129 = vand.u32 %v1997, 4294901760
        %4130 = vmatprep.subr.mxu0 %v4129
        %v4131 = vand.u32 %v1996, 4294901760
        %4132 = vmatpush1.msra.mxu0 %v4131
        %v4133 = vand.u32 %v1999, 4294901760
        %4134 = vmatprep.subr.mxu0 %v4133
        %v4135 = vand.u32 %v1998, 4294901760
        %4136 = vmatpush1.msra.mxu0 %v4135
        %v4137 = vand.u32 %v2001, 4294901760
        %4138 = vmatprep.subr.mxu0 %v4137
        %v4139 = vand.u32 %v2000, 4294901760
        %4140 = vmatpush1.msra.mxu0 %v4139
        %v4141 = vand.u32 %v2003, 4294901760
        %4142 = vmatprep.subr.mxu0 %v4141
        %v4143 = vand.u32 %v2002, 4294901760
        %4144 = vmatpush1.msra.mxu0 %v4143
        %v4145 = vand.u32 %v2005, 4294901760
        %4146 = vmatprep.subr.mxu0 %v4145
        %v4147 = vand.u32 %v2004, 4294901760
        %4148 = vmatpush1.msra.mxu0 %v4147
        %v4149 = vand.u32 %v2007, 4294901760
        %4150 = vmatprep.subr.mxu0 %v4149
        %v4151 = vand.u32 %v2006, 4294901760
        %4152 = vmatpush1.msra.mxu0 %v4151
        %v4153 = vand.u32 %v2009, 4294901760
        %4154 = vmatprep.subr.mxu0 %v4153
        %v4155 = vand.u32 %v2008, 4294901760
        %4156 = vmatpush1.msra.mxu0 %v4155
        %v4157 = vand.u32 %v2011, 4294901760
        %4158 = vmatprep.subr.mxu0 %v4157
        %v4159 = vand.u32 %v2010, 4294901760
        %4160 = vmatpush1.msra.mxu0 %v4159
        %v4161 = vand.u32 %v2013, 4294901760
        %4162 = vmatprep.subr.mxu0 %v4161
        %v4163 = vand.u32 %v2012, 4294901760
        %4164 = vmatpush1.msra.mxu0 %v4163
        %v4165 = vand.u32 %v2015, 4294901760
        %4166 = vmatprep.subr.mxu0 %v4165
        %v4167 = vand.u32 %v2014, 4294901760
        %4168 = vmatpush1.msra.mxu0 %v4167
        %v4169 = vand.u32 %v1887, 4294901760
        %v4170 = vsub.f32 %v1887, %v4169
        %v4171 = vand.u32 %v4170, 4294901760
        %4172 = vmatprep.mubr.f32.mxu0 %v4171
        %v4173 = vand.u32 %v1878, 4294901760
        %v4174 = vsub.f32 %v1878, %v4173
        %v4175 = vand.u32 %v4174, 4294901760
        %4176 = vmatmul.mubr.f32.gmra.mrb[0].mxu0 %v4175
        %v4177 = vpop.f32.mrb[0].mxu0
        %v4178 = vadd.f32 %v4037, %v4177
        %v4179 = vpop.f32.mrb[0].mxu0
        %v4180 = vadd.f32 %v4039, %v4179
        %4181 = vdwg.mxu0
        %v4182 = vand.u32 %v1953, 4294901760
        %v4183 = vsub.f32 %v1953, %v4182
        %v4184 = vand.u32 %v4183, 4294901760
        %4185 = vmatprep.subr.mxu0 %v4184
        %v4186 = vand.u32 %v1952, 4294901760
        %v4187 = vsub.f32 %v1952, %v4186
        %v4188 = vand.u32 %v4187, 4294901760
        %4189 = vmatpush1.msra.mxu0 %v4188
        %v4190 = vand.u32 %v1955, 4294901760
        %v4191 = vsub.f32 %v1955, %v4190
        %v4192 = vand.u32 %v4191, 4294901760
        %4193 = vmatprep.subr.mxu0 %v4192
        %v4194 = vand.u32 %v1954, 4294901760
        %v4195 = vsub.f32 %v1954, %v4194
        %v4196 = vand.u32 %v4195, 4294901760
        %4197 = vmatpush1.msra.mxu0 %v4196
        %v4198 = vand.u32 %v1957, 4294901760
        %v4199 = vsub.f32 %v1957, %v4198
        %v4200 = vand.u32 %v4199, 4294901760
        %4201 = vmatprep.subr.mxu0 %v4200
        %v4202 = vand.u32 %v1956, 4294901760
        %v4203 = vsub.f32 %v1956, %v4202
        %v4204 = vand.u32 %v4203, 4294901760
        %4205 = vmatpush1.msra.mxu0 %v4204
        %v4206 = vand.u32 %v1959, 4294901760
        %v4207 = vsub.f32 %v1959, %v4206
        %v4208 = vand.u32 %v4207, 4294901760
        %4209 = vmatprep.subr.mxu0 %v4208
        %v4210 = vand.u32 %v1958, 4294901760
        %v4211 = vsub.f32 %v1958, %v4210
        %v4212 = vand.u32 %v4211, 4294901760
        %4213 = vmatpush1.msra.mxu0 %v4212
        %v4214 = vand.u32 %v1961, 4294901760
        %v4215 = vsub.f32 %v1961, %v4214
        %v4216 = vand.u32 %v4215, 4294901760
        %4217 = vmatprep.subr.mxu0 %v4216
        %v4218 = vand.u32 %v1960, 4294901760
        %v4219 = vsub.f32 %v1960, %v4218
        %v4220 = vand.u32 %v4219, 4294901760
        %4221 = vmatpush1.msra.mxu0 %v4220
        %v4222 = vand.u32 %v1963, 4294901760
        %v4223 = vsub.f32 %v1963, %v4222
        %v4224 = vand.u32 %v4223, 4294901760
        %4225 = vmatprep.subr.mxu0 %v4224
        %v4226 = vand.u32 %v1962, 4294901760
        %v4227 = vsub.f32 %v1962, %v4226
        %v4228 = vand.u32 %v4227, 4294901760
        %4229 = vmatpush1.msra.mxu0 %v4228
        %v4230 = vand.u32 %v1965, 4294901760
        %v4231 = vsub.f32 %v1965, %v4230
        %v4232 = vand.u32 %v4231, 4294901760
        %4233 = vmatprep.subr.mxu0 %v4232
        %v4234 = vand.u32 %v1964, 4294901760
        %v4235 = vsub.f32 %v1964, %v4234
        %v4236 = vand.u32 %v4235, 4294901760
        %4237 = vmatpush1.msra.mxu0 %v4236
        %v4238 = vand.u32 %v1967, 4294901760
        %v4239 = vsub.f32 %v1967, %v4238
        %v4240 = vand.u32 %v4239, 4294901760
        %4241 = vmatprep.subr.mxu0 %v4240
        %v4242 = vand.u32 %v1966, 4294901760
        %v4243 = vsub.f32 %v1966, %v4242
        %v4244 = vand.u32 %v4243, 4294901760
        %4245 = vmatpush1.msra.mxu0 %v4244
        %v4246 = vand.u32 %v1969, 4294901760
        %v4247 = vsub.f32 %v1969, %v4246
        %v4248 = vand.u32 %v4247, 4294901760
        %4249 = vmatprep.subr.mxu0 %v4248
        %v4250 = vand.u32 %v1968, 4294901760
        %v4251 = vsub.f32 %v1968, %v4250
        %v4252 = vand.u32 %v4251, 4294901760
        %4253 = vmatpush1.msra.mxu0 %v4252
        %v4254 = vand.u32 %v1971, 4294901760
        %v4255 = vsub.f32 %v1971, %v4254
        %v4256 = vand.u32 %v4255, 4294901760
        %4257 = vmatprep.subr.mxu0 %v4256
        %v4258 = vand.u32 %v1970, 4294901760
        %v4259 = vsub.f32 %v1970, %v4258
        %v4260 = vand.u32 %v4259, 4294901760
        %4261 = vmatpush1.msra.mxu0 %v4260
        %v4262 = vand.u32 %v1973, 4294901760
        %v4263 = vsub.f32 %v1973, %v4262
        %v4264 = vand.u32 %v4263, 4294901760
        %4265 = vmatprep.subr.mxu0 %v4264
        %v4266 = vand.u32 %v1972, 4294901760
        %v4267 = vsub.f32 %v1972, %v4266
        %v4268 = vand.u32 %v4267, 4294901760
        %4269 = vmatpush1.msra.mxu0 %v4268
        %v4270 = vand.u32 %v1975, 4294901760
        %v4271 = vsub.f32 %v1975, %v4270
        %v4272 = vand.u32 %v4271, 4294901760
        %4273 = vmatprep.subr.mxu0 %v4272
        %v4274 = vand.u32 %v1974, 4294901760
        %v4275 = vsub.f32 %v1974, %v4274
        %v4276 = vand.u32 %v4275, 4294901760
        %4277 = vmatpush1.msra.mxu0 %v4276
        %v4278 = vand.u32 %v1977, 4294901760
        %v4279 = vsub.f32 %v1977, %v4278
        %v4280 = vand.u32 %v4279, 4294901760
        %4281 = vmatprep.subr.mxu0 %v4280
        %v4282 = vand.u32 %v1976, 4294901760
        %v4283 = vsub.f32 %v1976, %v4282
        %v4284 = vand.u32 %v4283, 4294901760
        %4285 = vmatpush1.msra.mxu0 %v4284
        %v4286 = vand.u32 %v1979, 4294901760
        %v4287 = vsub.f32 %v1979, %v4286
        %v4288 = vand.u32 %v4287, 4294901760
        %4289 = vmatprep.subr.mxu0 %v4288
        %v4290 = vand.u32 %v1978, 4294901760
        %v4291 = vsub.f32 %v1978, %v4290
        %v4292 = vand.u32 %v4291, 4294901760
        %4293 = vmatpush1.msra.mxu0 %v4292
        %v4294 = vand.u32 %v1981, 4294901760
        %v4295 = vsub.f32 %v1981, %v4294
        %v4296 = vand.u32 %v4295, 4294901760
        %4297 = vmatprep.subr.mxu0 %v4296
        %v4298 = vand.u32 %v1980, 4294901760
        %v4299 = vsub.f32 %v1980, %v4298
        %v4300 = vand.u32 %v4299, 4294901760
        %4301 = vmatpush1.msra.mxu0 %v4300
        %v4302 = vand.u32 %v1983, 4294901760
        %v4303 = vsub.f32 %v1983, %v4302
        %v4304 = vand.u32 %v4303, 4294901760
        %4305 = vmatprep.subr.mxu0 %v4304
        %v4306 = vand.u32 %v1982, 4294901760
        %v4307 = vsub.f32 %v1982, %v4306
        %v4308 = vand.u32 %v4307, 4294901760
        %4309 = vmatpush1.msra.mxu0 %v4308
        %v4310 = vand.u32 %v1985, 4294901760
        %v4311 = vsub.f32 %v1985, %v4310
        %v4312 = vand.u32 %v4311, 4294901760
        %4313 = vmatprep.subr.mxu0 %v4312
        %v4314 = vand.u32 %v1984, 4294901760
        %v4315 = vsub.f32 %v1984, %v4314
        %v4316 = vand.u32 %v4315, 4294901760
        %4317 = vmatpush1.msra.mxu0 %v4316
        %v4318 = vand.u32 %v1987, 4294901760
        %v4319 = vsub.f32 %v1987, %v4318
        %v4320 = vand.u32 %v4319, 4294901760
        %4321 = vmatprep.subr.mxu0 %v4320
        %v4322 = vand.u32 %v1986, 4294901760
        %v4323 = vsub.f32 %v1986, %v4322
        %v4324 = vand.u32 %v4323, 4294901760
        %4325 = vmatpush1.msra.mxu0 %v4324
        %v4326 = vand.u32 %v1989, 4294901760
        %v4327 = vsub.f32 %v1989, %v4326
        %v4328 = vand.u32 %v4327, 4294901760
        %4329 = vmatprep.subr.mxu0 %v4328
        %v4330 = vand.u32 %v1988, 4294901760
        %v4331 = vsub.f32 %v1988, %v4330
        %v4332 = vand.u32 %v4331, 4294901760
        %4333 = vmatpush1.msra.mxu0 %v4332
        %v4334 = vand.u32 %v1991, 4294901760
        %v4335 = vsub.f32 %v1991, %v4334
        %v4336 = vand.u32 %v4335, 4294901760
        %4337 = vmatprep.subr.mxu0 %v4336
        %v4338 = vand.u32 %v1990, 4294901760
        %v4339 = vsub.f32 %v1990, %v4338
        %v4340 = vand.u32 %v4339, 4294901760
        %4341 = vmatpush1.msra.mxu0 %v4340
        %v4342 = vand.u32 %v1993, 4294901760
        %v4343 = vsub.f32 %v1993, %v4342
        %v4344 = vand.u32 %v4343, 4294901760
        %4345 = vmatprep.subr.mxu0 %v4344
        %v4346 = vand.u32 %v1992, 4294901760
        %v4347 = vsub.f32 %v1992, %v4346
        %v4348 = vand.u32 %v4347, 4294901760
        %4349 = vmatpush1.msra.mxu0 %v4348
        %v4350 = vand.u32 %v1995, 4294901760
        %v4351 = vsub.f32 %v1995, %v4350
        %v4352 = vand.u32 %v4351, 4294901760
        %4353 = vmatprep.subr.mxu0 %v4352
        %v4354 = vand.u32 %v1994, 4294901760
        %v4355 = vsub.f32 %v1994, %v4354
        %v4356 = vand.u32 %v4355, 4294901760
        %4357 = vmatpush1.msra.mxu0 %v4356
        %v4358 = vand.u32 %v1997, 4294901760
        %v4359 = vsub.f32 %v1997, %v4358
        %v4360 = vand.u32 %v4359, 4294901760
        %4361 = vmatprep.subr.mxu0 %v4360
        %v4362 = vand.u32 %v1996, 4294901760
        %v4363 = vsub.f32 %v1996, %v4362
        %v4364 = vand.u32 %v4363, 4294901760
        %4365 = vmatpush1.msra.mxu0 %v4364
        %v4366 = vand.u32 %v1999, 4294901760
        %v4367 = vsub.f32 %v1999, %v4366
        %v4368 = vand.u32 %v4367, 4294901760
        %4369 = vmatprep.subr.mxu0 %v4368
        %v4370 = vand.u32 %v1998, 4294901760
        %v4371 = vsub.f32 %v1998, %v4370
        %v4372 = vand.u32 %v4371, 4294901760
        %4373 = vmatpush1.msra.mxu0 %v4372
        %v4374 = vand.u32 %v2001, 4294901760
        %v4375 = vsub.f32 %v2001, %v4374
        %v4376 = vand.u32 %v4375, 4294901760
        %4377 = vmatprep.subr.mxu0 %v4376
        %v4378 = vand.u32 %v2000, 4294901760
        %v4379 = vsub.f32 %v2000, %v4378
        %v4380 = vand.u32 %v4379, 4294901760
        %4381 = vmatpush1.msra.mxu0 %v4380
        %v4382 = vand.u32 %v2003, 4294901760
        %v4383 = vsub.f32 %v2003, %v4382
        %v4384 = vand.u32 %v4383, 4294901760
        %4385 = vmatprep.subr.mxu0 %v4384
        %v4386 = vand.u32 %v2002, 4294901760
        %v4387 = vsub.f32 %v2002, %v4386
        %v4388 = vand.u32 %v4387, 4294901760
        %4389 = vmatpush1.msra.mxu0 %v4388
        %v4390 = vand.u32 %v2005, 4294901760
        %v4391 = vsub.f32 %v2005, %v4390
        %v4392 = vand.u32 %v4391, 4294901760
        %4393 = vmatprep.subr.mxu0 %v4392
        %v4394 = vand.u32 %v2004, 4294901760
        %v4395 = vsub.f32 %v2004, %v4394
        %v4396 = vand.u32 %v4395, 4294901760
        %4397 = vmatpush1.msra.mxu0 %v4396
        %v4398 = vand.u32 %v2007, 4294901760
        %v4399 = vsub.f32 %v2007, %v4398
        %v4400 = vand.u32 %v4399, 4294901760
        %4401 = vmatprep.subr.mxu0 %v4400
        %v4402 = vand.u32 %v2006, 4294901760
        %v4403 = vsub.f32 %v2006, %v4402
        %v4404 = vand.u32 %v4403, 4294901760
        %4405 = vmatpush1.msra.mxu0 %v4404
        %v4406 = vand.u32 %v2009, 4294901760
        %v4407 = vsub.f32 %v2009, %v4406
        %v4408 = vand.u32 %v4407, 4294901760
        %4409 = vmatprep.subr.mxu0 %v4408
        %v4410 = vand.u32 %v2008, 4294901760
        %v4411 = vsub.f32 %v2008, %v4410
        %v4412 = vand.u32 %v4411, 4294901760
        %4413 = vmatpush1.msra.mxu0 %v4412
        %v4414 = vand.u32 %v2011, 4294901760
        %v4415 = vsub.f32 %v2011, %v4414
        %v4416 = vand.u32 %v4415, 4294901760
        %4417 = vmatprep.subr.mxu0 %v4416
        %v4418 = vand.u32 %v2010, 4294901760
        %v4419 = vsub.f32 %v2010, %v4418
        %v4420 = vand.u32 %v4419, 4294901760
        %4421 = vmatpush1.msra.mxu0 %v4420
        %v4422 = vand.u32 %v2013, 4294901760
        %v4423 = vsub.f32 %v2013, %v4422
        %v4424 = vand.u32 %v4423, 4294901760
        %4425 = vmatprep.subr.mxu0 %v4424
        %v4426 = vand.u32 %v2012, 4294901760
        %v4427 = vsub.f32 %v2012, %v4426
        %v4428 = vand.u32 %v4427, 4294901760
        %4429 = vmatpush1.msra.mxu0 %v4428
        %v4430 = vand.u32 %v2015, 4294901760
        %v4431 = vsub.f32 %v2015, %v4430
        %v4432 = vand.u32 %v4431, 4294901760
        %4433 = vmatprep.subr.mxu0 %v4432
        %v4434 = vand.u32 %v2014, 4294901760
        %v4435 = vsub.f32 %v2014, %v4434
        %v4436 = vand.u32 %v4435, 4294901760
        %4437 = vmatpush1.msra.mxu0 %v4436
        %v4438 = vand.u32 %v1887, 4294901760
        %4439 = vmatprep.mubr.f32.mxu0 %v4438
        %v4440 = vand.u32 %v1878, 4294901760
        %4441 = vmatmul.mubr.f32.gmra.mrb[0].mxu0 %v4440
        %v4442 = vpop.f32.mrb[0].mxu0
        %v4443 = vadd.f32 %v4178, %v4442
        %v4444 = vpop.f32.mrb[0].mxu0
        %v4445 = vadd.f32 %v4180, %v4444
        %4446 = vdwg.mxu0
        %v4447 = vand.u32 %v1953, 4294901760
        %4448 = vmatprep.subr.mxu0 %v4447
        %v4449 = vand.u32 %v1952, 4294901760
        %4450 = vmatpush1.msra.mxu0 %v4449
        %v4451 = vand.u32 %v1955, 4294901760
        %4452 = vmatprep.subr.mxu0 %v4451
        %v4453 = vand.u32 %v1954, 4294901760
        %4454 = vmatpush1.msra.mxu0 %v4453
        %v4455 = vand.u32 %v1957, 4294901760
        %4456 = vmatprep.subr.mxu0 %v4455
        %v4457 = vand.u32 %v1956, 4294901760
        %4458 = vmatpush1.msra.mxu0 %v4457
        %v4459 = vand.u32 %v1959, 4294901760
        %4460 = vmatprep.subr.mxu0 %v4459
        %v4461 = vand.u32 %v1958, 4294901760
        %4462 = vmatpush1.msra.mxu0 %v4461
        %v4463 = vand.u32 %v1961, 4294901760
        %4464 = vmatprep.subr.mxu0 %v4463
        %v4465 = vand.u32 %v1960, 4294901760
        %4466 = vmatpush1.msra.mxu0 %v4465
        %v4467 = vand.u32 %v1963, 4294901760
        %4468 = vmatprep.subr.mxu0 %v4467
        %v4469 = vand.u32 %v1962, 4294901760
        %4470 = vmatpush1.msra.mxu0 %v4469
        %v4471 = vand.u32 %v1965, 4294901760
        %4472 = vmatprep.subr.mxu0 %v4471
        %v4473 = vand.u32 %v1964, 4294901760
        %4474 = vmatpush1.msra.mxu0 %v4473
        %v4475 = vand.u32 %v1967, 4294901760
        %4476 = vmatprep.subr.mxu0 %v4475
        %v4477 = vand.u32 %v1966, 4294901760
        %4478 = vmatpush1.msra.mxu0 %v4477
        %v4479 = vand.u32 %v1969, 4294901760
        %4480 = vmatprep.subr.mxu0 %v4479
        %v4481 = vand.u32 %v1968, 4294901760
        %4482 = vmatpush1.msra.mxu0 %v4481
        %v4483 = vand.u32 %v1971, 4294901760
        %4484 = vmatprep.subr.mxu0 %v4483
        %v4485 = vand.u32 %v1970, 4294901760
        %4486 = vmatpush1.msra.mxu0 %v4485
        %v4487 = vand.u32 %v1973, 4294901760
        %4488 = vmatprep.subr.mxu0 %v4487
        %v4489 = vand.u32 %v1972, 4294901760
        %4490 = vmatpush1.msra.mxu0 %v4489
        %v4491 = vand.u32 %v1975, 4294901760
        %4492 = vmatprep.subr.mxu0 %v4491
        %v4493 = vand.u32 %v1974, 4294901760
        %4494 = vmatpush1.msra.mxu0 %v4493
        %v4495 = vand.u32 %v1977, 4294901760
        %4496 = vmatprep.subr.mxu0 %v4495
        %v4497 = vand.u32 %v1976, 4294901760
        %4498 = vmatpush1.msra.mxu0 %v4497
        %v4499 = vand.u32 %v1979, 4294901760
        %4500 = vmatprep.subr.mxu0 %v4499
        %v4501 = vand.u32 %v1978, 4294901760
        %4502 = vmatpush1.msra.mxu0 %v4501
        %v4503 = vand.u32 %v1981, 4294901760
        %4504 = vmatprep.subr.mxu0 %v4503
        %v4505 = vand.u32 %v1980, 4294901760
        %4506 = vmatpush1.msra.mxu0 %v4505
        %v4507 = vand.u32 %v1983, 4294901760
        %4508 = vmatprep.subr.mxu0 %v4507
        %v4509 = vand.u32 %v1982, 4294901760
        %4510 = vmatpush1.msra.mxu0 %v4509
        %v4511 = vand.u32 %v1985, 4294901760
        %4512 = vmatprep.subr.mxu0 %v4511
        %v4513 = vand.u32 %v1984, 4294901760
        %4514 = vmatpush1.msra.mxu0 %v4513
        %v4515 = vand.u32 %v1987, 4294901760
        %4516 = vmatprep.subr.mxu0 %v4515
        %v4517 = vand.u32 %v1986, 4294901760
        %4518 = vmatpush1.msra.mxu0 %v4517
        %v4519 = vand.u32 %v1989, 4294901760
        %4520 = vmatprep.subr.mxu0 %v4519
        %v4521 = vand.u32 %v1988, 4294901760
        %4522 = vmatpush1.msra.mxu0 %v4521
        %v4523 = vand.u32 %v1991, 4294901760
        %4524 = vmatprep.subr.mxu0 %v4523
        %v4525 = vand.u32 %v1990, 4294901760
        %4526 = vmatpush1.msra.mxu0 %v4525
        %v4527 = vand.u32 %v1993, 4294901760
        %4528 = vmatprep.subr.mxu0 %v4527
        %v4529 = vand.u32 %v1992, 4294901760
        %4530 = vmatpush1.msra.mxu0 %v4529
        %v4531 = vand.u32 %v1995, 4294901760
        %4532 = vmatprep.subr.mxu0 %v4531
        %v4533 = vand.u32 %v1994, 4294901760
        %4534 = vmatpush1.msra.mxu0 %v4533
        %v4535 = vand.u32 %v1997, 4294901760
        %4536 = vmatprep.subr.mxu0 %v4535
        %v4537 = vand.u32 %v1996, 4294901760
        %4538 = vmatpush1.msra.mxu0 %v4537
        %v4539 = vand.u32 %v1999, 4294901760
        %4540 = vmatprep.subr.mxu0 %v4539
        %v4541 = vand.u32 %v1998, 4294901760
        %4542 = vmatpush1.msra.mxu0 %v4541
        %v4543 = vand.u32 %v2001, 4294901760
        %4544 = vmatprep.subr.mxu0 %v4543
        %v4545 = vand.u32 %v2000, 4294901760
        %4546 = vmatpush1.msra.mxu0 %v4545
        %v4547 = vand.u32 %v2003, 4294901760
        %4548 = vmatprep.subr.mxu0 %v4547
        %v4549 = vand.u32 %v2002, 4294901760
        %4550 = vmatpush1.msra.mxu0 %v4549
        %v4551 = vand.u32 %v2005, 4294901760
        %4552 = vmatprep.subr.mxu0 %v4551
        %v4553 = vand.u32 %v2004, 4294901760
        %4554 = vmatpush1.msra.mxu0 %v4553
        %v4555 = vand.u32 %v2007, 4294901760
        %4556 = vmatprep.subr.mxu0 %v4555
        %v4557 = vand.u32 %v2006, 4294901760
        %4558 = vmatpush1.msra.mxu0 %v4557
        %v4559 = vand.u32 %v2009, 4294901760
        %4560 = vmatprep.subr.mxu0 %v4559
        %v4561 = vand.u32 %v2008, 4294901760
        %4562 = vmatpush1.msra.mxu0 %v4561
        %v4563 = vand.u32 %v2011, 4294901760
        %4564 = vmatprep.subr.mxu0 %v4563
        %v4565 = vand.u32 %v2010, 4294901760
        %4566 = vmatpush1.msra.mxu0 %v4565
        %v4567 = vand.u32 %v2013, 4294901760
        %4568 = vmatprep.subr.mxu0 %v4567
        %v4569 = vand.u32 %v2012, 4294901760
        %4570 = vmatpush1.msra.mxu0 %v4569
        %v4571 = vand.u32 %v2015, 4294901760
        %4572 = vmatprep.subr.mxu0 %v4571
        %v4573 = vand.u32 %v2014, 4294901760
        %4574 = vmatpush1.msra.mxu0 %v4573
        %v4575 = vand.u32 %v1887, 4294901760
        %4576 = vmatprep.mubr.f32.mxu0 %v4575
        %v4577 = vand.u32 %v1878, 4294901760
        %4578 = vmatmul.mubr.f32.gmra.mrb[0].mxu0 %v4577
        %v4579 = vpop.f32.mrb[0].mxu0
        %v4580 = vadd.f32 %v4443, %v4579
        %v4581 = vpop.f32.mrb[0].mxu0
        %v4582 = vadd.f32 %v4445, %v4581
        %4583 = vdwg.mxu0
        %v4584 = vxor.u32 %v4580, 2147483648
        %v4585 = vxor.u32 %v4582, 2147483648
        %v4586 = vmul.f32 %v4584, 1.442695
        %v4587 = vpow.pop %v4586
        %v4588 = vmul.f32 %v4585, 1.442695
        %v4589 = vpow.pop %v4588
        %v4590 = vadd.f32 %v4587, 1.0
        %v4591 = vadd.f32 %v4589, 1.0
        %v4592 = vrcp.pop %v4590
        %v4593 = vmul.f32 1.0, %v4592
        %v4594 = vrcp.pop %v4591
        %v4595 = vmul.f32 1.0, %v4594
        %v4596 = vlaneseq
        %v4597 = vshrl.u32 %v4596, 7
        %v4598 = vsub.s32 0, %v4597
        %v4599 = vrot.slane %v4593, %v4598
        %v4600 = vlaneseq
        %v4601 = vshrl.u32 %v4600, 7
        %v4602 = vsub.s32 0, %v4601
        %v4603 = vrot.slane %v4595, %v4602
        %v4604 = vmul.f32 %v1841, %v4599
        %v4605 = vmul.f32 %v1842, %v4603
        %v4606 = vmul.f32 %v1843, %v4599
        %v4607 = vmul.f32 %v1844, %v4603
        %v4608 = vmul.f32 %v1845, %v4599
        %v4609 = vmul.f32 %v1846, %v4603
        %v4610 = vmul.f32 %v1847, %v4599
        %v4611 = vmul.f32 %v1848, %v4603
        %4612 = vst [vmem:[%s284] sm:$0xff] %v4604
        %4613 = vst [vmem:[%s284 + $0x8] sm:$0xff] %v4605
        %4614 = vst [vmem:[%s284 + $0x10] sm:$0xff] %v4606
        %4615 = vst [vmem:[%s284 + $0x18] sm:$0xff] %v4607
        %4616 = vst [vmem:[%s284 + $0x20] sm:$0xff] %v4608
        %4617 = vst [vmem:[%s284 + $0x28] sm:$0xff] %v4609
        %4618 = vst [vmem:[%s284 + $0x30] sm:$0xff] %v4610
        %4619 = vst [vmem:[%s284 + $0x38] sm:$0xff] %v4611
        %s4620 = sand.u32 %s163, 1
        %s4621 = scalar_lea.sflag [#allocation4], %s4620
        %s4622 = sand.u32 %s163, 1
        %s4623 = smul.addr %s4622, 64
        %s4624 = scalar_lea.vmem [#allocation7], %s4623
        // Predicated region
        $region53: #{tpu_custom_call.1} parent=43 // pred_check
          %p4625 = pneg %p173
        $region54: #{tpu_custom_call.1} parent=43 // pred_check_branch
          %4627 = sbr.rel (%p4625) target = $region56
        $region55: #{tpu_custom_call.1} parent=43 // pred_region
          %s4629 = ssub.s32 1024, 1024
          %4630 = vsyncadd %s4621, %s4629
          %s4631 = smul.addr %s24, 8
          %s4632 = smul.addr %s4631, 128
          %s4633 = scalar_lea.hbm %s6, %s4632
          %s4634 = sshll.u32 %s4624, 4
          %s4635 = int_to_ptr.vmem [resolvable:$true] %s4634
          %4640 = dma.vmem_to_hbm [thread:$0]  %s4635, 1024, %s4633, %s4621, 256, 256, 16
        $region56: #{tpu_custom_call.1} parent=43 // pred_fallthru
          _
      $region44: #{tpu_custom_call.1} parent=5 // pred_fallthru
        _
      %p4641 = scmp.le.s32.totalorder 2, %s19
      // Predicated region
      $region57: #{tpu_custom_call.1} parent=5 // pred_check
        %p4642 = pneg %p4641
      $region58: #{tpu_custom_call.1} parent=5 // pred_check_branch
        %4644 = sbr.rel (%p4642) target = $region60
      $region59: #{tpu_custom_call.1} parent=5 // pred_region
        %s4645 = ssub.s32 %s19, 2
        // Predicated region
        $region61: #{tpu_custom_call.1} parent=59 // pred_check
          %p4646 = pneg %p179
        $region62: #{tpu_custom_call.1} parent=59 // pred_check_branch
          %4648 = sbr.rel (%p4646) target = $region64
        $region63: #{tpu_custom_call.1} parent=59 // pred_region
          %s4649 = sand.u32 %s164, 1
          %s4650 = scalar_lea.sflag [#allocation4], %s4649
          %s4651 = sand.u32 %s164, 1
          %s4652 = smul.addr %s4651, 64
          %s4653 = scalar_lea.vmem [#allocation7], %s4652
          %4654 = dma.done %s4650, 1024
        $region64: #{tpu_custom_call.1} parent=59 // pred_fallthru
          _
      $region60: #{tpu_custom_call.1} parent=5 // pred_fallthru
        _
    $region6: #{tpu_custom_call.1} parent=1 // loop_footer
      %s23 = sadd.s32 1, %s19
    $region7: #{tpu_custom_call.1} parent=1 // loop_footer_branch
      %18 = sbr.rel target = $region3
    $region8: #{tpu_custom_call.1} parent=1 // loop_exit
      _
    %4655 = vsyncpa [#allocation3], 1
    %s4656 = scalar_lea.sflag [#allocation3], 1
    %4657 = vsyncpa %s4656, 1
    %4658 = vsyncpa [#allocation6], 1
    %4659 = vsyncpa [#allocation4], 1
    %s4660 = scalar_lea.sflag [#allocation4], 1
    %4661 = vsyncpa %s4660, 1

</llo_original>
